<compile_context>
chip_gen: v6e
topology: v6e:2x2x1
jax: 0.10.0
libtpu: 0.0.40
codegen_flags: <defaults>
</compile_context>

<pallas_src>
import functools

import numpy as np

import jax
import jax.numpy as jnp
from jax import lax
from jax.experimental import pallas as pl
from jax.experimental.pallas import tpu as pltpu


# ------------------------------ fused Pallas kernel --------------------------------


def _lenet_fused_kernel(pat_ref, w1_ref, b1_ref, w2_ref, b2_ref, wfc_ref,
                        o_ref, p1_scr, y2_scr, p2_scr, *, nb, cdt):
    """Fused LeNet forward for one batch block of `nb` images (L = nb*144 lanes).

    pat_ref : (4, 25, L)   conv1 im2col patches; lane = n*144 + ph*12 + pw (pooled grid)
    w1_ref  : (10, 25)     conv1 weight with BN1 scale folded            (compute dtype)
    b1_ref  : (10, 1)      BN1 shift                                     (f32)
    w2_ref  : (25, 20, 10) conv2 weight per tap k = ki*5+kj, BN2 folded  (compute dtype)
    b2_ref  : (20, 1)      BN2 shift                                     (f32)
    wfc_ref : (16, 10, 20) FC weight per pooled position t = ph*4+pw, 1/T folded
    o_ref   : (nb, 10)     softmax-T probabilities                       (f32)
    p1_scr  : (10, L+64)   pooled conv1 activations (+ slide-over pad lanes)
    y2_scr  : (20, L+96)   conv2 activations (same row pitch)
    p2_scr  : (20, L+80)   2x2-max of conv2 activations (read by the FC taps)
    """
    f32 = jnp.float32
    L = nb * 144

    # ---- stage 1: conv1 as one MXU matmul per 2x2-pool offset, then max-pool ---------
    w1 = w1_ref[...]
    z = jnp.dot(w1, pat_ref[0], preferred_element_type=f32)               # (10, L)
    for s in range(1, 4):
        z = jnp.maximum(z, jnp.dot(w1, pat_ref[s], preferred_element_type=f32))
    # BN shift + ReLU commute with the window max, so apply them once (f32 epilogue).
    p1 = jnp.maximum(z + b1_ref[...], 0.0)                                # (10, L)

    p1_scr[...] = jnp.zeros(p1_scr.shape, cdt)     # keep the slide-over pad lanes finite
    p1_scr[:, :L] = p1.astype(cdt)

    # ---- stage 2: conv2 as 25 shifted-tap matmuls + BN shift + ReLU ------------------
    acc2 = jnp.zeros((20, L), f32)
    for ki in range(5):
        for kj in range(5):
            off = ki * 12 + kj
            tap = p1_scr[:, off:off + L]                                  # (10, L)
            acc2 = acc2 + jnp.dot(w2_ref[ki * 5 + kj], tap,
                                  preferred_element_type=f32)             # (20, L)
    y2 = jnp.maximum(acc2 + b2_ref[...], 0.0)                             # (20, L)

    y2_scr[...] = jnp.zeros(y2_scr.shape, cdt)
    y2_scr[:, :L] = y2.astype(cdt)

    # ---- 2x2 max-pool of conv2 output: shift-and-max (valid lanes at even (h, w)) ----
    wide = L + 80
    p2 = y2_scr[:, 0:wide]
    for d in (1, 12, 13):
        p2 = jnp.maximum(p2, y2_scr[:, d:d + wide])
    p2_scr[...] = p2                                                      # (20, L+80)

    # ---- FC over the 16 pooled positions as shifted-tap matmuls (1/T pre-folded) -----
    acc_fc = jnp.zeros((10, L), f32)
    for t in range(16):
        t0 = 24 * (t // 4) + 2 * (t % 4)
        acc_fc = acc_fc + jnp.dot(wfc_ref[t], p2_scr[:, t0:t0 + L],
                                  preferred_element_type=f32)             # (10, L)

    # ---- pick the one valid lane per image: logits[n, c] = acc_fc[c, n*144] ----------
    lane_idx = lax.broadcasted_iota(jnp.int32, (nb, L), 1)
    img_idx = lax.broadcasted_iota(jnp.int32, (nb, L), 0)
    sel = (lane_idx == img_idx * 144).astype(f32)                         # (nb, L)
    logits = lax.dot_general(sel, acc_fc, (((1,), (1,)), ((), ())),
                             preferred_element_type=f32)                  # (nb, 10)

    # ---- temperature softmax (1/T already in the FC weight), numerically stable ------
    mx = jnp.max(logits, axis=1, keepdims=True)
    e = jnp.exp(logits - mx)
    den = jnp.sum(e, axis=1, keepdims=True)
    o_ref[...] = (e * pl.reciprocal(den)).astype(o_ref.dtype)


# ------------------------------- JAX wrapper / glue ---------------------------------


def _fold_bn(gamma, beta, mean, var, eps=1e-5):
    scale = gamma / jnp.sqrt(var + eps)
    shift = beta - mean * scale
    return scale, shift


# Static numpy gather indices for conv1 im2col in a 2x2-maxpool-friendly order.
_DI = np.repeat(np.arange(2), 2)           # pool-window row offset, s = di*2 + dj
_DJ = np.tile(np.arange(2), 2)
_KI = np.repeat(np.arange(5), 5)           # conv1 tap, k = ki*5 + kj
_KJ = np.tile(np.arange(5), 5)
_PH = np.repeat(np.arange(12), 12)         # pooled output position, r = ph*12 + pw
_PW = np.tile(np.arange(12), 12)
_HH = ((2 * _PH)[None, None, :] + _DI[:, None, None] + _KI[None, :, None]).astype(np.int32)
_WW = ((2 * _PW)[None, None, :] + _DJ[:, None, None] + _KJ[None, :, None]).astype(np.int32)


def _conv1_pool_patches(x, dtype):
    """x: (N, 28, 28) -> (4, 25, N*144) conv1 im2col patches.

    pat[s, k, n*144 + ph*12 + pw] = x[n, 2*ph + di(s) + ki(k), 2*pw + dj(s) + kj(k)]
    """
    n = x.shape[0]
    pat = x[:, _HH, _WW]                                  # (N, 4, 25, 144) gather
    pat = jnp.transpose(pat, (1, 2, 0, 3)).reshape(4, 25, n * 144)
    return pat.astype(dtype)


def lenet_forward(params, x_nchw, temperature=10.0, *,
                  compute_dtype=jnp.float32, block_n=8):
    """x_nchw: (N, 1, 28, 28) float32 -> (N, 10) softmax-T probabilities."""
    n = x_nchw.shape[0]
    assert tuple(x_nchw.shape[1:]) == (1, 28, 28), x_nchw.shape

    # Batch block: whole batch if small (block == full dim is always legal), else
    # `block_n` (multiple of 8 so the lane-blocked patch dim nb*144 is 128-aligned).
    if n <= block_n:
        nb = n
    else:
        assert block_n % 8 == 0, "block_n must be a multiple of 8 when gridding"
        nb = block_n
    n_pad = -(-n // nb) * nb
    L = nb * 144

    x = x_nchw.reshape(n, 28, 28).astype(jnp.float32)
    if n_pad != n:
        x = jnp.concatenate([x, jnp.zeros((n_pad - n, 28, 28), x.dtype)], axis=0)

    # ---- trace-time constant folds: BN scale -> conv weights, 1/T -> FC weight -------
    s1, b1 = _fold_bn(params["bn1_gamma"], params["bn1_beta"],
                      params["bn1_mean"], params["bn1_var"])
    w1 = (params["w1"].reshape(10, 25) * s1[:, None]).astype(compute_dtype)    # (10, 25)
    b1 = b1.reshape(10, 1).astype(jnp.float32)

    s2, b2 = _fold_bn(params["bn2_gamma"], params["bn2_beta"],
                      params["bn2_mean"], params["bn2_var"])
    w2 = params["w2"] * s2[:, None, None, None]                                # (20,10,5,5)
    w2 = jnp.transpose(w2, (2, 3, 0, 1)).reshape(25, 20, 10).astype(compute_dtype)
    b2 = b2.reshape(20, 1).astype(jnp.float32)

    # Fold 1/T and the NCHW-flatten permutation into the FC weight.
    wfc = (params["w_fc"] * (1.0 / float(temperature))).reshape(10, 20, 4, 4)
    wfc = jnp.transpose(wfc, (2, 3, 0, 1)).reshape(16, 10, 20).astype(compute_dtype)

    patches = _conv1_pool_patches(x, compute_dtype)                            # (4,25,n_pad*144)

    kernel = functools.partial(_lenet_fused_kernel, nb=nb, cdt=compute_dtype)
    out = pl.pallas_call(
        kernel,
        out_shape=jax.ShapeDtypeStruct((n_pad, 10), jnp.float32),
        grid_spec=pltpu.PrefetchScalarGridSpec(
            num_scalar_prefetch=0,
            grid=(n_pad // nb,),
            in_specs=[
                pl.BlockSpec((4, 25, L), lambda b: (0, 0, b)),      # patches: batch-blocked
                pl.BlockSpec((10, 25), lambda b: (0, 0)),           # weights: VMEM-resident
                pl.BlockSpec((10, 1), lambda b: (0, 0)),
                pl.BlockSpec((25, 20, 10), lambda b: (0, 0, 0)),
                pl.BlockSpec((20, 1), lambda b: (0, 0)),
                pl.BlockSpec((16, 10, 20), lambda b: (0, 0, 0)),
            ],
            out_specs=pl.BlockSpec((nb, 10), lambda b: (b, 0)),
            scratch_shapes=[
                pltpu.VMEM((10, L + 64), compute_dtype),    # pooled conv1 (+ slide pad)
                pltpu.VMEM((20, L + 96), compute_dtype),    # conv2 activations
                pltpu.VMEM((20, L + 80), compute_dtype),    # pooled conv2
            ],
        ),
        compiler_params=pltpu.CompilerParams(
            dimension_semantics=("parallel",),
            vmem_limit_bytes=32 * 1024 * 1024,
        ),
    )(patches, w1, b1, w2, b2, wfc)
    return out[:n]


# ------------------------------------ reference -------------------------------------


def lenet_reference(params, x_nchw, temperature=10.0):
    """Pure-XLA mirror of the PyTorch module (inference-mode BatchNorm)."""
    hi = lax.Precision.HIGHEST
    x = x_nchw.astype(jnp.float32)

    s1, b1 = _fold_bn(params["bn1_gamma"], params["bn1_beta"],
                      params["bn1_mean"], params["bn1_var"])
    y = lax.conv_general_dilated(x, params["w1"], (1, 1), "VALID",
                                 dimension_numbers=("NCHW", "OIHW", "NCHW"), precision=hi)
    y = jnp.maximum(y * s1[None, :, None, None] + b1[None, :, None, None], 0.0)
    y = y.reshape(y.shape[0], 10, 12, 2, 12, 2).max(axis=(3, 5))

    s2, b2 = _fold_bn(params["bn2_gamma"], params["bn2_beta"],
                      params["bn2_mean"], params["bn2_var"])
    y = lax.conv_general_dilated(y, params["w2"], (1, 1), "VALID",
                                 dimension_numbers=("NCHW", "OIHW", "NCHW"), precision=hi)
    y = jnp.maximum(y * s2[None, :, None, None] + b2[None, :, None, None], 0.0)
    y = y.reshape(y.shape[0], 20, 4, 2, 4, 2).max(axis=(3, 5))

    flat = y.reshape(y.shape[0], -1)                                    # NCHW flatten
    logits = jnp.dot(flat, params["w_fc"].T, precision=hi)
    z = logits / temperature
    z = z - jnp.max(z, axis=1, keepdims=True)
    e = jnp.exp(z)
    return e / jnp.sum(e, axis=1, keepdims=True)


def init_params(key, in_channel=1, num_classes=10):
    ks = jax.random.split(key, 11)
    return {
        # PyTorch conv weight layout (OC, IC, KH, KW); linear weight (num_classes, 320).
        "w1": jax.random.normal(ks[0], (10, in_channel, 5, 5), jnp.float32) * 0.1,
        "bn1_gamma": 1.0 + 0.1 * jax.random.normal(ks[1], (10,), jnp.float32),
        "bn1_beta": 0.1 * jax.random.normal(ks[2], (10,), jnp.float32),
        "bn1_mean": 0.05 * jax.random.normal(ks[3], (10,), jnp.float32),
        "bn1_var": 0.5 + jax.random.uniform(ks[4], (10,), jnp.float32),
        "w2": jax.random.normal(ks[5], (20, 10, 5, 5), jnp.float32) * 0.05,
        "bn2_gamma": 1.0 + 0.1 * jax.random.normal(ks[6], (20,), jnp.float32),
        "bn2_beta": 0.1 * jax.random.normal(ks[7], (20,), jnp.float32),
        "bn2_mean": 0.05 * jax.random.normal(ks[8], (20,), jnp.float32),
        "bn2_var": 0.5 + jax.random.uniform(ks[9], (20,), jnp.float32),
        "w_fc": jax.random.normal(ks[10], (num_classes, 320), jnp.float32) * 0.05,
    }


# --------------------------------------- main ----------------------------------------

if __name__ == "__main__":
    key = jax.random.PRNGKey(0)
    k_param, k_x, k_x2 = jax.random.split(key, 3)

    params = init_params(k_param, in_channel=1, num_classes=10)
    # LeNet's Linear(320, ...) implies 28x28 single-channel input (MNIST-like).
    x = jax.random.normal(k_x, (2, 1, 28, 28), jnp.float32)

    # f32 path (exact, single block).
    out = jax.block_until_ready(lenet_forward(params, x, temperature=10.0))
    ref = jax.block_until_ready(lenet_reference(params, x, temperature=10.0))
    assert out.shape == (2, 10)
    assert jnp.allclose(jnp.sum(out, axis=1), 1.0, atol=1e-4)
    assert jnp.allclose(out, ref, atol=1e-3, rtol=1e-3), float(jnp.max(jnp.abs(out - ref)))

    # bf16 MXU operands (v6e/v7x path): f32 accumulation + f32 epilogue, looser tolerance.
    out_bf16 = jax.block_until_ready(
        lenet_forward(params, x, temperature=10.0, compute_dtype=jnp.bfloat16))
    assert jnp.allclose(out_bf16, ref, atol=3e-2), float(jnp.max(jnp.abs(out_bf16 - ref)))

    # Multi-block gridded path (batch > block, batch padded to a multiple of 8).
    x2 = jax.random.normal(k_x2, (9, 1, 28, 28), jnp.float32)
    out2 = jax.block_until_ready(lenet_forward(params, x2, temperature=10.0))
    ref2 = jax.block_until_ready(lenet_reference(params, x2, temperature=10.0))
    assert out2.shape == (9, 10)
    assert jnp.allclose(out2, ref2, atol=1e-3, rtol=1e-3), float(jnp.max(jnp.abs(out2 - ref2)))

    print("KERNEL_OK")
</pallas_src>

<mosaic_0001>
module attributes {stable_mosaic.version = 11 : i64} {
  func.func @_lenet_fused_kernel(%arg0: i32, %arg1: memref<4x25x288xf32, #tpu.memory_space<vmem>>, %arg2: memref<10x25xf32, #tpu.memory_space<vmem>>, %arg3: memref<10x1xf32, #tpu.memory_space<vmem>>, %arg4: memref<25x20x10xf32, #tpu.memory_space<vmem>>, %arg5: memref<20x1xf32, #tpu.memory_space<vmem>>, %arg6: memref<16x10x20xf32, #tpu.memory_space<vmem>>, %arg7: memref<2x10xf32, #tpu.memory_space<vmem>>, %arg8: memref<10x352xf32, #tpu.memory_space<vmem>>, %arg9: memref<20x384xf32, #tpu.memory_space<vmem>>, %arg10: memref<20x368xf32, #tpu.memory_space<vmem>>) attributes {dimension_semantics = [#tpu.dimension_semantics<parallel>], iteration_bounds = array<i64: 1>, scalar_prefetch = 0 : i64, scratch_operands = 3 : i64, tpu.core_type = #tpu.core_type<tc>, window_params = [{transform_indices = @transform_0, window_bounds = array<i64: 4, 25, 288>}, {pipeline_mode = #tpu.pipeline_mode<synchronous>, transform_indices = @transform_1, window_bounds = array<i64: 10, 25>}, {pipeline_mode = #tpu.pipeline_mode<synchronous>, transform_indices = @transform_2, window_bounds = array<i64: 10, 1>}, {pipeline_mode = #tpu.pipeline_mode<synchronous>, transform_indices = @transform_3, window_bounds = array<i64: 25, 20, 10>}, {pipeline_mode = #tpu.pipeline_mode<synchronous>, transform_indices = @transform_4, window_bounds = array<i64: 20, 1>}, {pipeline_mode = #tpu.pipeline_mode<synchronous>, transform_indices = @transform_5, window_bounds = array<i64: 16, 10, 20>}, {transform_indices = @transform_6, window_bounds = array<i64: 2, 10>}]} {
    %c0 = arith.constant 0 : index
    %c0_0 = arith.constant 0 : index
    %0 = vector.load %arg2[%c0, %c0_0] : memref<10x25xf32, #tpu.memory_space<vmem>>, vector<10x25xf32>
    %c0_1 = arith.constant 0 : index
    %c0_2 = arith.constant 0 : index
    %c0_3 = arith.constant 0 : index
    %1 = vector.load %arg1[%c0_1, %c0_2, %c0_3] : memref<4x25x288xf32, #tpu.memory_space<vmem>>, vector<1x25x288xf32>
    %2 = vector.shape_cast %1 : vector<1x25x288xf32> to vector<25x288xf32>
    %cst = arith.constant dense<0.000000e+00> : vector<10x288xf32>
    %3 = tpu.matmul %0, %2, %cst {dimension_numbers = #tpu.dot_dimension_numbers<[1], [0], [0], [1], [0, 0, 1, 1], [], []>} : vector<10x25xf32>, vector<25x288xf32>, vector<10x288xf32> -> vector<10x288xf32>
    %c1 = arith.constant 1 : index
    %c0_4 = arith.constant 0 : index
    %c0_5 = arith.constant 0 : index
    %4 = vector.load %arg1[%c1, %c0_4, %c0_5] : memref<4x25x288xf32, #tpu.memory_space<vmem>>, vector<1x25x288xf32>
    %5 = vector.shape_cast %4 : vector<1x25x288xf32> to vector<25x288xf32>
    %cst_6 = arith.constant dense<0.000000e+00> : vector<10x288xf32>
    %6 = tpu.matmul %0, %5, %cst_6 {dimension_numbers = #tpu.dot_dimension_numbers<[1], [0], [0], [1], [0, 0, 1, 1], [], []>} : vector<10x25xf32>, vector<25x288xf32>, vector<10x288xf32> -> vector<10x288xf32>
    %7 = arith.maximumf %3, %6 : vector<10x288xf32>
    %c2 = arith.constant 2 : index
    %c0_7 = arith.constant 0 : index
    %c0_8 = arith.constant 0 : index
    %8 = vector.load %arg1[%c2, %c0_7, %c0_8] : memref<4x25x288xf32, #tpu.memory_space<vmem>>, vector<1x25x288xf32>
    %9 = vector.shape_cast %8 : vector<1x25x288xf32> to vector<25x288xf32>
    %cst_9 = arith.constant dense<0.000000e+00> : vector<10x288xf32>
    %10 = tpu.matmul %0, %9, %cst_9 {dimension_numbers = #tpu.dot_dimension_numbers<[1], [0], [0], [1], [0, 0, 1, 1], [], []>} : vector<10x25xf32>, vector<25x288xf32>, vector<10x288xf32> -> vector<10x288xf32>
    %11 = arith.maximumf %7, %10 : vector<10x288xf32>
    %c3 = arith.constant 3 : index
    %c0_10 = arith.constant 0 : index
    %c0_11 = arith.constant 0 : index
    %12 = vector.load %arg1[%c3, %c0_10, %c0_11] : memref<4x25x288xf32, #tpu.memory_space<vmem>>, vector<1x25x288xf32>
    %13 = vector.shape_cast %12 : vector<1x25x288xf32> to vector<25x288xf32>
    %cst_12 = arith.constant dense<0.000000e+00> : vector<10x288xf32>
    %14 = tpu.matmul %0, %13, %cst_12 {dimension_numbers = #tpu.dot_dimension_numbers<[1], [0], [0], [1], [0, 0, 1, 1], [], []>} : vector<10x25xf32>, vector<25x288xf32>, vector<10x288xf32> -> vector<10x288xf32>
    %15 = arith.maximumf %11, %14 : vector<10x288xf32>
    %c0_13 = arith.constant 0 : index
    %c0_14 = arith.constant 0 : index
    %16 = vector.load %arg3[%c0_13, %c0_14] : memref<10x1xf32, #tpu.memory_space<vmem>>, vector<10x1xf32>
    %17 = vector.broadcast %16 : vector<10x1xf32> to vector<10x288xf32>
    %18 = arith.addf %15, %17 : vector<10x288xf32>
    %cst_15 = arith.constant 0.000000e+00 : f32
    %19 = vector.broadcast %cst_15 : f32 to vector<10x288xf32>
    %20 = arith.maximumf %18, %19 : vector<10x288xf32>
    %cst_16 = arith.constant 0.000000e+00 : f32
    %21 = vector.broadcast %cst_16 : f32 to vector<10x352xf32>
    %c0_17 = arith.constant 0 : index
    %c0_18 = arith.constant 0 : index
    %22 = vector.load %arg8[%c0_17, %c0_18] : memref<10x352xf32, #tpu.memory_space<vmem>>, vector<10x352xf32>
    tpu.vector_store %arg8[%c0_17, %c0_18], %21 {strides = array<i32>} : memref<10x352xf32, #tpu.memory_space<vmem>>, vector<10x352xf32>,
    %c0_19 = arith.constant 0 : index
    %c0_20 = arith.constant 0 : index
    %23 = vector.load %arg8[%c0_19, %c0_20] : memref<10x352xf32, #tpu.memory_space<vmem>>, vector<10x288xf32>
    tpu.vector_store %arg8[%c0_19, %c0_20], %20 {strides = array<i32>} : memref<10x352xf32, #tpu.memory_space<vmem>>, vector<10x288xf32>,
    %cst_21 = arith.constant 0.000000e+00 : f32
    %24 = vector.broadcast %cst_21 : f32 to vector<20x288xf32>
    %c0_22 = arith.constant 0 : index
    %c0_23 = arith.constant 0 : index
    %25 = vector.load %arg8[%c0_22, %c0_23] : memref<10x352xf32, #tpu.memory_space<vmem>>, vector<10x288xf32>
    %c0_24 = arith.constant 0 : index
    %c0_25 = arith.constant 0 : index
    %c0_26 = arith.constant 0 : index
    %26 = vector.load %arg4[%c0_24, %c0_25, %c0_26] : memref<25x20x10xf32, #tpu.memory_space<vmem>>, vector<1x20x10xf32>
    %27 = vector.shape_cast %26 : vector<1x20x10xf32> to vector<20x10xf32>
    %cst_27 = arith.constant dense<0.000000e+00> : vector<20x288xf32>
    %28 = tpu.matmul %27, %25, %cst_27 {dimension_numbers = #tpu.dot_dimension_numbers<[1], [0], [0], [1], [0, 0, 1, 1], [], []>} : vector<20x10xf32>, vector<10x288xf32>, vector<20x288xf32> -> vector<20x288xf32>
    %29 = arith.addf %24, %28 : vector<20x288xf32>
    %c0_28 = arith.constant 0 : index
    %c1_29 = arith.constant 1 : index
    %30 = vector.load %arg8[%c0_28, %c1_29] : memref<10x352xf32, #tpu.memory_space<vmem>>, vector<10x288xf32>
    %c1_30 = arith.constant 1 : index
    %c0_31 = arith.constant 0 : index
    %c0_32 = arith.constant 0 : index
    %31 = vector.load %arg4[%c1_30, %c0_31, %c0_32] : memref<25x20x10xf32, #tpu.memory_space<vmem>>, vector<1x20x10xf32>
    %32 = vector.shape_cast %31 : vector<1x20x10xf32> to vector<20x10xf32>
    %cst_33 = arith.constant dense<0.000000e+00> : vector<20x288xf32>
    %33 = tpu.matmul %32, %30, %cst_33 {dimension_numbers = #tpu.dot_dimension_numbers<[1], [0], [0], [1], [0, 0, 1, 1], [], []>} : vector<20x10xf32>, vector<10x288xf32>, vector<20x288xf32> -> vector<20x288xf32>
    %34 = arith.addf %29, %33 : vector<20x288xf32>
    %c0_34 = arith.constant 0 : index
    %c2_35 = arith.constant 2 : index
    %35 = vector.load %arg8[%c0_34, %c2_35] : memref<10x352xf32, #tpu.memory_space<vmem>>, vector<10x288xf32>
    %c2_36 = arith.constant 2 : index
    %c0_37 = arith.constant 0 : index
    %c0_38 = arith.constant 0 : index
    %36 = vector.load %arg4[%c2_36, %c0_37, %c0_38] : memref<25x20x10xf32, #tpu.memory_space<vmem>>, vector<1x20x10xf32>
    %37 = vector.shape_cast %36 : vector<1x20x10xf32> to vector<20x10xf32>
    %cst_39 = arith.constant dense<0.000000e+00> : vector<20x288xf32>
    %38 = tpu.matmul %37, %35, %cst_39 {dimension_numbers = #tpu.dot_dimension_numbers<[1], [0], [0], [1], [0, 0, 1, 1], [], []>} : vector<20x10xf32>, vector<10x288xf32>, vector<20x288xf32> -> vector<20x288xf32>
    %39 = arith.addf %34, %38 : vector<20x288xf32>
    %c0_40 = arith.constant 0 : index
    %c3_41 = arith.constant 3 : index
    %40 = vector.load %arg8[%c0_40, %c3_41] : memref<10x352xf32, #tpu.memory_space<vmem>>, vector<10x288xf32>
    %c3_42 = arith.constant 3 : index
    %c0_43 = arith.constant 0 : index
    %c0_44 = arith.constant 0 : index
    %41 = vector.load %arg4[%c3_42, %c0_43, %c0_44] : memref<25x20x10xf32, #tpu.memory_space<vmem>>, vector<1x20x10xf32>
    %42 = vector.shape_cast %41 : vector<1x20x10xf32> to vector<20x10xf32>
    %cst_45 = arith.constant dense<0.000000e+00> : vector<20x288xf32>
    %43 = tpu.matmul %42, %40, %cst_45 {dimension_numbers = #tpu.dot_dimension_numbers<[1], [0], [0], [1], [0, 0, 1, 1], [], []>} : vector<20x10xf32>, vector<10x288xf32>, vector<20x288xf32> -> vector<20x288xf32>
    %44 = arith.addf %39, %43 : vector<20x288xf32>
    %c0_46 = arith.constant 0 : index
    %c4 = arith.constant 4 : index
    %45 = vector.load %arg8[%c0_46, %c4] : memref<10x352xf32, #tpu.memory_space<vmem>>, vector<10x288xf32>
    %c4_47 = arith.constant 4 : index
    %c0_48 = arith.constant 0 : index
    %c0_49 = arith.constant 0 : index
    %46 = vector.load %arg4[%c4_47, %c0_48, %c0_49] : memref<25x20x10xf32, #tpu.memory_space<vmem>>, vector<1x20x10xf32>
    %47 = vector.shape_cast %46 : vector<1x20x10xf32> to vector<20x10xf32>
    %cst_50 = arith.constant dense<0.000000e+00> : vector<20x288xf32>
    %48 = tpu.matmul %47, %45, %cst_50 {dimension_numbers = #tpu.dot_dimension_numbers<[1], [0], [0], [1], [0, 0, 1, 1], [], []>} : vector<20x10xf32>, vector<10x288xf32>, vector<20x288xf32> -> vector<20x288xf32>
    %49 = arith.addf %44, %48 : vector<20x288xf32>
    %c0_51 = arith.constant 0 : index
    %c12 = arith.constant 12 : index
    %50 = vector.load %arg8[%c0_51, %c12] : memref<10x352xf32, #tpu.memory_space<vmem>>, vector<10x288xf32>
    %c5 = arith.constant 5 : index
    %c0_52 = arith.constant 0 : index
    %c0_53 = arith.constant 0 : index
    %51 = vector.load %arg4[%c5, %c0_52, %c0_53] : memref<25x20x10xf32, #tpu.memory_space<vmem>>, vector<1x20x10xf32>
    %52 = vector.shape_cast %51 : vector<1x20x10xf32> to vector<20x10xf32>
    %cst_54 = arith.constant dense<0.000000e+00> : vector<20x288xf32>
    %53 = tpu.matmul %52, %50, %cst_54 {dimension_numbers = #tpu.dot_dimension_numbers<[1], [0], [0], [1], [0, 0, 1, 1], [], []>} : vector<20x10xf32>, vector<10x288xf32>, vector<20x288xf32> -> vector<20x288xf32>
    %54 = arith.addf %49, %53 : vector<20x288xf32>
    %c0_55 = arith.constant 0 : index
    %c13 = arith.constant 13 : index
    %55 = vector.load %arg8[%c0_55, %c13] : memref<10x352xf32, #tpu.memory_space<vmem>>, vector<10x288xf32>
    %c6 = arith.constant 6 : index
    %c0_56 = arith.constant 0 : index
    %c0_57 = arith.constant 0 : index
    %56 = vector.load %arg4[%c6, %c0_56, %c0_57] : memref<25x20x10xf32, #tpu.memory_space<vmem>>, vector<1x20x10xf32>
    %57 = vector.shape_cast %56 : vector<1x20x10xf32> to vector<20x10xf32>
    %cst_58 = arith.constant dense<0.000000e+00> : vector<20x288xf32>
    %58 = tpu.matmul %57, %55, %cst_58 {dimension_numbers = #tpu.dot_dimension_numbers<[1], [0], [0], [1], [0, 0, 1, 1], [], []>} : vector<20x10xf32>, vector<10x288xf32>, vector<20x288xf32> -> vector<20x288xf32>
    %59 = arith.addf %54, %58 : vector<20x288xf32>
    %c0_59 = arith.constant 0 : index
    %c14 = arith.constant 14 : index
    %60 = vector.load %arg8[%c0_59, %c14] : memref<10x352xf32, #tpu.memory_space<vmem>>, vector<10x288xf32>
    %c7 = arith.constant 7 : index
    %c0_60 = arith.constant 0 : index
    %c0_61 = arith.constant 0 : index
    %61 = vector.load %arg4[%c7, %c0_60, %c0_61] : memref<25x20x10xf32, #tpu.memory_space<vmem>>, vector<1x20x10xf32>
    %62 = vector.shape_cast %61 : vector<1x20x10xf32> to vector<20x10xf32>
    %cst_62 = arith.constant dense<0.000000e+00> : vector<20x288xf32>
    %63 = tpu.matmul %62, %60, %cst_62 {dimension_numbers = #tpu.dot_dimension_numbers<[1], [0], [0], [1], [0, 0, 1, 1], [], []>} : vector<20x10xf32>, vector<10x288xf32>, vector<20x288xf32> -> vector<20x288xf32>
    %64 = arith.addf %59, %63 : vector<20x288xf32>
    %c0_63 = arith.constant 0 : index
    %c15 = arith.constant 15 : index
    %65 = vector.load %arg8[%c0_63, %c15] : memref<10x352xf32, #tpu.memory_space<vmem>>, vector<10x288xf32>
    %c8 = arith.constant 8 : index
    %c0_64 = arith.constant 0 : index
    %c0_65 = arith.constant 0 : index
    %66 = vector.load %arg4[%c8, %c0_64, %c0_65] : memref<25x20x10xf32, #tpu.memory_space<vmem>>, vector<1x20x10xf32>
    %67 = vector.shape_cast %66 : vector<1x20x10xf32> to vector<20x10xf32>
    %cst_66 = arith.constant dense<0.000000e+00> : vector<20x288xf32>
    %68 = tpu.matmul %67, %65, %cst_66 {dimension_numbers = #tpu.dot_dimension_numbers<[1], [0], [0], [1], [0, 0, 1, 1], [], []>} : vector<20x10xf32>, vector<10x288xf32>, vector<20x288xf32> -> vector<20x288xf32>
    %69 = arith.addf %64, %68 : vector<20x288xf32>
    %c0_67 = arith.constant 0 : index
    %c16 = arith.constant 16 : index
    %70 = vector.load %arg8[%c0_67, %c16] : memref<10x352xf32, #tpu.memory_space<vmem>>, vector<10x288xf32>
    %c9 = arith.constant 9 : index
    %c0_68 = arith.constant 0 : index
    %c0_69 = arith.constant 0 : index
    %71 = vector.load %arg4[%c9, %c0_68, %c0_69] : memref<25x20x10xf32, #tpu.memory_space<vmem>>, vector<1x20x10xf32>
    %72 = vector.shape_cast %71 : vector<1x20x10xf32> to vector<20x10xf32>
    %cst_70 = arith.constant dense<0.000000e+00> : vector<20x288xf32>
    %73 = tpu.matmul %72, %70, %cst_70 {dimension_numbers = #tpu.dot_dimension_numbers<[1], [0], [0], [1], [0, 0, 1, 1], [], []>} : vector<20x10xf32>, vector<10x288xf32>, vector<20x288xf32> -> vector<20x288xf32>
    %74 = arith.addf %69, %73 : vector<20x288xf32>
    %c0_71 = arith.constant 0 : index
    %c24 = arith.constant 24 : index
    %75 = vector.load %arg8[%c0_71, %c24] : memref<10x352xf32, #tpu.memory_space<vmem>>, vector<10x288xf32>
    %c10 = arith.constant 10 : index
    %c0_72 = arith.constant 0 : index
    %c0_73 = arith.constant 0 : index
    %76 = vector.load %arg4[%c10, %c0_72, %c0_73] : memref<25x20x10xf32, #tpu.memory_space<vmem>>, vector<1x20x10xf32>
    %77 = vector.shape_cast %76 : vector<1x20x10xf32> to vector<20x10xf32>
    %cst_74 = arith.constant dense<0.000000e+00> : vector<20x288xf32>
    %78 = tpu.matmul %77, %75, %cst_74 {dimension_numbers = #tpu.dot_dimension_numbers<[1], [0], [0], [1], [0, 0, 1, 1], [], []>} : vector<20x10xf32>, vector<10x288xf32>, vector<20x288xf32> -> vector<20x288xf32>
    %79 = arith.addf %74, %78 : vector<20x288xf32>
    %c0_75 = arith.constant 0 : index
    %c25 = arith.constant 25 : index
    %80 = vector.load %arg8[%c0_75, %c25] : memref<10x352xf32, #tpu.memory_space<vmem>>, vector<10x288xf32>
    %c11 = arith.constant 11 : index
    %c0_76 = arith.constant 0 : index
    %c0_77 = arith.constant 0 : index
    %81 = vector.load %arg4[%c11, %c0_76, %c0_77] : memref<25x20x10xf32, #tpu.memory_space<vmem>>, vector<1x20x10xf32>
    %82 = vector.shape_cast %81 : vector<1x20x10xf32> to vector<20x10xf32>
    %cst_78 = arith.constant dense<0.000000e+00> : vector<20x288xf32>
    %83 = tpu.matmul %82, %80, %cst_78 {dimension_numbers = #tpu.dot_dimension_numbers<[1], [0], [0], [1], [0, 0, 1, 1], [], []>} : vector<20x10xf32>, vector<10x288xf32>, vector<20x288xf32> -> vector<20x288xf32>
    %84 = arith.addf %79, %83 : vector<20x288xf32>
    %c0_79 = arith.constant 0 : index
    %c26 = arith.constant 26 : index
    %85 = vector.load %arg8[%c0_79, %c26] : memref<10x352xf32, #tpu.memory_space<vmem>>, vector<10x288xf32>
    %c12_80 = arith.constant 12 : index
    %c0_81 = arith.constant 0 : index
    %c0_82 = arith.constant 0 : index
    %86 = vector.load %arg4[%c12_80, %c0_81, %c0_82] : memref<25x20x10xf32, #tpu.memory_space<vmem>>, vector<1x20x10xf32>
    %87 = vector.shape_cast %86 : vector<1x20x10xf32> to vector<20x10xf32>
    %cst_83 = arith.constant dense<0.000000e+00> : vector<20x288xf32>
    %88 = tpu.matmul %87, %85, %cst_83 {dimension_numbers = #tpu.dot_dimension_numbers<[1], [0], [0], [1], [0, 0, 1, 1], [], []>} : vector<20x10xf32>, vector<10x288xf32>, vector<20x288xf32> -> vector<20x288xf32>
    %89 = arith.addf %84, %88 : vector<20x288xf32>
    %c0_84 = arith.constant 0 : index
    %c27 = arith.constant 27 : index
    %90 = vector.load %arg8[%c0_84, %c27] : memref<10x352xf32, #tpu.memory_space<vmem>>, vector<10x288xf32>
    %c13_85 = arith.constant 13 : index
    %c0_86 = arith.constant 0 : index
    %c0_87 = arith.constant 0 : index
    %91 = vector.load %arg4[%c13_85, %c0_86, %c0_87] : memref<25x20x10xf32, #tpu.memory_space<vmem>>, vector<1x20x10xf32>
    %92 = vector.shape_cast %91 : vector<1x20x10xf32> to vector<20x10xf32>
    %cst_88 = arith.constant dense<0.000000e+00> : vector<20x288xf32>
    %93 = tpu.matmul %92, %90, %cst_88 {dimension_numbers = #tpu.dot_dimension_numbers<[1], [0], [0], [1], [0, 0, 1, 1], [], []>} : vector<20x10xf32>, vector<10x288xf32>, vector<20x288xf32> -> vector<20x288xf32>
    %94 = arith.addf %89, %93 : vector<20x288xf32>
    %c0_89 = arith.constant 0 : index
    %c28 = arith.constant 28 : index
    %95 = vector.load %arg8[%c0_89, %c28] : memref<10x352xf32, #tpu.memory_space<vmem>>, vector<10x288xf32>
    %c14_90 = arith.constant 14 : index
    %c0_91 = arith.constant 0 : index
    %c0_92 = arith.constant 0 : index
    %96 = vector.load %arg4[%c14_90, %c0_91, %c0_92] : memref<25x20x10xf32, #tpu.memory_space<vmem>>, vector<1x20x10xf32>
    %97 = vector.shape_cast %96 : vector<1x20x10xf32> to vector<20x10xf32>
    %cst_93 = arith.constant dense<0.000000e+00> : vector<20x288xf32>
    %98 = tpu.matmul %97, %95, %cst_93 {dimension_numbers = #tpu.dot_dimension_numbers<[1], [0], [0], [1], [0, 0, 1, 1], [], []>} : vector<20x10xf32>, vector<10x288xf32>, vector<20x288xf32> -> vector<20x288xf32>
    %99 = arith.addf %94, %98 : vector<20x288xf32>
    %c0_94 = arith.constant 0 : index
    %c36 = arith.constant 36 : index
    %100 = vector.load %arg8[%c0_94, %c36] : memref<10x352xf32, #tpu.memory_space<vmem>>, vector<10x288xf32>
    %c15_95 = arith.constant 15 : index
    %c0_96 = arith.constant 0 : index
    %c0_97 = arith.constant 0 : index
    %101 = vector.load %arg4[%c15_95, %c0_96, %c0_97] : memref<25x20x10xf32, #tpu.memory_space<vmem>>, vector<1x20x10xf32>
    %102 = vector.shape_cast %101 : vector<1x20x10xf32> to vector<20x10xf32>
    %cst_98 = arith.constant dense<0.000000e+00> : vector<20x288xf32>
    %103 = tpu.matmul %102, %100, %cst_98 {dimension_numbers = #tpu.dot_dimension_numbers<[1], [0], [0], [1], [0, 0, 1, 1], [], []>} : vector<20x10xf32>, vector<10x288xf32>, vector<20x288xf32> -> vector<20x288xf32>
    %104 = arith.addf %99, %103 : vector<20x288xf32>
    %c0_99 = arith.constant 0 : index
    %c37 = arith.constant 37 : index
    %105 = vector.load %arg8[%c0_99, %c37] : memref<10x352xf32, #tpu.memory_space<vmem>>, vector<10x288xf32>
    %c16_100 = arith.constant 16 : index
    %c0_101 = arith.constant 0 : index
    %c0_102 = arith.constant 0 : index
    %106 = vector.load %arg4[%c16_100, %c0_101, %c0_102] : memref<25x20x10xf32, #tpu.memory_space<vmem>>, vector<1x20x10xf32>
    %107 = vector.shape_cast %106 : vector<1x20x10xf32> to vector<20x10xf32>
    %cst_103 = arith.constant dense<0.000000e+00> : vector<20x288xf32>
    %108 = tpu.matmul %107, %105, %cst_103 {dimension_numbers = #tpu.dot_dimension_numbers<[1], [0], [0], [1], [0, 0, 1, 1], [], []>} : vector<20x10xf32>, vector<10x288xf32>, vector<20x288xf32> -> vector<20x288xf32>
    %109 = arith.addf %104, %108 : vector<20x288xf32>
    %c0_104 = arith.constant 0 : index
    %c38 = arith.constant 38 : index
    %110 = vector.load %arg8[%c0_104, %c38] : memref<10x352xf32, #tpu.memory_space<vmem>>, vector<10x288xf32>
    %c17 = arith.constant 17 : index
    %c0_105 = arith.constant 0 : index
    %c0_106 = arith.constant 0 : index
    %111 = vector.load %arg4[%c17, %c0_105, %c0_106] : memref<25x20x10xf32, #tpu.memory_space<vmem>>, vector<1x20x10xf32>
    %112 = vector.shape_cast %111 : vector<1x20x10xf32> to vector<20x10xf32>
    %cst_107 = arith.constant dense<0.000000e+00> : vector<20x288xf32>
    %113 = tpu.matmul %112, %110, %cst_107 {dimension_numbers = #tpu.dot_dimension_numbers<[1], [0], [0], [1], [0, 0, 1, 1], [], []>} : vector<20x10xf32>, vector<10x288xf32>, vector<20x288xf32> -> vector<20x288xf32>
    %114 = arith.addf %109, %113 : vector<20x288xf32>
    %c0_108 = arith.constant 0 : index
    %c39 = arith.constant 39 : index
    %115 = vector.load %arg8[%c0_108, %c39] : memref<10x352xf32, #tpu.memory_space<vmem>>, vector<10x288xf32>
    %c18 = arith.constant 18 : index
    %c0_109 = arith.constant 0 : index
    %c0_110 = arith.constant 0 : index
    %116 = vector.load %arg4[%c18, %c0_109, %c0_110] : memref<25x20x10xf32, #tpu.memory_space<vmem>>, vector<1x20x10xf32>
    %117 = vector.shape_cast %116 : vector<1x20x10xf32> to vector<20x10xf32>
    %cst_111 = arith.constant dense<0.000000e+00> : vector<20x288xf32>
    %118 = tpu.matmul %117, %115, %cst_111 {dimension_numbers = #tpu.dot_dimension_numbers<[1], [0], [0], [1], [0, 0, 1, 1], [], []>} : vector<20x10xf32>, vector<10x288xf32>, vector<20x288xf32> -> vector<20x288xf32>
    %119 = arith.addf %114, %118 : vector<20x288xf32>
    %c0_112 = arith.constant 0 : index
    %c40 = arith.constant 40 : index
    %120 = vector.load %arg8[%c0_112, %c40] : memref<10x352xf32, #tpu.memory_space<vmem>>, vector<10x288xf32>
    %c19 = arith.constant 19 : index
    %c0_113 = arith.constant 0 : index
    %c0_114 = arith.constant 0 : index
    %121 = vector.load %arg4[%c19, %c0_113, %c0_114] : memref<25x20x10xf32, #tpu.memory_space<vmem>>, vector<1x20x10xf32>
    %122 = vector.shape_cast %121 : vector<1x20x10xf32> to vector<20x10xf32>
    %cst_115 = arith.constant dense<0.000000e+00> : vector<20x288xf32>
    %123 = tpu.matmul %122, %120, %cst_115 {dimension_numbers = #tpu.dot_dimension_numbers<[1], [0], [0], [1], [0, 0, 1, 1], [], []>} : vector<20x10xf32>, vector<10x288xf32>, vector<20x288xf32> -> vector<20x288xf32>
    %124 = arith.addf %119, %123 : vector<20x288xf32>
    %c0_116 = arith.constant 0 : index
    %c48 = arith.constant 48 : index
    %125 = vector.load %arg8[%c0_116, %c48] : memref<10x352xf32, #tpu.memory_space<vmem>>, vector<10x288xf32>
    %c20 = arith.constant 20 : index
    %c0_117 = arith.constant 0 : index
    %c0_118 = arith.constant 0 : index
    %126 = vector.load %arg4[%c20, %c0_117, %c0_118] : memref<25x20x10xf32, #tpu.memory_space<vmem>>, vector<1x20x10xf32>
    %127 = vector.shape_cast %126 : vector<1x20x10xf32> to vector<20x10xf32>
    %cst_119 = arith.constant dense<0.000000e+00> : vector<20x288xf32>
    %128 = tpu.matmul %127, %125, %cst_119 {dimension_numbers = #tpu.dot_dimension_numbers<[1], [0], [0], [1], [0, 0, 1, 1], [], []>} : vector<20x10xf32>, vector<10x288xf32>, vector<20x288xf32> -> vector<20x288xf32>
    %129 = arith.addf %124, %128 : vector<20x288xf32>
    %c0_120 = arith.constant 0 : index
    %c49 = arith.constant 49 : index
    %130 = vector.load %arg8[%c0_120, %c49] : memref<10x352xf32, #tpu.memory_space<vmem>>, vector<10x288xf32>
    %c21 = arith.constant 21 : index
    %c0_121 = arith.constant 0 : index
    %c0_122 = arith.constant 0 : index
    %131 = vector.load %arg4[%c21, %c0_121, %c0_122] : memref<25x20x10xf32, #tpu.memory_space<vmem>>, vector<1x20x10xf32>
    %132 = vector.shape_cast %131 : vector<1x20x10xf32> to vector<20x10xf32>
    %cst_123 = arith.constant dense<0.000000e+00> : vector<20x288xf32>
    %133 = tpu.matmul %132, %130, %cst_123 {dimension_numbers = #tpu.dot_dimension_numbers<[1], [0], [0], [1], [0, 0, 1, 1], [], []>} : vector<20x10xf32>, vector<10x288xf32>, vector<20x288xf32> -> vector<20x288xf32>
    %134 = arith.addf %129, %133 : vector<20x288xf32>
    %c0_124 = arith.constant 0 : index
    %c50 = arith.constant 50 : index
    %135 = vector.load %arg8[%c0_124, %c50] : memref<10x352xf32, #tpu.memory_space<vmem>>, vector<10x288xf32>
    %c22 = arith.constant 22 : index
    %c0_125 = arith.constant 0 : index
    %c0_126 = arith.constant 0 : index
    %136 = vector.load %arg4[%c22, %c0_125, %c0_126] : memref<25x20x10xf32, #tpu.memory_space<vmem>>, vector<1x20x10xf32>
    %137 = vector.shape_cast %136 : vector<1x20x10xf32> to vector<20x10xf32>
    %cst_127 = arith.constant dense<0.000000e+00> : vector<20x288xf32>
    %138 = tpu.matmul %137, %135, %cst_127 {dimension_numbers = #tpu.dot_dimension_numbers<[1], [0], [0], [1], [0, 0, 1, 1], [], []>} : vector<20x10xf32>, vector<10x288xf32>, vector<20x288xf32> -> vector<20x288xf32>
    %139 = arith.addf %134, %138 : vector<20x288xf32>
    %c0_128 = arith.constant 0 : index
    %c51 = arith.constant 51 : index
    %140 = vector.load %arg8[%c0_128, %c51] : memref<10x352xf32, #tpu.memory_space<vmem>>, vector<10x288xf32>
    %c23 = arith.constant 23 : index
    %c0_129 = arith.constant 0 : index
    %c0_130 = arith.constant 0 : index
    %141 = vector.load %arg4[%c23, %c0_129, %c0_130] : memref<25x20x10xf32, #tpu.memory_space<vmem>>, vector<1x20x10xf32>
    %142 = vector.shape_cast %141 : vector<1x20x10xf32> to vector<20x10xf32>
    %cst_131 = arith.constant dense<0.000000e+00> : vector<20x288xf32>
    %143 = tpu.matmul %142, %140, %cst_131 {dimension_numbers = #tpu.dot_dimension_numbers<[1], [0], [0], [1], [0, 0, 1, 1], [], []>} : vector<20x10xf32>, vector<10x288xf32>, vector<20x288xf32> -> vector<20x288xf32>
    %144 = arith.addf %139, %143 : vector<20x288xf32>
    %c0_132 = arith.constant 0 : index
    %c52 = arith.constant 52 : index
    %145 = vector.load %arg8[%c0_132, %c52] : memref<10x352xf32, #tpu.memory_space<vmem>>, vector<10x288xf32>
    %c24_133 = arith.constant 24 : index
    %c0_134 = arith.constant 0 : index
    %c0_135 = arith.constant 0 : index
    %146 = vector.load %arg4[%c24_133, %c0_134, %c0_135] : memref<25x20x10xf32, #tpu.memory_space<vmem>>, vector<1x20x10xf32>
    %147 = vector.shape_cast %146 : vector<1x20x10xf32> to vector<20x10xf32>
    %cst_136 = arith.constant dense<0.000000e+00> : vector<20x288xf32>
    %148 = tpu.matmul %147, %145, %cst_136 {dimension_numbers = #tpu.dot_dimension_numbers<[1], [0], [0], [1], [0, 0, 1, 1], [], []>} : vector<20x10xf32>, vector<10x288xf32>, vector<20x288xf32> -> vector<20x288xf32>
    %149 = arith.addf %144, %148 : vector<20x288xf32>
    %c0_137 = arith.constant 0 : index
    %c0_138 = arith.constant 0 : index
    %150 = vector.load %arg5[%c0_137, %c0_138] : memref<20x1xf32, #tpu.memory_space<vmem>>, vector<20x1xf32>
    %151 = vector.broadcast %150 : vector<20x1xf32> to vector<20x288xf32>
    %152 = arith.addf %149, %151 : vector<20x288xf32>
    %cst_139 = arith.constant 0.000000e+00 : f32
    %153 = vector.broadcast %cst_139 : f32 to vector<20x288xf32>
    %154 = arith.maximumf %152, %153 : vector<20x288xf32>
    %cst_140 = arith.constant 0.000000e+00 : f32
    %155 = vector.broadcast %cst_140 : f32 to vector<20x384xf32>
    %c0_141 = arith.constant 0 : index
    %c0_142 = arith.constant 0 : index
    %156 = vector.load %arg9[%c0_141, %c0_142] : memref<20x384xf32, #tpu.memory_space<vmem>>, vector<20x384xf32>
    tpu.vector_store %arg9[%c0_141, %c0_142], %155 {strides = array<i32>} : memref<20x384xf32, #tpu.memory_space<vmem>>, vector<20x384xf32>,
    %c0_143 = arith.constant 0 : index
    %c0_144 = arith.constant 0 : index
    %157 = vector.load %arg9[%c0_143, %c0_144] : memref<20x384xf32, #tpu.memory_space<vmem>>, vector<20x288xf32>
    tpu.vector_store %arg9[%c0_143, %c0_144], %154 {strides = array<i32>} : memref<20x384xf32, #tpu.memory_space<vmem>>, vector<20x288xf32>,
    %c0_145 = arith.constant 0 : index
    %c0_146 = arith.constant 0 : index
    %158 = vector.load %arg9[%c0_145, %c0_146] : memref<20x384xf32, #tpu.memory_space<vmem>>, vector<20x368xf32>
    %c0_147 = arith.constant 0 : index
    %c1_148 = arith.constant 1 : index
    %159 = vector.load %arg9[%c0_147, %c1_148] : memref<20x384xf32, #tpu.memory_space<vmem>>, vector<20x368xf32>
    %160 = arith.maximumf %158, %159 : vector<20x368xf32>
    %c0_149 = arith.constant 0 : index
    %c12_150 = arith.constant 12 : index
    %161 = vector.load %arg9[%c0_149, %c12_150] : memref<20x384xf32, #tpu.memory_space<vmem>>, vector<20x368xf32>
    %162 = arith.maximumf %160, %161 : vector<20x368xf32>
    %c0_151 = arith.constant 0 : index
    %c13_152 = arith.constant 13 : index
    %163 = vector.load %arg9[%c0_151, %c13_152] : memref<20x384xf32, #tpu.memory_space<vmem>>, vector<20x368xf32>
    %164 = arith.maximumf %162, %163 : vector<20x368xf32>
    %c0_153 = arith.constant 0 : index
    %c0_154 = arith.constant 0 : index
    %165 = vector.load %arg10[%c0_153, %c0_154] : memref<20x368xf32, #tpu.memory_space<vmem>>, vector<20x368xf32>
    tpu.vector_store %arg10[%c0_153, %c0_154], %164 {strides = array<i32>} : memref<20x368xf32, #tpu.memory_space<vmem>>, vector<20x368xf32>,
    %cst_155 = arith.constant 0.000000e+00 : f32
    %166 = vector.broadcast %cst_155 : f32 to vector<10x288xf32>
    %c0_156 = arith.constant 0 : index
    %c0_157 = arith.constant 0 : index
    %c0_158 = arith.constant 0 : index
    %167 = vector.load %arg6[%c0_156, %c0_157, %c0_158] : memref<16x10x20xf32, #tpu.memory_space<vmem>>, vector<1x10x20xf32>
    %168 = vector.shape_cast %167 : vector<1x10x20xf32> to vector<10x20xf32>
    %c0_159 = arith.constant 0 : index
    %c0_160 = arith.constant 0 : index
    %169 = vector.load %arg10[%c0_159, %c0_160] : memref<20x368xf32, #tpu.memory_space<vmem>>, vector<20x288xf32>
    %cst_161 = arith.constant dense<0.000000e+00> : vector<10x288xf32>
    %170 = tpu.matmul %168, %169, %cst_161 {dimension_numbers = #tpu.dot_dimension_numbers<[1], [0], [0], [1], [0, 0, 1, 1], [], []>} : vector<10x20xf32>, vector<20x288xf32>, vector<10x288xf32> -> vector<10x288xf32>
    %171 = arith.addf %166, %170 : vector<10x288xf32>
    %c1_162 = arith.constant 1 : index
    %c0_163 = arith.constant 0 : index
    %c0_164 = arith.constant 0 : index
    %172 = vector.load %arg6[%c1_162, %c0_163, %c0_164] : memref<16x10x20xf32, #tpu.memory_space<vmem>>, vector<1x10x20xf32>
    %173 = vector.shape_cast %172 : vector<1x10x20xf32> to vector<10x20xf32>
    %c0_165 = arith.constant 0 : index
    %c2_166 = arith.constant 2 : index
    %174 = vector.load %arg10[%c0_165, %c2_166] : memref<20x368xf32, #tpu.memory_space<vmem>>, vector<20x288xf32>
    %cst_167 = arith.constant dense<0.000000e+00> : vector<10x288xf32>
    %175 = tpu.matmul %173, %174, %cst_167 {dimension_numbers = #tpu.dot_dimension_numbers<[1], [0], [0], [1], [0, 0, 1, 1], [], []>} : vector<10x20xf32>, vector<20x288xf32>, vector<10x288xf32> -> vector<10x288xf32>
    %176 = arith.addf %171, %175 : vector<10x288xf32>
    %c2_168 = arith.constant 2 : index
    %c0_169 = arith.constant 0 : index
    %c0_170 = arith.constant 0 : index
    %177 = vector.load %arg6[%c2_168, %c0_169, %c0_170] : memref<16x10x20xf32, #tpu.memory_space<vmem>>, vector<1x10x20xf32>
    %178 = vector.shape_cast %177 : vector<1x10x20xf32> to vector<10x20xf32>
    %c0_171 = arith.constant 0 : index
    %c4_172 = arith.constant 4 : index
    %179 = vector.load %arg10[%c0_171, %c4_172] : memref<20x368xf32, #tpu.memory_space<vmem>>, vector<20x288xf32>
    %cst_173 = arith.constant dense<0.000000e+00> : vector<10x288xf32>
    %180 = tpu.matmul %178, %179, %cst_173 {dimension_numbers = #tpu.dot_dimension_numbers<[1], [0], [0], [1], [0, 0, 1, 1], [], []>} : vector<10x20xf32>, vector<20x288xf32>, vector<10x288xf32> -> vector<10x288xf32>
    %181 = arith.addf %176, %180 : vector<10x288xf32>
    %c3_174 = arith.constant 3 : index
    %c0_175 = arith.constant 0 : index
    %c0_176 = arith.constant 0 : index
    %182 = vector.load %arg6[%c3_174, %c0_175, %c0_176] : memref<16x10x20xf32, #tpu.memory_space<vmem>>, vector<1x10x20xf32>
    %183 = vector.shape_cast %182 : vector<1x10x20xf32> to vector<10x20xf32>
    %c0_177 = arith.constant 0 : index
    %c6_178 = arith.constant 6 : index
    %184 = vector.load %arg10[%c0_177, %c6_178] : memref<20x368xf32, #tpu.memory_space<vmem>>, vector<20x288xf32>
    %cst_179 = arith.constant dense<0.000000e+00> : vector<10x288xf32>
    %185 = tpu.matmul %183, %184, %cst_179 {dimension_numbers = #tpu.dot_dimension_numbers<[1], [0], [0], [1], [0, 0, 1, 1], [], []>} : vector<10x20xf32>, vector<20x288xf32>, vector<10x288xf32> -> vector<10x288xf32>
    %186 = arith.addf %181, %185 : vector<10x288xf32>
    %c4_180 = arith.constant 4 : index
    %c0_181 = arith.constant 0 : index
    %c0_182 = arith.constant 0 : index
    %187 = vector.load %arg6[%c4_180, %c0_181, %c0_182] : memref<16x10x20xf32, #tpu.memory_space<vmem>>, vector<1x10x20xf32>
    %188 = vector.shape_cast %187 : vector<1x10x20xf32> to vector<10x20xf32>
    %c0_183 = arith.constant 0 : index
    %c24_184 = arith.constant 24 : index
    %189 = vector.load %arg10[%c0_183, %c24_184] : memref<20x368xf32, #tpu.memory_space<vmem>>, vector<20x288xf32>
    %cst_185 = arith.constant dense<0.000000e+00> : vector<10x288xf32>
    %190 = tpu.matmul %188, %189, %cst_185 {dimension_numbers = #tpu.dot_dimension_numbers<[1], [0], [0], [1], [0, 0, 1, 1], [], []>} : vector<10x20xf32>, vector<20x288xf32>, vector<10x288xf32> -> vector<10x288xf32>
    %191 = arith.addf %186, %190 : vector<10x288xf32>
    %c5_186 = arith.constant 5 : index
    %c0_187 = arith.constant 0 : index
    %c0_188 = arith.constant 0 : index
    %192 = vector.load %arg6[%c5_186, %c0_187, %c0_188] : memref<16x10x20xf32, #tpu.memory_space<vmem>>, vector<1x10x20xf32>
    %193 = vector.shape_cast %192 : vector<1x10x20xf32> to vector<10x20xf32>
    %c0_189 = arith.constant 0 : index
    %c26_190 = arith.constant 26 : index
    %194 = vector.load %arg10[%c0_189, %c26_190] : memref<20x368xf32, #tpu.memory_space<vmem>>, vector<20x288xf32>
    %cst_191 = arith.constant dense<0.000000e+00> : vector<10x288xf32>
    %195 = tpu.matmul %193, %194, %cst_191 {dimension_numbers = #tpu.dot_dimension_numbers<[1], [0], [0], [1], [0, 0, 1, 1], [], []>} : vector<10x20xf32>, vector<20x288xf32>, vector<10x288xf32> -> vector<10x288xf32>
    %196 = arith.addf %191, %195 : vector<10x288xf32>
    %c6_192 = arith.constant 6 : index
    %c0_193 = arith.constant 0 : index
    %c0_194 = arith.constant 0 : index
    %197 = vector.load %arg6[%c6_192, %c0_193, %c0_194] : memref<16x10x20xf32, #tpu.memory_space<vmem>>, vector<1x10x20xf32>
    %198 = vector.shape_cast %197 : vector<1x10x20xf32> to vector<10x20xf32>
    %c0_195 = arith.constant 0 : index
    %c28_196 = arith.constant 28 : index
    %199 = vector.load %arg10[%c0_195, %c28_196] : memref<20x368xf32, #tpu.memory_space<vmem>>, vector<20x288xf32>
    %cst_197 = arith.constant dense<0.000000e+00> : vector<10x288xf32>
    %200 = tpu.matmul %198, %199, %cst_197 {dimension_numbers = #tpu.dot_dimension_numbers<[1], [0], [0], [1], [0, 0, 1, 1], [], []>} : vector<10x20xf32>, vector<20x288xf32>, vector<10x288xf32> -> vector<10x288xf32>
    %201 = arith.addf %196, %200 : vector<10x288xf32>
    %c7_198 = arith.constant 7 : index
    %c0_199 = arith.constant 0 : index
    %c0_200 = arith.constant 0 : index
    %202 = vector.load %arg6[%c7_198, %c0_199, %c0_200] : memref<16x10x20xf32, #tpu.memory_space<vmem>>, vector<1x10x20xf32>
    %203 = vector.shape_cast %202 : vector<1x10x20xf32> to vector<10x20xf32>
    %c0_201 = arith.constant 0 : index
    %c30 = arith.constant 30 : index
    %204 = vector.load %arg10[%c0_201, %c30] : memref<20x368xf32, #tpu.memory_space<vmem>>, vector<20x288xf32>
    %cst_202 = arith.constant dense<0.000000e+00> : vector<10x288xf32>
    %205 = tpu.matmul %203, %204, %cst_202 {dimension_numbers = #tpu.dot_dimension_numbers<[1], [0], [0], [1], [0, 0, 1, 1], [], []>} : vector<10x20xf32>, vector<20x288xf32>, vector<10x288xf32> -> vector<10x288xf32>
    %206 = arith.addf %201, %205 : vector<10x288xf32>
    %c8_203 = arith.constant 8 : index
    %c0_204 = arith.constant 0 : index
    %c0_205 = arith.constant 0 : index
    %207 = vector.load %arg6[%c8_203, %c0_204, %c0_205] : memref<16x10x20xf32, #tpu.memory_space<vmem>>, vector<1x10x20xf32>
    %208 = vector.shape_cast %207 : vector<1x10x20xf32> to vector<10x20xf32>
    %c0_206 = arith.constant 0 : index
    %c48_207 = arith.constant 48 : index
    %209 = vector.load %arg10[%c0_206, %c48_207] : memref<20x368xf32, #tpu.memory_space<vmem>>, vector<20x288xf32>
    %cst_208 = arith.constant dense<0.000000e+00> : vector<10x288xf32>
    %210 = tpu.matmul %208, %209, %cst_208 {dimension_numbers = #tpu.dot_dimension_numbers<[1], [0], [0], [1], [0, 0, 1, 1], [], []>} : vector<10x20xf32>, vector<20x288xf32>, vector<10x288xf32> -> vector<10x288xf32>
    %211 = arith.addf %206, %210 : vector<10x288xf32>
    %c9_209 = arith.constant 9 : index
    %c0_210 = arith.constant 0 : index
    %c0_211 = arith.constant 0 : index
    %212 = vector.load %arg6[%c9_209, %c0_210, %c0_211] : memref<16x10x20xf32, #tpu.memory_space<vmem>>, vector<1x10x20xf32>
    %213 = vector.shape_cast %212 : vector<1x10x20xf32> to vector<10x20xf32>
    %c0_212 = arith.constant 0 : index
    %c50_213 = arith.constant 50 : index
    %214 = vector.load %arg10[%c0_212, %c50_213] : memref<20x368xf32, #tpu.memory_space<vmem>>, vector<20x288xf32>
    %cst_214 = arith.constant dense<0.000000e+00> : vector<10x288xf32>
    %215 = tpu.matmul %213, %214, %cst_214 {dimension_numbers = #tpu.dot_dimension_numbers<[1], [0], [0], [1], [0, 0, 1, 1], [], []>} : vector<10x20xf32>, vector<20x288xf32>, vector<10x288xf32> -> vector<10x288xf32>
    %216 = arith.addf %211, %215 : vector<10x288xf32>
    %c10_215 = arith.constant 10 : index
    %c0_216 = arith.constant 0 : index
    %c0_217 = arith.constant 0 : index
    %217 = vector.load %arg6[%c10_215, %c0_216, %c0_217] : memref<16x10x20xf32, #tpu.memory_space<vmem>>, vector<1x10x20xf32>
    %218 = vector.shape_cast %217 : vector<1x10x20xf32> to vector<10x20xf32>
    %c0_218 = arith.constant 0 : index
    %c52_219 = arith.constant 52 : index
    %219 = vector.load %arg10[%c0_218, %c52_219] : memref<20x368xf32, #tpu.memory_space<vmem>>, vector<20x288xf32>
    %cst_220 = arith.constant dense<0.000000e+00> : vector<10x288xf32>
    %220 = tpu.matmul %218, %219, %cst_220 {dimension_numbers = #tpu.dot_dimension_numbers<[1], [0], [0], [1], [0, 0, 1, 1], [], []>} : vector<10x20xf32>, vector<20x288xf32>, vector<10x288xf32> -> vector<10x288xf32>
    %221 = arith.addf %216, %220 : vector<10x288xf32>
    %c11_221 = arith.constant 11 : index
    %c0_222 = arith.constant 0 : index
    %c0_223 = arith.constant 0 : index
    %222 = vector.load %arg6[%c11_221, %c0_222, %c0_223] : memref<16x10x20xf32, #tpu.memory_space<vmem>>, vector<1x10x20xf32>
    %223 = vector.shape_cast %222 : vector<1x10x20xf32> to vector<10x20xf32>
    %c0_224 = arith.constant 0 : index
    %c54 = arith.constant 54 : index
    %224 = vector.load %arg10[%c0_224, %c54] : memref<20x368xf32, #tpu.memory_space<vmem>>, vector<20x288xf32>
    %cst_225 = arith.constant dense<0.000000e+00> : vector<10x288xf32>
    %225 = tpu.matmul %223, %224, %cst_225 {dimension_numbers = #tpu.dot_dimension_numbers<[1], [0], [0], [1], [0, 0, 1, 1], [], []>} : vector<10x20xf32>, vector<20x288xf32>, vector<10x288xf32> -> vector<10x288xf32>
    %226 = arith.addf %221, %225 : vector<10x288xf32>
    %c12_226 = arith.constant 12 : index
    %c0_227 = arith.constant 0 : index
    %c0_228 = arith.constant 0 : index
    %227 = vector.load %arg6[%c12_226, %c0_227, %c0_228] : memref<16x10x20xf32, #tpu.memory_space<vmem>>, vector<1x10x20xf32>
    %228 = vector.shape_cast %227 : vector<1x10x20xf32> to vector<10x20xf32>
    %c0_229 = arith.constant 0 : index
    %c72 = arith.constant 72 : index
    %229 = vector.load %arg10[%c0_229, %c72] : memref<20x368xf32, #tpu.memory_space<vmem>>, vector<20x288xf32>
    %cst_230 = arith.constant dense<0.000000e+00> : vector<10x288xf32>
    %230 = tpu.matmul %228, %229, %cst_230 {dimension_numbers = #tpu.dot_dimension_numbers<[1], [0], [0], [1], [0, 0, 1, 1], [], []>} : vector<10x20xf32>, vector<20x288xf32>, vector<10x288xf32> -> vector<10x288xf32>
    %231 = arith.addf %226, %230 : vector<10x288xf32>
    %c13_231 = arith.constant 13 : index
    %c0_232 = arith.constant 0 : index
    %c0_233 = arith.constant 0 : index
    %232 = vector.load %arg6[%c13_231, %c0_232, %c0_233] : memref<16x10x20xf32, #tpu.memory_space<vmem>>, vector<1x10x20xf32>
    %233 = vector.shape_cast %232 : vector<1x10x20xf32> to vector<10x20xf32>
    %c0_234 = arith.constant 0 : index
    %c74 = arith.constant 74 : index
    %234 = vector.load %arg10[%c0_234, %c74] : memref<20x368xf32, #tpu.memory_space<vmem>>, vector<20x288xf32>
    %cst_235 = arith.constant dense<0.000000e+00> : vector<10x288xf32>
    %235 = tpu.matmul %233, %234, %cst_235 {dimension_numbers = #tpu.dot_dimension_numbers<[1], [0], [0], [1], [0, 0, 1, 1], [], []>} : vector<10x20xf32>, vector<20x288xf32>, vector<10x288xf32> -> vector<10x288xf32>
    %236 = arith.addf %231, %235 : vector<10x288xf32>
    %c14_236 = arith.constant 14 : index
    %c0_237 = arith.constant 0 : index
    %c0_238 = arith.constant 0 : index
    %237 = vector.load %arg6[%c14_236, %c0_237, %c0_238] : memref<16x10x20xf32, #tpu.memory_space<vmem>>, vector<1x10x20xf32>
    %238 = vector.shape_cast %237 : vector<1x10x20xf32> to vector<10x20xf32>
    %c0_239 = arith.constant 0 : index
    %c76 = arith.constant 76 : index
    %239 = vector.load %arg10[%c0_239, %c76] : memref<20x368xf32, #tpu.memory_space<vmem>>, vector<20x288xf32>
    %cst_240 = arith.constant dense<0.000000e+00> : vector<10x288xf32>
    %240 = tpu.matmul %238, %239, %cst_240 {dimension_numbers = #tpu.dot_dimension_numbers<[1], [0], [0], [1], [0, 0, 1, 1], [], []>} : vector<10x20xf32>, vector<20x288xf32>, vector<10x288xf32> -> vector<10x288xf32>
    %241 = arith.addf %236, %240 : vector<10x288xf32>
    %c15_241 = arith.constant 15 : index
    %c0_242 = arith.constant 0 : index
    %c0_243 = arith.constant 0 : index
    %242 = vector.load %arg6[%c15_241, %c0_242, %c0_243] : memref<16x10x20xf32, #tpu.memory_space<vmem>>, vector<1x10x20xf32>
    %243 = vector.shape_cast %242 : vector<1x10x20xf32> to vector<10x20xf32>
    %c0_244 = arith.constant 0 : index
    %c78 = arith.constant 78 : index
    %244 = vector.load %arg10[%c0_244, %c78] : memref<20x368xf32, #tpu.memory_space<vmem>>, vector<20x288xf32>
    %cst_245 = arith.constant dense<0.000000e+00> : vector<10x288xf32>
    %245 = tpu.matmul %243, %244, %cst_245 {dimension_numbers = #tpu.dot_dimension_numbers<[1], [0], [0], [1], [0, 0, 1, 1], [], []>} : vector<10x20xf32>, vector<20x288xf32>, vector<10x288xf32> -> vector<10x288xf32>
    %246 = arith.addf %241, %245 : vector<10x288xf32>
    %247 = tpu.iota {dimensions = array<i32: 1>} : vector<2x288xi32>
    %248 = tpu.iota {dimensions = array<i32: 0>} : vector<2x288xi32>
    %c144_i32 = arith.constant 144 : i32
    %249 = vector.broadcast %c144_i32 : i32 to vector<2x288xi32>
    %250 = arith.muli %248, %249 : vector<2x288xi32>
    %251 = arith.cmpi eq, %247, %250 : vector<2x288xi32>
    %252 = arith.extui %251 : vector<2x288xi1> to vector<2x288xi32>
    %253 = arith.sitofp %252 : vector<2x288xi32> to vector<2x288xf32>
    %cst_246 = arith.constant dense<0.000000e+00> : vector<2x10xf32>
    %254 = tpu.matmul %253, %246, %cst_246 {dimension_numbers = #tpu.dot_dimension_numbers<[1], [1], [0], [0], [0, 0, 1, 0], [], []>} : vector<2x288xf32>, vector<10x288xf32>, vector<2x10xf32> -> vector<2x10xf32>
    %cst_247 = arith.constant dense<0xFF800000> : vector<2xf32>
    %255 = vector.multi_reduction <maximumf>, %254, %cst_247 [1] : vector<2x10xf32> to vector<2xf32>
    %256 = vector.shape_cast %255 : vector<2xf32> to vector<2x1xf32>
    %257 = vector.broadcast %256 : vector<2x1xf32> to vector<2x10xf32>
    %258 = arith.subf %254, %257 : vector<2x10xf32>
    %259 = math.exp %258 : vector<2x10xf32>
    %cst_248 = arith.constant dense<0.000000e+00> : vector<2xf32>
    %260 = vector.multi_reduction <add>, %259, %cst_248 [1] : vector<2x10xf32> to vector<2xf32>
    %261 = vector.shape_cast %260 : vector<2xf32> to vector<2x1xf32>
    %262 = tpu.reciprocal %261 : vector<2x1xf32> -> vector<2x1xf32>
    %263 = vector.broadcast %262 : vector<2x1xf32> to vector<2x10xf32>
    %264 = arith.mulf %259, %263 : vector<2x10xf32>
    %c0_249 = arith.constant 0 : index
    %c0_250 = arith.constant 0 : index
    %265 = vector.load %arg7[%c0_249, %c0_250] : memref<2x10xf32, #tpu.memory_space<vmem>>, vector<2x10xf32>
    tpu.vector_store %arg7[%c0_249, %c0_250], %264 {strides = array<i32>} : memref<2x10xf32, #tpu.memory_space<vmem>>, vector<2x10xf32>,
    return
  }
  func.func @transform_0(%arg0: i32) -> (i32, i32, i32) {
    %c0_i32 = arith.constant 0 : i32
    %c0_i32_0 = arith.constant 0 : i32
    %c0_i32_1 = arith.constant 0 : i32
    return %c0_i32, %c0_i32_0, %arg0 : i32, i32, i32
  }
  func.func @transform_1(%arg0: i32) -> (i32, i32) {
    %c0_i32 = arith.constant 0 : i32
    %c0_i32_0 = arith.constant 0 : i32
    %c0_i32_1 = arith.constant 0 : i32
    return %c0_i32, %c0_i32_0 : i32, i32
  }
  func.func @transform_2(%arg0: i32) -> (i32, i32) {
    %c0_i32 = arith.constant 0 : i32
    %c0_i32_0 = arith.constant 0 : i32
    %c0_i32_1 = arith.constant 0 : i32
    return %c0_i32, %c0_i32_0 : i32, i32
  }
  func.func @transform_3(%arg0: i32) -> (i32, i32, i32) {
    %c0_i32 = arith.constant 0 : i32
    %c0_i32_0 = arith.constant 0 : i32
    %c0_i32_1 = arith.constant 0 : i32
    %c0_i32_2 = arith.constant 0 : i32
    return %c0_i32, %c0_i32_0, %c0_i32_1 : i32, i32, i32
  }
  func.func @transform_4(%arg0: i32) -> (i32, i32) {
    %c0_i32 = arith.constant 0 : i32
    %c0_i32_0 = arith.constant 0 : i32
    %c0_i32_1 = arith.constant 0 : i32
    return %c0_i32, %c0_i32_0 : i32, i32
  }
  func.func @transform_5(%arg0: i32) -> (i32, i32, i32) {
    %c0_i32 = arith.constant 0 : i32
    %c0_i32_0 = arith.constant 0 : i32
    %c0_i32_1 = arith.constant 0 : i32
    %c0_i32_2 = arith.constant 0 : i32
    return %c0_i32, %c0_i32_0, %c0_i32_1 : i32, i32, i32
  }
  func.func @transform_6(%arg0: i32) -> (i32, i32) {
    %c0_i32 = arith.constant 0 : i32
    %c0_i32_0 = arith.constant 0 : i32
    return %arg0, %c0_i32 : i32, i32
  }
}

</mosaic_0001>

<llo_original>
// kernel: tpu_custom_call.1
$region0: #{tpu_custom_call.1}
  #allocation0 [shape = 'u32[]', space=smem, size = 0x4, offset = 0x4, fixed_abs, tag = 'smem constant byte address 0x4 - core index']
  #allocation1 [shape = 'u32[144,128]{1,0:T(1,128)}', space=vmem, size = 0x12000, scoped, tag = 'internal scratch']
  #allocation2 [shape = 'f32[10,352]{1,0:T(8,128)}', space=vmem, size = 0x6000, scoped, tag = 'scratch operand']
  #allocation3 [shape = 'f32[20,384]{1,0:T(8,128)}', space=vmem, size = 0x9000, scoped, tag = 'scratch operand']
  #allocation4 [shape = 'f32[20,368]{1,0:T(8,128)}', space=vmem, size = 0x9000, scoped, tag = 'scratch operand']
  %s0 = inlined_call_operand.vmem [shape: f32[4,25,288], index: 0, kind: input, shape index: {}]
  %s1 = inlined_call_operand.vmem [shape: f32[10,25], index: 1, kind: input, shape index: {}]
  %s2 = inlined_call_operand.vmem [shape: f32[10,1], index: 2, kind: input, shape index: {}]
  %s3 = inlined_call_operand.vmem [shape: f32[25,20,10], index: 3, kind: input, shape index: {}]
  %s4 = inlined_call_operand.vmem [shape: f32[20,1], index: 4, kind: input, shape index: {}]
  %s5 = inlined_call_operand.vmem [shape: f32[16,10,20], index: 5, kind: input, shape index: {}]
  %s6 = inlined_call_operand.hbm [shape: f32[2,10], index: 6, kind: output, shape index: {}]
  %s7 = sld [smem:[#allocation0]]
  $region34: #{tpu_custom_call.1} parent=0
    _
  %s9 = ssub.s32 1, %s7
  %s10 = scalar_select 0, %s9, %s7
  $region1: #{tpu_custom_call.1} parent=0
    #allocation5 [shape = 'u8[1024]{0}', space=vmem, size = 0x400, scoped, tag = 'output window, operand 0, single buffered']
    #allocation6 [shape = 's32[1]{0}', space=sflag, size = 0x4, scoped, tag = 'scoped memory for tpu_custom_call.1']
    %11 = vsyncpa [#allocation6], 0
    // Predicated region
    $region2: #{tpu_custom_call.1} parent=1 // pred_check
      _
    $region3: #{tpu_custom_call.1} parent=1 // pred_check_branch
      %13 = sbr.rel (0) target = $region5
    $region4: #{tpu_custom_call.1} parent=1 // pred_region
      _
    $region5: #{tpu_custom_call.1} parent=1 // pred_fallthru
      _
    // Predicated region
    $region6: #{tpu_custom_call.1} parent=1 // pred_check
      _
    $region7: #{tpu_custom_call.1} parent=1 // pred_check_branch
      %15 = sbr.rel (0) target = $region9
    $region8: #{tpu_custom_call.1} parent=1 // pred_region
      _
    $region9: #{tpu_custom_call.1} parent=1 // pred_fallthru
      _
    // Predicated region
    $region10: #{tpu_custom_call.1} parent=1 // pred_check
      _
    $region11: #{tpu_custom_call.1} parent=1 // pred_check_branch
      %17 = sbr.rel (0) target = $region13
    $region12: #{tpu_custom_call.1} parent=1 // pred_region
      _
    $region13: #{tpu_custom_call.1} parent=1 // pred_fallthru
      _
    // Predicated region
    $region14: #{tpu_custom_call.1} parent=1 // pred_check
      _
    $region15: #{tpu_custom_call.1} parent=1 // pred_check_branch
      %19 = sbr.rel (0) target = $region17
    $region16: #{tpu_custom_call.1} parent=1 // pred_region
      _
    $region17: #{tpu_custom_call.1} parent=1 // pred_fallthru
      _
    // Predicated region
    $region18: #{tpu_custom_call.1} parent=1 // pred_check
      _
    $region19: #{tpu_custom_call.1} parent=1 // pred_check_branch
      %21 = sbr.rel (0) target = $region21
    $region20: #{tpu_custom_call.1} parent=1 // pred_region
      _
    $region21: #{tpu_custom_call.1} parent=1 // pred_fallthru
      _
    // Predicated region
    $region22: #{tpu_custom_call.1} parent=1 // pred_check
      _
    $region23: #{tpu_custom_call.1} parent=1 // pred_check_branch
      %23 = sbr.rel (0) target = $region25
    $region24: #{tpu_custom_call.1} parent=1 // pred_region
      _
    $region25: #{tpu_custom_call.1} parent=1 // pred_fallthru
      _
    %v24 = vld [vmem:[%s1] sm:$0xff]
    %v25 = vld [vmem:[%s1 + $0x8] sm:$0x3]
    %v26 = vld [vmem:[%s0] sm:$0xff]
    %v27 = vld [vmem:[%s0 + $0x8] sm:$0xff]
    %v28 = vld [vmem:[%s0 + $0x10] sm:$0xff]
    %v29 = vld [vmem:[%s0 + $0x18] sm:$0xff]
    %v30 = vld [vmem:[%s0 + $0x20] sm:$0xff]
    %v31 = vld [vmem:[%s0 + $0x28] sm:$0xff]
    %v32 = vld [vmem:[%s0 + $0x30] sm:$0xff]
    %v33 = vld [vmem:[%s0 + $0x38] sm:$0xff]
    %v34 = vld [vmem:[%s0 + $0x40] sm:$0xff]
    %v35 = vld [vmem:[%s0 + $0x48] sm:$0x1]
    %v36 = vld [vmem:[%s0 + $0x50] sm:$0x1]
    %v37 = vld [vmem:[%s0 + $0x58] sm:$0x1]
    %vm38 = vcmask 203776
    %v40 = vsel %vm38, %v24, 0
    %v43 = vsel %vm38, %v25, 0
    %vm45 = vcmask 1040384
    %v47 = vsel %vm45, %v35, 0
    %v50 = vsel %vm45, %v36, 0
    %v53 = vsel %vm45, %v37, 0
    %55 = vmatprep.subr.mxu0 0.0
    %56 = vmatpush1.msra.mxu0 0.0
    %57 = vmatprep.subr.mxu0 0.0
    %58 = vmatpush1.msra.mxu0 0.0
    %59 = vmatprep.subr.mxu0 0.0
    %60 = vmatpush1.msra.mxu0 0.0
    %61 = vmatprep.subr.mxu0 0.0
    %62 = vmatpush1.msra.mxu0 0.0
    %63 = vmatprep.subr.mxu0 0.0
    %64 = vmatpush1.msra.mxu0 0.0
    %65 = vmatprep.subr.mxu0 0.0
    %66 = vmatpush1.msra.mxu0 0.0
    %67 = vmatprep.subr.mxu0 0.0
    %68 = vmatpush1.msra.mxu0 0.0
    %69 = vmatprep.subr.mxu0 0.0
    %70 = vmatpush1.msra.mxu0 0.0
    %71 = vmatprep.subr.mxu0 0.0
    %72 = vmatpush1.msra.mxu0 0.0
    %73 = vmatprep.subr.mxu0 0.0
    %74 = vmatpush1.msra.mxu0 0.0
    %75 = vmatprep.subr.mxu0 0.0
    %76 = vmatpush1.msra.mxu0 0.0
    %77 = vmatprep.subr.mxu0 0.0
    %78 = vmatpush1.msra.mxu0 0.0
    %79 = vmatprep.subr.mxu0 %v50
    %80 = vmatpush1.msra.mxu0 %v47
    %81 = vmatprep.subr.mxu0 %v33
    %82 = vmatpush1.msra.mxu0 %v32
    %83 = vmatprep.subr.mxu0 %v30
    %84 = vmatpush1.msra.mxu0 %v29
    %85 = vmatprep.subr.mxu0 %v27
    %86 = vmatpush1.msra.mxu0 %v26
    %87 = vmatprep.subr.mxu0 0.0
    %88 = vmatpush2.msra.mxu0 0.0
    %89 = vmatprep.subr.mxu0 0.0
    %90 = vmatpush2.msra.mxu0 0.0
    %91 = vmatprep.subr.mxu0 0.0
    %92 = vmatpush2.msra.mxu0 0.0
    %93 = vmatprep.subr.mxu0 0.0
    %94 = vmatpush2.msra.mxu0 0.0
    %95 = vmatprep.subr.mxu0 0.0
    %96 = vmatpush2.msra.mxu0 0.0
    %97 = vmatprep.subr.mxu0 0.0
    %98 = vmatpush2.msra.mxu0 0.0
    %99 = vmatprep.subr.mxu0 0.0
    %100 = vmatpush2.msra.mxu0 0.0
    %101 = vmatprep.subr.mxu0 0.0
    %102 = vmatpush2.msra.mxu0 0.0
    %103 = vmatprep.subr.mxu0 0.0
    %104 = vmatpush2.msra.mxu0 0.0
    %105 = vmatprep.subr.mxu0 0.0
    %106 = vmatpush2.msra.mxu0 0.0
    %107 = vmatprep.subr.mxu0 0.0
    %108 = vmatpush2.msra.mxu0 0.0
    %109 = vmatprep.subr.mxu0 0.0
    %110 = vmatpush2.msra.mxu0 0.0
    %111 = vmatprep.subr.mxu0 0.0
    %112 = vmatpush2.msra.mxu0 0.0
    %113 = vmatprep.subr.mxu0 0.0
    %114 = vmatpush2.msra.mxu0 0.0
    %115 = vmatprep.subr.mxu0 0.0
    %116 = vmatpush2.msra.mxu0 0.0
    %117 = vmatprep.subr.mxu0 0.0
    %118 = vmatpush2.msra.mxu0 0.0
    %119 = vmatprep.mubr.f32.mxu0 0.0
    %120 = vmatmul.mubr.f32.gmra.mxu0 %v40
    %v121 = vpop.f32.mrf.mxu0
    %v122 = vadd.f32 0.0, %v121
    %v123 = vpop.f32.mrf.mxu0
    %v124 = vadd.f32 0.0, %v123
    %125 = vmatprep.mubr.f32.mxu0 0.0
    %126 = vmatmul.mubr.f32.gmra.mxu0 %v43
    %v127 = vpop.f32.mrf.mxu0
    %v128 = vadd.f32 0.0, %v127
    %v129 = vpop.f32.mrf.mxu0
    %v130 = vadd.f32 0.0, %v129
    %131 = vdwg.mxu0
    %132 = vmatprep.subr.mxu0 0.0
    %133 = vmatpush1.msra.mxu0 0.0
    %134 = vmatprep.subr.mxu0 0.0
    %135 = vmatpush1.msra.mxu0 0.0
    %136 = vmatprep.subr.mxu0 0.0
    %137 = vmatpush1.msra.mxu0 0.0
    %138 = vmatprep.subr.mxu0 0.0
    %139 = vmatpush1.msra.mxu0 0.0
    %140 = vmatprep.subr.mxu0 0.0
    %141 = vmatpush1.msra.mxu0 0.0
    %142 = vmatprep.subr.mxu0 0.0
    %143 = vmatpush1.msra.mxu0 0.0
    %144 = vmatprep.subr.mxu0 0.0
    %145 = vmatpush1.msra.mxu0 0.0
    %146 = vmatprep.subr.mxu0 0.0
    %147 = vmatpush1.msra.mxu0 0.0
    %148 = vmatprep.subr.mxu0 0.0
    %149 = vmatpush1.msra.mxu0 0.0
    %150 = vmatprep.subr.mxu0 0.0
    %151 = vmatpush1.msra.mxu0 0.0
    %152 = vmatprep.subr.mxu0 0.0
    %153 = vmatpush1.msra.mxu0 0.0
    %154 = vmatprep.subr.mxu0 0.0
    %155 = vmatpush1.msra.mxu0 0.0
    %156 = vmatprep.subr.mxu0 0.0
    %157 = vmatpush1.msra.mxu0 %v53
    %158 = vmatprep.subr.mxu0 0.0
    %159 = vmatpush1.msra.mxu0 %v34
    %160 = vmatprep.subr.mxu0 0.0
    %161 = vmatpush1.msra.mxu0 %v31
    %162 = vmatprep.subr.mxu0 0.0
    %163 = vmatpush1.msra.mxu0 %v28
    %164 = vmatprep.subr.mxu0 0.0
    %165 = vmatpush2.msra.mxu0 0.0
    %166 = vmatprep.subr.mxu0 0.0
    %167 = vmatpush2.msra.mxu0 0.0
    %168 = vmatprep.subr.mxu0 0.0
    %169 = vmatpush2.msra.mxu0 0.0
    %170 = vmatprep.subr.mxu0 0.0
    %171 = vmatpush2.msra.mxu0 0.0
    %172 = vmatprep.subr.mxu0 0.0
    %173 = vmatpush2.msra.mxu0 0.0
    %174 = vmatprep.subr.mxu0 0.0
    %175 = vmatpush2.msra.mxu0 0.0
    %176 = vmatprep.subr.mxu0 0.0
    %177 = vmatpush2.msra.mxu0 0.0
    %178 = vmatprep.subr.mxu0 0.0
    %179 = vmatpush2.msra.mxu0 0.0
    %180 = vmatprep.subr.mxu0 0.0
    %181 = vmatpush2.msra.mxu0 0.0
    %182 = vmatprep.subr.mxu0 0.0
    %183 = vmatpush2.msra.mxu0 0.0
    %184 = vmatprep.subr.mxu0 0.0
    %185 = vmatpush2.msra.mxu0 0.0
    %186 = vmatprep.subr.mxu0 0.0
    %187 = vmatpush2.msra.mxu0 0.0
    %188 = vmatprep.subr.mxu0 0.0
    %189 = vmatpush2.msra.mxu0 0.0
    %190 = vmatprep.subr.mxu0 0.0
    %191 = vmatpush2.msra.mxu0 0.0
    %192 = vmatprep.subr.mxu0 0.0
    %193 = vmatpush2.msra.mxu0 0.0
    %194 = vmatprep.subr.mxu0 0.0
    %195 = vmatpush2.msra.mxu0 0.0
    %196 = vmatprep.mubr.f32.mxu0 0.0
    %197 = vmatmul.mubr.f32.gmra.mxu0 %v40
    %v198 = vpop.f32.mrf.mxu0
    %v199 = vadd.f32 0.0, %v198
    %v200 = vpop.f32.mrf.mxu0
    %201 = vmatprep.mubr.f32.mxu0 0.0
    %202 = vmatmul.mubr.f32.gmra.mxu0 %v43
    %v203 = vpop.f32.mrf.mxu0
    %v204 = vadd.f32 0.0, %v203
    %v205 = vpop.f32.mrf.mxu0
    %206 = vdwg.mxu0
    %s207 = scalar_lea.vmem %s0, 96
    %v208 = vld [vmem:[%s207] sm:$0xff]
    %v209 = vld [vmem:[%s207 + $0x8] sm:$0xff]
    %v210 = vld [vmem:[%s207 + $0x10] sm:$0xff]
    %v211 = vld [vmem:[%s207 + $0x18] sm:$0xff]
    %v212 = vld [vmem:[%s207 + $0x20] sm:$0xff]
    %v213 = vld [vmem:[%s207 + $0x28] sm:$0xff]
    %v214 = vld [vmem:[%s207 + $0x30] sm:$0xff]
    %v215 = vld [vmem:[%s207 + $0x38] sm:$0xff]
    %v216 = vld [vmem:[%s207 + $0x40] sm:$0xff]
    %v217 = vld [vmem:[%s207 + $0x48] sm:$0x1]
    %v218 = vld [vmem:[%s207 + $0x50] sm:$0x1]
    %v219 = vld [vmem:[%s207 + $0x58] sm:$0x1]
    %v221 = vsel %vm45, %v217, 0
    %v224 = vsel %vm45, %v218, 0
    %v227 = vsel %vm45, %v219, 0
    %229 = vmatprep.subr.mxu0 0.0
    %230 = vmatpush1.msra.mxu0 0.0
    %231 = vmatprep.subr.mxu0 0.0
    %232 = vmatpush1.msra.mxu0 0.0
    %233 = vmatprep.subr.mxu0 0.0
    %234 = vmatpush1.msra.mxu0 0.0
    %235 = vmatprep.subr.mxu0 0.0
    %236 = vmatpush1.msra.mxu0 0.0
    %237 = vmatprep.subr.mxu0 0.0
    %238 = vmatpush1.msra.mxu0 0.0
    %239 = vmatprep.subr.mxu0 0.0
    %240 = vmatpush1.msra.mxu0 0.0
    %241 = vmatprep.subr.mxu0 0.0
    %242 = vmatpush1.msra.mxu0 0.0
    %243 = vmatprep.subr.mxu0 0.0
    %244 = vmatpush1.msra.mxu0 0.0
    %245 = vmatprep.subr.mxu0 0.0
    %246 = vmatpush1.msra.mxu0 0.0
    %247 = vmatprep.subr.mxu0 0.0
    %248 = vmatpush1.msra.mxu0 0.0
    %249 = vmatprep.subr.mxu0 0.0
    %250 = vmatpush1.msra.mxu0 0.0
    %251 = vmatprep.subr.mxu0 0.0
    %252 = vmatpush1.msra.mxu0 0.0
    %253 = vmatprep.subr.mxu0 %v224
    %254 = vmatpush1.msra.mxu0 %v221
    %255 = vmatprep.subr.mxu0 %v215
    %256 = vmatpush1.msra.mxu0 %v214
    %257 = vmatprep.subr.mxu0 %v212
    %258 = vmatpush1.msra.mxu0 %v211
    %259 = vmatprep.subr.mxu0 %v209
    %260 = vmatpush1.msra.mxu0 %v208
    %261 = vmatprep.subr.mxu0 0.0
    %262 = vmatpush2.msra.mxu0 0.0
    %263 = vmatprep.subr.mxu0 0.0
    %264 = vmatpush2.msra.mxu0 0.0
    %265 = vmatprep.subr.mxu0 0.0
    %266 = vmatpush2.msra.mxu0 0.0
    %267 = vmatprep.subr.mxu0 0.0
    %268 = vmatpush2.msra.mxu0 0.0
    %269 = vmatprep.subr.mxu0 0.0
    %270 = vmatpush2.msra.mxu0 0.0
    %271 = vmatprep.subr.mxu0 0.0
    %272 = vmatpush2.msra.mxu0 0.0
    %273 = vmatprep.subr.mxu0 0.0
    %274 = vmatpush2.msra.mxu0 0.0
    %275 = vmatprep.subr.mxu0 0.0
    %276 = vmatpush2.msra.mxu0 0.0
    %277 = vmatprep.subr.mxu0 0.0
    %278 = vmatpush2.msra.mxu0 0.0
    %279 = vmatprep.subr.mxu0 0.0
    %280 = vmatpush2.msra.mxu0 0.0
    %281 = vmatprep.subr.mxu0 0.0
    %282 = vmatpush2.msra.mxu0 0.0
    %283 = vmatprep.subr.mxu0 0.0
    %284 = vmatpush2.msra.mxu0 0.0
    %285 = vmatprep.subr.mxu0 0.0
    %286 = vmatpush2.msra.mxu0 0.0
    %287 = vmatprep.subr.mxu0 0.0
    %288 = vmatpush2.msra.mxu0 0.0
    %289 = vmatprep.subr.mxu0 0.0
    %290 = vmatpush2.msra.mxu0 0.0
    %291 = vmatprep.subr.mxu0 0.0
    %292 = vmatpush2.msra.mxu0 0.0
    %293 = vmatprep.mubr.f32.mxu0 0.0
    %294 = vmatmul.mubr.f32.gmra.mxu0 %v40
    %v295 = vpop.f32.mrf.mxu0
    %v296 = vadd.f32 0.0, %v295
    %v297 = vpop.f32.mrf.mxu0
    %v298 = vadd.f32 0.0, %v297
    %299 = vmatprep.mubr.f32.mxu0 0.0
    %300 = vmatmul.mubr.f32.gmra.mxu0 %v43
    %v301 = vpop.f32.mrf.mxu0
    %v302 = vadd.f32 0.0, %v301
    %v303 = vpop.f32.mrf.mxu0
    %v304 = vadd.f32 0.0, %v303
    %305 = vdwg.mxu0
    %306 = vmatprep.subr.mxu0 0.0
    %307 = vmatpush1.msra.mxu0 0.0
    %308 = vmatprep.subr.mxu0 0.0
    %309 = vmatpush1.msra.mxu0 0.0
    %310 = vmatprep.subr.mxu0 0.0
    %311 = vmatpush1.msra.mxu0 0.0
    %312 = vmatprep.subr.mxu0 0.0
    %313 = vmatpush1.msra.mxu0 0.0
    %314 = vmatprep.subr.mxu0 0.0
    %315 = vmatpush1.msra.mxu0 0.0
    %316 = vmatprep.subr.mxu0 0.0
    %317 = vmatpush1.msra.mxu0 0.0
    %318 = vmatprep.subr.mxu0 0.0
    %319 = vmatpush1.msra.mxu0 0.0
    %320 = vmatprep.subr.mxu0 0.0
    %321 = vmatpush1.msra.mxu0 0.0
    %322 = vmatprep.subr.mxu0 0.0
    %323 = vmatpush1.msra.mxu0 0.0
    %324 = vmatprep.subr.mxu0 0.0
    %325 = vmatpush1.msra.mxu0 0.0
    %326 = vmatprep.subr.mxu0 0.0
    %327 = vmatpush1.msra.mxu0 0.0
    %328 = vmatprep.subr.mxu0 0.0
    %329 = vmatpush1.msra.mxu0 0.0
    %330 = vmatprep.subr.mxu0 0.0
    %331 = vmatpush1.msra.mxu0 %v227
    %332 = vmatprep.subr.mxu0 0.0
    %333 = vmatpush1.msra.mxu0 %v216
    %334 = vmatprep.subr.mxu0 0.0
    %335 = vmatpush1.msra.mxu0 %v213
    %336 = vmatprep.subr.mxu0 0.0
    %337 = vmatpush1.msra.mxu0 %v210
    %338 = vmatprep.subr.mxu0 0.0
    %339 = vmatpush2.msra.mxu0 0.0
    %340 = vmatprep.subr.mxu0 0.0
    %341 = vmatpush2.msra.mxu0 0.0
    %342 = vmatprep.subr.mxu0 0.0
    %343 = vmatpush2.msra.mxu0 0.0
    %344 = vmatprep.subr.mxu0 0.0
    %345 = vmatpush2.msra.mxu0 0.0
    %346 = vmatprep.subr.mxu0 0.0
    %347 = vmatpush2.msra.mxu0 0.0
    %348 = vmatprep.subr.mxu0 0.0
    %349 = vmatpush2.msra.mxu0 0.0
    %350 = vmatprep.subr.mxu0 0.0
    %351 = vmatpush2.msra.mxu0 0.0
    %352 = vmatprep.subr.mxu0 0.0
    %353 = vmatpush2.msra.mxu0 0.0
    %354 = vmatprep.subr.mxu0 0.0
    %355 = vmatpush2.msra.mxu0 0.0
    %356 = vmatprep.subr.mxu0 0.0
    %357 = vmatpush2.msra.mxu0 0.0
    %358 = vmatprep.subr.mxu0 0.0
    %359 = vmatpush2.msra.mxu0 0.0
    %360 = vmatprep.subr.mxu0 0.0
    %361 = vmatpush2.msra.mxu0 0.0
    %362 = vmatprep.subr.mxu0 0.0
    %363 = vmatpush2.msra.mxu0 0.0
    %364 = vmatprep.subr.mxu0 0.0
    %365 = vmatpush2.msra.mxu0 0.0
    %366 = vmatprep.subr.mxu0 0.0
    %367 = vmatpush2.msra.mxu0 0.0
    %368 = vmatprep.subr.mxu0 0.0
    %369 = vmatpush2.msra.mxu0 0.0
    %370 = vmatprep.mubr.f32.mxu0 0.0
    %371 = vmatmul.mubr.f32.gmra.mxu0 %v40
    %v372 = vpop.f32.mrf.mxu0
    %v373 = vadd.f32 0.0, %v372
    %v374 = vpop.f32.mrf.mxu0
    %375 = vmatprep.mubr.f32.mxu0 0.0
    %376 = vmatmul.mubr.f32.gmra.mxu0 %v43
    %v377 = vpop.f32.mrf.mxu0
    %v378 = vadd.f32 0.0, %v377
    %v379 = vpop.f32.mrf.mxu0
    %380 = vdwg.mxu0
    %v381 = vmax.f32 %v122, %v296
    %v382 = vmax.f32 %v124, %v298
    %v383 = vmax.f32 %v199, %v373
    %v384 = vmax.f32 %v128, %v302
    %v385 = vmax.f32 %v130, %v304
    %v386 = vmax.f32 %v204, %v378
    %s387 = scalar_lea.vmem %s0, 192
    %v388 = vld [vmem:[%s387] sm:$0xff]
    %v389 = vld [vmem:[%s387 + $0x8] sm:$0xff]
    %v390 = vld [vmem:[%s387 + $0x10] sm:$0xff]
    %v391 = vld [vmem:[%s387 + $0x18] sm:$0xff]
    %v392 = vld [vmem:[%s387 + $0x20] sm:$0xff]
    %v393 = vld [vmem:[%s387 + $0x28] sm:$0xff]
    %v394 = vld [vmem:[%s387 + $0x30] sm:$0xff]
    %v395 = vld [vmem:[%s387 + $0x38] sm:$0xff]
    %v396 = vld [vmem:[%s387 + $0x40] sm:$0xff]
    %v397 = vld [vmem:[%s387 + $0x48] sm:$0x1]
    %v398 = vld [vmem:[%s387 + $0x50] sm:$0x1]
    %v399 = vld [vmem:[%s387 + $0x58] sm:$0x1]
    %v401 = vsel %vm45, %v397, 0
    %v404 = vsel %vm45, %v398, 0
    %v407 = vsel %vm45, %v399, 0
    %409 = vmatprep.subr.mxu0 0.0
    %410 = vmatpush1.msra.mxu0 0.0
    %411 = vmatprep.subr.mxu0 0.0
    %412 = vmatpush1.msra.mxu0 0.0
    %413 = vmatprep.subr.mxu0 0.0
    %414 = vmatpush1.msra.mxu0 0.0
    %415 = vmatprep.subr.mxu0 0.0
    %416 = vmatpush1.msra.mxu0 0.0
    %417 = vmatprep.subr.mxu0 0.0
    %418 = vmatpush1.msra.mxu0 0.0
    %419 = vmatprep.subr.mxu0 0.0
    %420 = vmatpush1.msra.mxu0 0.0
    %421 = vmatprep.subr.mxu0 0.0
    %422 = vmatpush1.msra.mxu0 0.0
    %423 = vmatprep.subr.mxu0 0.0
    %424 = vmatpush1.msra.mxu0 0.0
    %425 = vmatprep.subr.mxu0 0.0
    %426 = vmatpush1.msra.mxu0 0.0
    %427 = vmatprep.subr.mxu0 0.0
    %428 = vmatpush1.msra.mxu0 0.0
    %429 = vmatprep.subr.mxu0 0.0
    %430 = vmatpush1.msra.mxu0 0.0
    %431 = vmatprep.subr.mxu0 0.0
    %432 = vmatpush1.msra.mxu0 0.0
    %433 = vmatprep.subr.mxu0 %v404
    %434 = vmatpush1.msra.mxu0 %v401
    %435 = vmatprep.subr.mxu0 %v395
    %436 = vmatpush1.msra.mxu0 %v394
    %437 = vmatprep.subr.mxu0 %v392
    %438 = vmatpush1.msra.mxu0 %v391
    %439 = vmatprep.subr.mxu0 %v389
    %440 = vmatpush1.msra.mxu0 %v388
    %441 = vmatprep.subr.mxu0 0.0
    %442 = vmatpush2.msra.mxu0 0.0
    %443 = vmatprep.subr.mxu0 0.0
    %444 = vmatpush2.msra.mxu0 0.0
    %445 = vmatprep.subr.mxu0 0.0
    %446 = vmatpush2.msra.mxu0 0.0
    %447 = vmatprep.subr.mxu0 0.0
    %448 = vmatpush2.msra.mxu0 0.0
    %449 = vmatprep.subr.mxu0 0.0
    %450 = vmatpush2.msra.mxu0 0.0
    %451 = vmatprep.subr.mxu0 0.0
    %452 = vmatpush2.msra.mxu0 0.0
    %453 = vmatprep.subr.mxu0 0.0
    %454 = vmatpush2.msra.mxu0 0.0
    %455 = vmatprep.subr.mxu0 0.0
    %456 = vmatpush2.msra.mxu0 0.0
    %457 = vmatprep.subr.mxu0 0.0
    %458 = vmatpush2.msra.mxu0 0.0
    %459 = vmatprep.subr.mxu0 0.0
    %460 = vmatpush2.msra.mxu0 0.0
    %461 = vmatprep.subr.mxu0 0.0
    %462 = vmatpush2.msra.mxu0 0.0
    %463 = vmatprep.subr.mxu0 0.0
    %464 = vmatpush2.msra.mxu0 0.0
    %465 = vmatprep.subr.mxu0 0.0
    %466 = vmatpush2.msra.mxu0 0.0
    %467 = vmatprep.subr.mxu0 0.0
    %468 = vmatpush2.msra.mxu0 0.0
    %469 = vmatprep.subr.mxu0 0.0
    %470 = vmatpush2.msra.mxu0 0.0
    %471 = vmatprep.subr.mxu0 0.0
    %472 = vmatpush2.msra.mxu0 0.0
    %473 = vmatprep.mubr.f32.mxu0 0.0
    %474 = vmatmul.mubr.f32.gmra.mxu0 %v40
    %v475 = vpop.f32.mrf.mxu0
    %v476 = vadd.f32 0.0, %v475
    %v477 = vpop.f32.mrf.mxu0
    %v478 = vadd.f32 0.0, %v477
    %479 = vmatprep.mubr.f32.mxu0 0.0
    %480 = vmatmul.mubr.f32.gmra.mxu0 %v43
    %v481 = vpop.f32.mrf.mxu0
    %v482 = vadd.f32 0.0, %v481
    %v483 = vpop.f32.mrf.mxu0
    %v484 = vadd.f32 0.0, %v483
    %485 = vdwg.mxu0
    %486 = vmatprep.subr.mxu0 0.0
    %487 = vmatpush1.msra.mxu0 0.0
    %488 = vmatprep.subr.mxu0 0.0
    %489 = vmatpush1.msra.mxu0 0.0
    %490 = vmatprep.subr.mxu0 0.0
    %491 = vmatpush1.msra.mxu0 0.0
    %492 = vmatprep.subr.mxu0 0.0
    %493 = vmatpush1.msra.mxu0 0.0
    %494 = vmatprep.subr.mxu0 0.0
    %495 = vmatpush1.msra.mxu0 0.0
    %496 = vmatprep.subr.mxu0 0.0
    %497 = vmatpush1.msra.mxu0 0.0
    %498 = vmatprep.subr.mxu0 0.0
    %499 = vmatpush1.msra.mxu0 0.0
    %500 = vmatprep.subr.mxu0 0.0
    %501 = vmatpush1.msra.mxu0 0.0
    %502 = vmatprep.subr.mxu0 0.0
    %503 = vmatpush1.msra.mxu0 0.0
    %504 = vmatprep.subr.mxu0 0.0
    %505 = vmatpush1.msra.mxu0 0.0
    %506 = vmatprep.subr.mxu0 0.0
    %507 = vmatpush1.msra.mxu0 0.0
    %508 = vmatprep.subr.mxu0 0.0
    %509 = vmatpush1.msra.mxu0 0.0
    %510 = vmatprep.subr.mxu0 0.0
    %511 = vmatpush1.msra.mxu0 %v407
    %512 = vmatprep.subr.mxu0 0.0
    %513 = vmatpush1.msra.mxu0 %v396
    %514 = vmatprep.subr.mxu0 0.0
    %515 = vmatpush1.msra.mxu0 %v393
    %516 = vmatprep.subr.mxu0 0.0
    %517 = vmatpush1.msra.mxu0 %v390
    %518 = vmatprep.subr.mxu0 0.0
    %519 = vmatpush2.msra.mxu0 0.0
    %520 = vmatprep.subr.mxu0 0.0
    %521 = vmatpush2.msra.mxu0 0.0
    %522 = vmatprep.subr.mxu0 0.0
    %523 = vmatpush2.msra.mxu0 0.0
    %524 = vmatprep.subr.mxu0 0.0
    %525 = vmatpush2.msra.mxu0 0.0
    %526 = vmatprep.subr.mxu0 0.0
    %527 = vmatpush2.msra.mxu0 0.0
    %528 = vmatprep.subr.mxu0 0.0
    %529 = vmatpush2.msra.mxu0 0.0
    %530 = vmatprep.subr.mxu0 0.0
    %531 = vmatpush2.msra.mxu0 0.0
    %532 = vmatprep.subr.mxu0 0.0
    %533 = vmatpush2.msra.mxu0 0.0
    %534 = vmatprep.subr.mxu0 0.0
    %535 = vmatpush2.msra.mxu0 0.0
    %536 = vmatprep.subr.mxu0 0.0
    %537 = vmatpush2.msra.mxu0 0.0
    %538 = vmatprep.subr.mxu0 0.0
    %539 = vmatpush2.msra.mxu0 0.0
    %540 = vmatprep.subr.mxu0 0.0
    %541 = vmatpush2.msra.mxu0 0.0
    %542 = vmatprep.subr.mxu0 0.0
    %543 = vmatpush2.msra.mxu0 0.0
    %544 = vmatprep.subr.mxu0 0.0
    %545 = vmatpush2.msra.mxu0 0.0
    %546 = vmatprep.subr.mxu0 0.0
    %547 = vmatpush2.msra.mxu0 0.0
    %548 = vmatprep.subr.mxu0 0.0
    %549 = vmatpush2.msra.mxu0 0.0
    %550 = vmatprep.mubr.f32.mxu0 0.0
    %551 = vmatmul.mubr.f32.gmra.mxu0 %v40
    %v552 = vpop.f32.mrf.mxu0
    %v553 = vadd.f32 0.0, %v552
    %v554 = vpop.f32.mrf.mxu0
    %555 = vmatprep.mubr.f32.mxu0 0.0
    %556 = vmatmul.mubr.f32.gmra.mxu0 %v43
    %v557 = vpop.f32.mrf.mxu0
    %v558 = vadd.f32 0.0, %v557
    %v559 = vpop.f32.mrf.mxu0
    %560 = vdwg.mxu0
    %v561 = vmax.f32 %v381, %v476
    %v562 = vmax.f32 %v382, %v478
    %v563 = vmax.f32 %v383, %v553
    %v564 = vmax.f32 %v384, %v482
    %v565 = vmax.f32 %v385, %v484
    %v566 = vmax.f32 %v386, %v558
    %s567 = scalar_lea.vmem %s0, 288
    %v568 = vld [vmem:[%s567] sm:$0xff]
    %v569 = vld [vmem:[%s567 + $0x8] sm:$0xff]
    %v570 = vld [vmem:[%s567 + $0x10] sm:$0xff]
    %v571 = vld [vmem:[%s567 + $0x18] sm:$0xff]
    %v572 = vld [vmem:[%s567 + $0x20] sm:$0xff]
    %v573 = vld [vmem:[%s567 + $0x28] sm:$0xff]
    %v574 = vld [vmem:[%s567 + $0x30] sm:$0xff]
    %v575 = vld [vmem:[%s567 + $0x38] sm:$0xff]
    %v576 = vld [vmem:[%s567 + $0x40] sm:$0xff]
    %v577 = vld [vmem:[%s567 + $0x48] sm:$0x1]
    %v578 = vld [vmem:[%s567 + $0x50] sm:$0x1]
    %v579 = vld [vmem:[%s567 + $0x58] sm:$0x1]
    %v581 = vsel %vm45, %v577, 0
    %v584 = vsel %vm45, %v578, 0
    %v587 = vsel %vm45, %v579, 0
    %589 = vmatprep.subr.mxu0 0.0
    %590 = vmatpush1.msra.mxu0 0.0
    %591 = vmatprep.subr.mxu0 0.0
    %592 = vmatpush1.msra.mxu0 0.0
    %593 = vmatprep.subr.mxu0 0.0
    %594 = vmatpush1.msra.mxu0 0.0
    %595 = vmatprep.subr.mxu0 0.0
    %596 = vmatpush1.msra.mxu0 0.0
    %597 = vmatprep.subr.mxu0 0.0
    %598 = vmatpush1.msra.mxu0 0.0
    %599 = vmatprep.subr.mxu0 0.0
    %600 = vmatpush1.msra.mxu0 0.0
    %601 = vmatprep.subr.mxu0 0.0
    %602 = vmatpush1.msra.mxu0 0.0
    %603 = vmatprep.subr.mxu0 0.0
    %604 = vmatpush1.msra.mxu0 0.0
    %605 = vmatprep.subr.mxu0 0.0
    %606 = vmatpush1.msra.mxu0 0.0
    %607 = vmatprep.subr.mxu0 0.0
    %608 = vmatpush1.msra.mxu0 0.0
    %609 = vmatprep.subr.mxu0 0.0
    %610 = vmatpush1.msra.mxu0 0.0
    %611 = vmatprep.subr.mxu0 0.0
    %612 = vmatpush1.msra.mxu0 0.0
    %613 = vmatprep.subr.mxu0 %v584
    %614 = vmatpush1.msra.mxu0 %v581
    %615 = vmatprep.subr.mxu0 %v575
    %616 = vmatpush1.msra.mxu0 %v574
    %617 = vmatprep.subr.mxu0 %v572
    %618 = vmatpush1.msra.mxu0 %v571
    %619 = vmatprep.subr.mxu0 %v569
    %620 = vmatpush1.msra.mxu0 %v568
    %621 = vmatprep.subr.mxu0 0.0
    %622 = vmatpush2.msra.mxu0 0.0
    %623 = vmatprep.subr.mxu0 0.0
    %624 = vmatpush2.msra.mxu0 0.0
    %625 = vmatprep.subr.mxu0 0.0
    %626 = vmatpush2.msra.mxu0 0.0
    %627 = vmatprep.subr.mxu0 0.0
    %628 = vmatpush2.msra.mxu0 0.0
    %629 = vmatprep.subr.mxu0 0.0
    %630 = vmatpush2.msra.mxu0 0.0
    %631 = vmatprep.subr.mxu0 0.0
    %632 = vmatpush2.msra.mxu0 0.0
    %633 = vmatprep.subr.mxu0 0.0
    %634 = vmatpush2.msra.mxu0 0.0
    %635 = vmatprep.subr.mxu0 0.0
    %636 = vmatpush2.msra.mxu0 0.0
    %637 = vmatprep.subr.mxu0 0.0
    %638 = vmatpush2.msra.mxu0 0.0
    %639 = vmatprep.subr.mxu0 0.0
    %640 = vmatpush2.msra.mxu0 0.0
    %641 = vmatprep.subr.mxu0 0.0
    %642 = vmatpush2.msra.mxu0 0.0
    %643 = vmatprep.subr.mxu0 0.0
    %644 = vmatpush2.msra.mxu0 0.0
    %645 = vmatprep.subr.mxu0 0.0
    %646 = vmatpush2.msra.mxu0 0.0
    %647 = vmatprep.subr.mxu0 0.0
    %648 = vmatpush2.msra.mxu0 0.0
    %649 = vmatprep.subr.mxu0 0.0
    %650 = vmatpush2.msra.mxu0 0.0
    %651 = vmatprep.subr.mxu0 0.0
    %652 = vmatpush2.msra.mxu0 0.0
    %653 = vmatprep.mubr.f32.mxu0 0.0
    %654 = vmatmul.mubr.f32.gmra.mxu0 %v40
    %v655 = vpop.f32.mrf.mxu0
    %v656 = vadd.f32 0.0, %v655
    %v657 = vpop.f32.mrf.mxu0
    %v658 = vadd.f32 0.0, %v657
    %659 = vmatprep.mubr.f32.mxu0 0.0
    %660 = vmatmul.mubr.f32.gmra.mxu0 %v43
    %v661 = vpop.f32.mrf.mxu0
    %v662 = vadd.f32 0.0, %v661
    %v663 = vpop.f32.mrf.mxu0
    %v664 = vadd.f32 0.0, %v663
    %665 = vdwg.mxu0
    %666 = vmatprep.subr.mxu0 0.0
    %667 = vmatpush1.msra.mxu0 0.0
    %668 = vmatprep.subr.mxu0 0.0
    %669 = vmatpush1.msra.mxu0 0.0
    %670 = vmatprep.subr.mxu0 0.0
    %671 = vmatpush1.msra.mxu0 0.0
    %672 = vmatprep.subr.mxu0 0.0
    %673 = vmatpush1.msra.mxu0 0.0
    %674 = vmatprep.subr.mxu0 0.0
    %675 = vmatpush1.msra.mxu0 0.0
    %676 = vmatprep.subr.mxu0 0.0
    %677 = vmatpush1.msra.mxu0 0.0
    %678 = vmatprep.subr.mxu0 0.0
    %679 = vmatpush1.msra.mxu0 0.0
    %680 = vmatprep.subr.mxu0 0.0
    %681 = vmatpush1.msra.mxu0 0.0
    %682 = vmatprep.subr.mxu0 0.0
    %683 = vmatpush1.msra.mxu0 0.0
    %684 = vmatprep.subr.mxu0 0.0
    %685 = vmatpush1.msra.mxu0 0.0
    %686 = vmatprep.subr.mxu0 0.0
    %687 = vmatpush1.msra.mxu0 0.0
    %688 = vmatprep.subr.mxu0 0.0
    %689 = vmatpush1.msra.mxu0 0.0
    %690 = vmatprep.subr.mxu0 0.0
    %691 = vmatpush1.msra.mxu0 %v587
    %692 = vmatprep.subr.mxu0 0.0
    %693 = vmatpush1.msra.mxu0 %v576
    %694 = vmatprep.subr.mxu0 0.0
    %695 = vmatpush1.msra.mxu0 %v573
    %696 = vmatprep.subr.mxu0 0.0
    %697 = vmatpush1.msra.mxu0 %v570
    %698 = vmatprep.subr.mxu0 0.0
    %699 = vmatpush2.msra.mxu0 0.0
    %700 = vmatprep.subr.mxu0 0.0
    %701 = vmatpush2.msra.mxu0 0.0
    %702 = vmatprep.subr.mxu0 0.0
    %703 = vmatpush2.msra.mxu0 0.0
    %704 = vmatprep.subr.mxu0 0.0
    %705 = vmatpush2.msra.mxu0 0.0
    %706 = vmatprep.subr.mxu0 0.0
    %707 = vmatpush2.msra.mxu0 0.0
    %708 = vmatprep.subr.mxu0 0.0
    %709 = vmatpush2.msra.mxu0 0.0
    %710 = vmatprep.subr.mxu0 0.0
    %711 = vmatpush2.msra.mxu0 0.0
    %712 = vmatprep.subr.mxu0 0.0
    %713 = vmatpush2.msra.mxu0 0.0
    %714 = vmatprep.subr.mxu0 0.0
    %715 = vmatpush2.msra.mxu0 0.0
    %716 = vmatprep.subr.mxu0 0.0
    %717 = vmatpush2.msra.mxu0 0.0
    %718 = vmatprep.subr.mxu0 0.0
    %719 = vmatpush2.msra.mxu0 0.0
    %720 = vmatprep.subr.mxu0 0.0
    %721 = vmatpush2.msra.mxu0 0.0
    %722 = vmatprep.subr.mxu0 0.0
    %723 = vmatpush2.msra.mxu0 0.0
    %724 = vmatprep.subr.mxu0 0.0
    %725 = vmatpush2.msra.mxu0 0.0
    %726 = vmatprep.subr.mxu0 0.0
    %727 = vmatpush2.msra.mxu0 0.0
    %728 = vmatprep.subr.mxu0 0.0
    %729 = vmatpush2.msra.mxu0 0.0
    %730 = vmatprep.mubr.f32.mxu0 0.0
    %731 = vmatmul.mubr.f32.gmra.mxu0 %v40
    %v732 = vpop.f32.mrf.mxu0
    %v733 = vadd.f32 0.0, %v732
    %v734 = vpop.f32.mrf.mxu0
    %735 = vmatprep.mubr.f32.mxu0 0.0
    %736 = vmatmul.mubr.f32.gmra.mxu0 %v43
    %v737 = vpop.f32.mrf.mxu0
    %v738 = vadd.f32 0.0, %v737
    %v739 = vpop.f32.mrf.mxu0
    %740 = vdwg.mxu0
    %v741 = vmax.f32 %v561, %v656
    %v742 = vmax.f32 %v562, %v658
    %v743 = vmax.f32 %v563, %v733
    %v744 = vmax.f32 %v564, %v662
    %v745 = vmax.f32 %v565, %v664
    %v746 = vmax.f32 %v566, %v738
    %v747 = vld [vmem:[%s2] sm:$0xff]
    %v748 = vld [vmem:[%s2 + $0x8] sm:$0x3]
    %750 = vset.pattern.permute.xlu0 0
    %751 = vperm.xlu0 %750, %v747
    %v752 = vpop.permute.xlu0 %751
    %755 = vset.pattern.permute.xlu0 0
    %756 = vperm.xlu0 %755, %v748
    %v757 = vpop.permute.xlu0 %756
    %v759 = vadd.f32 %v741, %v752
    %v760 = vadd.f32 %v742, %v752
    %v761 = vadd.f32 %v743, %v752
    %v762 = vadd.f32 %v744, %v757
    %v763 = vadd.f32 %v745, %v757
    %v764 = vadd.f32 %v746, %v757
    %v765 = vmax.f32 %v759, 0.0
    %v766 = vmax.f32 %v760, 0.0
    %v767 = vmax.f32 %v761, 0.0
    %v768 = vmax.f32 %v762, 0.0
    %v769 = vmax.f32 %v763, 0.0
    %v770 = vmax.f32 %v764, 0.0
    %771 = vst [vmem:[#allocation2] sm:$0xff] 0.0
    %772 = vst [vmem:[#allocation2 + $0x8] sm:$0xff] 0.0
    %vm773 = vcmask 785408
    %774 = vst.msk [vmem:[#allocation2 + $0x10] sm:$0xff] %vm773, 0.0
    %775 = vst [vmem:[#allocation2 + $0x18] sm:$0x3] 0.0
    %776 = vst [vmem:[#allocation2 + $0x20] sm:$0x3] 0.0
    %vm777 = vcmask 779264
    %778 = vst.msk [vmem:[#allocation2 + $0x28] sm:$0x3] %vm777, 0.0
    %779 = vst [vmem:[#allocation2] sm:$0xff] %v765
    %780 = vst [vmem:[#allocation2 + $0x8] sm:$0xff] %v766
    %vm781 = vcmask 261120
    %782 = vst.msk [vmem:[#allocation2 + $0x10] sm:$0xff] %vm781, %v767
    %783 = vst [vmem:[#allocation2 + $0x18] sm:$0x3] %v768
    %784 = vst [vmem:[#allocation2 + $0x20] sm:$0x3] %v769
    %vm785 = vcmask 254976
    %786 = vst.msk [vmem:[#allocation2 + $0x28] sm:$0x3] %vm785, %v770
    %v787 = vld [vmem:[#allocation2] sm:$0xff]
    %v788 = vld [vmem:[#allocation2 + $0x8] sm:$0xff]
    %v789 = vld [vmem:[#allocation2 + $0x10] sm:$0xff]
    %v790 = vld [vmem:[#allocation2 + $0x18] sm:$0x3]
    %v791 = vld [vmem:[#allocation2 + $0x20] sm:$0x3]
    %v792 = vld [vmem:[#allocation2 + $0x28] sm:$0x3]
    %v793 = vld [vmem:[%s3] sm:$0xff]
    %v794 = vld [vmem:[%s3 + $0x8] sm:$0xff]
    %v795 = vld [vmem:[%s3 + $0x10] sm:$0xf]
    %s796 = scalar_lea.vmem %s3, 24
    %v797 = vld [vmem:[%s796] sm:$0xff]
    %v798 = vld [vmem:[%s796 + $0x8] sm:$0xff]
    %v799 = vld [vmem:[%s796 + $0x10] sm:$0xf]
    %806 = vrot.lane.b32.xlu0 %v787, 127
    %v807 = vpop.permute.xlu0 %806
    %808 = vrot.lane.b32.xlu0 %v788, 127
    %v809 = vpop.permute.xlu0 %808
    %810 = vrot.lane.b32.xlu0 %v789, 127
    %v811 = vpop.permute.xlu0 %810
    %812 = vrot.lane.b32.xlu0 %v790, 127
    %v813 = vpop.permute.xlu0 %812
    %814 = vrot.lane.b32.xlu0 %v791, 127
    %v815 = vpop.permute.xlu0 %814
    %816 = vrot.lane.b32.xlu0 %v792, 127
    %v817 = vpop.permute.xlu0 %816
    %vm818 = vcmask 1039360
    %v819 = vsel %vm818, %v807, %v809
    %v820 = vsel %vm818, %v809, %v811
    %v821 = vsel %vm818, %v813, %v815
    %v822 = vsel %vm818, %v815, %v817
    %vm826 = vcmask 80896
    %v828 = vsel %vm826, %v797, 0
    %v831 = vsel %vm826, %v798, 0
    %v834 = vsel %vm826, %v799, 0
    %vm836 = vcmask 1041408
    %v837 = vsel %vm836, %v821, 0
    %v839 = vsel %vm836, %v822, 0
    %v841 = vsel %vm836, %v817, 0
    %843 = vmatprep.subr.mxu0 0.0
    %844 = vmatpush1.msra.mxu0 0.0
    %845 = vmatprep.subr.mxu0 0.0
    %846 = vmatpush1.msra.mxu0 0.0
    %847 = vmatprep.subr.mxu0 0.0
    %848 = vmatpush1.msra.mxu0 0.0
    %849 = vmatprep.subr.mxu0 0.0
    %850 = vmatpush1.msra.mxu0 0.0
    %851 = vmatprep.subr.mxu0 0.0
    %852 = vmatpush1.msra.mxu0 0.0
    %853 = vmatprep.subr.mxu0 0.0
    %854 = vmatpush1.msra.mxu0 0.0
    %855 = vmatprep.subr.mxu0 0.0
    %856 = vmatpush1.msra.mxu0 0.0
    %857 = vmatprep.subr.mxu0 0.0
    %858 = vmatpush1.msra.mxu0 0.0
    %859 = vmatprep.subr.mxu0 0.0
    %860 = vmatpush1.msra.mxu0 0.0
    %861 = vmatprep.subr.mxu0 0.0
    %862 = vmatpush1.msra.mxu0 0.0
    %863 = vmatprep.subr.mxu0 0.0
    %864 = vmatpush1.msra.mxu0 0.0
    %865 = vmatprep.subr.mxu0 0.0
    %866 = vmatpush1.msra.mxu0 0.0
    %867 = vmatprep.subr.mxu0 0.0
    %868 = vmatpush1.msra.mxu0 0.0
    %869 = vmatprep.subr.mxu0 0.0
    %870 = vmatpush1.msra.mxu0 0.0
    %871 = vmatprep.subr.mxu0 %v839
    %872 = vmatpush1.msra.mxu0 %v837
    %873 = vmatprep.subr.mxu0 %v820
    %874 = vmatpush1.msra.mxu0 %v819
    %875 = vmatprep.subr.mxu0 0.0
    %876 = vmatpush2.msra.mxu0 0.0
    %877 = vmatprep.subr.mxu0 0.0
    %878 = vmatpush2.msra.mxu0 0.0
    %879 = vmatprep.subr.mxu0 0.0
    %880 = vmatpush2.msra.mxu0 0.0
    %881 = vmatprep.subr.mxu0 0.0
    %882 = vmatpush2.msra.mxu0 0.0
    %883 = vmatprep.subr.mxu0 0.0
    %884 = vmatpush2.msra.mxu0 0.0
    %885 = vmatprep.subr.mxu0 0.0
    %886 = vmatpush2.msra.mxu0 0.0
    %887 = vmatprep.subr.mxu0 0.0
    %888 = vmatpush2.msra.mxu0 0.0
    %889 = vmatprep.subr.mxu0 0.0
    %890 = vmatpush2.msra.mxu0 0.0
    %891 = vmatprep.subr.mxu0 0.0
    %892 = vmatpush2.msra.mxu0 0.0
    %893 = vmatprep.subr.mxu0 0.0
    %894 = vmatpush2.msra.mxu0 0.0
    %895 = vmatprep.subr.mxu0 0.0
    %896 = vmatpush2.msra.mxu0 0.0
    %897 = vmatprep.subr.mxu0 0.0
    %898 = vmatpush2.msra.mxu0 0.0
    %899 = vmatprep.subr.mxu0 0.0
    %900 = vmatpush2.msra.mxu0 0.0
    %901 = vmatprep.subr.mxu0 0.0
    %902 = vmatpush2.msra.mxu0 0.0
    %903 = vmatprep.subr.mxu0 0.0
    %904 = vmatpush2.msra.mxu0 0.0
    %905 = vmatprep.subr.mxu0 0.0
    %906 = vmatpush2.msra.mxu0 0.0
    %907 = vmatprep.mubr.f32.mxu0 0.0
    %908 = vmatmul.mubr.f32.gmra.mxu0 %v828
    %v909 = vpop.f32.mrf.mxu0
    %v910 = vadd.f32 0.0, %v909
    %v911 = vpop.f32.mrf.mxu0
    %v912 = vadd.f32 0.0, %v911
    %913 = vmatprep.mubr.f32.mxu0 0.0
    %914 = vmatmul.mubr.f32.gmra.mxu0 %v831
    %v915 = vpop.f32.mrf.mxu0
    %v916 = vadd.f32 0.0, %v915
    %v917 = vpop.f32.mrf.mxu0
    %v918 = vadd.f32 0.0, %v917
    %919 = vmatprep.mubr.f32.mxu0 0.0
    %920 = vmatmul.mubr.f32.gmra.mxu0 %v834
    %v921 = vpop.f32.mrf.mxu0
    %v922 = vadd.f32 0.0, %v921
    %v923 = vpop.f32.mrf.mxu0
    %v924 = vadd.f32 0.0, %v923
    %925 = vdwg.mxu0
    %926 = vmatprep.subr.mxu0 0.0
    %927 = vmatpush1.msra.mxu0 0.0
    %928 = vmatprep.subr.mxu0 0.0
    %929 = vmatpush1.msra.mxu0 0.0
    %930 = vmatprep.subr.mxu0 0.0
    %931 = vmatpush1.msra.mxu0 0.0
    %932 = vmatprep.subr.mxu0 0.0
    %933 = vmatpush1.msra.mxu0 0.0
    %934 = vmatprep.subr.mxu0 0.0
    %935 = vmatpush1.msra.mxu0 0.0
    %936 = vmatprep.subr.mxu0 0.0
    %937 = vmatpush1.msra.mxu0 0.0
    %938 = vmatprep.subr.mxu0 0.0
    %939 = vmatpush1.msra.mxu0 0.0
    %940 = vmatprep.subr.mxu0 0.0
    %941 = vmatpush1.msra.mxu0 0.0
    %942 = vmatprep.subr.mxu0 0.0
    %943 = vmatpush1.msra.mxu0 0.0
    %944 = vmatprep.subr.mxu0 0.0
    %945 = vmatpush1.msra.mxu0 0.0
    %946 = vmatprep.subr.mxu0 0.0
    %947 = vmatpush1.msra.mxu0 0.0
    %948 = vmatprep.subr.mxu0 0.0
    %949 = vmatpush1.msra.mxu0 0.0
    %950 = vmatprep.subr.mxu0 0.0
    %951 = vmatpush1.msra.mxu0 0.0
    %952 = vmatprep.subr.mxu0 0.0
    %953 = vmatpush1.msra.mxu0 0.0
    %954 = vmatprep.subr.mxu0 0.0
    %955 = vmatpush1.msra.mxu0 %v841
    %956 = vmatprep.subr.mxu0 0.0
    %957 = vmatpush1.msra.mxu0 %v811
    %958 = vmatprep.subr.mxu0 0.0
    %959 = vmatpush2.msra.mxu0 0.0
    %960 = vmatprep.subr.mxu0 0.0
    %961 = vmatpush2.msra.mxu0 0.0
    %962 = vmatprep.subr.mxu0 0.0
    %963 = vmatpush2.msra.mxu0 0.0
    %964 = vmatprep.subr.mxu0 0.0
    %965 = vmatpush2.msra.mxu0 0.0
    %966 = vmatprep.subr.mxu0 0.0
    %967 = vmatpush2.msra.mxu0 0.0
    %968 = vmatprep.subr.mxu0 0.0
    %969 = vmatpush2.msra.mxu0 0.0
    %970 = vmatprep.subr.mxu0 0.0
    %971 = vmatpush2.msra.mxu0 0.0
    %972 = vmatprep.subr.mxu0 0.0
    %973 = vmatpush2.msra.mxu0 0.0
    %974 = vmatprep.subr.mxu0 0.0
    %975 = vmatpush2.msra.mxu0 0.0
    %976 = vmatprep.subr.mxu0 0.0
    %977 = vmatpush2.msra.mxu0 0.0
    %978 = vmatprep.subr.mxu0 0.0
    %979 = vmatpush2.msra.mxu0 0.0
    %980 = vmatprep.subr.mxu0 0.0
    %981 = vmatpush2.msra.mxu0 0.0
    %982 = vmatprep.subr.mxu0 0.0
    %983 = vmatpush2.msra.mxu0 0.0
    %984 = vmatprep.subr.mxu0 0.0
    %985 = vmatpush2.msra.mxu0 0.0
    %986 = vmatprep.subr.mxu0 0.0
    %987 = vmatpush2.msra.mxu0 0.0
    %988 = vmatprep.subr.mxu0 0.0
    %989 = vmatpush2.msra.mxu0 0.0
    %990 = vmatprep.mubr.f32.mxu0 0.0
    %991 = vmatmul.mubr.f32.gmra.mxu0 %v828
    %v992 = vpop.f32.mrf.mxu0
    %v993 = vadd.f32 0.0, %v992
    %v994 = vpop.f32.mrf.mxu0
    %995 = vmatprep.mubr.f32.mxu0 0.0
    %996 = vmatmul.mubr.f32.gmra.mxu0 %v831
    %v997 = vpop.f32.mrf.mxu0
    %v998 = vadd.f32 0.0, %v997
    %v999 = vpop.f32.mrf.mxu0
    %1000 = vmatprep.mubr.f32.mxu0 0.0
    %1001 = vmatmul.mubr.f32.gmra.mxu0 %v834
    %v1002 = vpop.f32.mrf.mxu0
    %v1003 = vadd.f32 0.0, %v1002
    %v1004 = vpop.f32.mrf.mxu0
    %1005 = vdwg.mxu0
    %v1007 = vsel %vm826, %v793, 0
    %v1010 = vsel %vm826, %v794, 0
    %v1013 = vsel %vm826, %v795, 0
    %v1015 = vsel %vm836, %v790, 0
    %v1017 = vsel %vm836, %v791, 0
    %v1019 = vsel %vm836, %v792, 0
    %1021 = vmatprep.subr.mxu0 0.0
    %1022 = vmatpush1.msra.mxu0 0.0
    %1023 = vmatprep.subr.mxu0 0.0
    %1024 = vmatpush1.msra.mxu0 0.0
    %1025 = vmatprep.subr.mxu0 0.0
    %1026 = vmatpush1.msra.mxu0 0.0
    %1027 = vmatprep.subr.mxu0 0.0
    %1028 = vmatpush1.msra.mxu0 0.0
    %1029 = vmatprep.subr.mxu0 0.0
    %1030 = vmatpush1.msra.mxu0 0.0
    %1031 = vmatprep.subr.mxu0 0.0
    %1032 = vmatpush1.msra.mxu0 0.0
    %1033 = vmatprep.subr.mxu0 0.0
    %1034 = vmatpush1.msra.mxu0 0.0
    %1035 = vmatprep.subr.mxu0 0.0
    %1036 = vmatpush1.msra.mxu0 0.0
    %1037 = vmatprep.subr.mxu0 0.0
    %1038 = vmatpush1.msra.mxu0 0.0
    %1039 = vmatprep.subr.mxu0 0.0
    %1040 = vmatpush1.msra.mxu0 0.0
    %1041 = vmatprep.subr.mxu0 0.0
    %1042 = vmatpush1.msra.mxu0 0.0
    %1043 = vmatprep.subr.mxu0 0.0
    %1044 = vmatpush1.msra.mxu0 0.0
    %1045 = vmatprep.subr.mxu0 0.0
    %1046 = vmatpush1.msra.mxu0 0.0
    %1047 = vmatprep.subr.mxu0 0.0
    %1048 = vmatpush1.msra.mxu0 0.0
    %1049 = vmatprep.subr.mxu0 %v1017
    %1050 = vmatpush1.msra.mxu0 %v1015
    %1051 = vmatprep.subr.mxu0 %v788
    %1052 = vmatpush1.msra.mxu0 %v787
    %1053 = vmatprep.subr.mxu0 0.0
    %1054 = vmatpush2.msra.mxu0 0.0
    %1055 = vmatprep.subr.mxu0 0.0
    %1056 = vmatpush2.msra.mxu0 0.0
    %1057 = vmatprep.subr.mxu0 0.0
    %1058 = vmatpush2.msra.mxu0 0.0
    %1059 = vmatprep.subr.mxu0 0.0
    %1060 = vmatpush2.msra.mxu0 0.0
    %1061 = vmatprep.subr.mxu0 0.0
    %1062 = vmatpush2.msra.mxu0 0.0
    %1063 = vmatprep.subr.mxu0 0.0
    %1064 = vmatpush2.msra.mxu0 0.0
    %1065 = vmatprep.subr.mxu0 0.0
    %1066 = vmatpush2.msra.mxu0 0.0
    %1067 = vmatprep.subr.mxu0 0.0
    %1068 = vmatpush2.msra.mxu0 0.0
    %1069 = vmatprep.subr.mxu0 0.0
    %1070 = vmatpush2.msra.mxu0 0.0
    %1071 = vmatprep.subr.mxu0 0.0
    %1072 = vmatpush2.msra.mxu0 0.0
    %1073 = vmatprep.subr.mxu0 0.0
    %1074 = vmatpush2.msra.mxu0 0.0
    %1075 = vmatprep.subr.mxu0 0.0
    %1076 = vmatpush2.msra.mxu0 0.0
    %1077 = vmatprep.subr.mxu0 0.0
    %1078 = vmatpush2.msra.mxu0 0.0
    %1079 = vmatprep.subr.mxu0 0.0
    %1080 = vmatpush2.msra.mxu0 0.0
    %1081 = vmatprep.subr.mxu0 0.0
    %1082 = vmatpush2.msra.mxu0 0.0
    %1083 = vmatprep.subr.mxu0 0.0
    %1084 = vmatpush2.msra.mxu0 0.0
    %1085 = vmatprep.mubr.f32.mxu0 0.0
    %1086 = vmatmul.mubr.f32.gmra.mxu0 %v1007
    %v1087 = vpop.f32.mrf.mxu0
    %v1088 = vadd.f32 %v910, %v1087
    %v1089 = vpop.f32.mrf.mxu0
    %v1090 = vadd.f32 %v912, %v1089
    %1091 = vmatprep.mubr.f32.mxu0 0.0
    %1092 = vmatmul.mubr.f32.gmra.mxu0 %v1010
    %v1093 = vpop.f32.mrf.mxu0
    %v1094 = vadd.f32 %v916, %v1093
    %v1095 = vpop.f32.mrf.mxu0
    %v1096 = vadd.f32 %v918, %v1095
    %1097 = vmatprep.mubr.f32.mxu0 0.0
    %1098 = vmatmul.mubr.f32.gmra.mxu0 %v1013
    %v1099 = vpop.f32.mrf.mxu0
    %v1100 = vadd.f32 %v922, %v1099
    %v1101 = vpop.f32.mrf.mxu0
    %v1102 = vadd.f32 %v924, %v1101
    %1103 = vdwg.mxu0
    %1104 = vmatprep.subr.mxu0 0.0
    %1105 = vmatpush1.msra.mxu0 0.0
    %1106 = vmatprep.subr.mxu0 0.0
    %1107 = vmatpush1.msra.mxu0 0.0
    %1108 = vmatprep.subr.mxu0 0.0
    %1109 = vmatpush1.msra.mxu0 0.0
    %1110 = vmatprep.subr.mxu0 0.0
    %1111 = vmatpush1.msra.mxu0 0.0
    %1112 = vmatprep.subr.mxu0 0.0
    %1113 = vmatpush1.msra.mxu0 0.0
    %1114 = vmatprep.subr.mxu0 0.0
    %1115 = vmatpush1.msra.mxu0 0.0
    %1116 = vmatprep.subr.mxu0 0.0
    %1117 = vmatpush1.msra.mxu0 0.0
    %1118 = vmatprep.subr.mxu0 0.0
    %1119 = vmatpush1.msra.mxu0 0.0
    %1120 = vmatprep.subr.mxu0 0.0
    %1121 = vmatpush1.msra.mxu0 0.0
    %1122 = vmatprep.subr.mxu0 0.0
    %1123 = vmatpush1.msra.mxu0 0.0
    %1124 = vmatprep.subr.mxu0 0.0
    %1125 = vmatpush1.msra.mxu0 0.0
    %1126 = vmatprep.subr.mxu0 0.0
    %1127 = vmatpush1.msra.mxu0 0.0
    %1128 = vmatprep.subr.mxu0 0.0
    %1129 = vmatpush1.msra.mxu0 0.0
    %1130 = vmatprep.subr.mxu0 0.0
    %1131 = vmatpush1.msra.mxu0 0.0
    %1132 = vmatprep.subr.mxu0 0.0
    %1133 = vmatpush1.msra.mxu0 %v1019
    %1134 = vmatprep.subr.mxu0 0.0
    %1135 = vmatpush1.msra.mxu0 %v789
    %1136 = vmatprep.subr.mxu0 0.0
    %1137 = vmatpush2.msra.mxu0 0.0
    %1138 = vmatprep.subr.mxu0 0.0
    %1139 = vmatpush2.msra.mxu0 0.0
    %1140 = vmatprep.subr.mxu0 0.0
    %1141 = vmatpush2.msra.mxu0 0.0
    %1142 = vmatprep.subr.mxu0 0.0
    %1143 = vmatpush2.msra.mxu0 0.0
    %1144 = vmatprep.subr.mxu0 0.0
    %1145 = vmatpush2.msra.mxu0 0.0
    %1146 = vmatprep.subr.mxu0 0.0
    %1147 = vmatpush2.msra.mxu0 0.0
    %1148 = vmatprep.subr.mxu0 0.0
    %1149 = vmatpush2.msra.mxu0 0.0
    %1150 = vmatprep.subr.mxu0 0.0
    %1151 = vmatpush2.msra.mxu0 0.0
    %1152 = vmatprep.subr.mxu0 0.0
    %1153 = vmatpush2.msra.mxu0 0.0
    %1154 = vmatprep.subr.mxu0 0.0
    %1155 = vmatpush2.msra.mxu0 0.0
    %1156 = vmatprep.subr.mxu0 0.0
    %1157 = vmatpush2.msra.mxu0 0.0
    %1158 = vmatprep.subr.mxu0 0.0
    %1159 = vmatpush2.msra.mxu0 0.0
    %1160 = vmatprep.subr.mxu0 0.0
    %1161 = vmatpush2.msra.mxu0 0.0
    %1162 = vmatprep.subr.mxu0 0.0
    %1163 = vmatpush2.msra.mxu0 0.0
    %1164 = vmatprep.subr.mxu0 0.0
    %1165 = vmatpush2.msra.mxu0 0.0
    %1166 = vmatprep.subr.mxu0 0.0
    %1167 = vmatpush2.msra.mxu0 0.0
    %1168 = vmatprep.mubr.f32.mxu0 0.0
    %1169 = vmatmul.mubr.f32.gmra.mxu0 %v1007
    %v1170 = vpop.f32.mrf.mxu0
    %v1171 = vadd.f32 %v993, %v1170
    %v1172 = vpop.f32.mrf.mxu0
    %1173 = vmatprep.mubr.f32.mxu0 0.0
    %1174 = vmatmul.mubr.f32.gmra.mxu0 %v1010
    %v1175 = vpop.f32.mrf.mxu0
    %v1176 = vadd.f32 %v998, %v1175
    %v1177 = vpop.f32.mrf.mxu0
    %1178 = vmatprep.mubr.f32.mxu0 0.0
    %1179 = vmatmul.mubr.f32.gmra.mxu0 %v1013
    %v1180 = vpop.f32.mrf.mxu0
    %v1181 = vadd.f32 %v1003, %v1180
    %v1182 = vpop.f32.mrf.mxu0
    %1183 = vdwg.mxu0
    %s1184 = scalar_lea.vmem %s3, 48
    %v1185 = vld [vmem:[%s1184] sm:$0xff]
    %v1186 = vld [vmem:[%s1184 + $0x8] sm:$0xff]
    %v1187 = vld [vmem:[%s1184 + $0x10] sm:$0xf]
    %1188 = vrot.lane.b32.xlu0 %v787, 126
    %v1189 = vpop.permute.xlu0 %1188
    %1190 = vrot.lane.b32.xlu0 %v788, 126
    %v1191 = vpop.permute.xlu0 %1190
    %1192 = vrot.lane.b32.xlu0 %v789, 126
    %v1193 = vpop.permute.xlu0 %1192
    %1194 = vrot.lane.b32.xlu0 %v790, 126
    %v1195 = vpop.permute.xlu0 %1194
    %1196 = vrot.lane.b32.xlu0 %v791, 126
    %v1197 = vpop.permute.xlu0 %1196
    %1198 = vrot.lane.b32.xlu0 %v792, 126
    %v1199 = vpop.permute.xlu0 %1198
    %vm1200 = vcmask 1031168
    %v1201 = vsel %vm1200, %v1189, %v1191
    %v1202 = vsel %vm1200, %v1191, %v1193
    %v1203 = vsel %vm1200, %v1195, %v1197
    %v1204 = vsel %vm1200, %v1197, %v1199
    %v1209 = vsel %vm826, %v1185, 0
    %v1212 = vsel %vm826, %v1186, 0
    %v1215 = vsel %vm826, %v1187, 0
    %v1217 = vsel %vm836, %v1203, 0
    %v1219 = vsel %vm836, %v1204, 0
    %v1221 = vsel %vm836, %v1199, 0
    %1223 = vmatprep.subr.mxu0 0.0
    %1224 = vmatpush1.msra.mxu0 0.0
    %1225 = vmatprep.subr.mxu0 0.0
    %1226 = vmatpush1.msra.mxu0 0.0
    %1227 = vmatprep.subr.mxu0 0.0
    %1228 = vmatpush1.msra.mxu0 0.0
    %1229 = vmatprep.subr.mxu0 0.0
    %1230 = vmatpush1.msra.mxu0 0.0
    %1231 = vmatprep.subr.mxu0 0.0
    %1232 = vmatpush1.msra.mxu0 0.0
    %1233 = vmatprep.subr.mxu0 0.0
    %1234 = vmatpush1.msra.mxu0 0.0
    %1235 = vmatprep.subr.mxu0 0.0
    %1236 = vmatpush1.msra.mxu0 0.0
    %1237 = vmatprep.subr.mxu0 0.0
    %1238 = vmatpush1.msra.mxu0 0.0
    %1239 = vmatprep.subr.mxu0 0.0
    %1240 = vmatpush1.msra.mxu0 0.0
    %1241 = vmatprep.subr.mxu0 0.0
    %1242 = vmatpush1.msra.mxu0 0.0
    %1243 = vmatprep.subr.mxu0 0.0
    %1244 = vmatpush1.msra.mxu0 0.0
    %1245 = vmatprep.subr.mxu0 0.0
    %1246 = vmatpush1.msra.mxu0 0.0
    %1247 = vmatprep.subr.mxu0 0.0
    %1248 = vmatpush1.msra.mxu0 0.0
    %1249 = vmatprep.subr.mxu0 0.0
    %1250 = vmatpush1.msra.mxu0 0.0
    %1251 = vmatprep.subr.mxu0 %v1219
    %1252 = vmatpush1.msra.mxu0 %v1217
    %1253 = vmatprep.subr.mxu0 %v1202
    %1254 = vmatpush1.msra.mxu0 %v1201
    %1255 = vmatprep.subr.mxu0 0.0
    %1256 = vmatpush2.msra.mxu0 0.0
    %1257 = vmatprep.subr.mxu0 0.0
    %1258 = vmatpush2.msra.mxu0 0.0
    %1259 = vmatprep.subr.mxu0 0.0
    %1260 = vmatpush2.msra.mxu0 0.0
    %1261 = vmatprep.subr.mxu0 0.0
    %1262 = vmatpush2.msra.mxu0 0.0
    %1263 = vmatprep.subr.mxu0 0.0
    %1264 = vmatpush2.msra.mxu0 0.0
    %1265 = vmatprep.subr.mxu0 0.0
    %1266 = vmatpush2.msra.mxu0 0.0
    %1267 = vmatprep.subr.mxu0 0.0
    %1268 = vmatpush2.msra.mxu0 0.0
    %1269 = vmatprep.subr.mxu0 0.0
    %1270 = vmatpush2.msra.mxu0 0.0
    %1271 = vmatprep.subr.mxu0 0.0
    %1272 = vmatpush2.msra.mxu0 0.0
    %1273 = vmatprep.subr.mxu0 0.0
    %1274 = vmatpush2.msra.mxu0 0.0
    %1275 = vmatprep.subr.mxu0 0.0
    %1276 = vmatpush2.msra.mxu0 0.0
    %1277 = vmatprep.subr.mxu0 0.0
    %1278 = vmatpush2.msra.mxu0 0.0
    %1279 = vmatprep.subr.mxu0 0.0
    %1280 = vmatpush2.msra.mxu0 0.0
    %1281 = vmatprep.subr.mxu0 0.0
    %1282 = vmatpush2.msra.mxu0 0.0
    %1283 = vmatprep.subr.mxu0 0.0
    %1284 = vmatpush2.msra.mxu0 0.0
    %1285 = vmatprep.subr.mxu0 0.0
    %1286 = vmatpush2.msra.mxu0 0.0
    %1287 = vmatprep.mubr.f32.mxu0 0.0
    %1288 = vmatmul.mubr.f32.gmra.mxu0 %v1209
    %v1289 = vpop.f32.mrf.mxu0
    %v1290 = vadd.f32 0.0, %v1289
    %v1291 = vpop.f32.mrf.mxu0
    %v1292 = vadd.f32 0.0, %v1291
    %1293 = vmatprep.mubr.f32.mxu0 0.0
    %1294 = vmatmul.mubr.f32.gmra.mxu0 %v1212
    %v1295 = vpop.f32.mrf.mxu0
    %v1296 = vadd.f32 0.0, %v1295
    %v1297 = vpop.f32.mrf.mxu0
    %v1298 = vadd.f32 0.0, %v1297
    %1299 = vmatprep.mubr.f32.mxu0 0.0
    %1300 = vmatmul.mubr.f32.gmra.mxu0 %v1215
    %v1301 = vpop.f32.mrf.mxu0
    %v1302 = vadd.f32 0.0, %v1301
    %v1303 = vpop.f32.mrf.mxu0
    %v1304 = vadd.f32 0.0, %v1303
    %1305 = vdwg.mxu0
    %1306 = vmatprep.subr.mxu0 0.0
    %1307 = vmatpush1.msra.mxu0 0.0
    %1308 = vmatprep.subr.mxu0 0.0
    %1309 = vmatpush1.msra.mxu0 0.0
    %1310 = vmatprep.subr.mxu0 0.0
    %1311 = vmatpush1.msra.mxu0 0.0
    %1312 = vmatprep.subr.mxu0 0.0
    %1313 = vmatpush1.msra.mxu0 0.0
    %1314 = vmatprep.subr.mxu0 0.0
    %1315 = vmatpush1.msra.mxu0 0.0
    %1316 = vmatprep.subr.mxu0 0.0
    %1317 = vmatpush1.msra.mxu0 0.0
    %1318 = vmatprep.subr.mxu0 0.0
    %1319 = vmatpush1.msra.mxu0 0.0
    %1320 = vmatprep.subr.mxu0 0.0
    %1321 = vmatpush1.msra.mxu0 0.0
    %1322 = vmatprep.subr.mxu0 0.0
    %1323 = vmatpush1.msra.mxu0 0.0
    %1324 = vmatprep.subr.mxu0 0.0
    %1325 = vmatpush1.msra.mxu0 0.0
    %1326 = vmatprep.subr.mxu0 0.0
    %1327 = vmatpush1.msra.mxu0 0.0
    %1328 = vmatprep.subr.mxu0 0.0
    %1329 = vmatpush1.msra.mxu0 0.0
    %1330 = vmatprep.subr.mxu0 0.0
    %1331 = vmatpush1.msra.mxu0 0.0
    %1332 = vmatprep.subr.mxu0 0.0
    %1333 = vmatpush1.msra.mxu0 0.0
    %1334 = vmatprep.subr.mxu0 0.0
    %1335 = vmatpush1.msra.mxu0 %v1221
    %1336 = vmatprep.subr.mxu0 0.0
    %1337 = vmatpush1.msra.mxu0 %v1193
    %1338 = vmatprep.subr.mxu0 0.0
    %1339 = vmatpush2.msra.mxu0 0.0
    %1340 = vmatprep.subr.mxu0 0.0
    %1341 = vmatpush2.msra.mxu0 0.0
    %1342 = vmatprep.subr.mxu0 0.0
    %1343 = vmatpush2.msra.mxu0 0.0
    %1344 = vmatprep.subr.mxu0 0.0
    %1345 = vmatpush2.msra.mxu0 0.0
    %1346 = vmatprep.subr.mxu0 0.0
    %1347 = vmatpush2.msra.mxu0 0.0
    %1348 = vmatprep.subr.mxu0 0.0
    %1349 = vmatpush2.msra.mxu0 0.0
    %1350 = vmatprep.subr.mxu0 0.0
    %1351 = vmatpush2.msra.mxu0 0.0
    %1352 = vmatprep.subr.mxu0 0.0
    %1353 = vmatpush2.msra.mxu0 0.0
    %1354 = vmatprep.subr.mxu0 0.0
    %1355 = vmatpush2.msra.mxu0 0.0
    %1356 = vmatprep.subr.mxu0 0.0
    %1357 = vmatpush2.msra.mxu0 0.0
    %1358 = vmatprep.subr.mxu0 0.0
    %1359 = vmatpush2.msra.mxu0 0.0
    %1360 = vmatprep.subr.mxu0 0.0
    %1361 = vmatpush2.msra.mxu0 0.0
    %1362 = vmatprep.subr.mxu0 0.0
    %1363 = vmatpush2.msra.mxu0 0.0
    %1364 = vmatprep.subr.mxu0 0.0
    %1365 = vmatpush2.msra.mxu0 0.0
    %1366 = vmatprep.subr.mxu0 0.0
    %1367 = vmatpush2.msra.mxu0 0.0
    %1368 = vmatprep.subr.mxu0 0.0
    %1369 = vmatpush2.msra.mxu0 0.0
    %1370 = vmatprep.mubr.f32.mxu0 0.0
    %1371 = vmatmul.mubr.f32.gmra.mxu0 %v1209
    %v1372 = vpop.f32.mrf.mxu0
    %v1373 = vadd.f32 0.0, %v1372
    %v1374 = vpop.f32.mrf.mxu0
    %1375 = vmatprep.mubr.f32.mxu0 0.0
    %1376 = vmatmul.mubr.f32.gmra.mxu0 %v1212
    %v1377 = vpop.f32.mrf.mxu0
    %v1378 = vadd.f32 0.0, %v1377
    %v1379 = vpop.f32.mrf.mxu0
    %1380 = vmatprep.mubr.f32.mxu0 0.0
    %1381 = vmatmul.mubr.f32.gmra.mxu0 %v1215
    %v1382 = vpop.f32.mrf.mxu0
    %v1383 = vadd.f32 0.0, %v1382
    %v1384 = vpop.f32.mrf.mxu0
    %1385 = vdwg.mxu0
    %v1386 = vadd.f32 %v1088, %v1290
    %v1387 = vadd.f32 %v1090, %v1292
    %v1388 = vadd.f32 %v1171, %v1373
    %v1389 = vadd.f32 %v1094, %v1296
    %v1390 = vadd.f32 %v1096, %v1298
    %v1391 = vadd.f32 %v1176, %v1378
    %v1392 = vadd.f32 %v1100, %v1302
    %v1393 = vadd.f32 %v1102, %v1304
    %v1394 = vadd.f32 %v1181, %v1383
    %s1395 = scalar_lea.vmem %s3, 72
    %v1396 = vld [vmem:[%s1395] sm:$0xff]
    %v1397 = vld [vmem:[%s1395 + $0x8] sm:$0xff]
    %v1398 = vld [vmem:[%s1395 + $0x10] sm:$0xf]
    %1399 = vrot.lane.b32.xlu0 %v787, 125
    %v1400 = vpop.permute.xlu0 %1399
    %1401 = vrot.lane.b32.xlu0 %v788, 125
    %v1402 = vpop.permute.xlu0 %1401
    %1403 = vrot.lane.b32.xlu0 %v789, 125
    %v1404 = vpop.permute.xlu0 %1403
    %1405 = vrot.lane.b32.xlu0 %v790, 125
    %v1406 = vpop.permute.xlu0 %1405
    %1407 = vrot.lane.b32.xlu0 %v791, 125
    %v1408 = vpop.permute.xlu0 %1407
    %1409 = vrot.lane.b32.xlu0 %v792, 125
    %v1410 = vpop.permute.xlu0 %1409
    %vm1411 = vcmask 1022976
    %v1412 = vsel %vm1411, %v1400, %v1402
    %v1413 = vsel %vm1411, %v1402, %v1404
    %v1414 = vsel %vm1411, %v1406, %v1408
    %v1415 = vsel %vm1411, %v1408, %v1410
    %v1420 = vsel %vm826, %v1396, 0
    %v1423 = vsel %vm826, %v1397, 0
    %v1426 = vsel %vm826, %v1398, 0
    %v1428 = vsel %vm836, %v1414, 0
    %v1430 = vsel %vm836, %v1415, 0
    %v1432 = vsel %vm836, %v1410, 0
    %1434 = vmatprep.subr.mxu0 0.0
    %1435 = vmatpush1.msra.mxu0 0.0
    %1436 = vmatprep.subr.mxu0 0.0
    %1437 = vmatpush1.msra.mxu0 0.0
    %1438 = vmatprep.subr.mxu0 0.0
    %1439 = vmatpush1.msra.mxu0 0.0
    %1440 = vmatprep.subr.mxu0 0.0
    %1441 = vmatpush1.msra.mxu0 0.0
    %1442 = vmatprep.subr.mxu0 0.0
    %1443 = vmatpush1.msra.mxu0 0.0
    %1444 = vmatprep.subr.mxu0 0.0
    %1445 = vmatpush1.msra.mxu0 0.0
    %1446 = vmatprep.subr.mxu0 0.0
    %1447 = vmatpush1.msra.mxu0 0.0
    %1448 = vmatprep.subr.mxu0 0.0
    %1449 = vmatpush1.msra.mxu0 0.0
    %1450 = vmatprep.subr.mxu0 0.0
    %1451 = vmatpush1.msra.mxu0 0.0
    %1452 = vmatprep.subr.mxu0 0.0
    %1453 = vmatpush1.msra.mxu0 0.0
    %1454 = vmatprep.subr.mxu0 0.0
    %1455 = vmatpush1.msra.mxu0 0.0
    %1456 = vmatprep.subr.mxu0 0.0
    %1457 = vmatpush1.msra.mxu0 0.0
    %1458 = vmatprep.subr.mxu0 0.0
    %1459 = vmatpush1.msra.mxu0 0.0
    %1460 = vmatprep.subr.mxu0 0.0
    %1461 = vmatpush1.msra.mxu0 0.0
    %1462 = vmatprep.subr.mxu0 %v1430
    %1463 = vmatpush1.msra.mxu0 %v1428
    %1464 = vmatprep.subr.mxu0 %v1413
    %1465 = vmatpush1.msra.mxu0 %v1412
    %1466 = vmatprep.subr.mxu0 0.0
    %1467 = vmatpush2.msra.mxu0 0.0
    %1468 = vmatprep.subr.mxu0 0.0
    %1469 = vmatpush2.msra.mxu0 0.0
    %1470 = vmatprep.subr.mxu0 0.0
    %1471 = vmatpush2.msra.mxu0 0.0
    %1472 = vmatprep.subr.mxu0 0.0
    %1473 = vmatpush2.msra.mxu0 0.0
    %1474 = vmatprep.subr.mxu0 0.0
    %1475 = vmatpush2.msra.mxu0 0.0
    %1476 = vmatprep.subr.mxu0 0.0
    %1477 = vmatpush2.msra.mxu0 0.0
    %1478 = vmatprep.subr.mxu0 0.0
    %1479 = vmatpush2.msra.mxu0 0.0
    %1480 = vmatprep.subr.mxu0 0.0
    %1481 = vmatpush2.msra.mxu0 0.0
    %1482 = vmatprep.subr.mxu0 0.0
    %1483 = vmatpush2.msra.mxu0 0.0
    %1484 = vmatprep.subr.mxu0 0.0
    %1485 = vmatpush2.msra.mxu0 0.0
    %1486 = vmatprep.subr.mxu0 0.0
    %1487 = vmatpush2.msra.mxu0 0.0
    %1488 = vmatprep.subr.mxu0 0.0
    %1489 = vmatpush2.msra.mxu0 0.0
    %1490 = vmatprep.subr.mxu0 0.0
    %1491 = vmatpush2.msra.mxu0 0.0
    %1492 = vmatprep.subr.mxu0 0.0
    %1493 = vmatpush2.msra.mxu0 0.0
    %1494 = vmatprep.subr.mxu0 0.0
    %1495 = vmatpush2.msra.mxu0 0.0
    %1496 = vmatprep.subr.mxu0 0.0
    %1497 = vmatpush2.msra.mxu0 0.0
    %1498 = vmatprep.mubr.f32.mxu0 0.0
    %1499 = vmatmul.mubr.f32.gmra.mxu0 %v1420
    %v1500 = vpop.f32.mrf.mxu0
    %v1501 = vadd.f32 0.0, %v1500
    %v1502 = vpop.f32.mrf.mxu0
    %v1503 = vadd.f32 0.0, %v1502
    %1504 = vmatprep.mubr.f32.mxu0 0.0
    %1505 = vmatmul.mubr.f32.gmra.mxu0 %v1423
    %v1506 = vpop.f32.mrf.mxu0
    %v1507 = vadd.f32 0.0, %v1506
    %v1508 = vpop.f32.mrf.mxu0
    %v1509 = vadd.f32 0.0, %v1508
    %1510 = vmatprep.mubr.f32.mxu0 0.0
    %1511 = vmatmul.mubr.f32.gmra.mxu0 %v1426
    %v1512 = vpop.f32.mrf.mxu0
    %v1513 = vadd.f32 0.0, %v1512
    %v1514 = vpop.f32.mrf.mxu0
    %v1515 = vadd.f32 0.0, %v1514
    %1516 = vdwg.mxu0
    %1517 = vmatprep.subr.mxu0 0.0
    %1518 = vmatpush1.msra.mxu0 0.0
    %1519 = vmatprep.subr.mxu0 0.0
    %1520 = vmatpush1.msra.mxu0 0.0
    %1521 = vmatprep.subr.mxu0 0.0
    %1522 = vmatpush1.msra.mxu0 0.0
    %1523 = vmatprep.subr.mxu0 0.0
    %1524 = vmatpush1.msra.mxu0 0.0
    %1525 = vmatprep.subr.mxu0 0.0
    %1526 = vmatpush1.msra.mxu0 0.0
    %1527 = vmatprep.subr.mxu0 0.0
    %1528 = vmatpush1.msra.mxu0 0.0
    %1529 = vmatprep.subr.mxu0 0.0
    %1530 = vmatpush1.msra.mxu0 0.0
    %1531 = vmatprep.subr.mxu0 0.0
    %1532 = vmatpush1.msra.mxu0 0.0
    %1533 = vmatprep.subr.mxu0 0.0
    %1534 = vmatpush1.msra.mxu0 0.0
    %1535 = vmatprep.subr.mxu0 0.0
    %1536 = vmatpush1.msra.mxu0 0.0
    %1537 = vmatprep.subr.mxu0 0.0
    %1538 = vmatpush1.msra.mxu0 0.0
    %1539 = vmatprep.subr.mxu0 0.0
    %1540 = vmatpush1.msra.mxu0 0.0
    %1541 = vmatprep.subr.mxu0 0.0
    %1542 = vmatpush1.msra.mxu0 0.0
    %1543 = vmatprep.subr.mxu0 0.0
    %1544 = vmatpush1.msra.mxu0 0.0
    %1545 = vmatprep.subr.mxu0 0.0
    %1546 = vmatpush1.msra.mxu0 %v1432
    %1547 = vmatprep.subr.mxu0 0.0
    %1548 = vmatpush1.msra.mxu0 %v1404
    %1549 = vmatprep.subr.mxu0 0.0
    %1550 = vmatpush2.msra.mxu0 0.0
    %1551 = vmatprep.subr.mxu0 0.0
    %1552 = vmatpush2.msra.mxu0 0.0
    %1553 = vmatprep.subr.mxu0 0.0
    %1554 = vmatpush2.msra.mxu0 0.0
    %1555 = vmatprep.subr.mxu0 0.0
    %1556 = vmatpush2.msra.mxu0 0.0
    %1557 = vmatprep.subr.mxu0 0.0
    %1558 = vmatpush2.msra.mxu0 0.0
    %1559 = vmatprep.subr.mxu0 0.0
    %1560 = vmatpush2.msra.mxu0 0.0
    %1561 = vmatprep.subr.mxu0 0.0
    %1562 = vmatpush2.msra.mxu0 0.0
    %1563 = vmatprep.subr.mxu0 0.0
    %1564 = vmatpush2.msra.mxu0 0.0
    %1565 = vmatprep.subr.mxu0 0.0
    %1566 = vmatpush2.msra.mxu0 0.0
    %1567 = vmatprep.subr.mxu0 0.0
    %1568 = vmatpush2.msra.mxu0 0.0
    %1569 = vmatprep.subr.mxu0 0.0
    %1570 = vmatpush2.msra.mxu0 0.0
    %1571 = vmatprep.subr.mxu0 0.0
    %1572 = vmatpush2.msra.mxu0 0.0
    %1573 = vmatprep.subr.mxu0 0.0
    %1574 = vmatpush2.msra.mxu0 0.0
    %1575 = vmatprep.subr.mxu0 0.0
    %1576 = vmatpush2.msra.mxu0 0.0
    %1577 = vmatprep.subr.mxu0 0.0
    %1578 = vmatpush2.msra.mxu0 0.0
    %1579 = vmatprep.subr.mxu0 0.0
    %1580 = vmatpush2.msra.mxu0 0.0
    %1581 = vmatprep.mubr.f32.mxu0 0.0
    %1582 = vmatmul.mubr.f32.gmra.mxu0 %v1420
    %v1583 = vpop.f32.mrf.mxu0
    %v1584 = vadd.f32 0.0, %v1583
    %v1585 = vpop.f32.mrf.mxu0
    %1586 = vmatprep.mubr.f32.mxu0 0.0
    %1587 = vmatmul.mubr.f32.gmra.mxu0 %v1423
    %v1588 = vpop.f32.mrf.mxu0
    %v1589 = vadd.f32 0.0, %v1588
    %v1590 = vpop.f32.mrf.mxu0
    %1591 = vmatprep.mubr.f32.mxu0 0.0
    %1592 = vmatmul.mubr.f32.gmra.mxu0 %v1426
    %v1593 = vpop.f32.mrf.mxu0
    %v1594 = vadd.f32 0.0, %v1593
    %v1595 = vpop.f32.mrf.mxu0
    %1596 = vdwg.mxu0
    %v1597 = vadd.f32 %v1386, %v1501
    %v1598 = vadd.f32 %v1387, %v1503
    %v1599 = vadd.f32 %v1388, %v1584
    %v1600 = vadd.f32 %v1389, %v1507
    %v1601 = vadd.f32 %v1390, %v1509
    %v1602 = vadd.f32 %v1391, %v1589
    %v1603 = vadd.f32 %v1392, %v1513
    %v1604 = vadd.f32 %v1393, %v1515
    %v1605 = vadd.f32 %v1394, %v1594
    %s1606 = scalar_lea.vmem %s3, 96
    %v1607 = vld [vmem:[%s1606] sm:$0xff]
    %v1608 = vld [vmem:[%s1606 + $0x8] sm:$0xff]
    %v1609 = vld [vmem:[%s1606 + $0x10] sm:$0xf]
    %1610 = vrot.lane.b32.xlu0 %v787, 124
    %v1611 = vpop.permute.xlu0 %1610
    %1612 = vrot.lane.b32.xlu0 %v788, 124
    %v1613 = vpop.permute.xlu0 %1612
    %1614 = vrot.lane.b32.xlu0 %v789, 124
    %v1615 = vpop.permute.xlu0 %1614
    %1616 = vrot.lane.b32.xlu0 %v790, 124
    %v1617 = vpop.permute.xlu0 %1616
    %1618 = vrot.lane.b32.xlu0 %v791, 124
    %v1619 = vpop.permute.xlu0 %1618
    %1620 = vrot.lane.b32.xlu0 %v792, 124
    %v1621 = vpop.permute.xlu0 %1620
    %vm1622 = vcmask 1014784
    %v1623 = vsel %vm1622, %v1611, %v1613
    %v1624 = vsel %vm1622, %v1613, %v1615
    %v1625 = vsel %vm1622, %v1617, %v1619
    %v1626 = vsel %vm1622, %v1619, %v1621
    %v1631 = vsel %vm826, %v1607, 0
    %v1634 = vsel %vm826, %v1608, 0
    %v1637 = vsel %vm826, %v1609, 0
    %v1639 = vsel %vm836, %v1625, 0
    %v1641 = vsel %vm836, %v1626, 0
    %v1643 = vsel %vm836, %v1621, 0
    %1645 = vmatprep.subr.mxu0 0.0
    %1646 = vmatpush1.msra.mxu0 0.0
    %1647 = vmatprep.subr.mxu0 0.0
    %1648 = vmatpush1.msra.mxu0 0.0
    %1649 = vmatprep.subr.mxu0 0.0
    %1650 = vmatpush1.msra.mxu0 0.0
    %1651 = vmatprep.subr.mxu0 0.0
    %1652 = vmatpush1.msra.mxu0 0.0
    %1653 = vmatprep.subr.mxu0 0.0
    %1654 = vmatpush1.msra.mxu0 0.0
    %1655 = vmatprep.subr.mxu0 0.0
    %1656 = vmatpush1.msra.mxu0 0.0
    %1657 = vmatprep.subr.mxu0 0.0
    %1658 = vmatpush1.msra.mxu0 0.0
    %1659 = vmatprep.subr.mxu0 0.0
    %1660 = vmatpush1.msra.mxu0 0.0
    %1661 = vmatprep.subr.mxu0 0.0
    %1662 = vmatpush1.msra.mxu0 0.0
    %1663 = vmatprep.subr.mxu0 0.0
    %1664 = vmatpush1.msra.mxu0 0.0
    %1665 = vmatprep.subr.mxu0 0.0
    %1666 = vmatpush1.msra.mxu0 0.0
    %1667 = vmatprep.subr.mxu0 0.0
    %1668 = vmatpush1.msra.mxu0 0.0
    %1669 = vmatprep.subr.mxu0 0.0
    %1670 = vmatpush1.msra.mxu0 0.0
    %1671 = vmatprep.subr.mxu0 0.0
    %1672 = vmatpush1.msra.mxu0 0.0
    %1673 = vmatprep.subr.mxu0 %v1641
    %1674 = vmatpush1.msra.mxu0 %v1639
    %1675 = vmatprep.subr.mxu0 %v1624
    %1676 = vmatpush1.msra.mxu0 %v1623
    %1677 = vmatprep.subr.mxu0 0.0
    %1678 = vmatpush2.msra.mxu0 0.0
    %1679 = vmatprep.subr.mxu0 0.0
    %1680 = vmatpush2.msra.mxu0 0.0
    %1681 = vmatprep.subr.mxu0 0.0
    %1682 = vmatpush2.msra.mxu0 0.0
    %1683 = vmatprep.subr.mxu0 0.0
    %1684 = vmatpush2.msra.mxu0 0.0
    %1685 = vmatprep.subr.mxu0 0.0
    %1686 = vmatpush2.msra.mxu0 0.0
    %1687 = vmatprep.subr.mxu0 0.0
    %1688 = vmatpush2.msra.mxu0 0.0
    %1689 = vmatprep.subr.mxu0 0.0
    %1690 = vmatpush2.msra.mxu0 0.0
    %1691 = vmatprep.subr.mxu0 0.0
    %1692 = vmatpush2.msra.mxu0 0.0
    %1693 = vmatprep.subr.mxu0 0.0
    %1694 = vmatpush2.msra.mxu0 0.0
    %1695 = vmatprep.subr.mxu0 0.0
    %1696 = vmatpush2.msra.mxu0 0.0
    %1697 = vmatprep.subr.mxu0 0.0
    %1698 = vmatpush2.msra.mxu0 0.0
    %1699 = vmatprep.subr.mxu0 0.0
    %1700 = vmatpush2.msra.mxu0 0.0
    %1701 = vmatprep.subr.mxu0 0.0
    %1702 = vmatpush2.msra.mxu0 0.0
    %1703 = vmatprep.subr.mxu0 0.0
    %1704 = vmatpush2.msra.mxu0 0.0
    %1705 = vmatprep.subr.mxu0 0.0
    %1706 = vmatpush2.msra.mxu0 0.0
    %1707 = vmatprep.subr.mxu0 0.0
    %1708 = vmatpush2.msra.mxu0 0.0
    %1709 = vmatprep.mubr.f32.mxu0 0.0
    %1710 = vmatmul.mubr.f32.gmra.mxu0 %v1631
    %v1711 = vpop.f32.mrf.mxu0
    %v1712 = vadd.f32 0.0, %v1711
    %v1713 = vpop.f32.mrf.mxu0
    %v1714 = vadd.f32 0.0, %v1713
    %1715 = vmatprep.mubr.f32.mxu0 0.0
    %1716 = vmatmul.mubr.f32.gmra.mxu0 %v1634
    %v1717 = vpop.f32.mrf.mxu0
    %v1718 = vadd.f32 0.0, %v1717
    %v1719 = vpop.f32.mrf.mxu0
    %v1720 = vadd.f32 0.0, %v1719
    %1721 = vmatprep.mubr.f32.mxu0 0.0
    %1722 = vmatmul.mubr.f32.gmra.mxu0 %v1637
    %v1723 = vpop.f32.mrf.mxu0
    %v1724 = vadd.f32 0.0, %v1723
    %v1725 = vpop.f32.mrf.mxu0
    %v1726 = vadd.f32 0.0, %v1725
    %1727 = vdwg.mxu0
    %1728 = vmatprep.subr.mxu0 0.0
    %1729 = vmatpush1.msra.mxu0 0.0
    %1730 = vmatprep.subr.mxu0 0.0
    %1731 = vmatpush1.msra.mxu0 0.0
    %1732 = vmatprep.subr.mxu0 0.0
    %1733 = vmatpush1.msra.mxu0 0.0
    %1734 = vmatprep.subr.mxu0 0.0
    %1735 = vmatpush1.msra.mxu0 0.0
    %1736 = vmatprep.subr.mxu0 0.0
    %1737 = vmatpush1.msra.mxu0 0.0
    %1738 = vmatprep.subr.mxu0 0.0
    %1739 = vmatpush1.msra.mxu0 0.0
    %1740 = vmatprep.subr.mxu0 0.0
    %1741 = vmatpush1.msra.mxu0 0.0
    %1742 = vmatprep.subr.mxu0 0.0
    %1743 = vmatpush1.msra.mxu0 0.0
    %1744 = vmatprep.subr.mxu0 0.0
    %1745 = vmatpush1.msra.mxu0 0.0
    %1746 = vmatprep.subr.mxu0 0.0
    %1747 = vmatpush1.msra.mxu0 0.0
    %1748 = vmatprep.subr.mxu0 0.0
    %1749 = vmatpush1.msra.mxu0 0.0
    %1750 = vmatprep.subr.mxu0 0.0
    %1751 = vmatpush1.msra.mxu0 0.0
    %1752 = vmatprep.subr.mxu0 0.0
    %1753 = vmatpush1.msra.mxu0 0.0
    %1754 = vmatprep.subr.mxu0 0.0
    %1755 = vmatpush1.msra.mxu0 0.0
    %1756 = vmatprep.subr.mxu0 0.0
    %1757 = vmatpush1.msra.mxu0 %v1643
    %1758 = vmatprep.subr.mxu0 0.0
    %1759 = vmatpush1.msra.mxu0 %v1615
    %1760 = vmatprep.subr.mxu0 0.0
    %1761 = vmatpush2.msra.mxu0 0.0
    %1762 = vmatprep.subr.mxu0 0.0
    %1763 = vmatpush2.msra.mxu0 0.0
    %1764 = vmatprep.subr.mxu0 0.0
    %1765 = vmatpush2.msra.mxu0 0.0
    %1766 = vmatprep.subr.mxu0 0.0
    %1767 = vmatpush2.msra.mxu0 0.0
    %1768 = vmatprep.subr.mxu0 0.0
    %1769 = vmatpush2.msra.mxu0 0.0
    %1770 = vmatprep.subr.mxu0 0.0
    %1771 = vmatpush2.msra.mxu0 0.0
    %1772 = vmatprep.subr.mxu0 0.0
    %1773 = vmatpush2.msra.mxu0 0.0
    %1774 = vmatprep.subr.mxu0 0.0
    %1775 = vmatpush2.msra.mxu0 0.0
    %1776 = vmatprep.subr.mxu0 0.0
    %1777 = vmatpush2.msra.mxu0 0.0
    %1778 = vmatprep.subr.mxu0 0.0
    %1779 = vmatpush2.msra.mxu0 0.0
    %1780 = vmatprep.subr.mxu0 0.0
    %1781 = vmatpush2.msra.mxu0 0.0
    %1782 = vmatprep.subr.mxu0 0.0
    %1783 = vmatpush2.msra.mxu0 0.0
    %1784 = vmatprep.subr.mxu0 0.0
    %1785 = vmatpush2.msra.mxu0 0.0
    %1786 = vmatprep.subr.mxu0 0.0
    %1787 = vmatpush2.msra.mxu0 0.0
    %1788 = vmatprep.subr.mxu0 0.0
    %1789 = vmatpush2.msra.mxu0 0.0
    %1790 = vmatprep.subr.mxu0 0.0
    %1791 = vmatpush2.msra.mxu0 0.0
    %1792 = vmatprep.mubr.f32.mxu0 0.0
    %1793 = vmatmul.mubr.f32.gmra.mxu0 %v1631
    %v1794 = vpop.f32.mrf.mxu0
    %v1795 = vadd.f32 0.0, %v1794
    %v1796 = vpop.f32.mrf.mxu0
    %1797 = vmatprep.mubr.f32.mxu0 0.0
    %1798 = vmatmul.mubr.f32.gmra.mxu0 %v1634
    %v1799 = vpop.f32.mrf.mxu0
    %v1800 = vadd.f32 0.0, %v1799
    %v1801 = vpop.f32.mrf.mxu0
    %1802 = vmatprep.mubr.f32.mxu0 0.0
    %1803 = vmatmul.mubr.f32.gmra.mxu0 %v1637
    %v1804 = vpop.f32.mrf.mxu0
    %v1805 = vadd.f32 0.0, %v1804
    %v1806 = vpop.f32.mrf.mxu0
    %1807 = vdwg.mxu0
    %v1808 = vadd.f32 %v1597, %v1712
    %v1809 = vadd.f32 %v1598, %v1714
    %v1810 = vadd.f32 %v1599, %v1795
    %v1811 = vadd.f32 %v1600, %v1718
    %v1812 = vadd.f32 %v1601, %v1720
    %v1813 = vadd.f32 %v1602, %v1800
    %v1814 = vadd.f32 %v1603, %v1724
    %v1815 = vadd.f32 %v1604, %v1726
    %v1816 = vadd.f32 %v1605, %v1805
    %s1817 = scalar_lea.vmem %s3, 120
    %v1818 = vld [vmem:[%s1817] sm:$0xff]
    %v1819 = vld [vmem:[%s1817 + $0x8] sm:$0xff]
    %v1820 = vld [vmem:[%s1817 + $0x10] sm:$0xf]
    %1821 = vrot.lane.b32.xlu0 %v787, 116
    %v1822 = vpop.permute.xlu0 %1821
    %1823 = vrot.lane.b32.xlu0 %v788, 116
    %v1824 = vpop.permute.xlu0 %1823
    %1825 = vrot.lane.b32.xlu0 %v789, 116
    %v1826 = vpop.permute.xlu0 %1825
    %1827 = vrot.lane.b32.xlu0 %v790, 116
    %v1828 = vpop.permute.xlu0 %1827
    %1829 = vrot.lane.b32.xlu0 %v791, 116
    %v1830 = vpop.permute.xlu0 %1829
    %1831 = vrot.lane.b32.xlu0 %v792, 116
    %v1832 = vpop.permute.xlu0 %1831
    %vm1833 = vcmask 949248
    %v1834 = vsel %vm1833, %v1822, %v1824
    %v1835 = vsel %vm1833, %v1824, %v1826
    %v1836 = vsel %vm1833, %v1828, %v1830
    %v1837 = vsel %vm1833, %v1830, %v1832
    %v1842 = vsel %vm826, %v1818, 0
    %v1845 = vsel %vm826, %v1819, 0
    %v1848 = vsel %vm826, %v1820, 0
    %v1850 = vsel %vm836, %v1836, 0
    %v1852 = vsel %vm836, %v1837, 0
    %v1854 = vsel %vm836, %v1832, 0
    %1856 = vmatprep.subr.mxu0 0.0
    %1857 = vmatpush1.msra.mxu0 0.0
    %1858 = vmatprep.subr.mxu0 0.0
    %1859 = vmatpush1.msra.mxu0 0.0
    %1860 = vmatprep.subr.mxu0 0.0
    %1861 = vmatpush1.msra.mxu0 0.0
    %1862 = vmatprep.subr.mxu0 0.0
    %1863 = vmatpush1.msra.mxu0 0.0
    %1864 = vmatprep.subr.mxu0 0.0
    %1865 = vmatpush1.msra.mxu0 0.0
    %1866 = vmatprep.subr.mxu0 0.0
    %1867 = vmatpush1.msra.mxu0 0.0
    %1868 = vmatprep.subr.mxu0 0.0
    %1869 = vmatpush1.msra.mxu0 0.0
    %1870 = vmatprep.subr.mxu0 0.0
    %1871 = vmatpush1.msra.mxu0 0.0
    %1872 = vmatprep.subr.mxu0 0.0
    %1873 = vmatpush1.msra.mxu0 0.0
    %1874 = vmatprep.subr.mxu0 0.0
    %1875 = vmatpush1.msra.mxu0 0.0
    %1876 = vmatprep.subr.mxu0 0.0
    %1877 = vmatpush1.msra.mxu0 0.0
    %1878 = vmatprep.subr.mxu0 0.0
    %1879 = vmatpush1.msra.mxu0 0.0
    %1880 = vmatprep.subr.mxu0 0.0
    %1881 = vmatpush1.msra.mxu0 0.0
    %1882 = vmatprep.subr.mxu0 0.0
    %1883 = vmatpush1.msra.mxu0 0.0
    %1884 = vmatprep.subr.mxu0 %v1852
    %1885 = vmatpush1.msra.mxu0 %v1850
    %1886 = vmatprep.subr.mxu0 %v1835
    %1887 = vmatpush1.msra.mxu0 %v1834
    %1888 = vmatprep.subr.mxu0 0.0
    %1889 = vmatpush2.msra.mxu0 0.0
    %1890 = vmatprep.subr.mxu0 0.0
    %1891 = vmatpush2.msra.mxu0 0.0
    %1892 = vmatprep.subr.mxu0 0.0
    %1893 = vmatpush2.msra.mxu0 0.0
    %1894 = vmatprep.subr.mxu0 0.0
    %1895 = vmatpush2.msra.mxu0 0.0
    %1896 = vmatprep.subr.mxu0 0.0
    %1897 = vmatpush2.msra.mxu0 0.0
    %1898 = vmatprep.subr.mxu0 0.0
    %1899 = vmatpush2.msra.mxu0 0.0
    %1900 = vmatprep.subr.mxu0 0.0
    %1901 = vmatpush2.msra.mxu0 0.0
    %1902 = vmatprep.subr.mxu0 0.0
    %1903 = vmatpush2.msra.mxu0 0.0
    %1904 = vmatprep.subr.mxu0 0.0
    %1905 = vmatpush2.msra.mxu0 0.0
    %1906 = vmatprep.subr.mxu0 0.0
    %1907 = vmatpush2.msra.mxu0 0.0
    %1908 = vmatprep.subr.mxu0 0.0
    %1909 = vmatpush2.msra.mxu0 0.0
    %1910 = vmatprep.subr.mxu0 0.0
    %1911 = vmatpush2.msra.mxu0 0.0
    %1912 = vmatprep.subr.mxu0 0.0
    %1913 = vmatpush2.msra.mxu0 0.0
    %1914 = vmatprep.subr.mxu0 0.0
    %1915 = vmatpush2.msra.mxu0 0.0
    %1916 = vmatprep.subr.mxu0 0.0
    %1917 = vmatpush2.msra.mxu0 0.0
    %1918 = vmatprep.subr.mxu0 0.0
    %1919 = vmatpush2.msra.mxu0 0.0
    %1920 = vmatprep.mubr.f32.mxu0 0.0
    %1921 = vmatmul.mubr.f32.gmra.mxu0 %v1842
    %v1922 = vpop.f32.mrf.mxu0
    %v1923 = vadd.f32 0.0, %v1922
    %v1924 = vpop.f32.mrf.mxu0
    %v1925 = vadd.f32 0.0, %v1924
    %1926 = vmatprep.mubr.f32.mxu0 0.0
    %1927 = vmatmul.mubr.f32.gmra.mxu0 %v1845
    %v1928 = vpop.f32.mrf.mxu0
    %v1929 = vadd.f32 0.0, %v1928
    %v1930 = vpop.f32.mrf.mxu0
    %v1931 = vadd.f32 0.0, %v1930
    %1932 = vmatprep.mubr.f32.mxu0 0.0
    %1933 = vmatmul.mubr.f32.gmra.mxu0 %v1848
    %v1934 = vpop.f32.mrf.mxu0
    %v1935 = vadd.f32 0.0, %v1934
    %v1936 = vpop.f32.mrf.mxu0
    %v1937 = vadd.f32 0.0, %v1936
    %1938 = vdwg.mxu0
    %1939 = vmatprep.subr.mxu0 0.0
    %1940 = vmatpush1.msra.mxu0 0.0
    %1941 = vmatprep.subr.mxu0 0.0
    %1942 = vmatpush1.msra.mxu0 0.0
    %1943 = vmatprep.subr.mxu0 0.0
    %1944 = vmatpush1.msra.mxu0 0.0
    %1945 = vmatprep.subr.mxu0 0.0
    %1946 = vmatpush1.msra.mxu0 0.0
    %1947 = vmatprep.subr.mxu0 0.0
    %1948 = vmatpush1.msra.mxu0 0.0
    %1949 = vmatprep.subr.mxu0 0.0
    %1950 = vmatpush1.msra.mxu0 0.0
    %1951 = vmatprep.subr.mxu0 0.0
    %1952 = vmatpush1.msra.mxu0 0.0
    %1953 = vmatprep.subr.mxu0 0.0
    %1954 = vmatpush1.msra.mxu0 0.0
    %1955 = vmatprep.subr.mxu0 0.0
    %1956 = vmatpush1.msra.mxu0 0.0
    %1957 = vmatprep.subr.mxu0 0.0
    %1958 = vmatpush1.msra.mxu0 0.0
    %1959 = vmatprep.subr.mxu0 0.0
    %1960 = vmatpush1.msra.mxu0 0.0
    %1961 = vmatprep.subr.mxu0 0.0
    %1962 = vmatpush1.msra.mxu0 0.0
    %1963 = vmatprep.subr.mxu0 0.0
    %1964 = vmatpush1.msra.mxu0 0.0
    %1965 = vmatprep.subr.mxu0 0.0
    %1966 = vmatpush1.msra.mxu0 0.0
    %1967 = vmatprep.subr.mxu0 0.0
    %1968 = vmatpush1.msra.mxu0 %v1854
    %1969 = vmatprep.subr.mxu0 0.0
    %1970 = vmatpush1.msra.mxu0 %v1826
    %1971 = vmatprep.subr.mxu0 0.0
    %1972 = vmatpush2.msra.mxu0 0.0
    %1973 = vmatprep.subr.mxu0 0.0
    %1974 = vmatpush2.msra.mxu0 0.0
    %1975 = vmatprep.subr.mxu0 0.0
    %1976 = vmatpush2.msra.mxu0 0.0
    %1977 = vmatprep.subr.mxu0 0.0
    %1978 = vmatpush2.msra.mxu0 0.0
    %1979 = vmatprep.subr.mxu0 0.0
    %1980 = vmatpush2.msra.mxu0 0.0
    %1981 = vmatprep.subr.mxu0 0.0
    %1982 = vmatpush2.msra.mxu0 0.0
    %1983 = vmatprep.subr.mxu0 0.0
    %1984 = vmatpush2.msra.mxu0 0.0
    %1985 = vmatprep.subr.mxu0 0.0
    %1986 = vmatpush2.msra.mxu0 0.0
    %1987 = vmatprep.subr.mxu0 0.0
    %1988 = vmatpush2.msra.mxu0 0.0
    %1989 = vmatprep.subr.mxu0 0.0
    %1990 = vmatpush2.msra.mxu0 0.0
    %1991 = vmatprep.subr.mxu0 0.0
    %1992 = vmatpush2.msra.mxu0 0.0
    %1993 = vmatprep.subr.mxu0 0.0
    %1994 = vmatpush2.msra.mxu0 0.0
    %1995 = vmatprep.subr.mxu0 0.0
    %1996 = vmatpush2.msra.mxu0 0.0
    %1997 = vmatprep.subr.mxu0 0.0
    %1998 = vmatpush2.msra.mxu0 0.0
    %1999 = vmatprep.subr.mxu0 0.0
    %2000 = vmatpush2.msra.mxu0 0.0
    %2001 = vmatprep.subr.mxu0 0.0
    %2002 = vmatpush2.msra.mxu0 0.0
    %2003 = vmatprep.mubr.f32.mxu0 0.0
    %2004 = vmatmul.mubr.f32.gmra.mxu0 %v1842
    %v2005 = vpop.f32.mrf.mxu0
    %v2006 = vadd.f32 0.0, %v2005
    %v2007 = vpop.f32.mrf.mxu0
    %2008 = vmatprep.mubr.f32.mxu0 0.0
    %2009 = vmatmul.mubr.f32.gmra.mxu0 %v1845
    %v2010 = vpop.f32.mrf.mxu0
    %v2011 = vadd.f32 0.0, %v2010
    %v2012 = vpop.f32.mrf.mxu0
    %2013 = vmatprep.mubr.f32.mxu0 0.0
    %2014 = vmatmul.mubr.f32.gmra.mxu0 %v1848
    %v2015 = vpop.f32.mrf.mxu0
    %v2016 = vadd.f32 0.0, %v2015
    %v2017 = vpop.f32.mrf.mxu0
    %2018 = vdwg.mxu0
    %v2019 = vadd.f32 %v1808, %v1923
    %v2020 = vadd.f32 %v1809, %v1925
    %v2021 = vadd.f32 %v1810, %v2006
    %v2022 = vadd.f32 %v1811, %v1929
    %v2023 = vadd.f32 %v1812, %v1931
    %v2024 = vadd.f32 %v1813, %v2011
    %v2025 = vadd.f32 %v1814, %v1935
    %v2026 = vadd.f32 %v1815, %v1937
    %v2027 = vadd.f32 %v1816, %v2016
    %s2028 = scalar_lea.vmem %s3, 144
    %v2029 = vld [vmem:[%s2028] sm:$0xff]
    %v2030 = vld [vmem:[%s2028 + $0x8] sm:$0xff]
    %v2031 = vld [vmem:[%s2028 + $0x10] sm:$0xf]
    %2032 = vrot.lane.b32.xlu0 %v787, 115
    %v2033 = vpop.permute.xlu0 %2032
    %2034 = vrot.lane.b32.xlu0 %v788, 115
    %v2035 = vpop.permute.xlu0 %2034
    %2036 = vrot.lane.b32.xlu0 %v789, 115
    %v2037 = vpop.permute.xlu0 %2036
    %2038 = vrot.lane.b32.xlu0 %v790, 115
    %v2039 = vpop.permute.xlu0 %2038
    %2040 = vrot.lane.b32.xlu0 %v791, 115
    %v2041 = vpop.permute.xlu0 %2040
    %2042 = vrot.lane.b32.xlu0 %v792, 115
    %v2043 = vpop.permute.xlu0 %2042
    %vm2044 = vcmask 941056
    %v2045 = vsel %vm2044, %v2033, %v2035
    %v2046 = vsel %vm2044, %v2035, %v2037
    %v2047 = vsel %vm2044, %v2039, %v2041
    %v2048 = vsel %vm2044, %v2041, %v2043
    %v2053 = vsel %vm826, %v2029, 0
    %v2056 = vsel %vm826, %v2030, 0
    %v2059 = vsel %vm826, %v2031, 0
    %v2061 = vsel %vm836, %v2047, 0
    %v2063 = vsel %vm836, %v2048, 0
    %v2065 = vsel %vm836, %v2043, 0
    %2067 = vmatprep.subr.mxu0 0.0
    %2068 = vmatpush1.msra.mxu0 0.0
    %2069 = vmatprep.subr.mxu0 0.0
    %2070 = vmatpush1.msra.mxu0 0.0
    %2071 = vmatprep.subr.mxu0 0.0
    %2072 = vmatpush1.msra.mxu0 0.0
    %2073 = vmatprep.subr.mxu0 0.0
    %2074 = vmatpush1.msra.mxu0 0.0
    %2075 = vmatprep.subr.mxu0 0.0
    %2076 = vmatpush1.msra.mxu0 0.0
    %2077 = vmatprep.subr.mxu0 0.0
    %2078 = vmatpush1.msra.mxu0 0.0
    %2079 = vmatprep.subr.mxu0 0.0
    %2080 = vmatpush1.msra.mxu0 0.0
    %2081 = vmatprep.subr.mxu0 0.0
    %2082 = vmatpush1.msra.mxu0 0.0
    %2083 = vmatprep.subr.mxu0 0.0
    %2084 = vmatpush1.msra.mxu0 0.0
    %2085 = vmatprep.subr.mxu0 0.0
    %2086 = vmatpush1.msra.mxu0 0.0
    %2087 = vmatprep.subr.mxu0 0.0
    %2088 = vmatpush1.msra.mxu0 0.0
    %2089 = vmatprep.subr.mxu0 0.0
    %2090 = vmatpush1.msra.mxu0 0.0
    %2091 = vmatprep.subr.mxu0 0.0
    %2092 = vmatpush1.msra.mxu0 0.0
    %2093 = vmatprep.subr.mxu0 0.0
    %2094 = vmatpush1.msra.mxu0 0.0
    %2095 = vmatprep.subr.mxu0 %v2063
    %2096 = vmatpush1.msra.mxu0 %v2061
    %2097 = vmatprep.subr.mxu0 %v2046
    %2098 = vmatpush1.msra.mxu0 %v2045
    %2099 = vmatprep.subr.mxu0 0.0
    %2100 = vmatpush2.msra.mxu0 0.0
    %2101 = vmatprep.subr.mxu0 0.0
    %2102 = vmatpush2.msra.mxu0 0.0
    %2103 = vmatprep.subr.mxu0 0.0
    %2104 = vmatpush2.msra.mxu0 0.0
    %2105 = vmatprep.subr.mxu0 0.0
    %2106 = vmatpush2.msra.mxu0 0.0
    %2107 = vmatprep.subr.mxu0 0.0
    %2108 = vmatpush2.msra.mxu0 0.0
    %2109 = vmatprep.subr.mxu0 0.0
    %2110 = vmatpush2.msra.mxu0 0.0
    %2111 = vmatprep.subr.mxu0 0.0
    %2112 = vmatpush2.msra.mxu0 0.0
    %2113 = vmatprep.subr.mxu0 0.0
    %2114 = vmatpush2.msra.mxu0 0.0
    %2115 = vmatprep.subr.mxu0 0.0
    %2116 = vmatpush2.msra.mxu0 0.0
    %2117 = vmatprep.subr.mxu0 0.0
    %2118 = vmatpush2.msra.mxu0 0.0
    %2119 = vmatprep.subr.mxu0 0.0
    %2120 = vmatpush2.msra.mxu0 0.0
    %2121 = vmatprep.subr.mxu0 0.0
    %2122 = vmatpush2.msra.mxu0 0.0
    %2123 = vmatprep.subr.mxu0 0.0
    %2124 = vmatpush2.msra.mxu0 0.0
    %2125 = vmatprep.subr.mxu0 0.0
    %2126 = vmatpush2.msra.mxu0 0.0
    %2127 = vmatprep.subr.mxu0 0.0
    %2128 = vmatpush2.msra.mxu0 0.0
    %2129 = vmatprep.subr.mxu0 0.0
    %2130 = vmatpush2.msra.mxu0 0.0
    %2131 = vmatprep.mubr.f32.mxu0 0.0
    %2132 = vmatmul.mubr.f32.gmra.mxu0 %v2053
    %v2133 = vpop.f32.mrf.mxu0
    %v2134 = vadd.f32 0.0, %v2133
    %v2135 = vpop.f32.mrf.mxu0
    %v2136 = vadd.f32 0.0, %v2135
    %2137 = vmatprep.mubr.f32.mxu0 0.0
    %2138 = vmatmul.mubr.f32.gmra.mxu0 %v2056
    %v2139 = vpop.f32.mrf.mxu0
    %v2140 = vadd.f32 0.0, %v2139
    %v2141 = vpop.f32.mrf.mxu0
    %v2142 = vadd.f32 0.0, %v2141
    %2143 = vmatprep.mubr.f32.mxu0 0.0
    %2144 = vmatmul.mubr.f32.gmra.mxu0 %v2059
    %v2145 = vpop.f32.mrf.mxu0
    %v2146 = vadd.f32 0.0, %v2145
    %v2147 = vpop.f32.mrf.mxu0
    %v2148 = vadd.f32 0.0, %v2147
    %2149 = vdwg.mxu0
    %2150 = vmatprep.subr.mxu0 0.0
    %2151 = vmatpush1.msra.mxu0 0.0
    %2152 = vmatprep.subr.mxu0 0.0
    %2153 = vmatpush1.msra.mxu0 0.0
    %2154 = vmatprep.subr.mxu0 0.0
    %2155 = vmatpush1.msra.mxu0 0.0
    %2156 = vmatprep.subr.mxu0 0.0
    %2157 = vmatpush1.msra.mxu0 0.0
    %2158 = vmatprep.subr.mxu0 0.0
    %2159 = vmatpush1.msra.mxu0 0.0
    %2160 = vmatprep.subr.mxu0 0.0
    %2161 = vmatpush1.msra.mxu0 0.0
    %2162 = vmatprep.subr.mxu0 0.0
    %2163 = vmatpush1.msra.mxu0 0.0
    %2164 = vmatprep.subr.mxu0 0.0
    %2165 = vmatpush1.msra.mxu0 0.0
    %2166 = vmatprep.subr.mxu0 0.0
    %2167 = vmatpush1.msra.mxu0 0.0
    %2168 = vmatprep.subr.mxu0 0.0
    %2169 = vmatpush1.msra.mxu0 0.0
    %2170 = vmatprep.subr.mxu0 0.0
    %2171 = vmatpush1.msra.mxu0 0.0
    %2172 = vmatprep.subr.mxu0 0.0
    %2173 = vmatpush1.msra.mxu0 0.0
    %2174 = vmatprep.subr.mxu0 0.0
    %2175 = vmatpush1.msra.mxu0 0.0
    %2176 = vmatprep.subr.mxu0 0.0
    %2177 = vmatpush1.msra.mxu0 0.0
    %2178 = vmatprep.subr.mxu0 0.0
    %2179 = vmatpush1.msra.mxu0 %v2065
    %2180 = vmatprep.subr.mxu0 0.0
    %2181 = vmatpush1.msra.mxu0 %v2037
    %2182 = vmatprep.subr.mxu0 0.0
    %2183 = vmatpush2.msra.mxu0 0.0
    %2184 = vmatprep.subr.mxu0 0.0
    %2185 = vmatpush2.msra.mxu0 0.0
    %2186 = vmatprep.subr.mxu0 0.0
    %2187 = vmatpush2.msra.mxu0 0.0
    %2188 = vmatprep.subr.mxu0 0.0
    %2189 = vmatpush2.msra.mxu0 0.0
    %2190 = vmatprep.subr.mxu0 0.0
    %2191 = vmatpush2.msra.mxu0 0.0
    %2192 = vmatprep.subr.mxu0 0.0
    %2193 = vmatpush2.msra.mxu0 0.0
    %2194 = vmatprep.subr.mxu0 0.0
    %2195 = vmatpush2.msra.mxu0 0.0
    %2196 = vmatprep.subr.mxu0 0.0
    %2197 = vmatpush2.msra.mxu0 0.0
    %2198 = vmatprep.subr.mxu0 0.0
    %2199 = vmatpush2.msra.mxu0 0.0
    %2200 = vmatprep.subr.mxu0 0.0
    %2201 = vmatpush2.msra.mxu0 0.0
    %2202 = vmatprep.subr.mxu0 0.0
    %2203 = vmatpush2.msra.mxu0 0.0
    %2204 = vmatprep.subr.mxu0 0.0
    %2205 = vmatpush2.msra.mxu0 0.0
    %2206 = vmatprep.subr.mxu0 0.0
    %2207 = vmatpush2.msra.mxu0 0.0
    %2208 = vmatprep.subr.mxu0 0.0
    %2209 = vmatpush2.msra.mxu0 0.0
    %2210 = vmatprep.subr.mxu0 0.0
    %2211 = vmatpush2.msra.mxu0 0.0
    %2212 = vmatprep.subr.mxu0 0.0
    %2213 = vmatpush2.msra.mxu0 0.0
    %2214 = vmatprep.mubr.f32.mxu0 0.0
    %2215 = vmatmul.mubr.f32.gmra.mxu0 %v2053
    %v2216 = vpop.f32.mrf.mxu0
    %v2217 = vadd.f32 0.0, %v2216
    %v2218 = vpop.f32.mrf.mxu0
    %2219 = vmatprep.mubr.f32.mxu0 0.0
    %2220 = vmatmul.mubr.f32.gmra.mxu0 %v2056
    %v2221 = vpop.f32.mrf.mxu0
    %v2222 = vadd.f32 0.0, %v2221
    %v2223 = vpop.f32.mrf.mxu0
    %2224 = vmatprep.mubr.f32.mxu0 0.0
    %2225 = vmatmul.mubr.f32.gmra.mxu0 %v2059
    %v2226 = vpop.f32.mrf.mxu0
    %v2227 = vadd.f32 0.0, %v2226
    %v2228 = vpop.f32.mrf.mxu0
    %2229 = vdwg.mxu0
    %v2230 = vadd.f32 %v2019, %v2134
    %v2231 = vadd.f32 %v2020, %v2136
    %v2232 = vadd.f32 %v2021, %v2217
    %v2233 = vadd.f32 %v2022, %v2140
    %v2234 = vadd.f32 %v2023, %v2142
    %v2235 = vadd.f32 %v2024, %v2222
    %v2236 = vadd.f32 %v2025, %v2146
    %v2237 = vadd.f32 %v2026, %v2148
    %v2238 = vadd.f32 %v2027, %v2227
    %s2239 = scalar_lea.vmem %s3, 168
    %v2240 = vld [vmem:[%s2239] sm:$0xff]
    %v2241 = vld [vmem:[%s2239 + $0x8] sm:$0xff]
    %v2242 = vld [vmem:[%s2239 + $0x10] sm:$0xf]
    %2243 = vrot.lane.b32.xlu0 %v787, 114
    %v2244 = vpop.permute.xlu0 %2243
    %2245 = vrot.lane.b32.xlu0 %v788, 114
    %v2246 = vpop.permute.xlu0 %2245
    %2247 = vrot.lane.b32.xlu0 %v789, 114
    %v2248 = vpop.permute.xlu0 %2247
    %2249 = vrot.lane.b32.xlu0 %v790, 114
    %v2250 = vpop.permute.xlu0 %2249
    %2251 = vrot.lane.b32.xlu0 %v791, 114
    %v2252 = vpop.permute.xlu0 %2251
    %2253 = vrot.lane.b32.xlu0 %v792, 114
    %v2254 = vpop.permute.xlu0 %2253
    %vm2255 = vcmask 932864
    %v2256 = vsel %vm2255, %v2244, %v2246
    %v2257 = vsel %vm2255, %v2246, %v2248
    %v2258 = vsel %vm2255, %v2250, %v2252
    %v2259 = vsel %vm2255, %v2252, %v2254
    %v2264 = vsel %vm826, %v2240, 0
    %v2267 = vsel %vm826, %v2241, 0
    %v2270 = vsel %vm826, %v2242, 0
    %v2272 = vsel %vm836, %v2258, 0
    %v2274 = vsel %vm836, %v2259, 0
    %v2276 = vsel %vm836, %v2254, 0
    %2278 = vmatprep.subr.mxu0 0.0
    %2279 = vmatpush1.msra.mxu0 0.0
    %2280 = vmatprep.subr.mxu0 0.0
    %2281 = vmatpush1.msra.mxu0 0.0
    %2282 = vmatprep.subr.mxu0 0.0
    %2283 = vmatpush1.msra.mxu0 0.0
    %2284 = vmatprep.subr.mxu0 0.0
    %2285 = vmatpush1.msra.mxu0 0.0
    %2286 = vmatprep.subr.mxu0 0.0
    %2287 = vmatpush1.msra.mxu0 0.0
    %2288 = vmatprep.subr.mxu0 0.0
    %2289 = vmatpush1.msra.mxu0 0.0
    %2290 = vmatprep.subr.mxu0 0.0
    %2291 = vmatpush1.msra.mxu0 0.0
    %2292 = vmatprep.subr.mxu0 0.0
    %2293 = vmatpush1.msra.mxu0 0.0
    %2294 = vmatprep.subr.mxu0 0.0
    %2295 = vmatpush1.msra.mxu0 0.0
    %2296 = vmatprep.subr.mxu0 0.0
    %2297 = vmatpush1.msra.mxu0 0.0
    %2298 = vmatprep.subr.mxu0 0.0
    %2299 = vmatpush1.msra.mxu0 0.0
    %2300 = vmatprep.subr.mxu0 0.0
    %2301 = vmatpush1.msra.mxu0 0.0
    %2302 = vmatprep.subr.mxu0 0.0
    %2303 = vmatpush1.msra.mxu0 0.0
    %2304 = vmatprep.subr.mxu0 0.0
    %2305 = vmatpush1.msra.mxu0 0.0
    %2306 = vmatprep.subr.mxu0 %v2274
    %2307 = vmatpush1.msra.mxu0 %v2272
    %2308 = vmatprep.subr.mxu0 %v2257
    %2309 = vmatpush1.msra.mxu0 %v2256
    %2310 = vmatprep.subr.mxu0 0.0
    %2311 = vmatpush2.msra.mxu0 0.0
    %2312 = vmatprep.subr.mxu0 0.0
    %2313 = vmatpush2.msra.mxu0 0.0
    %2314 = vmatprep.subr.mxu0 0.0
    %2315 = vmatpush2.msra.mxu0 0.0
    %2316 = vmatprep.subr.mxu0 0.0
    %2317 = vmatpush2.msra.mxu0 0.0
    %2318 = vmatprep.subr.mxu0 0.0
    %2319 = vmatpush2.msra.mxu0 0.0
    %2320 = vmatprep.subr.mxu0 0.0
    %2321 = vmatpush2.msra.mxu0 0.0
    %2322 = vmatprep.subr.mxu0 0.0
    %2323 = vmatpush2.msra.mxu0 0.0
    %2324 = vmatprep.subr.mxu0 0.0
    %2325 = vmatpush2.msra.mxu0 0.0
    %2326 = vmatprep.subr.mxu0 0.0
    %2327 = vmatpush2.msra.mxu0 0.0
    %2328 = vmatprep.subr.mxu0 0.0
    %2329 = vmatpush2.msra.mxu0 0.0
    %2330 = vmatprep.subr.mxu0 0.0
    %2331 = vmatpush2.msra.mxu0 0.0
    %2332 = vmatprep.subr.mxu0 0.0
    %2333 = vmatpush2.msra.mxu0 0.0
    %2334 = vmatprep.subr.mxu0 0.0
    %2335 = vmatpush2.msra.mxu0 0.0
    %2336 = vmatprep.subr.mxu0 0.0
    %2337 = vmatpush2.msra.mxu0 0.0
    %2338 = vmatprep.subr.mxu0 0.0
    %2339 = vmatpush2.msra.mxu0 0.0
    %2340 = vmatprep.subr.mxu0 0.0
    %2341 = vmatpush2.msra.mxu0 0.0
    %2342 = vmatprep.mubr.f32.mxu0 0.0
    %2343 = vmatmul.mubr.f32.gmra.mxu0 %v2264
    %v2344 = vpop.f32.mrf.mxu0
    %v2345 = vadd.f32 0.0, %v2344
    %v2346 = vpop.f32.mrf.mxu0
    %v2347 = vadd.f32 0.0, %v2346
    %2348 = vmatprep.mubr.f32.mxu0 0.0
    %2349 = vmatmul.mubr.f32.gmra.mxu0 %v2267
    %v2350 = vpop.f32.mrf.mxu0
    %v2351 = vadd.f32 0.0, %v2350
    %v2352 = vpop.f32.mrf.mxu0
    %v2353 = vadd.f32 0.0, %v2352
    %2354 = vmatprep.mubr.f32.mxu0 0.0
    %2355 = vmatmul.mubr.f32.gmra.mxu0 %v2270
    %v2356 = vpop.f32.mrf.mxu0
    %v2357 = vadd.f32 0.0, %v2356
    %v2358 = vpop.f32.mrf.mxu0
    %v2359 = vadd.f32 0.0, %v2358
    %2360 = vdwg.mxu0
    %2361 = vmatprep.subr.mxu0 0.0
    %2362 = vmatpush1.msra.mxu0 0.0
    %2363 = vmatprep.subr.mxu0 0.0
    %2364 = vmatpush1.msra.mxu0 0.0
    %2365 = vmatprep.subr.mxu0 0.0
    %2366 = vmatpush1.msra.mxu0 0.0
    %2367 = vmatprep.subr.mxu0 0.0
    %2368 = vmatpush1.msra.mxu0 0.0
    %2369 = vmatprep.subr.mxu0 0.0
    %2370 = vmatpush1.msra.mxu0 0.0
    %2371 = vmatprep.subr.mxu0 0.0
    %2372 = vmatpush1.msra.mxu0 0.0
    %2373 = vmatprep.subr.mxu0 0.0
    %2374 = vmatpush1.msra.mxu0 0.0
    %2375 = vmatprep.subr.mxu0 0.0
    %2376 = vmatpush1.msra.mxu0 0.0
    %2377 = vmatprep.subr.mxu0 0.0
    %2378 = vmatpush1.msra.mxu0 0.0
    %2379 = vmatprep.subr.mxu0 0.0
    %2380 = vmatpush1.msra.mxu0 0.0
    %2381 = vmatprep.subr.mxu0 0.0
    %2382 = vmatpush1.msra.mxu0 0.0
    %2383 = vmatprep.subr.mxu0 0.0
    %2384 = vmatpush1.msra.mxu0 0.0
    %2385 = vmatprep.subr.mxu0 0.0
    %2386 = vmatpush1.msra.mxu0 0.0
    %2387 = vmatprep.subr.mxu0 0.0
    %2388 = vmatpush1.msra.mxu0 0.0
    %2389 = vmatprep.subr.mxu0 0.0
    %2390 = vmatpush1.msra.mxu0 %v2276
    %2391 = vmatprep.subr.mxu0 0.0
    %2392 = vmatpush1.msra.mxu0 %v2248
    %2393 = vmatprep.subr.mxu0 0.0
    %2394 = vmatpush2.msra.mxu0 0.0
    %2395 = vmatprep.subr.mxu0 0.0
    %2396 = vmatpush2.msra.mxu0 0.0
    %2397 = vmatprep.subr.mxu0 0.0
    %2398 = vmatpush2.msra.mxu0 0.0
    %2399 = vmatprep.subr.mxu0 0.0
    %2400 = vmatpush2.msra.mxu0 0.0
    %2401 = vmatprep.subr.mxu0 0.0
    %2402 = vmatpush2.msra.mxu0 0.0
    %2403 = vmatprep.subr.mxu0 0.0
    %2404 = vmatpush2.msra.mxu0 0.0
    %2405 = vmatprep.subr.mxu0 0.0
    %2406 = vmatpush2.msra.mxu0 0.0
    %2407 = vmatprep.subr.mxu0 0.0
    %2408 = vmatpush2.msra.mxu0 0.0
    %2409 = vmatprep.subr.mxu0 0.0
    %2410 = vmatpush2.msra.mxu0 0.0
    %2411 = vmatprep.subr.mxu0 0.0
    %2412 = vmatpush2.msra.mxu0 0.0
    %2413 = vmatprep.subr.mxu0 0.0
    %2414 = vmatpush2.msra.mxu0 0.0
    %2415 = vmatprep.subr.mxu0 0.0
    %2416 = vmatpush2.msra.mxu0 0.0
    %2417 = vmatprep.subr.mxu0 0.0
    %2418 = vmatpush2.msra.mxu0 0.0
    %2419 = vmatprep.subr.mxu0 0.0
    %2420 = vmatpush2.msra.mxu0 0.0
    %2421 = vmatprep.subr.mxu0 0.0
    %2422 = vmatpush2.msra.mxu0 0.0
    %2423 = vmatprep.subr.mxu0 0.0
    %2424 = vmatpush2.msra.mxu0 0.0
    %2425 = vmatprep.mubr.f32.mxu0 0.0
    %2426 = vmatmul.mubr.f32.gmra.mxu0 %v2264
    %v2427 = vpop.f32.mrf.mxu0
    %v2428 = vadd.f32 0.0, %v2427
    %v2429 = vpop.f32.mrf.mxu0
    %2430 = vmatprep.mubr.f32.mxu0 0.0
    %2431 = vmatmul.mubr.f32.gmra.mxu0 %v2267
    %v2432 = vpop.f32.mrf.mxu0
    %v2433 = vadd.f32 0.0, %v2432
    %v2434 = vpop.f32.mrf.mxu0
    %2435 = vmatprep.mubr.f32.mxu0 0.0
    %2436 = vmatmul.mubr.f32.gmra.mxu0 %v2270
    %v2437 = vpop.f32.mrf.mxu0
    %v2438 = vadd.f32 0.0, %v2437
    %v2439 = vpop.f32.mrf.mxu0
    %2440 = vdwg.mxu0
    %v2441 = vadd.f32 %v2230, %v2345
    %v2442 = vadd.f32 %v2231, %v2347
    %v2443 = vadd.f32 %v2232, %v2428
    %v2444 = vadd.f32 %v2233, %v2351
    %v2445 = vadd.f32 %v2234, %v2353
    %v2446 = vadd.f32 %v2235, %v2433
    %v2447 = vadd.f32 %v2236, %v2357
    %v2448 = vadd.f32 %v2237, %v2359
    %v2449 = vadd.f32 %v2238, %v2438
    %s2450 = scalar_lea.vmem %s3, 192
    %v2451 = vld [vmem:[%s2450] sm:$0xff]
    %v2452 = vld [vmem:[%s2450 + $0x8] sm:$0xff]
    %v2453 = vld [vmem:[%s2450 + $0x10] sm:$0xf]
    %2454 = vrot.lane.b32.xlu0 %v787, 113
    %v2455 = vpop.permute.xlu0 %2454
    %2456 = vrot.lane.b32.xlu0 %v788, 113
    %v2457 = vpop.permute.xlu0 %2456
    %2458 = vrot.lane.b32.xlu0 %v789, 113
    %v2459 = vpop.permute.xlu0 %2458
    %2460 = vrot.lane.b32.xlu0 %v790, 113
    %v2461 = vpop.permute.xlu0 %2460
    %2462 = vrot.lane.b32.xlu0 %v791, 113
    %v2463 = vpop.permute.xlu0 %2462
    %2464 = vrot.lane.b32.xlu0 %v792, 113
    %v2465 = vpop.permute.xlu0 %2464
    %vm2466 = vcmask 924672
    %v2467 = vsel %vm2466, %v2455, %v2457
    %v2468 = vsel %vm2466, %v2457, %v2459
    %v2469 = vsel %vm2466, %v2461, %v2463
    %v2470 = vsel %vm2466, %v2463, %v2465
    %v2475 = vsel %vm826, %v2451, 0
    %v2478 = vsel %vm826, %v2452, 0
    %v2481 = vsel %vm826, %v2453, 0
    %v2483 = vsel %vm836, %v2469, 0
    %v2485 = vsel %vm836, %v2470, 0
    %v2487 = vsel %vm836, %v2465, 0
    %2489 = vmatprep.subr.mxu0 0.0
    %2490 = vmatpush1.msra.mxu0 0.0
    %2491 = vmatprep.subr.mxu0 0.0
    %2492 = vmatpush1.msra.mxu0 0.0
    %2493 = vmatprep.subr.mxu0 0.0
    %2494 = vmatpush1.msra.mxu0 0.0
    %2495 = vmatprep.subr.mxu0 0.0
    %2496 = vmatpush1.msra.mxu0 0.0
    %2497 = vmatprep.subr.mxu0 0.0
    %2498 = vmatpush1.msra.mxu0 0.0
    %2499 = vmatprep.subr.mxu0 0.0
    %2500 = vmatpush1.msra.mxu0 0.0
    %2501 = vmatprep.subr.mxu0 0.0
    %2502 = vmatpush1.msra.mxu0 0.0
    %2503 = vmatprep.subr.mxu0 0.0
    %2504 = vmatpush1.msra.mxu0 0.0
    %2505 = vmatprep.subr.mxu0 0.0
    %2506 = vmatpush1.msra.mxu0 0.0
    %2507 = vmatprep.subr.mxu0 0.0
    %2508 = vmatpush1.msra.mxu0 0.0
    %2509 = vmatprep.subr.mxu0 0.0
    %2510 = vmatpush1.msra.mxu0 0.0
    %2511 = vmatprep.subr.mxu0 0.0
    %2512 = vmatpush1.msra.mxu0 0.0
    %2513 = vmatprep.subr.mxu0 0.0
    %2514 = vmatpush1.msra.mxu0 0.0
    %2515 = vmatprep.subr.mxu0 0.0
    %2516 = vmatpush1.msra.mxu0 0.0
    %2517 = vmatprep.subr.mxu0 %v2485
    %2518 = vmatpush1.msra.mxu0 %v2483
    %2519 = vmatprep.subr.mxu0 %v2468
    %2520 = vmatpush1.msra.mxu0 %v2467
    %2521 = vmatprep.subr.mxu0 0.0
    %2522 = vmatpush2.msra.mxu0 0.0
    %2523 = vmatprep.subr.mxu0 0.0
    %2524 = vmatpush2.msra.mxu0 0.0
    %2525 = vmatprep.subr.mxu0 0.0
    %2526 = vmatpush2.msra.mxu0 0.0
    %2527 = vmatprep.subr.mxu0 0.0
    %2528 = vmatpush2.msra.mxu0 0.0
    %2529 = vmatprep.subr.mxu0 0.0
    %2530 = vmatpush2.msra.mxu0 0.0
    %2531 = vmatprep.subr.mxu0 0.0
    %2532 = vmatpush2.msra.mxu0 0.0
    %2533 = vmatprep.subr.mxu0 0.0
    %2534 = vmatpush2.msra.mxu0 0.0
    %2535 = vmatprep.subr.mxu0 0.0
    %2536 = vmatpush2.msra.mxu0 0.0
    %2537 = vmatprep.subr.mxu0 0.0
    %2538 = vmatpush2.msra.mxu0 0.0
    %2539 = vmatprep.subr.mxu0 0.0
    %2540 = vmatpush2.msra.mxu0 0.0
    %2541 = vmatprep.subr.mxu0 0.0
    %2542 = vmatpush2.msra.mxu0 0.0
    %2543 = vmatprep.subr.mxu0 0.0
    %2544 = vmatpush2.msra.mxu0 0.0
    %2545 = vmatprep.subr.mxu0 0.0
    %2546 = vmatpush2.msra.mxu0 0.0
    %2547 = vmatprep.subr.mxu0 0.0
    %2548 = vmatpush2.msra.mxu0 0.0
    %2549 = vmatprep.subr.mxu0 0.0
    %2550 = vmatpush2.msra.mxu0 0.0
    %2551 = vmatprep.subr.mxu0 0.0
    %2552 = vmatpush2.msra.mxu0 0.0
    %2553 = vmatprep.mubr.f32.mxu0 0.0
    %2554 = vmatmul.mubr.f32.gmra.mxu0 %v2475
    %v2555 = vpop.f32.mrf.mxu0
    %v2556 = vadd.f32 0.0, %v2555
    %v2557 = vpop.f32.mrf.mxu0
    %v2558 = vadd.f32 0.0, %v2557
    %2559 = vmatprep.mubr.f32.mxu0 0.0
    %2560 = vmatmul.mubr.f32.gmra.mxu0 %v2478
    %v2561 = vpop.f32.mrf.mxu0
    %v2562 = vadd.f32 0.0, %v2561
    %v2563 = vpop.f32.mrf.mxu0
    %v2564 = vadd.f32 0.0, %v2563
    %2565 = vmatprep.mubr.f32.mxu0 0.0
    %2566 = vmatmul.mubr.f32.gmra.mxu0 %v2481
    %v2567 = vpop.f32.mrf.mxu0
    %v2568 = vadd.f32 0.0, %v2567
    %v2569 = vpop.f32.mrf.mxu0
    %v2570 = vadd.f32 0.0, %v2569
    %2571 = vdwg.mxu0
    %2572 = vmatprep.subr.mxu0 0.0
    %2573 = vmatpush1.msra.mxu0 0.0
    %2574 = vmatprep.subr.mxu0 0.0
    %2575 = vmatpush1.msra.mxu0 0.0
    %2576 = vmatprep.subr.mxu0 0.0
    %2577 = vmatpush1.msra.mxu0 0.0
    %2578 = vmatprep.subr.mxu0 0.0
    %2579 = vmatpush1.msra.mxu0 0.0
    %2580 = vmatprep.subr.mxu0 0.0
    %2581 = vmatpush1.msra.mxu0 0.0
    %2582 = vmatprep.subr.mxu0 0.0
    %2583 = vmatpush1.msra.mxu0 0.0
    %2584 = vmatprep.subr.mxu0 0.0
    %2585 = vmatpush1.msra.mxu0 0.0
    %2586 = vmatprep.subr.mxu0 0.0
    %2587 = vmatpush1.msra.mxu0 0.0
    %2588 = vmatprep.subr.mxu0 0.0
    %2589 = vmatpush1.msra.mxu0 0.0
    %2590 = vmatprep.subr.mxu0 0.0
    %2591 = vmatpush1.msra.mxu0 0.0
    %2592 = vmatprep.subr.mxu0 0.0
    %2593 = vmatpush1.msra.mxu0 0.0
    %2594 = vmatprep.subr.mxu0 0.0
    %2595 = vmatpush1.msra.mxu0 0.0
    %2596 = vmatprep.subr.mxu0 0.0
    %2597 = vmatpush1.msra.mxu0 0.0
    %2598 = vmatprep.subr.mxu0 0.0
    %2599 = vmatpush1.msra.mxu0 0.0
    %2600 = vmatprep.subr.mxu0 0.0
    %2601 = vmatpush1.msra.mxu0 %v2487
    %2602 = vmatprep.subr.mxu0 0.0
    %2603 = vmatpush1.msra.mxu0 %v2459
    %2604 = vmatprep.subr.mxu0 0.0
    %2605 = vmatpush2.msra.mxu0 0.0
    %2606 = vmatprep.subr.mxu0 0.0
    %2607 = vmatpush2.msra.mxu0 0.0
    %2608 = vmatprep.subr.mxu0 0.0
    %2609 = vmatpush2.msra.mxu0 0.0
    %2610 = vmatprep.subr.mxu0 0.0
    %2611 = vmatpush2.msra.mxu0 0.0
    %2612 = vmatprep.subr.mxu0 0.0
    %2613 = vmatpush2.msra.mxu0 0.0
    %2614 = vmatprep.subr.mxu0 0.0
    %2615 = vmatpush2.msra.mxu0 0.0
    %2616 = vmatprep.subr.mxu0 0.0
    %2617 = vmatpush2.msra.mxu0 0.0
    %2618 = vmatprep.subr.mxu0 0.0
    %2619 = vmatpush2.msra.mxu0 0.0
    %2620 = vmatprep.subr.mxu0 0.0
    %2621 = vmatpush2.msra.mxu0 0.0
    %2622 = vmatprep.subr.mxu0 0.0
    %2623 = vmatpush2.msra.mxu0 0.0
    %2624 = vmatprep.subr.mxu0 0.0
    %2625 = vmatpush2.msra.mxu0 0.0
    %2626 = vmatprep.subr.mxu0 0.0
    %2627 = vmatpush2.msra.mxu0 0.0
    %2628 = vmatprep.subr.mxu0 0.0
    %2629 = vmatpush2.msra.mxu0 0.0
    %2630 = vmatprep.subr.mxu0 0.0
    %2631 = vmatpush2.msra.mxu0 0.0
    %2632 = vmatprep.subr.mxu0 0.0
    %2633 = vmatpush2.msra.mxu0 0.0
    %2634 = vmatprep.subr.mxu0 0.0
    %2635 = vmatpush2.msra.mxu0 0.0
    %2636 = vmatprep.mubr.f32.mxu0 0.0
    %2637 = vmatmul.mubr.f32.gmra.mxu0 %v2475
    %v2638 = vpop.f32.mrf.mxu0
    %v2639 = vadd.f32 0.0, %v2638
    %v2640 = vpop.f32.mrf.mxu0
    %2641 = vmatprep.mubr.f32.mxu0 0.0
    %2642 = vmatmul.mubr.f32.gmra.mxu0 %v2478
    %v2643 = vpop.f32.mrf.mxu0
    %v2644 = vadd.f32 0.0, %v2643
    %v2645 = vpop.f32.mrf.mxu0
    %2646 = vmatprep.mubr.f32.mxu0 0.0
    %2647 = vmatmul.mubr.f32.gmra.mxu0 %v2481
    %v2648 = vpop.f32.mrf.mxu0
    %v2649 = vadd.f32 0.0, %v2648
    %v2650 = vpop.f32.mrf.mxu0
    %2651 = vdwg.mxu0
    %v2652 = vadd.f32 %v2441, %v2556
    %v2653 = vadd.f32 %v2442, %v2558
    %v2654 = vadd.f32 %v2443, %v2639
    %v2655 = vadd.f32 %v2444, %v2562
    %v2656 = vadd.f32 %v2445, %v2564
    %v2657 = vadd.f32 %v2446, %v2644
    %v2658 = vadd.f32 %v2447, %v2568
    %v2659 = vadd.f32 %v2448, %v2570
    %v2660 = vadd.f32 %v2449, %v2649
    %s2661 = scalar_lea.vmem %s3, 216
    %v2662 = vld [vmem:[%s2661] sm:$0xff]
    %v2663 = vld [vmem:[%s2661 + $0x8] sm:$0xff]
    %v2664 = vld [vmem:[%s2661 + $0x10] sm:$0xf]
    %2665 = vrot.lane.b32.xlu0 %v787, 112
    %v2666 = vpop.permute.xlu0 %2665
    %2667 = vrot.lane.b32.xlu0 %v788, 112
    %v2668 = vpop.permute.xlu0 %2667
    %2669 = vrot.lane.b32.xlu0 %v789, 112
    %v2670 = vpop.permute.xlu0 %2669
    %2671 = vrot.lane.b32.xlu0 %v790, 112
    %v2672 = vpop.permute.xlu0 %2671
    %2673 = vrot.lane.b32.xlu0 %v791, 112
    %v2674 = vpop.permute.xlu0 %2673
    %2675 = vrot.lane.b32.xlu0 %v792, 112
    %v2676 = vpop.permute.xlu0 %2675
    %vm2677 = vcmask 916480
    %v2678 = vsel %vm2677, %v2666, %v2668
    %v2679 = vsel %vm2677, %v2668, %v2670
    %v2680 = vsel %vm2677, %v2672, %v2674
    %v2681 = vsel %vm2677, %v2674, %v2676
    %v2686 = vsel %vm826, %v2662, 0
    %v2689 = vsel %vm826, %v2663, 0
    %v2692 = vsel %vm826, %v2664, 0
    %v2694 = vsel %vm836, %v2680, 0
    %v2696 = vsel %vm836, %v2681, 0
    %v2698 = vsel %vm836, %v2676, 0
    %2700 = vmatprep.subr.mxu0 0.0
    %2701 = vmatpush1.msra.mxu0 0.0
    %2702 = vmatprep.subr.mxu0 0.0
    %2703 = vmatpush1.msra.mxu0 0.0
    %2704 = vmatprep.subr.mxu0 0.0
    %2705 = vmatpush1.msra.mxu0 0.0
    %2706 = vmatprep.subr.mxu0 0.0
    %2707 = vmatpush1.msra.mxu0 0.0
    %2708 = vmatprep.subr.mxu0 0.0
    %2709 = vmatpush1.msra.mxu0 0.0
    %2710 = vmatprep.subr.mxu0 0.0
    %2711 = vmatpush1.msra.mxu0 0.0
    %2712 = vmatprep.subr.mxu0 0.0
    %2713 = vmatpush1.msra.mxu0 0.0
    %2714 = vmatprep.subr.mxu0 0.0
    %2715 = vmatpush1.msra.mxu0 0.0
    %2716 = vmatprep.subr.mxu0 0.0
    %2717 = vmatpush1.msra.mxu0 0.0
    %2718 = vmatprep.subr.mxu0 0.0
    %2719 = vmatpush1.msra.mxu0 0.0
    %2720 = vmatprep.subr.mxu0 0.0
    %2721 = vmatpush1.msra.mxu0 0.0
    %2722 = vmatprep.subr.mxu0 0.0
    %2723 = vmatpush1.msra.mxu0 0.0
    %2724 = vmatprep.subr.mxu0 0.0
    %2725 = vmatpush1.msra.mxu0 0.0
    %2726 = vmatprep.subr.mxu0 0.0
    %2727 = vmatpush1.msra.mxu0 0.0
    %2728 = vmatprep.subr.mxu0 %v2696
    %2729 = vmatpush1.msra.mxu0 %v2694
    %2730 = vmatprep.subr.mxu0 %v2679
    %2731 = vmatpush1.msra.mxu0 %v2678
    %2732 = vmatprep.subr.mxu0 0.0
    %2733 = vmatpush2.msra.mxu0 0.0
    %2734 = vmatprep.subr.mxu0 0.0
    %2735 = vmatpush2.msra.mxu0 0.0
    %2736 = vmatprep.subr.mxu0 0.0
    %2737 = vmatpush2.msra.mxu0 0.0
    %2738 = vmatprep.subr.mxu0 0.0
    %2739 = vmatpush2.msra.mxu0 0.0
    %2740 = vmatprep.subr.mxu0 0.0
    %2741 = vmatpush2.msra.mxu0 0.0
    %2742 = vmatprep.subr.mxu0 0.0
    %2743 = vmatpush2.msra.mxu0 0.0
    %2744 = vmatprep.subr.mxu0 0.0
    %2745 = vmatpush2.msra.mxu0 0.0
    %2746 = vmatprep.subr.mxu0 0.0
    %2747 = vmatpush2.msra.mxu0 0.0
    %2748 = vmatprep.subr.mxu0 0.0
    %2749 = vmatpush2.msra.mxu0 0.0
    %2750 = vmatprep.subr.mxu0 0.0
    %2751 = vmatpush2.msra.mxu0 0.0
    %2752 = vmatprep.subr.mxu0 0.0
    %2753 = vmatpush2.msra.mxu0 0.0
    %2754 = vmatprep.subr.mxu0 0.0
    %2755 = vmatpush2.msra.mxu0 0.0
    %2756 = vmatprep.subr.mxu0 0.0
    %2757 = vmatpush2.msra.mxu0 0.0
    %2758 = vmatprep.subr.mxu0 0.0
    %2759 = vmatpush2.msra.mxu0 0.0
    %2760 = vmatprep.subr.mxu0 0.0
    %2761 = vmatpush2.msra.mxu0 0.0
    %2762 = vmatprep.subr.mxu0 0.0
    %2763 = vmatpush2.msra.mxu0 0.0
    %2764 = vmatprep.mubr.f32.mxu0 0.0
    %2765 = vmatmul.mubr.f32.gmra.mxu0 %v2686
    %v2766 = vpop.f32.mrf.mxu0
    %v2767 = vadd.f32 0.0, %v2766
    %v2768 = vpop.f32.mrf.mxu0
    %v2769 = vadd.f32 0.0, %v2768
    %2770 = vmatprep.mubr.f32.mxu0 0.0
    %2771 = vmatmul.mubr.f32.gmra.mxu0 %v2689
    %v2772 = vpop.f32.mrf.mxu0
    %v2773 = vadd.f32 0.0, %v2772
    %v2774 = vpop.f32.mrf.mxu0
    %v2775 = vadd.f32 0.0, %v2774
    %2776 = vmatprep.mubr.f32.mxu0 0.0
    %2777 = vmatmul.mubr.f32.gmra.mxu0 %v2692
    %v2778 = vpop.f32.mrf.mxu0
    %v2779 = vadd.f32 0.0, %v2778
    %v2780 = vpop.f32.mrf.mxu0
    %v2781 = vadd.f32 0.0, %v2780
    %2782 = vdwg.mxu0
    %2783 = vmatprep.subr.mxu0 0.0
    %2784 = vmatpush1.msra.mxu0 0.0
    %2785 = vmatprep.subr.mxu0 0.0
    %2786 = vmatpush1.msra.mxu0 0.0
    %2787 = vmatprep.subr.mxu0 0.0
    %2788 = vmatpush1.msra.mxu0 0.0
    %2789 = vmatprep.subr.mxu0 0.0
    %2790 = vmatpush1.msra.mxu0 0.0
    %2791 = vmatprep.subr.mxu0 0.0
    %2792 = vmatpush1.msra.mxu0 0.0
    %2793 = vmatprep.subr.mxu0 0.0
    %2794 = vmatpush1.msra.mxu0 0.0
    %2795 = vmatprep.subr.mxu0 0.0
    %2796 = vmatpush1.msra.mxu0 0.0
    %2797 = vmatprep.subr.mxu0 0.0
    %2798 = vmatpush1.msra.mxu0 0.0
    %2799 = vmatprep.subr.mxu0 0.0
    %2800 = vmatpush1.msra.mxu0 0.0
    %2801 = vmatprep.subr.mxu0 0.0
    %2802 = vmatpush1.msra.mxu0 0.0
    %2803 = vmatprep.subr.mxu0 0.0
    %2804 = vmatpush1.msra.mxu0 0.0
    %2805 = vmatprep.subr.mxu0 0.0
    %2806 = vmatpush1.msra.mxu0 0.0
    %2807 = vmatprep.subr.mxu0 0.0
    %2808 = vmatpush1.msra.mxu0 0.0
    %2809 = vmatprep.subr.mxu0 0.0
    %2810 = vmatpush1.msra.mxu0 0.0
    %2811 = vmatprep.subr.mxu0 0.0
    %2812 = vmatpush1.msra.mxu0 %v2698
    %2813 = vmatprep.subr.mxu0 0.0
    %2814 = vmatpush1.msra.mxu0 %v2670
    %2815 = vmatprep.subr.mxu0 0.0
    %2816 = vmatpush2.msra.mxu0 0.0
    %2817 = vmatprep.subr.mxu0 0.0
    %2818 = vmatpush2.msra.mxu0 0.0
    %2819 = vmatprep.subr.mxu0 0.0
    %2820 = vmatpush2.msra.mxu0 0.0
    %2821 = vmatprep.subr.mxu0 0.0
    %2822 = vmatpush2.msra.mxu0 0.0
    %2823 = vmatprep.subr.mxu0 0.0
    %2824 = vmatpush2.msra.mxu0 0.0
    %2825 = vmatprep.subr.mxu0 0.0
    %2826 = vmatpush2.msra.mxu0 0.0
    %2827 = vmatprep.subr.mxu0 0.0
    %2828 = vmatpush2.msra.mxu0 0.0
    %2829 = vmatprep.subr.mxu0 0.0
    %2830 = vmatpush2.msra.mxu0 0.0
    %2831 = vmatprep.subr.mxu0 0.0
    %2832 = vmatpush2.msra.mxu0 0.0
    %2833 = vmatprep.subr.mxu0 0.0
    %2834 = vmatpush2.msra.mxu0 0.0
    %2835 = vmatprep.subr.mxu0 0.0
    %2836 = vmatpush2.msra.mxu0 0.0
    %2837 = vmatprep.subr.mxu0 0.0
    %2838 = vmatpush2.msra.mxu0 0.0
    %2839 = vmatprep.subr.mxu0 0.0
    %2840 = vmatpush2.msra.mxu0 0.0
    %2841 = vmatprep.subr.mxu0 0.0
    %2842 = vmatpush2.msra.mxu0 0.0
    %2843 = vmatprep.subr.mxu0 0.0
    %2844 = vmatpush2.msra.mxu0 0.0
    %2845 = vmatprep.subr.mxu0 0.0
    %2846 = vmatpush2.msra.mxu0 0.0
    %2847 = vmatprep.mubr.f32.mxu0 0.0
    %2848 = vmatmul.mubr.f32.gmra.mxu0 %v2686
    %v2849 = vpop.f32.mrf.mxu0
    %v2850 = vadd.f32 0.0, %v2849
    %v2851 = vpop.f32.mrf.mxu0
    %2852 = vmatprep.mubr.f32.mxu0 0.0
    %2853 = vmatmul.mubr.f32.gmra.mxu0 %v2689
    %v2854 = vpop.f32.mrf.mxu0
    %v2855 = vadd.f32 0.0, %v2854
    %v2856 = vpop.f32.mrf.mxu0
    %2857 = vmatprep.mubr.f32.mxu0 0.0
    %2858 = vmatmul.mubr.f32.gmra.mxu0 %v2692
    %v2859 = vpop.f32.mrf.mxu0
    %v2860 = vadd.f32 0.0, %v2859
    %v2861 = vpop.f32.mrf.mxu0
    %2862 = vdwg.mxu0
    %v2863 = vadd.f32 %v2652, %v2767
    %v2864 = vadd.f32 %v2653, %v2769
    %v2865 = vadd.f32 %v2654, %v2850
    %v2866 = vadd.f32 %v2655, %v2773
    %v2867 = vadd.f32 %v2656, %v2775
    %v2868 = vadd.f32 %v2657, %v2855
    %v2869 = vadd.f32 %v2658, %v2779
    %v2870 = vadd.f32 %v2659, %v2781
    %v2871 = vadd.f32 %v2660, %v2860
    %s2872 = scalar_lea.vmem %s3, 240
    %v2873 = vld [vmem:[%s2872] sm:$0xff]
    %v2874 = vld [vmem:[%s2872 + $0x8] sm:$0xff]
    %v2875 = vld [vmem:[%s2872 + $0x10] sm:$0xf]
    %2876 = vrot.lane.b32.xlu0 %v787, 104
    %v2877 = vpop.permute.xlu0 %2876
    %2878 = vrot.lane.b32.xlu0 %v788, 104
    %v2879 = vpop.permute.xlu0 %2878
    %2880 = vrot.lane.b32.xlu0 %v789, 104
    %v2881 = vpop.permute.xlu0 %2880
    %2882 = vrot.lane.b32.xlu0 %v790, 104
    %v2883 = vpop.permute.xlu0 %2882
    %2884 = vrot.lane.b32.xlu0 %v791, 104
    %v2885 = vpop.permute.xlu0 %2884
    %2886 = vrot.lane.b32.xlu0 %v792, 104
    %v2887 = vpop.permute.xlu0 %2886
    %vm2888 = vcmask 850944
    %v2889 = vsel %vm2888, %v2877, %v2879
    %v2890 = vsel %vm2888, %v2879, %v2881
    %v2891 = vsel %vm2888, %v2883, %v2885
    %v2892 = vsel %vm2888, %v2885, %v2887
    %v2897 = vsel %vm826, %v2873, 0
    %v2900 = vsel %vm826, %v2874, 0
    %v2903 = vsel %vm826, %v2875, 0
    %v2905 = vsel %vm836, %v2891, 0
    %v2907 = vsel %vm836, %v2892, 0
    %v2909 = vsel %vm836, %v2887, 0
    %2911 = vmatprep.subr.mxu0 0.0
    %2912 = vmatpush1.msra.mxu0 0.0
    %2913 = vmatprep.subr.mxu0 0.0
    %2914 = vmatpush1.msra.mxu0 0.0
    %2915 = vmatprep.subr.mxu0 0.0
    %2916 = vmatpush1.msra.mxu0 0.0
    %2917 = vmatprep.subr.mxu0 0.0
    %2918 = vmatpush1.msra.mxu0 0.0
    %2919 = vmatprep.subr.mxu0 0.0
    %2920 = vmatpush1.msra.mxu0 0.0
    %2921 = vmatprep.subr.mxu0 0.0
    %2922 = vmatpush1.msra.mxu0 0.0
    %2923 = vmatprep.subr.mxu0 0.0
    %2924 = vmatpush1.msra.mxu0 0.0
    %2925 = vmatprep.subr.mxu0 0.0
    %2926 = vmatpush1.msra.mxu0 0.0
    %2927 = vmatprep.subr.mxu0 0.0
    %2928 = vmatpush1.msra.mxu0 0.0
    %2929 = vmatprep.subr.mxu0 0.0
    %2930 = vmatpush1.msra.mxu0 0.0
    %2931 = vmatprep.subr.mxu0 0.0
    %2932 = vmatpush1.msra.mxu0 0.0
    %2933 = vmatprep.subr.mxu0 0.0
    %2934 = vmatpush1.msra.mxu0 0.0
    %2935 = vmatprep.subr.mxu0 0.0
    %2936 = vmatpush1.msra.mxu0 0.0
    %2937 = vmatprep.subr.mxu0 0.0
    %2938 = vmatpush1.msra.mxu0 0.0
    %2939 = vmatprep.subr.mxu0 %v2907
    %2940 = vmatpush1.msra.mxu0 %v2905
    %2941 = vmatprep.subr.mxu0 %v2890
    %2942 = vmatpush1.msra.mxu0 %v2889
    %2943 = vmatprep.subr.mxu0 0.0
    %2944 = vmatpush2.msra.mxu0 0.0
    %2945 = vmatprep.subr.mxu0 0.0
    %2946 = vmatpush2.msra.mxu0 0.0
    %2947 = vmatprep.subr.mxu0 0.0
    %2948 = vmatpush2.msra.mxu0 0.0
    %2949 = vmatprep.subr.mxu0 0.0
    %2950 = vmatpush2.msra.mxu0 0.0
    %2951 = vmatprep.subr.mxu0 0.0
    %2952 = vmatpush2.msra.mxu0 0.0
    %2953 = vmatprep.subr.mxu0 0.0
    %2954 = vmatpush2.msra.mxu0 0.0
    %2955 = vmatprep.subr.mxu0 0.0
    %2956 = vmatpush2.msra.mxu0 0.0
    %2957 = vmatprep.subr.mxu0 0.0
    %2958 = vmatpush2.msra.mxu0 0.0
    %2959 = vmatprep.subr.mxu0 0.0
    %2960 = vmatpush2.msra.mxu0 0.0
    %2961 = vmatprep.subr.mxu0 0.0
    %2962 = vmatpush2.msra.mxu0 0.0
    %2963 = vmatprep.subr.mxu0 0.0
    %2964 = vmatpush2.msra.mxu0 0.0
    %2965 = vmatprep.subr.mxu0 0.0
    %2966 = vmatpush2.msra.mxu0 0.0
    %2967 = vmatprep.subr.mxu0 0.0
    %2968 = vmatpush2.msra.mxu0 0.0
    %2969 = vmatprep.subr.mxu0 0.0
    %2970 = vmatpush2.msra.mxu0 0.0
    %2971 = vmatprep.subr.mxu0 0.0
    %2972 = vmatpush2.msra.mxu0 0.0
    %2973 = vmatprep.subr.mxu0 0.0
    %2974 = vmatpush2.msra.mxu0 0.0
    %2975 = vmatprep.mubr.f32.mxu0 0.0
    %2976 = vmatmul.mubr.f32.gmra.mxu0 %v2897
    %v2977 = vpop.f32.mrf.mxu0
    %v2978 = vadd.f32 0.0, %v2977
    %v2979 = vpop.f32.mrf.mxu0
    %v2980 = vadd.f32 0.0, %v2979
    %2981 = vmatprep.mubr.f32.mxu0 0.0
    %2982 = vmatmul.mubr.f32.gmra.mxu0 %v2900
    %v2983 = vpop.f32.mrf.mxu0
    %v2984 = vadd.f32 0.0, %v2983
    %v2985 = vpop.f32.mrf.mxu0
    %v2986 = vadd.f32 0.0, %v2985
    %2987 = vmatprep.mubr.f32.mxu0 0.0
    %2988 = vmatmul.mubr.f32.gmra.mxu0 %v2903
    %v2989 = vpop.f32.mrf.mxu0
    %v2990 = vadd.f32 0.0, %v2989
    %v2991 = vpop.f32.mrf.mxu0
    %v2992 = vadd.f32 0.0, %v2991
    %2993 = vdwg.mxu0
    %2994 = vmatprep.subr.mxu0 0.0
    %2995 = vmatpush1.msra.mxu0 0.0
    %2996 = vmatprep.subr.mxu0 0.0
    %2997 = vmatpush1.msra.mxu0 0.0
    %2998 = vmatprep.subr.mxu0 0.0
    %2999 = vmatpush1.msra.mxu0 0.0
    %3000 = vmatprep.subr.mxu0 0.0
    %3001 = vmatpush1.msra.mxu0 0.0
    %3002 = vmatprep.subr.mxu0 0.0
    %3003 = vmatpush1.msra.mxu0 0.0
    %3004 = vmatprep.subr.mxu0 0.0
    %3005 = vmatpush1.msra.mxu0 0.0
    %3006 = vmatprep.subr.mxu0 0.0
    %3007 = vmatpush1.msra.mxu0 0.0
    %3008 = vmatprep.subr.mxu0 0.0
    %3009 = vmatpush1.msra.mxu0 0.0
    %3010 = vmatprep.subr.mxu0 0.0
    %3011 = vmatpush1.msra.mxu0 0.0
    %3012 = vmatprep.subr.mxu0 0.0
    %3013 = vmatpush1.msra.mxu0 0.0
    %3014 = vmatprep.subr.mxu0 0.0
    %3015 = vmatpush1.msra.mxu0 0.0
    %3016 = vmatprep.subr.mxu0 0.0
    %3017 = vmatpush1.msra.mxu0 0.0
    %3018 = vmatprep.subr.mxu0 0.0
    %3019 = vmatpush1.msra.mxu0 0.0
    %3020 = vmatprep.subr.mxu0 0.0
    %3021 = vmatpush1.msra.mxu0 0.0
    %3022 = vmatprep.subr.mxu0 0.0
    %3023 = vmatpush1.msra.mxu0 %v2909
    %3024 = vmatprep.subr.mxu0 0.0
    %3025 = vmatpush1.msra.mxu0 %v2881
    %3026 = vmatprep.subr.mxu0 0.0
    %3027 = vmatpush2.msra.mxu0 0.0
    %3028 = vmatprep.subr.mxu0 0.0
    %3029 = vmatpush2.msra.mxu0 0.0
    %3030 = vmatprep.subr.mxu0 0.0
    %3031 = vmatpush2.msra.mxu0 0.0
    %3032 = vmatprep.subr.mxu0 0.0
    %3033 = vmatpush2.msra.mxu0 0.0
    %3034 = vmatprep.subr.mxu0 0.0
    %3035 = vmatpush2.msra.mxu0 0.0
    %3036 = vmatprep.subr.mxu0 0.0
    %3037 = vmatpush2.msra.mxu0 0.0
    %3038 = vmatprep.subr.mxu0 0.0
    %3039 = vmatpush2.msra.mxu0 0.0
    %3040 = vmatprep.subr.mxu0 0.0
    %3041 = vmatpush2.msra.mxu0 0.0
    %3042 = vmatprep.subr.mxu0 0.0
    %3043 = vmatpush2.msra.mxu0 0.0
    %3044 = vmatprep.subr.mxu0 0.0
    %3045 = vmatpush2.msra.mxu0 0.0
    %3046 = vmatprep.subr.mxu0 0.0
    %3047 = vmatpush2.msra.mxu0 0.0
    %3048 = vmatprep.subr.mxu0 0.0
    %3049 = vmatpush2.msra.mxu0 0.0
    %3050 = vmatprep.subr.mxu0 0.0
    %3051 = vmatpush2.msra.mxu0 0.0
    %3052 = vmatprep.subr.mxu0 0.0
    %3053 = vmatpush2.msra.mxu0 0.0
    %3054 = vmatprep.subr.mxu0 0.0
    %3055 = vmatpush2.msra.mxu0 0.0
    %3056 = vmatprep.subr.mxu0 0.0
    %3057 = vmatpush2.msra.mxu0 0.0
    %3058 = vmatprep.mubr.f32.mxu0 0.0
    %3059 = vmatmul.mubr.f32.gmra.mxu0 %v2897
    %v3060 = vpop.f32.mrf.mxu0
    %v3061 = vadd.f32 0.0, %v3060
    %v3062 = vpop.f32.mrf.mxu0
    %3063 = vmatprep.mubr.f32.mxu0 0.0
    %3064 = vmatmul.mubr.f32.gmra.mxu0 %v2900
    %v3065 = vpop.f32.mrf.mxu0
    %v3066 = vadd.f32 0.0, %v3065
    %v3067 = vpop.f32.mrf.mxu0
    %3068 = vmatprep.mubr.f32.mxu0 0.0
    %3069 = vmatmul.mubr.f32.gmra.mxu0 %v2903
    %v3070 = vpop.f32.mrf.mxu0
    %v3071 = vadd.f32 0.0, %v3070
    %v3072 = vpop.f32.mrf.mxu0
    %3073 = vdwg.mxu0
    %v3074 = vadd.f32 %v2863, %v2978
    %v3075 = vadd.f32 %v2864, %v2980
    %v3076 = vadd.f32 %v2865, %v3061
    %v3077 = vadd.f32 %v2866, %v2984
    %v3078 = vadd.f32 %v2867, %v2986
    %v3079 = vadd.f32 %v2868, %v3066
    %v3080 = vadd.f32 %v2869, %v2990
    %v3081 = vadd.f32 %v2870, %v2992
    %v3082 = vadd.f32 %v2871, %v3071
    %s3083 = scalar_lea.vmem %s3, 264
    %v3084 = vld [vmem:[%s3083] sm:$0xff]
    %v3085 = vld [vmem:[%s3083 + $0x8] sm:$0xff]
    %v3086 = vld [vmem:[%s3083 + $0x10] sm:$0xf]
    %3087 = vrot.lane.b32.xlu0 %v787, 103
    %v3088 = vpop.permute.xlu0 %3087
    %3089 = vrot.lane.b32.xlu0 %v788, 103
    %v3090 = vpop.permute.xlu0 %3089
    %3091 = vrot.lane.b32.xlu0 %v789, 103
    %v3092 = vpop.permute.xlu0 %3091
    %3093 = vrot.lane.b32.xlu0 %v790, 103
    %v3094 = vpop.permute.xlu0 %3093
    %3095 = vrot.lane.b32.xlu0 %v791, 103
    %v3096 = vpop.permute.xlu0 %3095
    %3097 = vrot.lane.b32.xlu0 %v792, 103
    %v3098 = vpop.permute.xlu0 %3097
    %vm3099 = vcmask 842752
    %v3100 = vsel %vm3099, %v3088, %v3090
    %v3101 = vsel %vm3099, %v3090, %v3092
    %v3102 = vsel %vm3099, %v3094, %v3096
    %v3103 = vsel %vm3099, %v3096, %v3098
    %v3108 = vsel %vm826, %v3084, 0
    %v3111 = vsel %vm826, %v3085, 0
    %v3114 = vsel %vm826, %v3086, 0
    %v3116 = vsel %vm836, %v3102, 0
    %v3118 = vsel %vm836, %v3103, 0
    %v3120 = vsel %vm836, %v3098, 0
    %3122 = vmatprep.subr.mxu0 0.0
    %3123 = vmatpush1.msra.mxu0 0.0
    %3124 = vmatprep.subr.mxu0 0.0
    %3125 = vmatpush1.msra.mxu0 0.0
    %3126 = vmatprep.subr.mxu0 0.0
    %3127 = vmatpush1.msra.mxu0 0.0
    %3128 = vmatprep.subr.mxu0 0.0
    %3129 = vmatpush1.msra.mxu0 0.0
    %3130 = vmatprep.subr.mxu0 0.0
    %3131 = vmatpush1.msra.mxu0 0.0
    %3132 = vmatprep.subr.mxu0 0.0
    %3133 = vmatpush1.msra.mxu0 0.0
    %3134 = vmatprep.subr.mxu0 0.0
    %3135 = vmatpush1.msra.mxu0 0.0
    %3136 = vmatprep.subr.mxu0 0.0
    %3137 = vmatpush1.msra.mxu0 0.0
    %3138 = vmatprep.subr.mxu0 0.0
    %3139 = vmatpush1.msra.mxu0 0.0
    %3140 = vmatprep.subr.mxu0 0.0
    %3141 = vmatpush1.msra.mxu0 0.0
    %3142 = vmatprep.subr.mxu0 0.0
    %3143 = vmatpush1.msra.mxu0 0.0
    %3144 = vmatprep.subr.mxu0 0.0
    %3145 = vmatpush1.msra.mxu0 0.0
    %3146 = vmatprep.subr.mxu0 0.0
    %3147 = vmatpush1.msra.mxu0 0.0
    %3148 = vmatprep.subr.mxu0 0.0
    %3149 = vmatpush1.msra.mxu0 0.0
    %3150 = vmatprep.subr.mxu0 %v3118
    %3151 = vmatpush1.msra.mxu0 %v3116
    %3152 = vmatprep.subr.mxu0 %v3101
    %3153 = vmatpush1.msra.mxu0 %v3100
    %3154 = vmatprep.subr.mxu0 0.0
    %3155 = vmatpush2.msra.mxu0 0.0
    %3156 = vmatprep.subr.mxu0 0.0
    %3157 = vmatpush2.msra.mxu0 0.0
    %3158 = vmatprep.subr.mxu0 0.0
    %3159 = vmatpush2.msra.mxu0 0.0
    %3160 = vmatprep.subr.mxu0 0.0
    %3161 = vmatpush2.msra.mxu0 0.0
    %3162 = vmatprep.subr.mxu0 0.0
    %3163 = vmatpush2.msra.mxu0 0.0
    %3164 = vmatprep.subr.mxu0 0.0
    %3165 = vmatpush2.msra.mxu0 0.0
    %3166 = vmatprep.subr.mxu0 0.0
    %3167 = vmatpush2.msra.mxu0 0.0
    %3168 = vmatprep.subr.mxu0 0.0
    %3169 = vmatpush2.msra.mxu0 0.0
    %3170 = vmatprep.subr.mxu0 0.0
    %3171 = vmatpush2.msra.mxu0 0.0
    %3172 = vmatprep.subr.mxu0 0.0
    %3173 = vmatpush2.msra.mxu0 0.0
    %3174 = vmatprep.subr.mxu0 0.0
    %3175 = vmatpush2.msra.mxu0 0.0
    %3176 = vmatprep.subr.mxu0 0.0
    %3177 = vmatpush2.msra.mxu0 0.0
    %3178 = vmatprep.subr.mxu0 0.0
    %3179 = vmatpush2.msra.mxu0 0.0
    %3180 = vmatprep.subr.mxu0 0.0
    %3181 = vmatpush2.msra.mxu0 0.0
    %3182 = vmatprep.subr.mxu0 0.0
    %3183 = vmatpush2.msra.mxu0 0.0
    %3184 = vmatprep.subr.mxu0 0.0
    %3185 = vmatpush2.msra.mxu0 0.0
    %3186 = vmatprep.mubr.f32.mxu0 0.0
    %3187 = vmatmul.mubr.f32.gmra.mxu0 %v3108
    %v3188 = vpop.f32.mrf.mxu0
    %v3189 = vadd.f32 0.0, %v3188
    %v3190 = vpop.f32.mrf.mxu0
    %v3191 = vadd.f32 0.0, %v3190
    %3192 = vmatprep.mubr.f32.mxu0 0.0
    %3193 = vmatmul.mubr.f32.gmra.mxu0 %v3111
    %v3194 = vpop.f32.mrf.mxu0
    %v3195 = vadd.f32 0.0, %v3194
    %v3196 = vpop.f32.mrf.mxu0
    %v3197 = vadd.f32 0.0, %v3196
    %3198 = vmatprep.mubr.f32.mxu0 0.0
    %3199 = vmatmul.mubr.f32.gmra.mxu0 %v3114
    %v3200 = vpop.f32.mrf.mxu0
    %v3201 = vadd.f32 0.0, %v3200
    %v3202 = vpop.f32.mrf.mxu0
    %v3203 = vadd.f32 0.0, %v3202
    %3204 = vdwg.mxu0
    %3205 = vmatprep.subr.mxu0 0.0
    %3206 = vmatpush1.msra.mxu0 0.0
    %3207 = vmatprep.subr.mxu0 0.0
    %3208 = vmatpush1.msra.mxu0 0.0
    %3209 = vmatprep.subr.mxu0 0.0
    %3210 = vmatpush1.msra.mxu0 0.0
    %3211 = vmatprep.subr.mxu0 0.0
    %3212 = vmatpush1.msra.mxu0 0.0
    %3213 = vmatprep.subr.mxu0 0.0
    %3214 = vmatpush1.msra.mxu0 0.0
    %3215 = vmatprep.subr.mxu0 0.0
    %3216 = vmatpush1.msra.mxu0 0.0
    %3217 = vmatprep.subr.mxu0 0.0
    %3218 = vmatpush1.msra.mxu0 0.0
    %3219 = vmatprep.subr.mxu0 0.0
    %3220 = vmatpush1.msra.mxu0 0.0
    %3221 = vmatprep.subr.mxu0 0.0
    %3222 = vmatpush1.msra.mxu0 0.0
    %3223 = vmatprep.subr.mxu0 0.0
    %3224 = vmatpush1.msra.mxu0 0.0
    %3225 = vmatprep.subr.mxu0 0.0
    %3226 = vmatpush1.msra.mxu0 0.0
    %3227 = vmatprep.subr.mxu0 0.0
    %3228 = vmatpush1.msra.mxu0 0.0
    %3229 = vmatprep.subr.mxu0 0.0
    %3230 = vmatpush1.msra.mxu0 0.0
    %3231 = vmatprep.subr.mxu0 0.0
    %3232 = vmatpush1.msra.mxu0 0.0
    %3233 = vmatprep.subr.mxu0 0.0
    %3234 = vmatpush1.msra.mxu0 %v3120
    %3235 = vmatprep.subr.mxu0 0.0
    %3236 = vmatpush1.msra.mxu0 %v3092
    %3237 = vmatprep.subr.mxu0 0.0
    %3238 = vmatpush2.msra.mxu0 0.0
    %3239 = vmatprep.subr.mxu0 0.0
    %3240 = vmatpush2.msra.mxu0 0.0
    %3241 = vmatprep.subr.mxu0 0.0
    %3242 = vmatpush2.msra.mxu0 0.0
    %3243 = vmatprep.subr.mxu0 0.0
    %3244 = vmatpush2.msra.mxu0 0.0
    %3245 = vmatprep.subr.mxu0 0.0
    %3246 = vmatpush2.msra.mxu0 0.0
    %3247 = vmatprep.subr.mxu0 0.0
    %3248 = vmatpush2.msra.mxu0 0.0
    %3249 = vmatprep.subr.mxu0 0.0
    %3250 = vmatpush2.msra.mxu0 0.0
    %3251 = vmatprep.subr.mxu0 0.0
    %3252 = vmatpush2.msra.mxu0 0.0
    %3253 = vmatprep.subr.mxu0 0.0
    %3254 = vmatpush2.msra.mxu0 0.0
    %3255 = vmatprep.subr.mxu0 0.0
    %3256 = vmatpush2.msra.mxu0 0.0
    %3257 = vmatprep.subr.mxu0 0.0
    %3258 = vmatpush2.msra.mxu0 0.0
    %3259 = vmatprep.subr.mxu0 0.0
    %3260 = vmatpush2.msra.mxu0 0.0
    %3261 = vmatprep.subr.mxu0 0.0
    %3262 = vmatpush2.msra.mxu0 0.0
    %3263 = vmatprep.subr.mxu0 0.0
    %3264 = vmatpush2.msra.mxu0 0.0
    %3265 = vmatprep.subr.mxu0 0.0
    %3266 = vmatpush2.msra.mxu0 0.0
    %3267 = vmatprep.subr.mxu0 0.0
    %3268 = vmatpush2.msra.mxu0 0.0
    %3269 = vmatprep.mubr.f32.mxu0 0.0
    %3270 = vmatmul.mubr.f32.gmra.mxu0 %v3108
    %v3271 = vpop.f32.mrf.mxu0
    %v3272 = vadd.f32 0.0, %v3271
    %v3273 = vpop.f32.mrf.mxu0
    %3274 = vmatprep.mubr.f32.mxu0 0.0
    %3275 = vmatmul.mubr.f32.gmra.mxu0 %v3111
    %v3276 = vpop.f32.mrf.mxu0
    %v3277 = vadd.f32 0.0, %v3276
    %v3278 = vpop.f32.mrf.mxu0
    %3279 = vmatprep.mubr.f32.mxu0 0.0
    %3280 = vmatmul.mubr.f32.gmra.mxu0 %v3114
    %v3281 = vpop.f32.mrf.mxu0
    %v3282 = vadd.f32 0.0, %v3281
    %v3283 = vpop.f32.mrf.mxu0
    %3284 = vdwg.mxu0
    %v3285 = vadd.f32 %v3074, %v3189
    %v3286 = vadd.f32 %v3075, %v3191
    %v3287 = vadd.f32 %v3076, %v3272
    %v3288 = vadd.f32 %v3077, %v3195
    %v3289 = vadd.f32 %v3078, %v3197
    %v3290 = vadd.f32 %v3079, %v3277
    %v3291 = vadd.f32 %v3080, %v3201
    %v3292 = vadd.f32 %v3081, %v3203
    %v3293 = vadd.f32 %v3082, %v3282
    %s3294 = scalar_lea.vmem %s3, 288
    %v3295 = vld [vmem:[%s3294] sm:$0xff]
    %v3296 = vld [vmem:[%s3294 + $0x8] sm:$0xff]
    %v3297 = vld [vmem:[%s3294 + $0x10] sm:$0xf]
    %3298 = vrot.lane.b32.xlu0 %v787, 102
    %v3299 = vpop.permute.xlu0 %3298
    %3300 = vrot.lane.b32.xlu0 %v788, 102
    %v3301 = vpop.permute.xlu0 %3300
    %3302 = vrot.lane.b32.xlu0 %v789, 102
    %v3303 = vpop.permute.xlu0 %3302
    %3304 = vrot.lane.b32.xlu0 %v790, 102
    %v3305 = vpop.permute.xlu0 %3304
    %3306 = vrot.lane.b32.xlu0 %v791, 102
    %v3307 = vpop.permute.xlu0 %3306
    %3308 = vrot.lane.b32.xlu0 %v792, 102
    %v3309 = vpop.permute.xlu0 %3308
    %vm3310 = vcmask 834560
    %v3311 = vsel %vm3310, %v3299, %v3301
    %v3312 = vsel %vm3310, %v3301, %v3303
    %v3313 = vsel %vm3310, %v3305, %v3307
    %v3314 = vsel %vm3310, %v3307, %v3309
    %v3319 = vsel %vm826, %v3295, 0
    %v3322 = vsel %vm826, %v3296, 0
    %v3325 = vsel %vm826, %v3297, 0
    %v3327 = vsel %vm836, %v3313, 0
    %v3329 = vsel %vm836, %v3314, 0
    %v3331 = vsel %vm836, %v3309, 0
    %3333 = vmatprep.subr.mxu0 0.0
    %3334 = vmatpush1.msra.mxu0 0.0
    %3335 = vmatprep.subr.mxu0 0.0
    %3336 = vmatpush1.msra.mxu0 0.0
    %3337 = vmatprep.subr.mxu0 0.0
    %3338 = vmatpush1.msra.mxu0 0.0
    %3339 = vmatprep.subr.mxu0 0.0
    %3340 = vmatpush1.msra.mxu0 0.0
    %3341 = vmatprep.subr.mxu0 0.0
    %3342 = vmatpush1.msra.mxu0 0.0
    %3343 = vmatprep.subr.mxu0 0.0
    %3344 = vmatpush1.msra.mxu0 0.0
    %3345 = vmatprep.subr.mxu0 0.0
    %3346 = vmatpush1.msra.mxu0 0.0
    %3347 = vmatprep.subr.mxu0 0.0
    %3348 = vmatpush1.msra.mxu0 0.0
    %3349 = vmatprep.subr.mxu0 0.0
    %3350 = vmatpush1.msra.mxu0 0.0
    %3351 = vmatprep.subr.mxu0 0.0
    %3352 = vmatpush1.msra.mxu0 0.0
    %3353 = vmatprep.subr.mxu0 0.0
    %3354 = vmatpush1.msra.mxu0 0.0
    %3355 = vmatprep.subr.mxu0 0.0
    %3356 = vmatpush1.msra.mxu0 0.0
    %3357 = vmatprep.subr.mxu0 0.0
    %3358 = vmatpush1.msra.mxu0 0.0
    %3359 = vmatprep.subr.mxu0 0.0
    %3360 = vmatpush1.msra.mxu0 0.0
    %3361 = vmatprep.subr.mxu0 %v3329
    %3362 = vmatpush1.msra.mxu0 %v3327
    %3363 = vmatprep.subr.mxu0 %v3312
    %3364 = vmatpush1.msra.mxu0 %v3311
    %3365 = vmatprep.subr.mxu0 0.0
    %3366 = vmatpush2.msra.mxu0 0.0
    %3367 = vmatprep.subr.mxu0 0.0
    %3368 = vmatpush2.msra.mxu0 0.0
    %3369 = vmatprep.subr.mxu0 0.0
    %3370 = vmatpush2.msra.mxu0 0.0
    %3371 = vmatprep.subr.mxu0 0.0
    %3372 = vmatpush2.msra.mxu0 0.0
    %3373 = vmatprep.subr.mxu0 0.0
    %3374 = vmatpush2.msra.mxu0 0.0
    %3375 = vmatprep.subr.mxu0 0.0
    %3376 = vmatpush2.msra.mxu0 0.0
    %3377 = vmatprep.subr.mxu0 0.0
    %3378 = vmatpush2.msra.mxu0 0.0
    %3379 = vmatprep.subr.mxu0 0.0
    %3380 = vmatpush2.msra.mxu0 0.0
    %3381 = vmatprep.subr.mxu0 0.0
    %3382 = vmatpush2.msra.mxu0 0.0
    %3383 = vmatprep.subr.mxu0 0.0
    %3384 = vmatpush2.msra.mxu0 0.0
    %3385 = vmatprep.subr.mxu0 0.0
    %3386 = vmatpush2.msra.mxu0 0.0
    %3387 = vmatprep.subr.mxu0 0.0
    %3388 = vmatpush2.msra.mxu0 0.0
    %3389 = vmatprep.subr.mxu0 0.0
    %3390 = vmatpush2.msra.mxu0 0.0
    %3391 = vmatprep.subr.mxu0 0.0
    %3392 = vmatpush2.msra.mxu0 0.0
    %3393 = vmatprep.subr.mxu0 0.0
    %3394 = vmatpush2.msra.mxu0 0.0
    %3395 = vmatprep.subr.mxu0 0.0
    %3396 = vmatpush2.msra.mxu0 0.0
    %3397 = vmatprep.mubr.f32.mxu0 0.0
    %3398 = vmatmul.mubr.f32.gmra.mxu0 %v3319
    %v3399 = vpop.f32.mrf.mxu0
    %v3400 = vadd.f32 0.0, %v3399
    %v3401 = vpop.f32.mrf.mxu0
    %v3402 = vadd.f32 0.0, %v3401
    %3403 = vmatprep.mubr.f32.mxu0 0.0
    %3404 = vmatmul.mubr.f32.gmra.mxu0 %v3322
    %v3405 = vpop.f32.mrf.mxu0
    %v3406 = vadd.f32 0.0, %v3405
    %v3407 = vpop.f32.mrf.mxu0
    %v3408 = vadd.f32 0.0, %v3407
    %3409 = vmatprep.mubr.f32.mxu0 0.0
    %3410 = vmatmul.mubr.f32.gmra.mxu0 %v3325
    %v3411 = vpop.f32.mrf.mxu0
    %v3412 = vadd.f32 0.0, %v3411
    %v3413 = vpop.f32.mrf.mxu0
    %v3414 = vadd.f32 0.0, %v3413
    %3415 = vdwg.mxu0
    %3416 = vmatprep.subr.mxu0 0.0
    %3417 = vmatpush1.msra.mxu0 0.0
    %3418 = vmatprep.subr.mxu0 0.0
    %3419 = vmatpush1.msra.mxu0 0.0
    %3420 = vmatprep.subr.mxu0 0.0
    %3421 = vmatpush1.msra.mxu0 0.0
    %3422 = vmatprep.subr.mxu0 0.0
    %3423 = vmatpush1.msra.mxu0 0.0
    %3424 = vmatprep.subr.mxu0 0.0
    %3425 = vmatpush1.msra.mxu0 0.0
    %3426 = vmatprep.subr.mxu0 0.0
    %3427 = vmatpush1.msra.mxu0 0.0
    %3428 = vmatprep.subr.mxu0 0.0
    %3429 = vmatpush1.msra.mxu0 0.0
    %3430 = vmatprep.subr.mxu0 0.0
    %3431 = vmatpush1.msra.mxu0 0.0
    %3432 = vmatprep.subr.mxu0 0.0
    %3433 = vmatpush1.msra.mxu0 0.0
    %3434 = vmatprep.subr.mxu0 0.0
    %3435 = vmatpush1.msra.mxu0 0.0
    %3436 = vmatprep.subr.mxu0 0.0
    %3437 = vmatpush1.msra.mxu0 0.0
    %3438 = vmatprep.subr.mxu0 0.0
    %3439 = vmatpush1.msra.mxu0 0.0
    %3440 = vmatprep.subr.mxu0 0.0
    %3441 = vmatpush1.msra.mxu0 0.0
    %3442 = vmatprep.subr.mxu0 0.0
    %3443 = vmatpush1.msra.mxu0 0.0
    %3444 = vmatprep.subr.mxu0 0.0
    %3445 = vmatpush1.msra.mxu0 %v3331
    %3446 = vmatprep.subr.mxu0 0.0
    %3447 = vmatpush1.msra.mxu0 %v3303
    %3448 = vmatprep.subr.mxu0 0.0
    %3449 = vmatpush2.msra.mxu0 0.0
    %3450 = vmatprep.subr.mxu0 0.0
    %3451 = vmatpush2.msra.mxu0 0.0
    %3452 = vmatprep.subr.mxu0 0.0
    %3453 = vmatpush2.msra.mxu0 0.0
    %3454 = vmatprep.subr.mxu0 0.0
    %3455 = vmatpush2.msra.mxu0 0.0
    %3456 = vmatprep.subr.mxu0 0.0
    %3457 = vmatpush2.msra.mxu0 0.0
    %3458 = vmatprep.subr.mxu0 0.0
    %3459 = vmatpush2.msra.mxu0 0.0
    %3460 = vmatprep.subr.mxu0 0.0
    %3461 = vmatpush2.msra.mxu0 0.0
    %3462 = vmatprep.subr.mxu0 0.0
    %3463 = vmatpush2.msra.mxu0 0.0
    %3464 = vmatprep.subr.mxu0 0.0
    %3465 = vmatpush2.msra.mxu0 0.0
    %3466 = vmatprep.subr.mxu0 0.0
    %3467 = vmatpush2.msra.mxu0 0.0
    %3468 = vmatprep.subr.mxu0 0.0
    %3469 = vmatpush2.msra.mxu0 0.0
    %3470 = vmatprep.subr.mxu0 0.0
    %3471 = vmatpush2.msra.mxu0 0.0
    %3472 = vmatprep.subr.mxu0 0.0
    %3473 = vmatpush2.msra.mxu0 0.0
    %3474 = vmatprep.subr.mxu0 0.0
    %3475 = vmatpush2.msra.mxu0 0.0
    %3476 = vmatprep.subr.mxu0 0.0
    %3477 = vmatpush2.msra.mxu0 0.0
    %3478 = vmatprep.subr.mxu0 0.0
    %3479 = vmatpush2.msra.mxu0 0.0
    %3480 = vmatprep.mubr.f32.mxu0 0.0
    %3481 = vmatmul.mubr.f32.gmra.mxu0 %v3319
    %v3482 = vpop.f32.mrf.mxu0
    %v3483 = vadd.f32 0.0, %v3482
    %v3484 = vpop.f32.mrf.mxu0
    %3485 = vmatprep.mubr.f32.mxu0 0.0
    %3486 = vmatmul.mubr.f32.gmra.mxu0 %v3322
    %v3487 = vpop.f32.mrf.mxu0
    %v3488 = vadd.f32 0.0, %v3487
    %v3489 = vpop.f32.mrf.mxu0
    %3490 = vmatprep.mubr.f32.mxu0 0.0
    %3491 = vmatmul.mubr.f32.gmra.mxu0 %v3325
    %v3492 = vpop.f32.mrf.mxu0
    %v3493 = vadd.f32 0.0, %v3492
    %v3494 = vpop.f32.mrf.mxu0
    %3495 = vdwg.mxu0
    %v3496 = vadd.f32 %v3285, %v3400
    %v3497 = vadd.f32 %v3286, %v3402
    %v3498 = vadd.f32 %v3287, %v3483
    %v3499 = vadd.f32 %v3288, %v3406
    %v3500 = vadd.f32 %v3289, %v3408
    %v3501 = vadd.f32 %v3290, %v3488
    %v3502 = vadd.f32 %v3291, %v3412
    %v3503 = vadd.f32 %v3292, %v3414
    %v3504 = vadd.f32 %v3293, %v3493
    %s3505 = scalar_lea.vmem %s3, 312
    %v3506 = vld [vmem:[%s3505] sm:$0xff]
    %v3507 = vld [vmem:[%s3505 + $0x8] sm:$0xff]
    %v3508 = vld [vmem:[%s3505 + $0x10] sm:$0xf]
    %3509 = vrot.lane.b32.xlu0 %v787, 101
    %v3510 = vpop.permute.xlu0 %3509
    %3511 = vrot.lane.b32.xlu0 %v788, 101
    %v3512 = vpop.permute.xlu0 %3511
    %3513 = vrot.lane.b32.xlu0 %v789, 101
    %v3514 = vpop.permute.xlu0 %3513
    %3515 = vrot.lane.b32.xlu0 %v790, 101
    %v3516 = vpop.permute.xlu0 %3515
    %3517 = vrot.lane.b32.xlu0 %v791, 101
    %v3518 = vpop.permute.xlu0 %3517
    %3519 = vrot.lane.b32.xlu0 %v792, 101
    %v3520 = vpop.permute.xlu0 %3519
    %vm3521 = vcmask 826368
    %v3522 = vsel %vm3521, %v3510, %v3512
    %v3523 = vsel %vm3521, %v3512, %v3514
    %v3524 = vsel %vm3521, %v3516, %v3518
    %v3525 = vsel %vm3521, %v3518, %v3520
    %v3530 = vsel %vm826, %v3506, 0
    %v3533 = vsel %vm826, %v3507, 0
    %v3536 = vsel %vm826, %v3508, 0
    %v3538 = vsel %vm836, %v3524, 0
    %v3540 = vsel %vm836, %v3525, 0
    %v3542 = vsel %vm836, %v3520, 0
    %3544 = vmatprep.subr.mxu0 0.0
    %3545 = vmatpush1.msra.mxu0 0.0
    %3546 = vmatprep.subr.mxu0 0.0
    %3547 = vmatpush1.msra.mxu0 0.0
    %3548 = vmatprep.subr.mxu0 0.0
    %3549 = vmatpush1.msra.mxu0 0.0
    %3550 = vmatprep.subr.mxu0 0.0
    %3551 = vmatpush1.msra.mxu0 0.0
    %3552 = vmatprep.subr.mxu0 0.0
    %3553 = vmatpush1.msra.mxu0 0.0
    %3554 = vmatprep.subr.mxu0 0.0
    %3555 = vmatpush1.msra.mxu0 0.0
    %3556 = vmatprep.subr.mxu0 0.0
    %3557 = vmatpush1.msra.mxu0 0.0
    %3558 = vmatprep.subr.mxu0 0.0
    %3559 = vmatpush1.msra.mxu0 0.0
    %3560 = vmatprep.subr.mxu0 0.0
    %3561 = vmatpush1.msra.mxu0 0.0
    %3562 = vmatprep.subr.mxu0 0.0
    %3563 = vmatpush1.msra.mxu0 0.0
    %3564 = vmatprep.subr.mxu0 0.0
    %3565 = vmatpush1.msra.mxu0 0.0
    %3566 = vmatprep.subr.mxu0 0.0
    %3567 = vmatpush1.msra.mxu0 0.0
    %3568 = vmatprep.subr.mxu0 0.0
    %3569 = vmatpush1.msra.mxu0 0.0
    %3570 = vmatprep.subr.mxu0 0.0
    %3571 = vmatpush1.msra.mxu0 0.0
    %3572 = vmatprep.subr.mxu0 %v3540
    %3573 = vmatpush1.msra.mxu0 %v3538
    %3574 = vmatprep.subr.mxu0 %v3523
    %3575 = vmatpush1.msra.mxu0 %v3522
    %3576 = vmatprep.subr.mxu0 0.0
    %3577 = vmatpush2.msra.mxu0 0.0
    %3578 = vmatprep.subr.mxu0 0.0
    %3579 = vmatpush2.msra.mxu0 0.0
    %3580 = vmatprep.subr.mxu0 0.0
    %3581 = vmatpush2.msra.mxu0 0.0
    %3582 = vmatprep.subr.mxu0 0.0
    %3583 = vmatpush2.msra.mxu0 0.0
    %3584 = vmatprep.subr.mxu0 0.0
    %3585 = vmatpush2.msra.mxu0 0.0
    %3586 = vmatprep.subr.mxu0 0.0
    %3587 = vmatpush2.msra.mxu0 0.0
    %3588 = vmatprep.subr.mxu0 0.0
    %3589 = vmatpush2.msra.mxu0 0.0
    %3590 = vmatprep.subr.mxu0 0.0
    %3591 = vmatpush2.msra.mxu0 0.0
    %3592 = vmatprep.subr.mxu0 0.0
    %3593 = vmatpush2.msra.mxu0 0.0
    %3594 = vmatprep.subr.mxu0 0.0
    %3595 = vmatpush2.msra.mxu0 0.0
    %3596 = vmatprep.subr.mxu0 0.0
    %3597 = vmatpush2.msra.mxu0 0.0
    %3598 = vmatprep.subr.mxu0 0.0
    %3599 = vmatpush2.msra.mxu0 0.0
    %3600 = vmatprep.subr.mxu0 0.0
    %3601 = vmatpush2.msra.mxu0 0.0
    %3602 = vmatprep.subr.mxu0 0.0
    %3603 = vmatpush2.msra.mxu0 0.0
    %3604 = vmatprep.subr.mxu0 0.0
    %3605 = vmatpush2.msra.mxu0 0.0
    %3606 = vmatprep.subr.mxu0 0.0
    %3607 = vmatpush2.msra.mxu0 0.0
    %3608 = vmatprep.mubr.f32.mxu0 0.0
    %3609 = vmatmul.mubr.f32.gmra.mxu0 %v3530
    %v3610 = vpop.f32.mrf.mxu0
    %v3611 = vadd.f32 0.0, %v3610
    %v3612 = vpop.f32.mrf.mxu0
    %v3613 = vadd.f32 0.0, %v3612
    %3614 = vmatprep.mubr.f32.mxu0 0.0
    %3615 = vmatmul.mubr.f32.gmra.mxu0 %v3533
    %v3616 = vpop.f32.mrf.mxu0
    %v3617 = vadd.f32 0.0, %v3616
    %v3618 = vpop.f32.mrf.mxu0
    %v3619 = vadd.f32 0.0, %v3618
    %3620 = vmatprep.mubr.f32.mxu0 0.0
    %3621 = vmatmul.mubr.f32.gmra.mxu0 %v3536
    %v3622 = vpop.f32.mrf.mxu0
    %v3623 = vadd.f32 0.0, %v3622
    %v3624 = vpop.f32.mrf.mxu0
    %v3625 = vadd.f32 0.0, %v3624
    %3626 = vdwg.mxu0
    %3627 = vmatprep.subr.mxu0 0.0
    %3628 = vmatpush1.msra.mxu0 0.0
    %3629 = vmatprep.subr.mxu0 0.0
    %3630 = vmatpush1.msra.mxu0 0.0
    %3631 = vmatprep.subr.mxu0 0.0
    %3632 = vmatpush1.msra.mxu0 0.0
    %3633 = vmatprep.subr.mxu0 0.0
    %3634 = vmatpush1.msra.mxu0 0.0
    %3635 = vmatprep.subr.mxu0 0.0
    %3636 = vmatpush1.msra.mxu0 0.0
    %3637 = vmatprep.subr.mxu0 0.0
    %3638 = vmatpush1.msra.mxu0 0.0
    %3639 = vmatprep.subr.mxu0 0.0
    %3640 = vmatpush1.msra.mxu0 0.0
    %3641 = vmatprep.subr.mxu0 0.0
    %3642 = vmatpush1.msra.mxu0 0.0
    %3643 = vmatprep.subr.mxu0 0.0
    %3644 = vmatpush1.msra.mxu0 0.0
    %3645 = vmatprep.subr.mxu0 0.0
    %3646 = vmatpush1.msra.mxu0 0.0
    %3647 = vmatprep.subr.mxu0 0.0
    %3648 = vmatpush1.msra.mxu0 0.0
    %3649 = vmatprep.subr.mxu0 0.0
    %3650 = vmatpush1.msra.mxu0 0.0
    %3651 = vmatprep.subr.mxu0 0.0
    %3652 = vmatpush1.msra.mxu0 0.0
    %3653 = vmatprep.subr.mxu0 0.0
    %3654 = vmatpush1.msra.mxu0 0.0
    %3655 = vmatprep.subr.mxu0 0.0
    %3656 = vmatpush1.msra.mxu0 %v3542
    %3657 = vmatprep.subr.mxu0 0.0
    %3658 = vmatpush1.msra.mxu0 %v3514
    %3659 = vmatprep.subr.mxu0 0.0
    %3660 = vmatpush2.msra.mxu0 0.0
    %3661 = vmatprep.subr.mxu0 0.0
    %3662 = vmatpush2.msra.mxu0 0.0
    %3663 = vmatprep.subr.mxu0 0.0
    %3664 = vmatpush2.msra.mxu0 0.0
    %3665 = vmatprep.subr.mxu0 0.0
    %3666 = vmatpush2.msra.mxu0 0.0
    %3667 = vmatprep.subr.mxu0 0.0
    %3668 = vmatpush2.msra.mxu0 0.0
    %3669 = vmatprep.subr.mxu0 0.0
    %3670 = vmatpush2.msra.mxu0 0.0
    %3671 = vmatprep.subr.mxu0 0.0
    %3672 = vmatpush2.msra.mxu0 0.0
    %3673 = vmatprep.subr.mxu0 0.0
    %3674 = vmatpush2.msra.mxu0 0.0
    %3675 = vmatprep.subr.mxu0 0.0
    %3676 = vmatpush2.msra.mxu0 0.0
    %3677 = vmatprep.subr.mxu0 0.0
    %3678 = vmatpush2.msra.mxu0 0.0
    %3679 = vmatprep.subr.mxu0 0.0
    %3680 = vmatpush2.msra.mxu0 0.0
    %3681 = vmatprep.subr.mxu0 0.0
    %3682 = vmatpush2.msra.mxu0 0.0
    %3683 = vmatprep.subr.mxu0 0.0
    %3684 = vmatpush2.msra.mxu0 0.0
    %3685 = vmatprep.subr.mxu0 0.0
    %3686 = vmatpush2.msra.mxu0 0.0
    %3687 = vmatprep.subr.mxu0 0.0
    %3688 = vmatpush2.msra.mxu0 0.0
    %3689 = vmatprep.subr.mxu0 0.0
    %3690 = vmatpush2.msra.mxu0 0.0
    %3691 = vmatprep.mubr.f32.mxu0 0.0
    %3692 = vmatmul.mubr.f32.gmra.mxu0 %v3530
    %v3693 = vpop.f32.mrf.mxu0
    %v3694 = vadd.f32 0.0, %v3693
    %v3695 = vpop.f32.mrf.mxu0
    %3696 = vmatprep.mubr.f32.mxu0 0.0
    %3697 = vmatmul.mubr.f32.gmra.mxu0 %v3533
    %v3698 = vpop.f32.mrf.mxu0
    %v3699 = vadd.f32 0.0, %v3698
    %v3700 = vpop.f32.mrf.mxu0
    %3701 = vmatprep.mubr.f32.mxu0 0.0
    %3702 = vmatmul.mubr.f32.gmra.mxu0 %v3536
    %v3703 = vpop.f32.mrf.mxu0
    %v3704 = vadd.f32 0.0, %v3703
    %v3705 = vpop.f32.mrf.mxu0
    %3706 = vdwg.mxu0
    %v3707 = vadd.f32 %v3496, %v3611
    %v3708 = vadd.f32 %v3497, %v3613
    %v3709 = vadd.f32 %v3498, %v3694
    %v3710 = vadd.f32 %v3499, %v3617
    %v3711 = vadd.f32 %v3500, %v3619
    %v3712 = vadd.f32 %v3501, %v3699
    %v3713 = vadd.f32 %v3502, %v3623
    %v3714 = vadd.f32 %v3503, %v3625
    %v3715 = vadd.f32 %v3504, %v3704
    %s3716 = scalar_lea.vmem %s3, 336
    %v3717 = vld [vmem:[%s3716] sm:$0xff]
    %v3718 = vld [vmem:[%s3716 + $0x8] sm:$0xff]
    %v3719 = vld [vmem:[%s3716 + $0x10] sm:$0xf]
    %3720 = vrot.lane.b32.xlu0 %v787, 100
    %v3721 = vpop.permute.xlu0 %3720
    %3722 = vrot.lane.b32.xlu0 %v788, 100
    %v3723 = vpop.permute.xlu0 %3722
    %3724 = vrot.lane.b32.xlu0 %v789, 100
    %v3725 = vpop.permute.xlu0 %3724
    %3726 = vrot.lane.b32.xlu0 %v790, 100
    %v3727 = vpop.permute.xlu0 %3726
    %3728 = vrot.lane.b32.xlu0 %v791, 100
    %v3729 = vpop.permute.xlu0 %3728
    %3730 = vrot.lane.b32.xlu0 %v792, 100
    %v3731 = vpop.permute.xlu0 %3730
    %vm3732 = vcmask 818176
    %v3733 = vsel %vm3732, %v3721, %v3723
    %v3734 = vsel %vm3732, %v3723, %v3725
    %v3735 = vsel %vm3732, %v3727, %v3729
    %v3736 = vsel %vm3732, %v3729, %v3731
    %v3741 = vsel %vm826, %v3717, 0
    %v3744 = vsel %vm826, %v3718, 0
    %v3747 = vsel %vm826, %v3719, 0
    %v3749 = vsel %vm836, %v3735, 0
    %v3751 = vsel %vm836, %v3736, 0
    %v3753 = vsel %vm836, %v3731, 0
    %3755 = vmatprep.subr.mxu0 0.0
    %3756 = vmatpush1.msra.mxu0 0.0
    %3757 = vmatprep.subr.mxu0 0.0
    %3758 = vmatpush1.msra.mxu0 0.0
    %3759 = vmatprep.subr.mxu0 0.0
    %3760 = vmatpush1.msra.mxu0 0.0
    %3761 = vmatprep.subr.mxu0 0.0
    %3762 = vmatpush1.msra.mxu0 0.0
    %3763 = vmatprep.subr.mxu0 0.0
    %3764 = vmatpush1.msra.mxu0 0.0
    %3765 = vmatprep.subr.mxu0 0.0
    %3766 = vmatpush1.msra.mxu0 0.0
    %3767 = vmatprep.subr.mxu0 0.0
    %3768 = vmatpush1.msra.mxu0 0.0
    %3769 = vmatprep.subr.mxu0 0.0
    %3770 = vmatpush1.msra.mxu0 0.0
    %3771 = vmatprep.subr.mxu0 0.0
    %3772 = vmatpush1.msra.mxu0 0.0
    %3773 = vmatprep.subr.mxu0 0.0
    %3774 = vmatpush1.msra.mxu0 0.0
    %3775 = vmatprep.subr.mxu0 0.0
    %3776 = vmatpush1.msra.mxu0 0.0
    %3777 = vmatprep.subr.mxu0 0.0
    %3778 = vmatpush1.msra.mxu0 0.0
    %3779 = vmatprep.subr.mxu0 0.0
    %3780 = vmatpush1.msra.mxu0 0.0
    %3781 = vmatprep.subr.mxu0 0.0
    %3782 = vmatpush1.msra.mxu0 0.0
    %3783 = vmatprep.subr.mxu0 %v3751
    %3784 = vmatpush1.msra.mxu0 %v3749
    %3785 = vmatprep.subr.mxu0 %v3734
    %3786 = vmatpush1.msra.mxu0 %v3733
    %3787 = vmatprep.subr.mxu0 0.0
    %3788 = vmatpush2.msra.mxu0 0.0
    %3789 = vmatprep.subr.mxu0 0.0
    %3790 = vmatpush2.msra.mxu0 0.0
    %3791 = vmatprep.subr.mxu0 0.0
    %3792 = vmatpush2.msra.mxu0 0.0
    %3793 = vmatprep.subr.mxu0 0.0
    %3794 = vmatpush2.msra.mxu0 0.0
    %3795 = vmatprep.subr.mxu0 0.0
    %3796 = vmatpush2.msra.mxu0 0.0
    %3797 = vmatprep.subr.mxu0 0.0
    %3798 = vmatpush2.msra.mxu0 0.0
    %3799 = vmatprep.subr.mxu0 0.0
    %3800 = vmatpush2.msra.mxu0 0.0
    %3801 = vmatprep.subr.mxu0 0.0
    %3802 = vmatpush2.msra.mxu0 0.0
    %3803 = vmatprep.subr.mxu0 0.0
    %3804 = vmatpush2.msra.mxu0 0.0
    %3805 = vmatprep.subr.mxu0 0.0
    %3806 = vmatpush2.msra.mxu0 0.0
    %3807 = vmatprep.subr.mxu0 0.0
    %3808 = vmatpush2.msra.mxu0 0.0
    %3809 = vmatprep.subr.mxu0 0.0
    %3810 = vmatpush2.msra.mxu0 0.0
    %3811 = vmatprep.subr.mxu0 0.0
    %3812 = vmatpush2.msra.mxu0 0.0
    %3813 = vmatprep.subr.mxu0 0.0
    %3814 = vmatpush2.msra.mxu0 0.0
    %3815 = vmatprep.subr.mxu0 0.0
    %3816 = vmatpush2.msra.mxu0 0.0
    %3817 = vmatprep.subr.mxu0 0.0
    %3818 = vmatpush2.msra.mxu0 0.0
    %3819 = vmatprep.mubr.f32.mxu0 0.0
    %3820 = vmatmul.mubr.f32.gmra.mxu0 %v3741
    %v3821 = vpop.f32.mrf.mxu0
    %v3822 = vadd.f32 0.0, %v3821
    %v3823 = vpop.f32.mrf.mxu0
    %v3824 = vadd.f32 0.0, %v3823
    %3825 = vmatprep.mubr.f32.mxu0 0.0
    %3826 = vmatmul.mubr.f32.gmra.mxu0 %v3744
    %v3827 = vpop.f32.mrf.mxu0
    %v3828 = vadd.f32 0.0, %v3827
    %v3829 = vpop.f32.mrf.mxu0
    %v3830 = vadd.f32 0.0, %v3829
    %3831 = vmatprep.mubr.f32.mxu0 0.0
    %3832 = vmatmul.mubr.f32.gmra.mxu0 %v3747
    %v3833 = vpop.f32.mrf.mxu0
    %v3834 = vadd.f32 0.0, %v3833
    %v3835 = vpop.f32.mrf.mxu0
    %v3836 = vadd.f32 0.0, %v3835
    %3837 = vdwg.mxu0
    %3838 = vmatprep.subr.mxu0 0.0
    %3839 = vmatpush1.msra.mxu0 0.0
    %3840 = vmatprep.subr.mxu0 0.0
    %3841 = vmatpush1.msra.mxu0 0.0
    %3842 = vmatprep.subr.mxu0 0.0
    %3843 = vmatpush1.msra.mxu0 0.0
    %3844 = vmatprep.subr.mxu0 0.0
    %3845 = vmatpush1.msra.mxu0 0.0
    %3846 = vmatprep.subr.mxu0 0.0
    %3847 = vmatpush1.msra.mxu0 0.0
    %3848 = vmatprep.subr.mxu0 0.0
    %3849 = vmatpush1.msra.mxu0 0.0
    %3850 = vmatprep.subr.mxu0 0.0
    %3851 = vmatpush1.msra.mxu0 0.0
    %3852 = vmatprep.subr.mxu0 0.0
    %3853 = vmatpush1.msra.mxu0 0.0
    %3854 = vmatprep.subr.mxu0 0.0
    %3855 = vmatpush1.msra.mxu0 0.0
    %3856 = vmatprep.subr.mxu0 0.0
    %3857 = vmatpush1.msra.mxu0 0.0
    %3858 = vmatprep.subr.mxu0 0.0
    %3859 = vmatpush1.msra.mxu0 0.0
    %3860 = vmatprep.subr.mxu0 0.0
    %3861 = vmatpush1.msra.mxu0 0.0
    %3862 = vmatprep.subr.mxu0 0.0
    %3863 = vmatpush1.msra.mxu0 0.0
    %3864 = vmatprep.subr.mxu0 0.0
    %3865 = vmatpush1.msra.mxu0 0.0
    %3866 = vmatprep.subr.mxu0 0.0
    %3867 = vmatpush1.msra.mxu0 %v3753
    %3868 = vmatprep.subr.mxu0 0.0
    %3869 = vmatpush1.msra.mxu0 %v3725
    %3870 = vmatprep.subr.mxu0 0.0
    %3871 = vmatpush2.msra.mxu0 0.0
    %3872 = vmatprep.subr.mxu0 0.0
    %3873 = vmatpush2.msra.mxu0 0.0
    %3874 = vmatprep.subr.mxu0 0.0
    %3875 = vmatpush2.msra.mxu0 0.0
    %3876 = vmatprep.subr.mxu0 0.0
    %3877 = vmatpush2.msra.mxu0 0.0
    %3878 = vmatprep.subr.mxu0 0.0
    %3879 = vmatpush2.msra.mxu0 0.0
    %3880 = vmatprep.subr.mxu0 0.0
    %3881 = vmatpush2.msra.mxu0 0.0
    %3882 = vmatprep.subr.mxu0 0.0
    %3883 = vmatpush2.msra.mxu0 0.0
    %3884 = vmatprep.subr.mxu0 0.0
    %3885 = vmatpush2.msra.mxu0 0.0
    %3886 = vmatprep.subr.mxu0 0.0
    %3887 = vmatpush2.msra.mxu0 0.0
    %3888 = vmatprep.subr.mxu0 0.0
    %3889 = vmatpush2.msra.mxu0 0.0
    %3890 = vmatprep.subr.mxu0 0.0
    %3891 = vmatpush2.msra.mxu0 0.0
    %3892 = vmatprep.subr.mxu0 0.0
    %3893 = vmatpush2.msra.mxu0 0.0
    %3894 = vmatprep.subr.mxu0 0.0
    %3895 = vmatpush2.msra.mxu0 0.0
    %3896 = vmatprep.subr.mxu0 0.0
    %3897 = vmatpush2.msra.mxu0 0.0
    %3898 = vmatprep.subr.mxu0 0.0
    %3899 = vmatpush2.msra.mxu0 0.0
    %3900 = vmatprep.subr.mxu0 0.0
    %3901 = vmatpush2.msra.mxu0 0.0
    %3902 = vmatprep.mubr.f32.mxu0 0.0
    %3903 = vmatmul.mubr.f32.gmra.mxu0 %v3741
    %v3904 = vpop.f32.mrf.mxu0
    %v3905 = vadd.f32 0.0, %v3904
    %v3906 = vpop.f32.mrf.mxu0
    %3907 = vmatprep.mubr.f32.mxu0 0.0
    %3908 = vmatmul.mubr.f32.gmra.mxu0 %v3744
    %v3909 = vpop.f32.mrf.mxu0
    %v3910 = vadd.f32 0.0, %v3909
    %v3911 = vpop.f32.mrf.mxu0
    %3912 = vmatprep.mubr.f32.mxu0 0.0
    %3913 = vmatmul.mubr.f32.gmra.mxu0 %v3747
    %v3914 = vpop.f32.mrf.mxu0
    %v3915 = vadd.f32 0.0, %v3914
    %v3916 = vpop.f32.mrf.mxu0
    %3917 = vdwg.mxu0
    %v3918 = vadd.f32 %v3707, %v3822
    %v3919 = vadd.f32 %v3708, %v3824
    %v3920 = vadd.f32 %v3709, %v3905
    %v3921 = vadd.f32 %v3710, %v3828
    %v3922 = vadd.f32 %v3711, %v3830
    %v3923 = vadd.f32 %v3712, %v3910
    %v3924 = vadd.f32 %v3713, %v3834
    %v3925 = vadd.f32 %v3714, %v3836
    %v3926 = vadd.f32 %v3715, %v3915
    %s3927 = scalar_lea.vmem %s3, 360
    %v3928 = vld [vmem:[%s3927] sm:$0xff]
    %v3929 = vld [vmem:[%s3927 + $0x8] sm:$0xff]
    %v3930 = vld [vmem:[%s3927 + $0x10] sm:$0xf]
    %3931 = vrot.lane.b32.xlu0 %v787, 92
    %v3932 = vpop.permute.xlu0 %3931
    %3933 = vrot.lane.b32.xlu0 %v788, 92
    %v3934 = vpop.permute.xlu0 %3933
    %3935 = vrot.lane.b32.xlu0 %v789, 92
    %v3936 = vpop.permute.xlu0 %3935
    %3937 = vrot.lane.b32.xlu0 %v790, 92
    %v3938 = vpop.permute.xlu0 %3937
    %3939 = vrot.lane.b32.xlu0 %v791, 92
    %v3940 = vpop.permute.xlu0 %3939
    %3941 = vrot.lane.b32.xlu0 %v792, 92
    %v3942 = vpop.permute.xlu0 %3941
    %vm3943 = vcmask 752640
    %v3944 = vsel %vm3943, %v3932, %v3934
    %v3945 = vsel %vm3943, %v3934, %v3936
    %v3946 = vsel %vm3943, %v3938, %v3940
    %v3947 = vsel %vm3943, %v3940, %v3942
    %v3952 = vsel %vm826, %v3928, 0
    %v3955 = vsel %vm826, %v3929, 0
    %v3958 = vsel %vm826, %v3930, 0
    %v3960 = vsel %vm836, %v3946, 0
    %v3962 = vsel %vm836, %v3947, 0
    %v3964 = vsel %vm836, %v3942, 0
    %3966 = vmatprep.subr.mxu0 0.0
    %3967 = vmatpush1.msra.mxu0 0.0
    %3968 = vmatprep.subr.mxu0 0.0
    %3969 = vmatpush1.msra.mxu0 0.0
    %3970 = vmatprep.subr.mxu0 0.0
    %3971 = vmatpush1.msra.mxu0 0.0
    %3972 = vmatprep.subr.mxu0 0.0
    %3973 = vmatpush1.msra.mxu0 0.0
    %3974 = vmatprep.subr.mxu0 0.0
    %3975 = vmatpush1.msra.mxu0 0.0
    %3976 = vmatprep.subr.mxu0 0.0
    %3977 = vmatpush1.msra.mxu0 0.0
    %3978 = vmatprep.subr.mxu0 0.0
    %3979 = vmatpush1.msra.mxu0 0.0
    %3980 = vmatprep.subr.mxu0 0.0
    %3981 = vmatpush1.msra.mxu0 0.0
    %3982 = vmatprep.subr.mxu0 0.0
    %3983 = vmatpush1.msra.mxu0 0.0
    %3984 = vmatprep.subr.mxu0 0.0
    %3985 = vmatpush1.msra.mxu0 0.0
    %3986 = vmatprep.subr.mxu0 0.0
    %3987 = vmatpush1.msra.mxu0 0.0
    %3988 = vmatprep.subr.mxu0 0.0
    %3989 = vmatpush1.msra.mxu0 0.0
    %3990 = vmatprep.subr.mxu0 0.0
    %3991 = vmatpush1.msra.mxu0 0.0
    %3992 = vmatprep.subr.mxu0 0.0
    %3993 = vmatpush1.msra.mxu0 0.0
    %3994 = vmatprep.subr.mxu0 %v3962
    %3995 = vmatpush1.msra.mxu0 %v3960
    %3996 = vmatprep.subr.mxu0 %v3945
    %3997 = vmatpush1.msra.mxu0 %v3944
    %3998 = vmatprep.subr.mxu0 0.0
    %3999 = vmatpush2.msra.mxu0 0.0
    %4000 = vmatprep.subr.mxu0 0.0
    %4001 = vmatpush2.msra.mxu0 0.0
    %4002 = vmatprep.subr.mxu0 0.0
    %4003 = vmatpush2.msra.mxu0 0.0
    %4004 = vmatprep.subr.mxu0 0.0
    %4005 = vmatpush2.msra.mxu0 0.0
    %4006 = vmatprep.subr.mxu0 0.0
    %4007 = vmatpush2.msra.mxu0 0.0
    %4008 = vmatprep.subr.mxu0 0.0
    %4009 = vmatpush2.msra.mxu0 0.0
    %4010 = vmatprep.subr.mxu0 0.0
    %4011 = vmatpush2.msra.mxu0 0.0
    %4012 = vmatprep.subr.mxu0 0.0
    %4013 = vmatpush2.msra.mxu0 0.0
    %4014 = vmatprep.subr.mxu0 0.0
    %4015 = vmatpush2.msra.mxu0 0.0
    %4016 = vmatprep.subr.mxu0 0.0
    %4017 = vmatpush2.msra.mxu0 0.0
    %4018 = vmatprep.subr.mxu0 0.0
    %4019 = vmatpush2.msra.mxu0 0.0
    %4020 = vmatprep.subr.mxu0 0.0
    %4021 = vmatpush2.msra.mxu0 0.0
    %4022 = vmatprep.subr.mxu0 0.0
    %4023 = vmatpush2.msra.mxu0 0.0
    %4024 = vmatprep.subr.mxu0 0.0
    %4025 = vmatpush2.msra.mxu0 0.0
    %4026 = vmatprep.subr.mxu0 0.0
    %4027 = vmatpush2.msra.mxu0 0.0
    %4028 = vmatprep.subr.mxu0 0.0
    %4029 = vmatpush2.msra.mxu0 0.0
    %4030 = vmatprep.mubr.f32.mxu0 0.0
    %4031 = vmatmul.mubr.f32.gmra.mxu0 %v3952
    %v4032 = vpop.f32.mrf.mxu0
    %v4033 = vadd.f32 0.0, %v4032
    %v4034 = vpop.f32.mrf.mxu0
    %v4035 = vadd.f32 0.0, %v4034
    %4036 = vmatprep.mubr.f32.mxu0 0.0
    %4037 = vmatmul.mubr.f32.gmra.mxu0 %v3955
    %v4038 = vpop.f32.mrf.mxu0
    %v4039 = vadd.f32 0.0, %v4038
    %v4040 = vpop.f32.mrf.mxu0
    %v4041 = vadd.f32 0.0, %v4040
    %4042 = vmatprep.mubr.f32.mxu0 0.0
    %4043 = vmatmul.mubr.f32.gmra.mxu0 %v3958
    %v4044 = vpop.f32.mrf.mxu0
    %v4045 = vadd.f32 0.0, %v4044
    %v4046 = vpop.f32.mrf.mxu0
    %v4047 = vadd.f32 0.0, %v4046
    %4048 = vdwg.mxu0
    %4049 = vmatprep.subr.mxu0 0.0
    %4050 = vmatpush1.msra.mxu0 0.0
    %4051 = vmatprep.subr.mxu0 0.0
    %4052 = vmatpush1.msra.mxu0 0.0
    %4053 = vmatprep.subr.mxu0 0.0
    %4054 = vmatpush1.msra.mxu0 0.0
    %4055 = vmatprep.subr.mxu0 0.0
    %4056 = vmatpush1.msra.mxu0 0.0
    %4057 = vmatprep.subr.mxu0 0.0
    %4058 = vmatpush1.msra.mxu0 0.0
    %4059 = vmatprep.subr.mxu0 0.0
    %4060 = vmatpush1.msra.mxu0 0.0
    %4061 = vmatprep.subr.mxu0 0.0
    %4062 = vmatpush1.msra.mxu0 0.0
    %4063 = vmatprep.subr.mxu0 0.0
    %4064 = vmatpush1.msra.mxu0 0.0
    %4065 = vmatprep.subr.mxu0 0.0
    %4066 = vmatpush1.msra.mxu0 0.0
    %4067 = vmatprep.subr.mxu0 0.0
    %4068 = vmatpush1.msra.mxu0 0.0
    %4069 = vmatprep.subr.mxu0 0.0
    %4070 = vmatpush1.msra.mxu0 0.0
    %4071 = vmatprep.subr.mxu0 0.0
    %4072 = vmatpush1.msra.mxu0 0.0
    %4073 = vmatprep.subr.mxu0 0.0
    %4074 = vmatpush1.msra.mxu0 0.0
    %4075 = vmatprep.subr.mxu0 0.0
    %4076 = vmatpush1.msra.mxu0 0.0
    %4077 = vmatprep.subr.mxu0 0.0
    %4078 = vmatpush1.msra.mxu0 %v3964
    %4079 = vmatprep.subr.mxu0 0.0
    %4080 = vmatpush1.msra.mxu0 %v3936
    %4081 = vmatprep.subr.mxu0 0.0
    %4082 = vmatpush2.msra.mxu0 0.0
    %4083 = vmatprep.subr.mxu0 0.0
    %4084 = vmatpush2.msra.mxu0 0.0
    %4085 = vmatprep.subr.mxu0 0.0
    %4086 = vmatpush2.msra.mxu0 0.0
    %4087 = vmatprep.subr.mxu0 0.0
    %4088 = vmatpush2.msra.mxu0 0.0
    %4089 = vmatprep.subr.mxu0 0.0
    %4090 = vmatpush2.msra.mxu0 0.0
    %4091 = vmatprep.subr.mxu0 0.0
    %4092 = vmatpush2.msra.mxu0 0.0
    %4093 = vmatprep.subr.mxu0 0.0
    %4094 = vmatpush2.msra.mxu0 0.0
    %4095 = vmatprep.subr.mxu0 0.0
    %4096 = vmatpush2.msra.mxu0 0.0
    %4097 = vmatprep.subr.mxu0 0.0
    %4098 = vmatpush2.msra.mxu0 0.0
    %4099 = vmatprep.subr.mxu0 0.0
    %4100 = vmatpush2.msra.mxu0 0.0
    %4101 = vmatprep.subr.mxu0 0.0
    %4102 = vmatpush2.msra.mxu0 0.0
    %4103 = vmatprep.subr.mxu0 0.0
    %4104 = vmatpush2.msra.mxu0 0.0
    %4105 = vmatprep.subr.mxu0 0.0
    %4106 = vmatpush2.msra.mxu0 0.0
    %4107 = vmatprep.subr.mxu0 0.0
    %4108 = vmatpush2.msra.mxu0 0.0
    %4109 = vmatprep.subr.mxu0 0.0
    %4110 = vmatpush2.msra.mxu0 0.0
    %4111 = vmatprep.subr.mxu0 0.0
    %4112 = vmatpush2.msra.mxu0 0.0
    %4113 = vmatprep.mubr.f32.mxu0 0.0
    %4114 = vmatmul.mubr.f32.gmra.mxu0 %v3952
    %v4115 = vpop.f32.mrf.mxu0
    %v4116 = vadd.f32 0.0, %v4115
    %v4117 = vpop.f32.mrf.mxu0
    %4118 = vmatprep.mubr.f32.mxu0 0.0
    %4119 = vmatmul.mubr.f32.gmra.mxu0 %v3955
    %v4120 = vpop.f32.mrf.mxu0
    %v4121 = vadd.f32 0.0, %v4120
    %v4122 = vpop.f32.mrf.mxu0
    %4123 = vmatprep.mubr.f32.mxu0 0.0
    %4124 = vmatmul.mubr.f32.gmra.mxu0 %v3958
    %v4125 = vpop.f32.mrf.mxu0
    %v4126 = vadd.f32 0.0, %v4125
    %v4127 = vpop.f32.mrf.mxu0
    %4128 = vdwg.mxu0
    %v4129 = vadd.f32 %v3918, %v4033
    %v4130 = vadd.f32 %v3919, %v4035
    %v4131 = vadd.f32 %v3920, %v4116
    %v4132 = vadd.f32 %v3921, %v4039
    %v4133 = vadd.f32 %v3922, %v4041
    %v4134 = vadd.f32 %v3923, %v4121
    %v4135 = vadd.f32 %v3924, %v4045
    %v4136 = vadd.f32 %v3925, %v4047
    %v4137 = vadd.f32 %v3926, %v4126
    %s4138 = scalar_lea.vmem %s3, 384
    %v4139 = vld [vmem:[%s4138] sm:$0xff]
    %v4140 = vld [vmem:[%s4138 + $0x8] sm:$0xff]
    %v4141 = vld [vmem:[%s4138 + $0x10] sm:$0xf]
    %4142 = vrot.lane.b32.xlu0 %v787, 91
    %v4143 = vpop.permute.xlu0 %4142
    %4144 = vrot.lane.b32.xlu0 %v788, 91
    %v4145 = vpop.permute.xlu0 %4144
    %4146 = vrot.lane.b32.xlu0 %v789, 91
    %v4147 = vpop.permute.xlu0 %4146
    %4148 = vrot.lane.b32.xlu0 %v790, 91
    %v4149 = vpop.permute.xlu0 %4148
    %4150 = vrot.lane.b32.xlu0 %v791, 91
    %v4151 = vpop.permute.xlu0 %4150
    %4152 = vrot.lane.b32.xlu0 %v792, 91
    %v4153 = vpop.permute.xlu0 %4152
    %vm4154 = vcmask 744448
    %v4155 = vsel %vm4154, %v4143, %v4145
    %v4156 = vsel %vm4154, %v4145, %v4147
    %v4157 = vsel %vm4154, %v4149, %v4151
    %v4158 = vsel %vm4154, %v4151, %v4153
    %v4163 = vsel %vm826, %v4139, 0
    %v4166 = vsel %vm826, %v4140, 0
    %v4169 = vsel %vm826, %v4141, 0
    %v4171 = vsel %vm836, %v4157, 0
    %v4173 = vsel %vm836, %v4158, 0
    %v4175 = vsel %vm836, %v4153, 0
    %4177 = vmatprep.subr.mxu0 0.0
    %4178 = vmatpush1.msra.mxu0 0.0
    %4179 = vmatprep.subr.mxu0 0.0
    %4180 = vmatpush1.msra.mxu0 0.0
    %4181 = vmatprep.subr.mxu0 0.0
    %4182 = vmatpush1.msra.mxu0 0.0
    %4183 = vmatprep.subr.mxu0 0.0
    %4184 = vmatpush1.msra.mxu0 0.0
    %4185 = vmatprep.subr.mxu0 0.0
    %4186 = vmatpush1.msra.mxu0 0.0
    %4187 = vmatprep.subr.mxu0 0.0
    %4188 = vmatpush1.msra.mxu0 0.0
    %4189 = vmatprep.subr.mxu0 0.0
    %4190 = vmatpush1.msra.mxu0 0.0
    %4191 = vmatprep.subr.mxu0 0.0
    %4192 = vmatpush1.msra.mxu0 0.0
    %4193 = vmatprep.subr.mxu0 0.0
    %4194 = vmatpush1.msra.mxu0 0.0
    %4195 = vmatprep.subr.mxu0 0.0
    %4196 = vmatpush1.msra.mxu0 0.0
    %4197 = vmatprep.subr.mxu0 0.0
    %4198 = vmatpush1.msra.mxu0 0.0
    %4199 = vmatprep.subr.mxu0 0.0
    %4200 = vmatpush1.msra.mxu0 0.0
    %4201 = vmatprep.subr.mxu0 0.0
    %4202 = vmatpush1.msra.mxu0 0.0
    %4203 = vmatprep.subr.mxu0 0.0
    %4204 = vmatpush1.msra.mxu0 0.0
    %4205 = vmatprep.subr.mxu0 %v4173
    %4206 = vmatpush1.msra.mxu0 %v4171
    %4207 = vmatprep.subr.mxu0 %v4156
    %4208 = vmatpush1.msra.mxu0 %v4155
    %4209 = vmatprep.subr.mxu0 0.0
    %4210 = vmatpush2.msra.mxu0 0.0
    %4211 = vmatprep.subr.mxu0 0.0
    %4212 = vmatpush2.msra.mxu0 0.0
    %4213 = vmatprep.subr.mxu0 0.0
    %4214 = vmatpush2.msra.mxu0 0.0
    %4215 = vmatprep.subr.mxu0 0.0
    %4216 = vmatpush2.msra.mxu0 0.0
    %4217 = vmatprep.subr.mxu0 0.0
    %4218 = vmatpush2.msra.mxu0 0.0
    %4219 = vmatprep.subr.mxu0 0.0
    %4220 = vmatpush2.msra.mxu0 0.0
    %4221 = vmatprep.subr.mxu0 0.0
    %4222 = vmatpush2.msra.mxu0 0.0
    %4223 = vmatprep.subr.mxu0 0.0
    %4224 = vmatpush2.msra.mxu0 0.0
    %4225 = vmatprep.subr.mxu0 0.0
    %4226 = vmatpush2.msra.mxu0 0.0
    %4227 = vmatprep.subr.mxu0 0.0
    %4228 = vmatpush2.msra.mxu0 0.0
    %4229 = vmatprep.subr.mxu0 0.0
    %4230 = vmatpush2.msra.mxu0 0.0
    %4231 = vmatprep.subr.mxu0 0.0
    %4232 = vmatpush2.msra.mxu0 0.0
    %4233 = vmatprep.subr.mxu0 0.0
    %4234 = vmatpush2.msra.mxu0 0.0
    %4235 = vmatprep.subr.mxu0 0.0
    %4236 = vmatpush2.msra.mxu0 0.0
    %4237 = vmatprep.subr.mxu0 0.0
    %4238 = vmatpush2.msra.mxu0 0.0
    %4239 = vmatprep.subr.mxu0 0.0
    %4240 = vmatpush2.msra.mxu0 0.0
    %4241 = vmatprep.mubr.f32.mxu0 0.0
    %4242 = vmatmul.mubr.f32.gmra.mxu0 %v4163
    %v4243 = vpop.f32.mrf.mxu0
    %v4244 = vadd.f32 0.0, %v4243
    %v4245 = vpop.f32.mrf.mxu0
    %v4246 = vadd.f32 0.0, %v4245
    %4247 = vmatprep.mubr.f32.mxu0 0.0
    %4248 = vmatmul.mubr.f32.gmra.mxu0 %v4166
    %v4249 = vpop.f32.mrf.mxu0
    %v4250 = vadd.f32 0.0, %v4249
    %v4251 = vpop.f32.mrf.mxu0
    %v4252 = vadd.f32 0.0, %v4251
    %4253 = vmatprep.mubr.f32.mxu0 0.0
    %4254 = vmatmul.mubr.f32.gmra.mxu0 %v4169
    %v4255 = vpop.f32.mrf.mxu0
    %v4256 = vadd.f32 0.0, %v4255
    %v4257 = vpop.f32.mrf.mxu0
    %v4258 = vadd.f32 0.0, %v4257
    %4259 = vdwg.mxu0
    %4260 = vmatprep.subr.mxu0 0.0
    %4261 = vmatpush1.msra.mxu0 0.0
    %4262 = vmatprep.subr.mxu0 0.0
    %4263 = vmatpush1.msra.mxu0 0.0
    %4264 = vmatprep.subr.mxu0 0.0
    %4265 = vmatpush1.msra.mxu0 0.0
    %4266 = vmatprep.subr.mxu0 0.0
    %4267 = vmatpush1.msra.mxu0 0.0
    %4268 = vmatprep.subr.mxu0 0.0
    %4269 = vmatpush1.msra.mxu0 0.0
    %4270 = vmatprep.subr.mxu0 0.0
    %4271 = vmatpush1.msra.mxu0 0.0
    %4272 = vmatprep.subr.mxu0 0.0
    %4273 = vmatpush1.msra.mxu0 0.0
    %4274 = vmatprep.subr.mxu0 0.0
    %4275 = vmatpush1.msra.mxu0 0.0
    %4276 = vmatprep.subr.mxu0 0.0
    %4277 = vmatpush1.msra.mxu0 0.0
    %4278 = vmatprep.subr.mxu0 0.0
    %4279 = vmatpush1.msra.mxu0 0.0
    %4280 = vmatprep.subr.mxu0 0.0
    %4281 = vmatpush1.msra.mxu0 0.0
    %4282 = vmatprep.subr.mxu0 0.0
    %4283 = vmatpush1.msra.mxu0 0.0
    %4284 = vmatprep.subr.mxu0 0.0
    %4285 = vmatpush1.msra.mxu0 0.0
    %4286 = vmatprep.subr.mxu0 0.0
    %4287 = vmatpush1.msra.mxu0 0.0
    %4288 = vmatprep.subr.mxu0 0.0
    %4289 = vmatpush1.msra.mxu0 %v4175
    %4290 = vmatprep.subr.mxu0 0.0
    %4291 = vmatpush1.msra.mxu0 %v4147
    %4292 = vmatprep.subr.mxu0 0.0
    %4293 = vmatpush2.msra.mxu0 0.0
    %4294 = vmatprep.subr.mxu0 0.0
    %4295 = vmatpush2.msra.mxu0 0.0
    %4296 = vmatprep.subr.mxu0 0.0
    %4297 = vmatpush2.msra.mxu0 0.0
    %4298 = vmatprep.subr.mxu0 0.0
    %4299 = vmatpush2.msra.mxu0 0.0
    %4300 = vmatprep.subr.mxu0 0.0
    %4301 = vmatpush2.msra.mxu0 0.0
    %4302 = vmatprep.subr.mxu0 0.0
    %4303 = vmatpush2.msra.mxu0 0.0
    %4304 = vmatprep.subr.mxu0 0.0
    %4305 = vmatpush2.msra.mxu0 0.0
    %4306 = vmatprep.subr.mxu0 0.0
    %4307 = vmatpush2.msra.mxu0 0.0
    %4308 = vmatprep.subr.mxu0 0.0
    %4309 = vmatpush2.msra.mxu0 0.0
    %4310 = vmatprep.subr.mxu0 0.0
    %4311 = vmatpush2.msra.mxu0 0.0
    %4312 = vmatprep.subr.mxu0 0.0
    %4313 = vmatpush2.msra.mxu0 0.0
    %4314 = vmatprep.subr.mxu0 0.0
    %4315 = vmatpush2.msra.mxu0 0.0
    %4316 = vmatprep.subr.mxu0 0.0
    %4317 = vmatpush2.msra.mxu0 0.0
    %4318 = vmatprep.subr.mxu0 0.0
    %4319 = vmatpush2.msra.mxu0 0.0
    %4320 = vmatprep.subr.mxu0 0.0
    %4321 = vmatpush2.msra.mxu0 0.0
    %4322 = vmatprep.subr.mxu0 0.0
    %4323 = vmatpush2.msra.mxu0 0.0
    %4324 = vmatprep.mubr.f32.mxu0 0.0
    %4325 = vmatmul.mubr.f32.gmra.mxu0 %v4163
    %v4326 = vpop.f32.mrf.mxu0
    %v4327 = vadd.f32 0.0, %v4326
    %v4328 = vpop.f32.mrf.mxu0
    %4329 = vmatprep.mubr.f32.mxu0 0.0
    %4330 = vmatmul.mubr.f32.gmra.mxu0 %v4166
    %v4331 = vpop.f32.mrf.mxu0
    %v4332 = vadd.f32 0.0, %v4331
    %v4333 = vpop.f32.mrf.mxu0
    %4334 = vmatprep.mubr.f32.mxu0 0.0
    %4335 = vmatmul.mubr.f32.gmra.mxu0 %v4169
    %v4336 = vpop.f32.mrf.mxu0
    %v4337 = vadd.f32 0.0, %v4336
    %v4338 = vpop.f32.mrf.mxu0
    %4339 = vdwg.mxu0
    %v4340 = vadd.f32 %v4129, %v4244
    %v4341 = vadd.f32 %v4130, %v4246
    %v4342 = vadd.f32 %v4131, %v4327
    %v4343 = vadd.f32 %v4132, %v4250
    %v4344 = vadd.f32 %v4133, %v4252
    %v4345 = vadd.f32 %v4134, %v4332
    %v4346 = vadd.f32 %v4135, %v4256
    %v4347 = vadd.f32 %v4136, %v4258
    %v4348 = vadd.f32 %v4137, %v4337
    %s4349 = scalar_lea.vmem %s3, 408
    %v4350 = vld [vmem:[%s4349] sm:$0xff]
    %v4351 = vld [vmem:[%s4349 + $0x8] sm:$0xff]
    %v4352 = vld [vmem:[%s4349 + $0x10] sm:$0xf]
    %4353 = vrot.lane.b32.xlu0 %v787, 90
    %v4354 = vpop.permute.xlu0 %4353
    %4355 = vrot.lane.b32.xlu0 %v788, 90
    %v4356 = vpop.permute.xlu0 %4355
    %4357 = vrot.lane.b32.xlu0 %v789, 90
    %v4358 = vpop.permute.xlu0 %4357
    %4359 = vrot.lane.b32.xlu0 %v790, 90
    %v4360 = vpop.permute.xlu0 %4359
    %4361 = vrot.lane.b32.xlu0 %v791, 90
    %v4362 = vpop.permute.xlu0 %4361
    %4363 = vrot.lane.b32.xlu0 %v792, 90
    %v4364 = vpop.permute.xlu0 %4363
    %vm4365 = vcmask 736256
    %v4366 = vsel %vm4365, %v4354, %v4356
    %v4367 = vsel %vm4365, %v4356, %v4358
    %v4368 = vsel %vm4365, %v4360, %v4362
    %v4369 = vsel %vm4365, %v4362, %v4364
    %v4374 = vsel %vm826, %v4350, 0
    %v4377 = vsel %vm826, %v4351, 0
    %v4380 = vsel %vm826, %v4352, 0
    %v4382 = vsel %vm836, %v4368, 0
    %v4384 = vsel %vm836, %v4369, 0
    %v4386 = vsel %vm836, %v4364, 0
    %4388 = vmatprep.subr.mxu0 0.0
    %4389 = vmatpush1.msra.mxu0 0.0
    %4390 = vmatprep.subr.mxu0 0.0
    %4391 = vmatpush1.msra.mxu0 0.0
    %4392 = vmatprep.subr.mxu0 0.0
    %4393 = vmatpush1.msra.mxu0 0.0
    %4394 = vmatprep.subr.mxu0 0.0
    %4395 = vmatpush1.msra.mxu0 0.0
    %4396 = vmatprep.subr.mxu0 0.0
    %4397 = vmatpush1.msra.mxu0 0.0
    %4398 = vmatprep.subr.mxu0 0.0
    %4399 = vmatpush1.msra.mxu0 0.0
    %4400 = vmatprep.subr.mxu0 0.0
    %4401 = vmatpush1.msra.mxu0 0.0
    %4402 = vmatprep.subr.mxu0 0.0
    %4403 = vmatpush1.msra.mxu0 0.0
    %4404 = vmatprep.subr.mxu0 0.0
    %4405 = vmatpush1.msra.mxu0 0.0
    %4406 = vmatprep.subr.mxu0 0.0
    %4407 = vmatpush1.msra.mxu0 0.0
    %4408 = vmatprep.subr.mxu0 0.0
    %4409 = vmatpush1.msra.mxu0 0.0
    %4410 = vmatprep.subr.mxu0 0.0
    %4411 = vmatpush1.msra.mxu0 0.0
    %4412 = vmatprep.subr.mxu0 0.0
    %4413 = vmatpush1.msra.mxu0 0.0
    %4414 = vmatprep.subr.mxu0 0.0
    %4415 = vmatpush1.msra.mxu0 0.0
    %4416 = vmatprep.subr.mxu0 %v4384
    %4417 = vmatpush1.msra.mxu0 %v4382
    %4418 = vmatprep.subr.mxu0 %v4367
    %4419 = vmatpush1.msra.mxu0 %v4366
    %4420 = vmatprep.subr.mxu0 0.0
    %4421 = vmatpush2.msra.mxu0 0.0
    %4422 = vmatprep.subr.mxu0 0.0
    %4423 = vmatpush2.msra.mxu0 0.0
    %4424 = vmatprep.subr.mxu0 0.0
    %4425 = vmatpush2.msra.mxu0 0.0
    %4426 = vmatprep.subr.mxu0 0.0
    %4427 = vmatpush2.msra.mxu0 0.0
    %4428 = vmatprep.subr.mxu0 0.0
    %4429 = vmatpush2.msra.mxu0 0.0
    %4430 = vmatprep.subr.mxu0 0.0
    %4431 = vmatpush2.msra.mxu0 0.0
    %4432 = vmatprep.subr.mxu0 0.0
    %4433 = vmatpush2.msra.mxu0 0.0
    %4434 = vmatprep.subr.mxu0 0.0
    %4435 = vmatpush2.msra.mxu0 0.0
    %4436 = vmatprep.subr.mxu0 0.0
    %4437 = vmatpush2.msra.mxu0 0.0
    %4438 = vmatprep.subr.mxu0 0.0
    %4439 = vmatpush2.msra.mxu0 0.0
    %4440 = vmatprep.subr.mxu0 0.0
    %4441 = vmatpush2.msra.mxu0 0.0
    %4442 = vmatprep.subr.mxu0 0.0
    %4443 = vmatpush2.msra.mxu0 0.0
    %4444 = vmatprep.subr.mxu0 0.0
    %4445 = vmatpush2.msra.mxu0 0.0
    %4446 = vmatprep.subr.mxu0 0.0
    %4447 = vmatpush2.msra.mxu0 0.0
    %4448 = vmatprep.subr.mxu0 0.0
    %4449 = vmatpush2.msra.mxu0 0.0
    %4450 = vmatprep.subr.mxu0 0.0
    %4451 = vmatpush2.msra.mxu0 0.0
    %4452 = vmatprep.mubr.f32.mxu0 0.0
    %4453 = vmatmul.mubr.f32.gmra.mxu0 %v4374
    %v4454 = vpop.f32.mrf.mxu0
    %v4455 = vadd.f32 0.0, %v4454
    %v4456 = vpop.f32.mrf.mxu0
    %v4457 = vadd.f32 0.0, %v4456
    %4458 = vmatprep.mubr.f32.mxu0 0.0
    %4459 = vmatmul.mubr.f32.gmra.mxu0 %v4377
    %v4460 = vpop.f32.mrf.mxu0
    %v4461 = vadd.f32 0.0, %v4460
    %v4462 = vpop.f32.mrf.mxu0
    %v4463 = vadd.f32 0.0, %v4462
    %4464 = vmatprep.mubr.f32.mxu0 0.0
    %4465 = vmatmul.mubr.f32.gmra.mxu0 %v4380
    %v4466 = vpop.f32.mrf.mxu0
    %v4467 = vadd.f32 0.0, %v4466
    %v4468 = vpop.f32.mrf.mxu0
    %v4469 = vadd.f32 0.0, %v4468
    %4470 = vdwg.mxu0
    %4471 = vmatprep.subr.mxu0 0.0
    %4472 = vmatpush1.msra.mxu0 0.0
    %4473 = vmatprep.subr.mxu0 0.0
    %4474 = vmatpush1.msra.mxu0 0.0
    %4475 = vmatprep.subr.mxu0 0.0
    %4476 = vmatpush1.msra.mxu0 0.0
    %4477 = vmatprep.subr.mxu0 0.0
    %4478 = vmatpush1.msra.mxu0 0.0
    %4479 = vmatprep.subr.mxu0 0.0
    %4480 = vmatpush1.msra.mxu0 0.0
    %4481 = vmatprep.subr.mxu0 0.0
    %4482 = vmatpush1.msra.mxu0 0.0
    %4483 = vmatprep.subr.mxu0 0.0
    %4484 = vmatpush1.msra.mxu0 0.0
    %4485 = vmatprep.subr.mxu0 0.0
    %4486 = vmatpush1.msra.mxu0 0.0
    %4487 = vmatprep.subr.mxu0 0.0
    %4488 = vmatpush1.msra.mxu0 0.0
    %4489 = vmatprep.subr.mxu0 0.0
    %4490 = vmatpush1.msra.mxu0 0.0
    %4491 = vmatprep.subr.mxu0 0.0
    %4492 = vmatpush1.msra.mxu0 0.0
    %4493 = vmatprep.subr.mxu0 0.0
    %4494 = vmatpush1.msra.mxu0 0.0
    %4495 = vmatprep.subr.mxu0 0.0
    %4496 = vmatpush1.msra.mxu0 0.0
    %4497 = vmatprep.subr.mxu0 0.0
    %4498 = vmatpush1.msra.mxu0 0.0
    %4499 = vmatprep.subr.mxu0 0.0
    %4500 = vmatpush1.msra.mxu0 %v4386
    %4501 = vmatprep.subr.mxu0 0.0
    %4502 = vmatpush1.msra.mxu0 %v4358
    %4503 = vmatprep.subr.mxu0 0.0
    %4504 = vmatpush2.msra.mxu0 0.0
    %4505 = vmatprep.subr.mxu0 0.0
    %4506 = vmatpush2.msra.mxu0 0.0
    %4507 = vmatprep.subr.mxu0 0.0
    %4508 = vmatpush2.msra.mxu0 0.0
    %4509 = vmatprep.subr.mxu0 0.0
    %4510 = vmatpush2.msra.mxu0 0.0
    %4511 = vmatprep.subr.mxu0 0.0
    %4512 = vmatpush2.msra.mxu0 0.0
    %4513 = vmatprep.subr.mxu0 0.0
    %4514 = vmatpush2.msra.mxu0 0.0
    %4515 = vmatprep.subr.mxu0 0.0
    %4516 = vmatpush2.msra.mxu0 0.0
    %4517 = vmatprep.subr.mxu0 0.0
    %4518 = vmatpush2.msra.mxu0 0.0
    %4519 = vmatprep.subr.mxu0 0.0
    %4520 = vmatpush2.msra.mxu0 0.0
    %4521 = vmatprep.subr.mxu0 0.0
    %4522 = vmatpush2.msra.mxu0 0.0
    %4523 = vmatprep.subr.mxu0 0.0
    %4524 = vmatpush2.msra.mxu0 0.0
    %4525 = vmatprep.subr.mxu0 0.0
    %4526 = vmatpush2.msra.mxu0 0.0
    %4527 = vmatprep.subr.mxu0 0.0
    %4528 = vmatpush2.msra.mxu0 0.0
    %4529 = vmatprep.subr.mxu0 0.0
    %4530 = vmatpush2.msra.mxu0 0.0
    %4531 = vmatprep.subr.mxu0 0.0
    %4532 = vmatpush2.msra.mxu0 0.0
    %4533 = vmatprep.subr.mxu0 0.0
    %4534 = vmatpush2.msra.mxu0 0.0
    %4535 = vmatprep.mubr.f32.mxu0 0.0
    %4536 = vmatmul.mubr.f32.gmra.mxu0 %v4374
    %v4537 = vpop.f32.mrf.mxu0
    %v4538 = vadd.f32 0.0, %v4537
    %v4539 = vpop.f32.mrf.mxu0
    %4540 = vmatprep.mubr.f32.mxu0 0.0
    %4541 = vmatmul.mubr.f32.gmra.mxu0 %v4377
    %v4542 = vpop.f32.mrf.mxu0
    %v4543 = vadd.f32 0.0, %v4542
    %v4544 = vpop.f32.mrf.mxu0
    %4545 = vmatprep.mubr.f32.mxu0 0.0
    %4546 = vmatmul.mubr.f32.gmra.mxu0 %v4380
    %v4547 = vpop.f32.mrf.mxu0
    %v4548 = vadd.f32 0.0, %v4547
    %v4549 = vpop.f32.mrf.mxu0
    %4550 = vdwg.mxu0
    %v4551 = vadd.f32 %v4340, %v4455
    %v4552 = vadd.f32 %v4341, %v4457
    %v4553 = vadd.f32 %v4342, %v4538
    %v4554 = vadd.f32 %v4343, %v4461
    %v4555 = vadd.f32 %v4344, %v4463
    %v4556 = vadd.f32 %v4345, %v4543
    %v4557 = vadd.f32 %v4346, %v4467
    %v4558 = vadd.f32 %v4347, %v4469
    %v4559 = vadd.f32 %v4348, %v4548
    %s4560 = scalar_lea.vmem %s3, 432
    %v4561 = vld [vmem:[%s4560] sm:$0xff]
    %v4562 = vld [vmem:[%s4560 + $0x8] sm:$0xff]
    %v4563 = vld [vmem:[%s4560 + $0x10] sm:$0xf]
    %4564 = vrot.lane.b32.xlu0 %v787, 89
    %v4565 = vpop.permute.xlu0 %4564
    %4566 = vrot.lane.b32.xlu0 %v788, 89
    %v4567 = vpop.permute.xlu0 %4566
    %4568 = vrot.lane.b32.xlu0 %v789, 89
    %v4569 = vpop.permute.xlu0 %4568
    %4570 = vrot.lane.b32.xlu0 %v790, 89
    %v4571 = vpop.permute.xlu0 %4570
    %4572 = vrot.lane.b32.xlu0 %v791, 89
    %v4573 = vpop.permute.xlu0 %4572
    %4574 = vrot.lane.b32.xlu0 %v792, 89
    %v4575 = vpop.permute.xlu0 %4574
    %vm4576 = vcmask 728064
    %v4577 = vsel %vm4576, %v4565, %v4567
    %v4578 = vsel %vm4576, %v4567, %v4569
    %v4579 = vsel %vm4576, %v4571, %v4573
    %v4580 = vsel %vm4576, %v4573, %v4575
    %v4585 = vsel %vm826, %v4561, 0
    %v4588 = vsel %vm826, %v4562, 0
    %v4591 = vsel %vm826, %v4563, 0
    %v4593 = vsel %vm836, %v4579, 0
    %v4595 = vsel %vm836, %v4580, 0
    %v4597 = vsel %vm836, %v4575, 0
    %4599 = vmatprep.subr.mxu0 0.0
    %4600 = vmatpush1.msra.mxu0 0.0
    %4601 = vmatprep.subr.mxu0 0.0
    %4602 = vmatpush1.msra.mxu0 0.0
    %4603 = vmatprep.subr.mxu0 0.0
    %4604 = vmatpush1.msra.mxu0 0.0
    %4605 = vmatprep.subr.mxu0 0.0
    %4606 = vmatpush1.msra.mxu0 0.0
    %4607 = vmatprep.subr.mxu0 0.0
    %4608 = vmatpush1.msra.mxu0 0.0
    %4609 = vmatprep.subr.mxu0 0.0
    %4610 = vmatpush1.msra.mxu0 0.0
    %4611 = vmatprep.subr.mxu0 0.0
    %4612 = vmatpush1.msra.mxu0 0.0
    %4613 = vmatprep.subr.mxu0 0.0
    %4614 = vmatpush1.msra.mxu0 0.0
    %4615 = vmatprep.subr.mxu0 0.0
    %4616 = vmatpush1.msra.mxu0 0.0
    %4617 = vmatprep.subr.mxu0 0.0
    %4618 = vmatpush1.msra.mxu0 0.0
    %4619 = vmatprep.subr.mxu0 0.0
    %4620 = vmatpush1.msra.mxu0 0.0
    %4621 = vmatprep.subr.mxu0 0.0
    %4622 = vmatpush1.msra.mxu0 0.0
    %4623 = vmatprep.subr.mxu0 0.0
    %4624 = vmatpush1.msra.mxu0 0.0
    %4625 = vmatprep.subr.mxu0 0.0
    %4626 = vmatpush1.msra.mxu0 0.0
    %4627 = vmatprep.subr.mxu0 %v4595
    %4628 = vmatpush1.msra.mxu0 %v4593
    %4629 = vmatprep.subr.mxu0 %v4578
    %4630 = vmatpush1.msra.mxu0 %v4577
    %4631 = vmatprep.subr.mxu0 0.0
    %4632 = vmatpush2.msra.mxu0 0.0
    %4633 = vmatprep.subr.mxu0 0.0
    %4634 = vmatpush2.msra.mxu0 0.0
    %4635 = vmatprep.subr.mxu0 0.0
    %4636 = vmatpush2.msra.mxu0 0.0
    %4637 = vmatprep.subr.mxu0 0.0
    %4638 = vmatpush2.msra.mxu0 0.0
    %4639 = vmatprep.subr.mxu0 0.0
    %4640 = vmatpush2.msra.mxu0 0.0
    %4641 = vmatprep.subr.mxu0 0.0
    %4642 = vmatpush2.msra.mxu0 0.0
    %4643 = vmatprep.subr.mxu0 0.0
    %4644 = vmatpush2.msra.mxu0 0.0
    %4645 = vmatprep.subr.mxu0 0.0
    %4646 = vmatpush2.msra.mxu0 0.0
    %4647 = vmatprep.subr.mxu0 0.0
    %4648 = vmatpush2.msra.mxu0 0.0
    %4649 = vmatprep.subr.mxu0 0.0
    %4650 = vmatpush2.msra.mxu0 0.0
    %4651 = vmatprep.subr.mxu0 0.0
    %4652 = vmatpush2.msra.mxu0 0.0
    %4653 = vmatprep.subr.mxu0 0.0
    %4654 = vmatpush2.msra.mxu0 0.0
    %4655 = vmatprep.subr.mxu0 0.0
    %4656 = vmatpush2.msra.mxu0 0.0
    %4657 = vmatprep.subr.mxu0 0.0
    %4658 = vmatpush2.msra.mxu0 0.0
    %4659 = vmatprep.subr.mxu0 0.0
    %4660 = vmatpush2.msra.mxu0 0.0
    %4661 = vmatprep.subr.mxu0 0.0
    %4662 = vmatpush2.msra.mxu0 0.0
    %4663 = vmatprep.mubr.f32.mxu0 0.0
    %4664 = vmatmul.mubr.f32.gmra.mxu0 %v4585
    %v4665 = vpop.f32.mrf.mxu0
    %v4666 = vadd.f32 0.0, %v4665
    %v4667 = vpop.f32.mrf.mxu0
    %v4668 = vadd.f32 0.0, %v4667
    %4669 = vmatprep.mubr.f32.mxu0 0.0
    %4670 = vmatmul.mubr.f32.gmra.mxu0 %v4588
    %v4671 = vpop.f32.mrf.mxu0
    %v4672 = vadd.f32 0.0, %v4671
    %v4673 = vpop.f32.mrf.mxu0
    %v4674 = vadd.f32 0.0, %v4673
    %4675 = vmatprep.mubr.f32.mxu0 0.0
    %4676 = vmatmul.mubr.f32.gmra.mxu0 %v4591
    %v4677 = vpop.f32.mrf.mxu0
    %v4678 = vadd.f32 0.0, %v4677
    %v4679 = vpop.f32.mrf.mxu0
    %v4680 = vadd.f32 0.0, %v4679
    %4681 = vdwg.mxu0
    %4682 = vmatprep.subr.mxu0 0.0
    %4683 = vmatpush1.msra.mxu0 0.0
    %4684 = vmatprep.subr.mxu0 0.0
    %4685 = vmatpush1.msra.mxu0 0.0
    %4686 = vmatprep.subr.mxu0 0.0
    %4687 = vmatpush1.msra.mxu0 0.0
    %4688 = vmatprep.subr.mxu0 0.0
    %4689 = vmatpush1.msra.mxu0 0.0
    %4690 = vmatprep.subr.mxu0 0.0
    %4691 = vmatpush1.msra.mxu0 0.0
    %4692 = vmatprep.subr.mxu0 0.0
    %4693 = vmatpush1.msra.mxu0 0.0
    %4694 = vmatprep.subr.mxu0 0.0
    %4695 = vmatpush1.msra.mxu0 0.0
    %4696 = vmatprep.subr.mxu0 0.0
    %4697 = vmatpush1.msra.mxu0 0.0
    %4698 = vmatprep.subr.mxu0 0.0
    %4699 = vmatpush1.msra.mxu0 0.0
    %4700 = vmatprep.subr.mxu0 0.0
    %4701 = vmatpush1.msra.mxu0 0.0
    %4702 = vmatprep.subr.mxu0 0.0
    %4703 = vmatpush1.msra.mxu0 0.0
    %4704 = vmatprep.subr.mxu0 0.0
    %4705 = vmatpush1.msra.mxu0 0.0
    %4706 = vmatprep.subr.mxu0 0.0
    %4707 = vmatpush1.msra.mxu0 0.0
    %4708 = vmatprep.subr.mxu0 0.0
    %4709 = vmatpush1.msra.mxu0 0.0
    %4710 = vmatprep.subr.mxu0 0.0
    %4711 = vmatpush1.msra.mxu0 %v4597
    %4712 = vmatprep.subr.mxu0 0.0
    %4713 = vmatpush1.msra.mxu0 %v4569
    %4714 = vmatprep.subr.mxu0 0.0
    %4715 = vmatpush2.msra.mxu0 0.0
    %4716 = vmatprep.subr.mxu0 0.0
    %4717 = vmatpush2.msra.mxu0 0.0
    %4718 = vmatprep.subr.mxu0 0.0
    %4719 = vmatpush2.msra.mxu0 0.0
    %4720 = vmatprep.subr.mxu0 0.0
    %4721 = vmatpush2.msra.mxu0 0.0
    %4722 = vmatprep.subr.mxu0 0.0
    %4723 = vmatpush2.msra.mxu0 0.0
    %4724 = vmatprep.subr.mxu0 0.0
    %4725 = vmatpush2.msra.mxu0 0.0
    %4726 = vmatprep.subr.mxu0 0.0
    %4727 = vmatpush2.msra.mxu0 0.0
    %4728 = vmatprep.subr.mxu0 0.0
    %4729 = vmatpush2.msra.mxu0 0.0
    %4730 = vmatprep.subr.mxu0 0.0
    %4731 = vmatpush2.msra.mxu0 0.0
    %4732 = vmatprep.subr.mxu0 0.0
    %4733 = vmatpush2.msra.mxu0 0.0
    %4734 = vmatprep.subr.mxu0 0.0
    %4735 = vmatpush2.msra.mxu0 0.0
    %4736 = vmatprep.subr.mxu0 0.0
    %4737 = vmatpush2.msra.mxu0 0.0
    %4738 = vmatprep.subr.mxu0 0.0
    %4739 = vmatpush2.msra.mxu0 0.0
    %4740 = vmatprep.subr.mxu0 0.0
    %4741 = vmatpush2.msra.mxu0 0.0
    %4742 = vmatprep.subr.mxu0 0.0
    %4743 = vmatpush2.msra.mxu0 0.0
    %4744 = vmatprep.subr.mxu0 0.0
    %4745 = vmatpush2.msra.mxu0 0.0
    %4746 = vmatprep.mubr.f32.mxu0 0.0
    %4747 = vmatmul.mubr.f32.gmra.mxu0 %v4585
    %v4748 = vpop.f32.mrf.mxu0
    %v4749 = vadd.f32 0.0, %v4748
    %v4750 = vpop.f32.mrf.mxu0
    %4751 = vmatprep.mubr.f32.mxu0 0.0
    %4752 = vmatmul.mubr.f32.gmra.mxu0 %v4588
    %v4753 = vpop.f32.mrf.mxu0
    %v4754 = vadd.f32 0.0, %v4753
    %v4755 = vpop.f32.mrf.mxu0
    %4756 = vmatprep.mubr.f32.mxu0 0.0
    %4757 = vmatmul.mubr.f32.gmra.mxu0 %v4591
    %v4758 = vpop.f32.mrf.mxu0
    %v4759 = vadd.f32 0.0, %v4758
    %v4760 = vpop.f32.mrf.mxu0
    %4761 = vdwg.mxu0
    %v4762 = vadd.f32 %v4551, %v4666
    %v4763 = vadd.f32 %v4552, %v4668
    %v4764 = vadd.f32 %v4553, %v4749
    %v4765 = vadd.f32 %v4554, %v4672
    %v4766 = vadd.f32 %v4555, %v4674
    %v4767 = vadd.f32 %v4556, %v4754
    %v4768 = vadd.f32 %v4557, %v4678
    %v4769 = vadd.f32 %v4558, %v4680
    %v4770 = vadd.f32 %v4559, %v4759
    %s4771 = scalar_lea.vmem %s3, 456
    %v4772 = vld [vmem:[%s4771] sm:$0xff]
    %v4773 = vld [vmem:[%s4771 + $0x8] sm:$0xff]
    %v4774 = vld [vmem:[%s4771 + $0x10] sm:$0xf]
    %4775 = vrot.lane.b32.xlu0 %v787, 88
    %v4776 = vpop.permute.xlu0 %4775
    %4777 = vrot.lane.b32.xlu0 %v788, 88
    %v4778 = vpop.permute.xlu0 %4777
    %4779 = vrot.lane.b32.xlu0 %v789, 88
    %v4780 = vpop.permute.xlu0 %4779
    %4781 = vrot.lane.b32.xlu0 %v790, 88
    %v4782 = vpop.permute.xlu0 %4781
    %4783 = vrot.lane.b32.xlu0 %v791, 88
    %v4784 = vpop.permute.xlu0 %4783
    %4785 = vrot.lane.b32.xlu0 %v792, 88
    %v4786 = vpop.permute.xlu0 %4785
    %vm4787 = vcmask 719872
    %v4788 = vsel %vm4787, %v4776, %v4778
    %v4789 = vsel %vm4787, %v4778, %v4780
    %v4790 = vsel %vm4787, %v4782, %v4784
    %v4791 = vsel %vm4787, %v4784, %v4786
    %v4796 = vsel %vm826, %v4772, 0
    %v4799 = vsel %vm826, %v4773, 0
    %v4802 = vsel %vm826, %v4774, 0
    %v4804 = vsel %vm836, %v4790, 0
    %v4806 = vsel %vm836, %v4791, 0
    %v4808 = vsel %vm836, %v4786, 0
    %4810 = vmatprep.subr.mxu0 0.0
    %4811 = vmatpush1.msra.mxu0 0.0
    %4812 = vmatprep.subr.mxu0 0.0
    %4813 = vmatpush1.msra.mxu0 0.0
    %4814 = vmatprep.subr.mxu0 0.0
    %4815 = vmatpush1.msra.mxu0 0.0
    %4816 = vmatprep.subr.mxu0 0.0
    %4817 = vmatpush1.msra.mxu0 0.0
    %4818 = vmatprep.subr.mxu0 0.0
    %4819 = vmatpush1.msra.mxu0 0.0
    %4820 = vmatprep.subr.mxu0 0.0
    %4821 = vmatpush1.msra.mxu0 0.0
    %4822 = vmatprep.subr.mxu0 0.0
    %4823 = vmatpush1.msra.mxu0 0.0
    %4824 = vmatprep.subr.mxu0 0.0
    %4825 = vmatpush1.msra.mxu0 0.0
    %4826 = vmatprep.subr.mxu0 0.0
    %4827 = vmatpush1.msra.mxu0 0.0
    %4828 = vmatprep.subr.mxu0 0.0
    %4829 = vmatpush1.msra.mxu0 0.0
    %4830 = vmatprep.subr.mxu0 0.0
    %4831 = vmatpush1.msra.mxu0 0.0
    %4832 = vmatprep.subr.mxu0 0.0
    %4833 = vmatpush1.msra.mxu0 0.0
    %4834 = vmatprep.subr.mxu0 0.0
    %4835 = vmatpush1.msra.mxu0 0.0
    %4836 = vmatprep.subr.mxu0 0.0
    %4837 = vmatpush1.msra.mxu0 0.0
    %4838 = vmatprep.subr.mxu0 %v4806
    %4839 = vmatpush1.msra.mxu0 %v4804
    %4840 = vmatprep.subr.mxu0 %v4789
    %4841 = vmatpush1.msra.mxu0 %v4788
    %4842 = vmatprep.subr.mxu0 0.0
    %4843 = vmatpush2.msra.mxu0 0.0
    %4844 = vmatprep.subr.mxu0 0.0
    %4845 = vmatpush2.msra.mxu0 0.0
    %4846 = vmatprep.subr.mxu0 0.0
    %4847 = vmatpush2.msra.mxu0 0.0
    %4848 = vmatprep.subr.mxu0 0.0
    %4849 = vmatpush2.msra.mxu0 0.0
    %4850 = vmatprep.subr.mxu0 0.0
    %4851 = vmatpush2.msra.mxu0 0.0
    %4852 = vmatprep.subr.mxu0 0.0
    %4853 = vmatpush2.msra.mxu0 0.0
    %4854 = vmatprep.subr.mxu0 0.0
    %4855 = vmatpush2.msra.mxu0 0.0
    %4856 = vmatprep.subr.mxu0 0.0
    %4857 = vmatpush2.msra.mxu0 0.0
    %4858 = vmatprep.subr.mxu0 0.0
    %4859 = vmatpush2.msra.mxu0 0.0
    %4860 = vmatprep.subr.mxu0 0.0
    %4861 = vmatpush2.msra.mxu0 0.0
    %4862 = vmatprep.subr.mxu0 0.0
    %4863 = vmatpush2.msra.mxu0 0.0
    %4864 = vmatprep.subr.mxu0 0.0
    %4865 = vmatpush2.msra.mxu0 0.0
    %4866 = vmatprep.subr.mxu0 0.0
    %4867 = vmatpush2.msra.mxu0 0.0
    %4868 = vmatprep.subr.mxu0 0.0
    %4869 = vmatpush2.msra.mxu0 0.0
    %4870 = vmatprep.subr.mxu0 0.0
    %4871 = vmatpush2.msra.mxu0 0.0
    %4872 = vmatprep.subr.mxu0 0.0
    %4873 = vmatpush2.msra.mxu0 0.0
    %4874 = vmatprep.mubr.f32.mxu0 0.0
    %4875 = vmatmul.mubr.f32.gmra.mxu0 %v4796
    %v4876 = vpop.f32.mrf.mxu0
    %v4877 = vadd.f32 0.0, %v4876
    %v4878 = vpop.f32.mrf.mxu0
    %v4879 = vadd.f32 0.0, %v4878
    %4880 = vmatprep.mubr.f32.mxu0 0.0
    %4881 = vmatmul.mubr.f32.gmra.mxu0 %v4799
    %v4882 = vpop.f32.mrf.mxu0
    %v4883 = vadd.f32 0.0, %v4882
    %v4884 = vpop.f32.mrf.mxu0
    %v4885 = vadd.f32 0.0, %v4884
    %4886 = vmatprep.mubr.f32.mxu0 0.0
    %4887 = vmatmul.mubr.f32.gmra.mxu0 %v4802
    %v4888 = vpop.f32.mrf.mxu0
    %v4889 = vadd.f32 0.0, %v4888
    %v4890 = vpop.f32.mrf.mxu0
    %v4891 = vadd.f32 0.0, %v4890
    %4892 = vdwg.mxu0
    %4893 = vmatprep.subr.mxu0 0.0
    %4894 = vmatpush1.msra.mxu0 0.0
    %4895 = vmatprep.subr.mxu0 0.0
    %4896 = vmatpush1.msra.mxu0 0.0
    %4897 = vmatprep.subr.mxu0 0.0
    %4898 = vmatpush1.msra.mxu0 0.0
    %4899 = vmatprep.subr.mxu0 0.0
    %4900 = vmatpush1.msra.mxu0 0.0
    %4901 = vmatprep.subr.mxu0 0.0
    %4902 = vmatpush1.msra.mxu0 0.0
    %4903 = vmatprep.subr.mxu0 0.0
    %4904 = vmatpush1.msra.mxu0 0.0
    %4905 = vmatprep.subr.mxu0 0.0
    %4906 = vmatpush1.msra.mxu0 0.0
    %4907 = vmatprep.subr.mxu0 0.0
    %4908 = vmatpush1.msra.mxu0 0.0
    %4909 = vmatprep.subr.mxu0 0.0
    %4910 = vmatpush1.msra.mxu0 0.0
    %4911 = vmatprep.subr.mxu0 0.0
    %4912 = vmatpush1.msra.mxu0 0.0
    %4913 = vmatprep.subr.mxu0 0.0
    %4914 = vmatpush1.msra.mxu0 0.0
    %4915 = vmatprep.subr.mxu0 0.0
    %4916 = vmatpush1.msra.mxu0 0.0
    %4917 = vmatprep.subr.mxu0 0.0
    %4918 = vmatpush1.msra.mxu0 0.0
    %4919 = vmatprep.subr.mxu0 0.0
    %4920 = vmatpush1.msra.mxu0 0.0
    %4921 = vmatprep.subr.mxu0 0.0
    %4922 = vmatpush1.msra.mxu0 %v4808
    %4923 = vmatprep.subr.mxu0 0.0
    %4924 = vmatpush1.msra.mxu0 %v4780
    %4925 = vmatprep.subr.mxu0 0.0
    %4926 = vmatpush2.msra.mxu0 0.0
    %4927 = vmatprep.subr.mxu0 0.0
    %4928 = vmatpush2.msra.mxu0 0.0
    %4929 = vmatprep.subr.mxu0 0.0
    %4930 = vmatpush2.msra.mxu0 0.0
    %4931 = vmatprep.subr.mxu0 0.0
    %4932 = vmatpush2.msra.mxu0 0.0
    %4933 = vmatprep.subr.mxu0 0.0
    %4934 = vmatpush2.msra.mxu0 0.0
    %4935 = vmatprep.subr.mxu0 0.0
    %4936 = vmatpush2.msra.mxu0 0.0
    %4937 = vmatprep.subr.mxu0 0.0
    %4938 = vmatpush2.msra.mxu0 0.0
    %4939 = vmatprep.subr.mxu0 0.0
    %4940 = vmatpush2.msra.mxu0 0.0
    %4941 = vmatprep.subr.mxu0 0.0
    %4942 = vmatpush2.msra.mxu0 0.0
    %4943 = vmatprep.subr.mxu0 0.0
    %4944 = vmatpush2.msra.mxu0 0.0
    %4945 = vmatprep.subr.mxu0 0.0
    %4946 = vmatpush2.msra.mxu0 0.0
    %4947 = vmatprep.subr.mxu0 0.0
    %4948 = vmatpush2.msra.mxu0 0.0
    %4949 = vmatprep.subr.mxu0 0.0
    %4950 = vmatpush2.msra.mxu0 0.0
    %4951 = vmatprep.subr.mxu0 0.0
    %4952 = vmatpush2.msra.mxu0 0.0
    %4953 = vmatprep.subr.mxu0 0.0
    %4954 = vmatpush2.msra.mxu0 0.0
    %4955 = vmatprep.subr.mxu0 0.0
    %4956 = vmatpush2.msra.mxu0 0.0
    %4957 = vmatprep.mubr.f32.mxu0 0.0
    %4958 = vmatmul.mubr.f32.gmra.mxu0 %v4796
    %v4959 = vpop.f32.mrf.mxu0
    %v4960 = vadd.f32 0.0, %v4959
    %v4961 = vpop.f32.mrf.mxu0
    %4962 = vmatprep.mubr.f32.mxu0 0.0
    %4963 = vmatmul.mubr.f32.gmra.mxu0 %v4799
    %v4964 = vpop.f32.mrf.mxu0
    %v4965 = vadd.f32 0.0, %v4964
    %v4966 = vpop.f32.mrf.mxu0
    %4967 = vmatprep.mubr.f32.mxu0 0.0
    %4968 = vmatmul.mubr.f32.gmra.mxu0 %v4802
    %v4969 = vpop.f32.mrf.mxu0
    %v4970 = vadd.f32 0.0, %v4969
    %v4971 = vpop.f32.mrf.mxu0
    %4972 = vdwg.mxu0
    %v4973 = vadd.f32 %v4762, %v4877
    %v4974 = vadd.f32 %v4763, %v4879
    %v4975 = vadd.f32 %v4764, %v4960
    %v4976 = vadd.f32 %v4765, %v4883
    %v4977 = vadd.f32 %v4766, %v4885
    %v4978 = vadd.f32 %v4767, %v4965
    %v4979 = vadd.f32 %v4768, %v4889
    %v4980 = vadd.f32 %v4769, %v4891
    %v4981 = vadd.f32 %v4770, %v4970
    %s4982 = scalar_lea.vmem %s3, 480
    %v4983 = vld [vmem:[%s4982] sm:$0xff]
    %v4984 = vld [vmem:[%s4982 + $0x8] sm:$0xff]
    %v4985 = vld [vmem:[%s4982 + $0x10] sm:$0xf]
    %4986 = vrot.lane.b32.xlu0 %v787, 80
    %v4987 = vpop.permute.xlu0 %4986
    %4988 = vrot.lane.b32.xlu0 %v788, 80
    %v4989 = vpop.permute.xlu0 %4988
    %4990 = vrot.lane.b32.xlu0 %v789, 80
    %v4991 = vpop.permute.xlu0 %4990
    %4992 = vrot.lane.b32.xlu0 %v790, 80
    %v4993 = vpop.permute.xlu0 %4992
    %4994 = vrot.lane.b32.xlu0 %v791, 80
    %v4995 = vpop.permute.xlu0 %4994
    %4996 = vrot.lane.b32.xlu0 %v792, 80
    %v4997 = vpop.permute.xlu0 %4996
    %vm4998 = vcmask 654336
    %v4999 = vsel %vm4998, %v4987, %v4989
    %v5000 = vsel %vm4998, %v4989, %v4991
    %v5001 = vsel %vm4998, %v4993, %v4995
    %v5002 = vsel %vm4998, %v4995, %v4997
    %v5007 = vsel %vm826, %v4983, 0
    %v5010 = vsel %vm826, %v4984, 0
    %v5013 = vsel %vm826, %v4985, 0
    %v5015 = vsel %vm836, %v5001, 0
    %v5017 = vsel %vm836, %v5002, 0
    %v5019 = vsel %vm836, %v4997, 0
    %5021 = vmatprep.subr.mxu0 0.0
    %5022 = vmatpush1.msra.mxu0 0.0
    %5023 = vmatprep.subr.mxu0 0.0
    %5024 = vmatpush1.msra.mxu0 0.0
    %5025 = vmatprep.subr.mxu0 0.0
    %5026 = vmatpush1.msra.mxu0 0.0
    %5027 = vmatprep.subr.mxu0 0.0
    %5028 = vmatpush1.msra.mxu0 0.0
    %5029 = vmatprep.subr.mxu0 0.0
    %5030 = vmatpush1.msra.mxu0 0.0
    %5031 = vmatprep.subr.mxu0 0.0
    %5032 = vmatpush1.msra.mxu0 0.0
    %5033 = vmatprep.subr.mxu0 0.0
    %5034 = vmatpush1.msra.mxu0 0.0
    %5035 = vmatprep.subr.mxu0 0.0
    %5036 = vmatpush1.msra.mxu0 0.0
    %5037 = vmatprep.subr.mxu0 0.0
    %5038 = vmatpush1.msra.mxu0 0.0
    %5039 = vmatprep.subr.mxu0 0.0
    %5040 = vmatpush1.msra.mxu0 0.0
    %5041 = vmatprep.subr.mxu0 0.0
    %5042 = vmatpush1.msra.mxu0 0.0
    %5043 = vmatprep.subr.mxu0 0.0
    %5044 = vmatpush1.msra.mxu0 0.0
    %5045 = vmatprep.subr.mxu0 0.0
    %5046 = vmatpush1.msra.mxu0 0.0
    %5047 = vmatprep.subr.mxu0 0.0
    %5048 = vmatpush1.msra.mxu0 0.0
    %5049 = vmatprep.subr.mxu0 %v5017
    %5050 = vmatpush1.msra.mxu0 %v5015
    %5051 = vmatprep.subr.mxu0 %v5000
    %5052 = vmatpush1.msra.mxu0 %v4999
    %5053 = vmatprep.subr.mxu0 0.0
    %5054 = vmatpush2.msra.mxu0 0.0
    %5055 = vmatprep.subr.mxu0 0.0
    %5056 = vmatpush2.msra.mxu0 0.0
    %5057 = vmatprep.subr.mxu0 0.0
    %5058 = vmatpush2.msra.mxu0 0.0
    %5059 = vmatprep.subr.mxu0 0.0
    %5060 = vmatpush2.msra.mxu0 0.0
    %5061 = vmatprep.subr.mxu0 0.0
    %5062 = vmatpush2.msra.mxu0 0.0
    %5063 = vmatprep.subr.mxu0 0.0
    %5064 = vmatpush2.msra.mxu0 0.0
    %5065 = vmatprep.subr.mxu0 0.0
    %5066 = vmatpush2.msra.mxu0 0.0
    %5067 = vmatprep.subr.mxu0 0.0
    %5068 = vmatpush2.msra.mxu0 0.0
    %5069 = vmatprep.subr.mxu0 0.0
    %5070 = vmatpush2.msra.mxu0 0.0
    %5071 = vmatprep.subr.mxu0 0.0
    %5072 = vmatpush2.msra.mxu0 0.0
    %5073 = vmatprep.subr.mxu0 0.0
    %5074 = vmatpush2.msra.mxu0 0.0
    %5075 = vmatprep.subr.mxu0 0.0
    %5076 = vmatpush2.msra.mxu0 0.0
    %5077 = vmatprep.subr.mxu0 0.0
    %5078 = vmatpush2.msra.mxu0 0.0
    %5079 = vmatprep.subr.mxu0 0.0
    %5080 = vmatpush2.msra.mxu0 0.0
    %5081 = vmatprep.subr.mxu0 0.0
    %5082 = vmatpush2.msra.mxu0 0.0
    %5083 = vmatprep.subr.mxu0 0.0
    %5084 = vmatpush2.msra.mxu0 0.0
    %5085 = vmatprep.mubr.f32.mxu0 0.0
    %5086 = vmatmul.mubr.f32.gmra.mxu0 %v5007
    %v5087 = vpop.f32.mrf.mxu0
    %v5088 = vadd.f32 0.0, %v5087
    %v5089 = vpop.f32.mrf.mxu0
    %v5090 = vadd.f32 0.0, %v5089
    %5091 = vmatprep.mubr.f32.mxu0 0.0
    %5092 = vmatmul.mubr.f32.gmra.mxu0 %v5010
    %v5093 = vpop.f32.mrf.mxu0
    %v5094 = vadd.f32 0.0, %v5093
    %v5095 = vpop.f32.mrf.mxu0
    %v5096 = vadd.f32 0.0, %v5095
    %5097 = vmatprep.mubr.f32.mxu0 0.0
    %5098 = vmatmul.mubr.f32.gmra.mxu0 %v5013
    %v5099 = vpop.f32.mrf.mxu0
    %v5100 = vadd.f32 0.0, %v5099
    %v5101 = vpop.f32.mrf.mxu0
    %v5102 = vadd.f32 0.0, %v5101
    %5103 = vdwg.mxu0
    %5104 = vmatprep.subr.mxu0 0.0
    %5105 = vmatpush1.msra.mxu0 0.0
    %5106 = vmatprep.subr.mxu0 0.0
    %5107 = vmatpush1.msra.mxu0 0.0
    %5108 = vmatprep.subr.mxu0 0.0
    %5109 = vmatpush1.msra.mxu0 0.0
    %5110 = vmatprep.subr.mxu0 0.0
    %5111 = vmatpush1.msra.mxu0 0.0
    %5112 = vmatprep.subr.mxu0 0.0
    %5113 = vmatpush1.msra.mxu0 0.0
    %5114 = vmatprep.subr.mxu0 0.0
    %5115 = vmatpush1.msra.mxu0 0.0
    %5116 = vmatprep.subr.mxu0 0.0
    %5117 = vmatpush1.msra.mxu0 0.0
    %5118 = vmatprep.subr.mxu0 0.0
    %5119 = vmatpush1.msra.mxu0 0.0
    %5120 = vmatprep.subr.mxu0 0.0
    %5121 = vmatpush1.msra.mxu0 0.0
    %5122 = vmatprep.subr.mxu0 0.0
    %5123 = vmatpush1.msra.mxu0 0.0
    %5124 = vmatprep.subr.mxu0 0.0
    %5125 = vmatpush1.msra.mxu0 0.0
    %5126 = vmatprep.subr.mxu0 0.0
    %5127 = vmatpush1.msra.mxu0 0.0
    %5128 = vmatprep.subr.mxu0 0.0
    %5129 = vmatpush1.msra.mxu0 0.0
    %5130 = vmatprep.subr.mxu0 0.0
    %5131 = vmatpush1.msra.mxu0 0.0
    %5132 = vmatprep.subr.mxu0 0.0
    %5133 = vmatpush1.msra.mxu0 %v5019
    %5134 = vmatprep.subr.mxu0 0.0
    %5135 = vmatpush1.msra.mxu0 %v4991
    %5136 = vmatprep.subr.mxu0 0.0
    %5137 = vmatpush2.msra.mxu0 0.0
    %5138 = vmatprep.subr.mxu0 0.0
    %5139 = vmatpush2.msra.mxu0 0.0
    %5140 = vmatprep.subr.mxu0 0.0
    %5141 = vmatpush2.msra.mxu0 0.0
    %5142 = vmatprep.subr.mxu0 0.0
    %5143 = vmatpush2.msra.mxu0 0.0
    %5144 = vmatprep.subr.mxu0 0.0
    %5145 = vmatpush2.msra.mxu0 0.0
    %5146 = vmatprep.subr.mxu0 0.0
    %5147 = vmatpush2.msra.mxu0 0.0
    %5148 = vmatprep.subr.mxu0 0.0
    %5149 = vmatpush2.msra.mxu0 0.0
    %5150 = vmatprep.subr.mxu0 0.0
    %5151 = vmatpush2.msra.mxu0 0.0
    %5152 = vmatprep.subr.mxu0 0.0
    %5153 = vmatpush2.msra.mxu0 0.0
    %5154 = vmatprep.subr.mxu0 0.0
    %5155 = vmatpush2.msra.mxu0 0.0
    %5156 = vmatprep.subr.mxu0 0.0
    %5157 = vmatpush2.msra.mxu0 0.0
    %5158 = vmatprep.subr.mxu0 0.0
    %5159 = vmatpush2.msra.mxu0 0.0
    %5160 = vmatprep.subr.mxu0 0.0
    %5161 = vmatpush2.msra.mxu0 0.0
    %5162 = vmatprep.subr.mxu0 0.0
    %5163 = vmatpush2.msra.mxu0 0.0
    %5164 = vmatprep.subr.mxu0 0.0
    %5165 = vmatpush2.msra.mxu0 0.0
    %5166 = vmatprep.subr.mxu0 0.0
    %5167 = vmatpush2.msra.mxu0 0.0
    %5168 = vmatprep.mubr.f32.mxu0 0.0
    %5169 = vmatmul.mubr.f32.gmra.mxu0 %v5007
    %v5170 = vpop.f32.mrf.mxu0
    %v5171 = vadd.f32 0.0, %v5170
    %v5172 = vpop.f32.mrf.mxu0
    %5173 = vmatprep.mubr.f32.mxu0 0.0
    %5174 = vmatmul.mubr.f32.gmra.mxu0 %v5010
    %v5175 = vpop.f32.mrf.mxu0
    %v5176 = vadd.f32 0.0, %v5175
    %v5177 = vpop.f32.mrf.mxu0
    %5178 = vmatprep.mubr.f32.mxu0 0.0
    %5179 = vmatmul.mubr.f32.gmra.mxu0 %v5013
    %v5180 = vpop.f32.mrf.mxu0
    %v5181 = vadd.f32 0.0, %v5180
    %v5182 = vpop.f32.mrf.mxu0
    %5183 = vdwg.mxu0
    %v5184 = vadd.f32 %v4973, %v5088
    %v5185 = vadd.f32 %v4974, %v5090
    %v5186 = vadd.f32 %v4975, %v5171
    %v5187 = vadd.f32 %v4976, %v5094
    %v5188 = vadd.f32 %v4977, %v5096
    %v5189 = vadd.f32 %v4978, %v5176
    %v5190 = vadd.f32 %v4979, %v5100
    %v5191 = vadd.f32 %v4980, %v5102
    %v5192 = vadd.f32 %v4981, %v5181
    %s5193 = scalar_lea.vmem %s3, 504
    %v5194 = vld [vmem:[%s5193] sm:$0xff]
    %v5195 = vld [vmem:[%s5193 + $0x8] sm:$0xff]
    %v5196 = vld [vmem:[%s5193 + $0x10] sm:$0xf]
    %5197 = vrot.lane.b32.xlu0 %v787, 79
    %v5198 = vpop.permute.xlu0 %5197
    %5199 = vrot.lane.b32.xlu0 %v788, 79
    %v5200 = vpop.permute.xlu0 %5199
    %5201 = vrot.lane.b32.xlu0 %v789, 79
    %v5202 = vpop.permute.xlu0 %5201
    %5203 = vrot.lane.b32.xlu0 %v790, 79
    %v5204 = vpop.permute.xlu0 %5203
    %5205 = vrot.lane.b32.xlu0 %v791, 79
    %v5206 = vpop.permute.xlu0 %5205
    %5207 = vrot.lane.b32.xlu0 %v792, 79
    %v5208 = vpop.permute.xlu0 %5207
    %vm5209 = vcmask 646144
    %v5210 = vsel %vm5209, %v5198, %v5200
    %v5211 = vsel %vm5209, %v5200, %v5202
    %v5212 = vsel %vm5209, %v5204, %v5206
    %v5213 = vsel %vm5209, %v5206, %v5208
    %v5218 = vsel %vm826, %v5194, 0
    %v5221 = vsel %vm826, %v5195, 0
    %v5224 = vsel %vm826, %v5196, 0
    %v5226 = vsel %vm836, %v5212, 0
    %v5228 = vsel %vm836, %v5213, 0
    %v5230 = vsel %vm836, %v5208, 0
    %5232 = vmatprep.subr.mxu0 0.0
    %5233 = vmatpush1.msra.mxu0 0.0
    %5234 = vmatprep.subr.mxu0 0.0
    %5235 = vmatpush1.msra.mxu0 0.0
    %5236 = vmatprep.subr.mxu0 0.0
    %5237 = vmatpush1.msra.mxu0 0.0
    %5238 = vmatprep.subr.mxu0 0.0
    %5239 = vmatpush1.msra.mxu0 0.0
    %5240 = vmatprep.subr.mxu0 0.0
    %5241 = vmatpush1.msra.mxu0 0.0
    %5242 = vmatprep.subr.mxu0 0.0
    %5243 = vmatpush1.msra.mxu0 0.0
    %5244 = vmatprep.subr.mxu0 0.0
    %5245 = vmatpush1.msra.mxu0 0.0
    %5246 = vmatprep.subr.mxu0 0.0
    %5247 = vmatpush1.msra.mxu0 0.0
    %5248 = vmatprep.subr.mxu0 0.0
    %5249 = vmatpush1.msra.mxu0 0.0
    %5250 = vmatprep.subr.mxu0 0.0
    %5251 = vmatpush1.msra.mxu0 0.0
    %5252 = vmatprep.subr.mxu0 0.0
    %5253 = vmatpush1.msra.mxu0 0.0
    %5254 = vmatprep.subr.mxu0 0.0
    %5255 = vmatpush1.msra.mxu0 0.0
    %5256 = vmatprep.subr.mxu0 0.0
    %5257 = vmatpush1.msra.mxu0 0.0
    %5258 = vmatprep.subr.mxu0 0.0
    %5259 = vmatpush1.msra.mxu0 0.0
    %5260 = vmatprep.subr.mxu0 %v5228
    %5261 = vmatpush1.msra.mxu0 %v5226
    %5262 = vmatprep.subr.mxu0 %v5211
    %5263 = vmatpush1.msra.mxu0 %v5210
    %5264 = vmatprep.subr.mxu0 0.0
    %5265 = vmatpush2.msra.mxu0 0.0
    %5266 = vmatprep.subr.mxu0 0.0
    %5267 = vmatpush2.msra.mxu0 0.0
    %5268 = vmatprep.subr.mxu0 0.0
    %5269 = vmatpush2.msra.mxu0 0.0
    %5270 = vmatprep.subr.mxu0 0.0
    %5271 = vmatpush2.msra.mxu0 0.0
    %5272 = vmatprep.subr.mxu0 0.0
    %5273 = vmatpush2.msra.mxu0 0.0
    %5274 = vmatprep.subr.mxu0 0.0
    %5275 = vmatpush2.msra.mxu0 0.0
    %5276 = vmatprep.subr.mxu0 0.0
    %5277 = vmatpush2.msra.mxu0 0.0
    %5278 = vmatprep.subr.mxu0 0.0
    %5279 = vmatpush2.msra.mxu0 0.0
    %5280 = vmatprep.subr.mxu0 0.0
    %5281 = vmatpush2.msra.mxu0 0.0
    %5282 = vmatprep.subr.mxu0 0.0
    %5283 = vmatpush2.msra.mxu0 0.0
    %5284 = vmatprep.subr.mxu0 0.0
    %5285 = vmatpush2.msra.mxu0 0.0
    %5286 = vmatprep.subr.mxu0 0.0
    %5287 = vmatpush2.msra.mxu0 0.0
    %5288 = vmatprep.subr.mxu0 0.0
    %5289 = vmatpush2.msra.mxu0 0.0
    %5290 = vmatprep.subr.mxu0 0.0
    %5291 = vmatpush2.msra.mxu0 0.0
    %5292 = vmatprep.subr.mxu0 0.0
    %5293 = vmatpush2.msra.mxu0 0.0
    %5294 = vmatprep.subr.mxu0 0.0
    %5295 = vmatpush2.msra.mxu0 0.0
    %5296 = vmatprep.mubr.f32.mxu0 0.0
    %5297 = vmatmul.mubr.f32.gmra.mxu0 %v5218
    %v5298 = vpop.f32.mrf.mxu0
    %v5299 = vadd.f32 0.0, %v5298
    %v5300 = vpop.f32.mrf.mxu0
    %v5301 = vadd.f32 0.0, %v5300
    %5302 = vmatprep.mubr.f32.mxu0 0.0
    %5303 = vmatmul.mubr.f32.gmra.mxu0 %v5221
    %v5304 = vpop.f32.mrf.mxu0
    %v5305 = vadd.f32 0.0, %v5304
    %v5306 = vpop.f32.mrf.mxu0
    %v5307 = vadd.f32 0.0, %v5306
    %5308 = vmatprep.mubr.f32.mxu0 0.0
    %5309 = vmatmul.mubr.f32.gmra.mxu0 %v5224
    %v5310 = vpop.f32.mrf.mxu0
    %v5311 = vadd.f32 0.0, %v5310
    %v5312 = vpop.f32.mrf.mxu0
    %v5313 = vadd.f32 0.0, %v5312
    %5314 = vdwg.mxu0
    %5315 = vmatprep.subr.mxu0 0.0
    %5316 = vmatpush1.msra.mxu0 0.0
    %5317 = vmatprep.subr.mxu0 0.0
    %5318 = vmatpush1.msra.mxu0 0.0
    %5319 = vmatprep.subr.mxu0 0.0
    %5320 = vmatpush1.msra.mxu0 0.0
    %5321 = vmatprep.subr.mxu0 0.0
    %5322 = vmatpush1.msra.mxu0 0.0
    %5323 = vmatprep.subr.mxu0 0.0
    %5324 = vmatpush1.msra.mxu0 0.0
    %5325 = vmatprep.subr.mxu0 0.0
    %5326 = vmatpush1.msra.mxu0 0.0
    %5327 = vmatprep.subr.mxu0 0.0
    %5328 = vmatpush1.msra.mxu0 0.0
    %5329 = vmatprep.subr.mxu0 0.0
    %5330 = vmatpush1.msra.mxu0 0.0
    %5331 = vmatprep.subr.mxu0 0.0
    %5332 = vmatpush1.msra.mxu0 0.0
    %5333 = vmatprep.subr.mxu0 0.0
    %5334 = vmatpush1.msra.mxu0 0.0
    %5335 = vmatprep.subr.mxu0 0.0
    %5336 = vmatpush1.msra.mxu0 0.0
    %5337 = vmatprep.subr.mxu0 0.0
    %5338 = vmatpush1.msra.mxu0 0.0
    %5339 = vmatprep.subr.mxu0 0.0
    %5340 = vmatpush1.msra.mxu0 0.0
    %5341 = vmatprep.subr.mxu0 0.0
    %5342 = vmatpush1.msra.mxu0 0.0
    %5343 = vmatprep.subr.mxu0 0.0
    %5344 = vmatpush1.msra.mxu0 %v5230
    %5345 = vmatprep.subr.mxu0 0.0
    %5346 = vmatpush1.msra.mxu0 %v5202
    %5347 = vmatprep.subr.mxu0 0.0
    %5348 = vmatpush2.msra.mxu0 0.0
    %5349 = vmatprep.subr.mxu0 0.0
    %5350 = vmatpush2.msra.mxu0 0.0
    %5351 = vmatprep.subr.mxu0 0.0
    %5352 = vmatpush2.msra.mxu0 0.0
    %5353 = vmatprep.subr.mxu0 0.0
    %5354 = vmatpush2.msra.mxu0 0.0
    %5355 = vmatprep.subr.mxu0 0.0
    %5356 = vmatpush2.msra.mxu0 0.0
    %5357 = vmatprep.subr.mxu0 0.0
    %5358 = vmatpush2.msra.mxu0 0.0
    %5359 = vmatprep.subr.mxu0 0.0
    %5360 = vmatpush2.msra.mxu0 0.0
    %5361 = vmatprep.subr.mxu0 0.0
    %5362 = vmatpush2.msra.mxu0 0.0
    %5363 = vmatprep.subr.mxu0 0.0
    %5364 = vmatpush2.msra.mxu0 0.0
    %5365 = vmatprep.subr.mxu0 0.0
    %5366 = vmatpush2.msra.mxu0 0.0
    %5367 = vmatprep.subr.mxu0 0.0
    %5368 = vmatpush2.msra.mxu0 0.0
    %5369 = vmatprep.subr.mxu0 0.0
    %5370 = vmatpush2.msra.mxu0 0.0
    %5371 = vmatprep.subr.mxu0 0.0
    %5372 = vmatpush2.msra.mxu0 0.0
    %5373 = vmatprep.subr.mxu0 0.0
    %5374 = vmatpush2.msra.mxu0 0.0
    %5375 = vmatprep.subr.mxu0 0.0
    %5376 = vmatpush2.msra.mxu0 0.0
    %5377 = vmatprep.subr.mxu0 0.0
    %5378 = vmatpush2.msra.mxu0 0.0
    %5379 = vmatprep.mubr.f32.mxu0 0.0
    %5380 = vmatmul.mubr.f32.gmra.mxu0 %v5218
    %v5381 = vpop.f32.mrf.mxu0
    %v5382 = vadd.f32 0.0, %v5381
    %v5383 = vpop.f32.mrf.mxu0
    %5384 = vmatprep.mubr.f32.mxu0 0.0
    %5385 = vmatmul.mubr.f32.gmra.mxu0 %v5221
    %v5386 = vpop.f32.mrf.mxu0
    %v5387 = vadd.f32 0.0, %v5386
    %v5388 = vpop.f32.mrf.mxu0
    %5389 = vmatprep.mubr.f32.mxu0 0.0
    %5390 = vmatmul.mubr.f32.gmra.mxu0 %v5224
    %v5391 = vpop.f32.mrf.mxu0
    %v5392 = vadd.f32 0.0, %v5391
    %v5393 = vpop.f32.mrf.mxu0
    %5394 = vdwg.mxu0
    %v5395 = vadd.f32 %v5184, %v5299
    %v5396 = vadd.f32 %v5185, %v5301
    %v5397 = vadd.f32 %v5186, %v5382
    %v5398 = vadd.f32 %v5187, %v5305
    %v5399 = vadd.f32 %v5188, %v5307
    %v5400 = vadd.f32 %v5189, %v5387
    %v5401 = vadd.f32 %v5190, %v5311
    %v5402 = vadd.f32 %v5191, %v5313
    %v5403 = vadd.f32 %v5192, %v5392
    %s5404 = scalar_lea.vmem %s3, 528
    %v5405 = vld [vmem:[%s5404] sm:$0xff]
    %v5406 = vld [vmem:[%s5404 + $0x8] sm:$0xff]
    %v5407 = vld [vmem:[%s5404 + $0x10] sm:$0xf]
    %5408 = vrot.lane.b32.xlu0 %v787, 78
    %v5409 = vpop.permute.xlu0 %5408
    %5410 = vrot.lane.b32.xlu0 %v788, 78
    %v5411 = vpop.permute.xlu0 %5410
    %5412 = vrot.lane.b32.xlu0 %v789, 78
    %v5413 = vpop.permute.xlu0 %5412
    %5414 = vrot.lane.b32.xlu0 %v790, 78
    %v5415 = vpop.permute.xlu0 %5414
    %5416 = vrot.lane.b32.xlu0 %v791, 78
    %v5417 = vpop.permute.xlu0 %5416
    %5418 = vrot.lane.b32.xlu0 %v792, 78
    %v5419 = vpop.permute.xlu0 %5418
    %vm5420 = vcmask 637952
    %v5421 = vsel %vm5420, %v5409, %v5411
    %v5422 = vsel %vm5420, %v5411, %v5413
    %v5423 = vsel %vm5420, %v5415, %v5417
    %v5424 = vsel %vm5420, %v5417, %v5419
    %v5429 = vsel %vm826, %v5405, 0
    %v5432 = vsel %vm826, %v5406, 0
    %v5435 = vsel %vm826, %v5407, 0
    %v5437 = vsel %vm836, %v5423, 0
    %v5439 = vsel %vm836, %v5424, 0
    %v5441 = vsel %vm836, %v5419, 0
    %5443 = vmatprep.subr.mxu0 0.0
    %5444 = vmatpush1.msra.mxu0 0.0
    %5445 = vmatprep.subr.mxu0 0.0
    %5446 = vmatpush1.msra.mxu0 0.0
    %5447 = vmatprep.subr.mxu0 0.0
    %5448 = vmatpush1.msra.mxu0 0.0
    %5449 = vmatprep.subr.mxu0 0.0
    %5450 = vmatpush1.msra.mxu0 0.0
    %5451 = vmatprep.subr.mxu0 0.0
    %5452 = vmatpush1.msra.mxu0 0.0
    %5453 = vmatprep.subr.mxu0 0.0
    %5454 = vmatpush1.msra.mxu0 0.0
    %5455 = vmatprep.subr.mxu0 0.0
    %5456 = vmatpush1.msra.mxu0 0.0
    %5457 = vmatprep.subr.mxu0 0.0
    %5458 = vmatpush1.msra.mxu0 0.0
    %5459 = vmatprep.subr.mxu0 0.0
    %5460 = vmatpush1.msra.mxu0 0.0
    %5461 = vmatprep.subr.mxu0 0.0
    %5462 = vmatpush1.msra.mxu0 0.0
    %5463 = vmatprep.subr.mxu0 0.0
    %5464 = vmatpush1.msra.mxu0 0.0
    %5465 = vmatprep.subr.mxu0 0.0
    %5466 = vmatpush1.msra.mxu0 0.0
    %5467 = vmatprep.subr.mxu0 0.0
    %5468 = vmatpush1.msra.mxu0 0.0
    %5469 = vmatprep.subr.mxu0 0.0
    %5470 = vmatpush1.msra.mxu0 0.0
    %5471 = vmatprep.subr.mxu0 %v5439
    %5472 = vmatpush1.msra.mxu0 %v5437
    %5473 = vmatprep.subr.mxu0 %v5422
    %5474 = vmatpush1.msra.mxu0 %v5421
    %5475 = vmatprep.subr.mxu0 0.0
    %5476 = vmatpush2.msra.mxu0 0.0
    %5477 = vmatprep.subr.mxu0 0.0
    %5478 = vmatpush2.msra.mxu0 0.0
    %5479 = vmatprep.subr.mxu0 0.0
    %5480 = vmatpush2.msra.mxu0 0.0
    %5481 = vmatprep.subr.mxu0 0.0
    %5482 = vmatpush2.msra.mxu0 0.0
    %5483 = vmatprep.subr.mxu0 0.0
    %5484 = vmatpush2.msra.mxu0 0.0
    %5485 = vmatprep.subr.mxu0 0.0
    %5486 = vmatpush2.msra.mxu0 0.0
    %5487 = vmatprep.subr.mxu0 0.0
    %5488 = vmatpush2.msra.mxu0 0.0
    %5489 = vmatprep.subr.mxu0 0.0
    %5490 = vmatpush2.msra.mxu0 0.0
    %5491 = vmatprep.subr.mxu0 0.0
    %5492 = vmatpush2.msra.mxu0 0.0
    %5493 = vmatprep.subr.mxu0 0.0
    %5494 = vmatpush2.msra.mxu0 0.0
    %5495 = vmatprep.subr.mxu0 0.0
    %5496 = vmatpush2.msra.mxu0 0.0
    %5497 = vmatprep.subr.mxu0 0.0
    %5498 = vmatpush2.msra.mxu0 0.0
    %5499 = vmatprep.subr.mxu0 0.0
    %5500 = vmatpush2.msra.mxu0 0.0
    %5501 = vmatprep.subr.mxu0 0.0
    %5502 = vmatpush2.msra.mxu0 0.0
    %5503 = vmatprep.subr.mxu0 0.0
    %5504 = vmatpush2.msra.mxu0 0.0
    %5505 = vmatprep.subr.mxu0 0.0
    %5506 = vmatpush2.msra.mxu0 0.0
    %5507 = vmatprep.mubr.f32.mxu0 0.0
    %5508 = vmatmul.mubr.f32.gmra.mxu0 %v5429
    %v5509 = vpop.f32.mrf.mxu0
    %v5510 = vadd.f32 0.0, %v5509
    %v5511 = vpop.f32.mrf.mxu0
    %v5512 = vadd.f32 0.0, %v5511
    %5513 = vmatprep.mubr.f32.mxu0 0.0
    %5514 = vmatmul.mubr.f32.gmra.mxu0 %v5432
    %v5515 = vpop.f32.mrf.mxu0
    %v5516 = vadd.f32 0.0, %v5515
    %v5517 = vpop.f32.mrf.mxu0
    %v5518 = vadd.f32 0.0, %v5517
    %5519 = vmatprep.mubr.f32.mxu0 0.0
    %5520 = vmatmul.mubr.f32.gmra.mxu0 %v5435
    %v5521 = vpop.f32.mrf.mxu0
    %v5522 = vadd.f32 0.0, %v5521
    %v5523 = vpop.f32.mrf.mxu0
    %v5524 = vadd.f32 0.0, %v5523
    %5525 = vdwg.mxu0
    %5526 = vmatprep.subr.mxu0 0.0
    %5527 = vmatpush1.msra.mxu0 0.0
    %5528 = vmatprep.subr.mxu0 0.0
    %5529 = vmatpush1.msra.mxu0 0.0
    %5530 = vmatprep.subr.mxu0 0.0
    %5531 = vmatpush1.msra.mxu0 0.0
    %5532 = vmatprep.subr.mxu0 0.0
    %5533 = vmatpush1.msra.mxu0 0.0
    %5534 = vmatprep.subr.mxu0 0.0
    %5535 = vmatpush1.msra.mxu0 0.0
    %5536 = vmatprep.subr.mxu0 0.0
    %5537 = vmatpush1.msra.mxu0 0.0
    %5538 = vmatprep.subr.mxu0 0.0
    %5539 = vmatpush1.msra.mxu0 0.0
    %5540 = vmatprep.subr.mxu0 0.0
    %5541 = vmatpush1.msra.mxu0 0.0
    %5542 = vmatprep.subr.mxu0 0.0
    %5543 = vmatpush1.msra.mxu0 0.0
    %5544 = vmatprep.subr.mxu0 0.0
    %5545 = vmatpush1.msra.mxu0 0.0
    %5546 = vmatprep.subr.mxu0 0.0
    %5547 = vmatpush1.msra.mxu0 0.0
    %5548 = vmatprep.subr.mxu0 0.0
    %5549 = vmatpush1.msra.mxu0 0.0
    %5550 = vmatprep.subr.mxu0 0.0
    %5551 = vmatpush1.msra.mxu0 0.0
    %5552 = vmatprep.subr.mxu0 0.0
    %5553 = vmatpush1.msra.mxu0 0.0
    %5554 = vmatprep.subr.mxu0 0.0
    %5555 = vmatpush1.msra.mxu0 %v5441
    %5556 = vmatprep.subr.mxu0 0.0
    %5557 = vmatpush1.msra.mxu0 %v5413
    %5558 = vmatprep.subr.mxu0 0.0
    %5559 = vmatpush2.msra.mxu0 0.0
    %5560 = vmatprep.subr.mxu0 0.0
    %5561 = vmatpush2.msra.mxu0 0.0
    %5562 = vmatprep.subr.mxu0 0.0
    %5563 = vmatpush2.msra.mxu0 0.0
    %5564 = vmatprep.subr.mxu0 0.0
    %5565 = vmatpush2.msra.mxu0 0.0
    %5566 = vmatprep.subr.mxu0 0.0
    %5567 = vmatpush2.msra.mxu0 0.0
    %5568 = vmatprep.subr.mxu0 0.0
    %5569 = vmatpush2.msra.mxu0 0.0
    %5570 = vmatprep.subr.mxu0 0.0
    %5571 = vmatpush2.msra.mxu0 0.0
    %5572 = vmatprep.subr.mxu0 0.0
    %5573 = vmatpush2.msra.mxu0 0.0
    %5574 = vmatprep.subr.mxu0 0.0
    %5575 = vmatpush2.msra.mxu0 0.0
    %5576 = vmatprep.subr.mxu0 0.0
    %5577 = vmatpush2.msra.mxu0 0.0
    %5578 = vmatprep.subr.mxu0 0.0
    %5579 = vmatpush2.msra.mxu0 0.0
    %5580 = vmatprep.subr.mxu0 0.0
    %5581 = vmatpush2.msra.mxu0 0.0
    %5582 = vmatprep.subr.mxu0 0.0
    %5583 = vmatpush2.msra.mxu0 0.0
    %5584 = vmatprep.subr.mxu0 0.0
    %5585 = vmatpush2.msra.mxu0 0.0
    %5586 = vmatprep.subr.mxu0 0.0
    %5587 = vmatpush2.msra.mxu0 0.0
    %5588 = vmatprep.subr.mxu0 0.0
    %5589 = vmatpush2.msra.mxu0 0.0
    %5590 = vmatprep.mubr.f32.mxu0 0.0
    %5591 = vmatmul.mubr.f32.gmra.mxu0 %v5429
    %v5592 = vpop.f32.mrf.mxu0
    %v5593 = vadd.f32 0.0, %v5592
    %v5594 = vpop.f32.mrf.mxu0
    %5595 = vmatprep.mubr.f32.mxu0 0.0
    %5596 = vmatmul.mubr.f32.gmra.mxu0 %v5432
    %v5597 = vpop.f32.mrf.mxu0
    %v5598 = vadd.f32 0.0, %v5597
    %v5599 = vpop.f32.mrf.mxu0
    %5600 = vmatprep.mubr.f32.mxu0 0.0
    %5601 = vmatmul.mubr.f32.gmra.mxu0 %v5435
    %v5602 = vpop.f32.mrf.mxu0
    %v5603 = vadd.f32 0.0, %v5602
    %v5604 = vpop.f32.mrf.mxu0
    %5605 = vdwg.mxu0
    %v5606 = vadd.f32 %v5395, %v5510
    %v5607 = vadd.f32 %v5396, %v5512
    %v5608 = vadd.f32 %v5397, %v5593
    %v5609 = vadd.f32 %v5398, %v5516
    %v5610 = vadd.f32 %v5399, %v5518
    %v5611 = vadd.f32 %v5400, %v5598
    %v5612 = vadd.f32 %v5401, %v5522
    %v5613 = vadd.f32 %v5402, %v5524
    %v5614 = vadd.f32 %v5403, %v5603
    %s5615 = scalar_lea.vmem %s3, 552
    %v5616 = vld [vmem:[%s5615] sm:$0xff]
    %v5617 = vld [vmem:[%s5615 + $0x8] sm:$0xff]
    %v5618 = vld [vmem:[%s5615 + $0x10] sm:$0xf]
    %5619 = vrot.lane.b32.xlu0 %v787, 77
    %v5620 = vpop.permute.xlu0 %5619
    %5621 = vrot.lane.b32.xlu0 %v788, 77
    %v5622 = vpop.permute.xlu0 %5621
    %5623 = vrot.lane.b32.xlu0 %v789, 77
    %v5624 = vpop.permute.xlu0 %5623
    %5625 = vrot.lane.b32.xlu0 %v790, 77
    %v5626 = vpop.permute.xlu0 %5625
    %5627 = vrot.lane.b32.xlu0 %v791, 77
    %v5628 = vpop.permute.xlu0 %5627
    %5629 = vrot.lane.b32.xlu0 %v792, 77
    %v5630 = vpop.permute.xlu0 %5629
    %vm5631 = vcmask 629760
    %v5632 = vsel %vm5631, %v5620, %v5622
    %v5633 = vsel %vm5631, %v5622, %v5624
    %v5634 = vsel %vm5631, %v5626, %v5628
    %v5635 = vsel %vm5631, %v5628, %v5630
    %v5640 = vsel %vm826, %v5616, 0
    %v5643 = vsel %vm826, %v5617, 0
    %v5646 = vsel %vm826, %v5618, 0
    %v5648 = vsel %vm836, %v5634, 0
    %v5650 = vsel %vm836, %v5635, 0
    %v5652 = vsel %vm836, %v5630, 0
    %5654 = vmatprep.subr.mxu0 0.0
    %5655 = vmatpush1.msra.mxu0 0.0
    %5656 = vmatprep.subr.mxu0 0.0
    %5657 = vmatpush1.msra.mxu0 0.0
    %5658 = vmatprep.subr.mxu0 0.0
    %5659 = vmatpush1.msra.mxu0 0.0
    %5660 = vmatprep.subr.mxu0 0.0
    %5661 = vmatpush1.msra.mxu0 0.0
    %5662 = vmatprep.subr.mxu0 0.0
    %5663 = vmatpush1.msra.mxu0 0.0
    %5664 = vmatprep.subr.mxu0 0.0
    %5665 = vmatpush1.msra.mxu0 0.0
    %5666 = vmatprep.subr.mxu0 0.0
    %5667 = vmatpush1.msra.mxu0 0.0
    %5668 = vmatprep.subr.mxu0 0.0
    %5669 = vmatpush1.msra.mxu0 0.0
    %5670 = vmatprep.subr.mxu0 0.0
    %5671 = vmatpush1.msra.mxu0 0.0
    %5672 = vmatprep.subr.mxu0 0.0
    %5673 = vmatpush1.msra.mxu0 0.0
    %5674 = vmatprep.subr.mxu0 0.0
    %5675 = vmatpush1.msra.mxu0 0.0
    %5676 = vmatprep.subr.mxu0 0.0
    %5677 = vmatpush1.msra.mxu0 0.0
    %5678 = vmatprep.subr.mxu0 0.0
    %5679 = vmatpush1.msra.mxu0 0.0
    %5680 = vmatprep.subr.mxu0 0.0
    %5681 = vmatpush1.msra.mxu0 0.0
    %5682 = vmatprep.subr.mxu0 %v5650
    %5683 = vmatpush1.msra.mxu0 %v5648
    %5684 = vmatprep.subr.mxu0 %v5633
    %5685 = vmatpush1.msra.mxu0 %v5632
    %5686 = vmatprep.subr.mxu0 0.0
    %5687 = vmatpush2.msra.mxu0 0.0
    %5688 = vmatprep.subr.mxu0 0.0
    %5689 = vmatpush2.msra.mxu0 0.0
    %5690 = vmatprep.subr.mxu0 0.0
    %5691 = vmatpush2.msra.mxu0 0.0
    %5692 = vmatprep.subr.mxu0 0.0
    %5693 = vmatpush2.msra.mxu0 0.0
    %5694 = vmatprep.subr.mxu0 0.0
    %5695 = vmatpush2.msra.mxu0 0.0
    %5696 = vmatprep.subr.mxu0 0.0
    %5697 = vmatpush2.msra.mxu0 0.0
    %5698 = vmatprep.subr.mxu0 0.0
    %5699 = vmatpush2.msra.mxu0 0.0
    %5700 = vmatprep.subr.mxu0 0.0
    %5701 = vmatpush2.msra.mxu0 0.0
    %5702 = vmatprep.subr.mxu0 0.0
    %5703 = vmatpush2.msra.mxu0 0.0
    %5704 = vmatprep.subr.mxu0 0.0
    %5705 = vmatpush2.msra.mxu0 0.0
    %5706 = vmatprep.subr.mxu0 0.0
    %5707 = vmatpush2.msra.mxu0 0.0
    %5708 = vmatprep.subr.mxu0 0.0
    %5709 = vmatpush2.msra.mxu0 0.0
    %5710 = vmatprep.subr.mxu0 0.0
    %5711 = vmatpush2.msra.mxu0 0.0
    %5712 = vmatprep.subr.mxu0 0.0
    %5713 = vmatpush2.msra.mxu0 0.0
    %5714 = vmatprep.subr.mxu0 0.0
    %5715 = vmatpush2.msra.mxu0 0.0
    %5716 = vmatprep.subr.mxu0 0.0
    %5717 = vmatpush2.msra.mxu0 0.0
    %5718 = vmatprep.mubr.f32.mxu0 0.0
    %5719 = vmatmul.mubr.f32.gmra.mxu0 %v5640
    %v5720 = vpop.f32.mrf.mxu0
    %v5721 = vadd.f32 0.0, %v5720
    %v5722 = vpop.f32.mrf.mxu0
    %v5723 = vadd.f32 0.0, %v5722
    %5724 = vmatprep.mubr.f32.mxu0 0.0
    %5725 = vmatmul.mubr.f32.gmra.mxu0 %v5643
    %v5726 = vpop.f32.mrf.mxu0
    %v5727 = vadd.f32 0.0, %v5726
    %v5728 = vpop.f32.mrf.mxu0
    %v5729 = vadd.f32 0.0, %v5728
    %5730 = vmatprep.mubr.f32.mxu0 0.0
    %5731 = vmatmul.mubr.f32.gmra.mxu0 %v5646
    %v5732 = vpop.f32.mrf.mxu0
    %v5733 = vadd.f32 0.0, %v5732
    %v5734 = vpop.f32.mrf.mxu0
    %v5735 = vadd.f32 0.0, %v5734
    %5736 = vdwg.mxu0
    %5737 = vmatprep.subr.mxu0 0.0
    %5738 = vmatpush1.msra.mxu0 0.0
    %5739 = vmatprep.subr.mxu0 0.0
    %5740 = vmatpush1.msra.mxu0 0.0
    %5741 = vmatprep.subr.mxu0 0.0
    %5742 = vmatpush1.msra.mxu0 0.0
    %5743 = vmatprep.subr.mxu0 0.0
    %5744 = vmatpush1.msra.mxu0 0.0
    %5745 = vmatprep.subr.mxu0 0.0
    %5746 = vmatpush1.msra.mxu0 0.0
    %5747 = vmatprep.subr.mxu0 0.0
    %5748 = vmatpush1.msra.mxu0 0.0
    %5749 = vmatprep.subr.mxu0 0.0
    %5750 = vmatpush1.msra.mxu0 0.0
    %5751 = vmatprep.subr.mxu0 0.0
    %5752 = vmatpush1.msra.mxu0 0.0
    %5753 = vmatprep.subr.mxu0 0.0
    %5754 = vmatpush1.msra.mxu0 0.0
    %5755 = vmatprep.subr.mxu0 0.0
    %5756 = vmatpush1.msra.mxu0 0.0
    %5757 = vmatprep.subr.mxu0 0.0
    %5758 = vmatpush1.msra.mxu0 0.0
    %5759 = vmatprep.subr.mxu0 0.0
    %5760 = vmatpush1.msra.mxu0 0.0
    %5761 = vmatprep.subr.mxu0 0.0
    %5762 = vmatpush1.msra.mxu0 0.0
    %5763 = vmatprep.subr.mxu0 0.0
    %5764 = vmatpush1.msra.mxu0 0.0
    %5765 = vmatprep.subr.mxu0 0.0
    %5766 = vmatpush1.msra.mxu0 %v5652
    %5767 = vmatprep.subr.mxu0 0.0
    %5768 = vmatpush1.msra.mxu0 %v5624
    %5769 = vmatprep.subr.mxu0 0.0
    %5770 = vmatpush2.msra.mxu0 0.0
    %5771 = vmatprep.subr.mxu0 0.0
    %5772 = vmatpush2.msra.mxu0 0.0
    %5773 = vmatprep.subr.mxu0 0.0
    %5774 = vmatpush2.msra.mxu0 0.0
    %5775 = vmatprep.subr.mxu0 0.0
    %5776 = vmatpush2.msra.mxu0 0.0
    %5777 = vmatprep.subr.mxu0 0.0
    %5778 = vmatpush2.msra.mxu0 0.0
    %5779 = vmatprep.subr.mxu0 0.0
    %5780 = vmatpush2.msra.mxu0 0.0
    %5781 = vmatprep.subr.mxu0 0.0
    %5782 = vmatpush2.msra.mxu0 0.0
    %5783 = vmatprep.subr.mxu0 0.0
    %5784 = vmatpush2.msra.mxu0 0.0
    %5785 = vmatprep.subr.mxu0 0.0
    %5786 = vmatpush2.msra.mxu0 0.0
    %5787 = vmatprep.subr.mxu0 0.0
    %5788 = vmatpush2.msra.mxu0 0.0
    %5789 = vmatprep.subr.mxu0 0.0
    %5790 = vmatpush2.msra.mxu0 0.0
    %5791 = vmatprep.subr.mxu0 0.0
    %5792 = vmatpush2.msra.mxu0 0.0
    %5793 = vmatprep.subr.mxu0 0.0
    %5794 = vmatpush2.msra.mxu0 0.0
    %5795 = vmatprep.subr.mxu0 0.0
    %5796 = vmatpush2.msra.mxu0 0.0
    %5797 = vmatprep.subr.mxu0 0.0
    %5798 = vmatpush2.msra.mxu0 0.0
    %5799 = vmatprep.subr.mxu0 0.0
    %5800 = vmatpush2.msra.mxu0 0.0
    %5801 = vmatprep.mubr.f32.mxu0 0.0
    %5802 = vmatmul.mubr.f32.gmra.mxu0 %v5640
    %v5803 = vpop.f32.mrf.mxu0
    %v5804 = vadd.f32 0.0, %v5803
    %v5805 = vpop.f32.mrf.mxu0
    %5806 = vmatprep.mubr.f32.mxu0 0.0
    %5807 = vmatmul.mubr.f32.gmra.mxu0 %v5643
    %v5808 = vpop.f32.mrf.mxu0
    %v5809 = vadd.f32 0.0, %v5808
    %v5810 = vpop.f32.mrf.mxu0
    %5811 = vmatprep.mubr.f32.mxu0 0.0
    %5812 = vmatmul.mubr.f32.gmra.mxu0 %v5646
    %v5813 = vpop.f32.mrf.mxu0
    %v5814 = vadd.f32 0.0, %v5813
    %v5815 = vpop.f32.mrf.mxu0
    %5816 = vdwg.mxu0
    %v5817 = vadd.f32 %v5606, %v5721
    %v5818 = vadd.f32 %v5607, %v5723
    %v5819 = vadd.f32 %v5608, %v5804
    %v5820 = vadd.f32 %v5609, %v5727
    %v5821 = vadd.f32 %v5610, %v5729
    %v5822 = vadd.f32 %v5611, %v5809
    %v5823 = vadd.f32 %v5612, %v5733
    %v5824 = vadd.f32 %v5613, %v5735
    %v5825 = vadd.f32 %v5614, %v5814
    %s5826 = scalar_lea.vmem %s3, 576
    %v5827 = vld [vmem:[%s5826] sm:$0xff]
    %v5828 = vld [vmem:[%s5826 + $0x8] sm:$0xff]
    %v5829 = vld [vmem:[%s5826 + $0x10] sm:$0xf]
    %5830 = vrot.lane.b32.xlu0 %v787, 76
    %v5831 = vpop.permute.xlu0 %5830
    %5832 = vrot.lane.b32.xlu0 %v788, 76
    %v5833 = vpop.permute.xlu0 %5832
    %5834 = vrot.lane.b32.xlu0 %v789, 76
    %v5835 = vpop.permute.xlu0 %5834
    %5836 = vrot.lane.b32.xlu0 %v790, 76
    %v5837 = vpop.permute.xlu0 %5836
    %5838 = vrot.lane.b32.xlu0 %v791, 76
    %v5839 = vpop.permute.xlu0 %5838
    %5840 = vrot.lane.b32.xlu0 %v792, 76
    %v5841 = vpop.permute.xlu0 %5840
    %vm5842 = vcmask 621568
    %v5843 = vsel %vm5842, %v5831, %v5833
    %v5844 = vsel %vm5842, %v5833, %v5835
    %v5845 = vsel %vm5842, %v5837, %v5839
    %v5846 = vsel %vm5842, %v5839, %v5841
    %v5851 = vsel %vm826, %v5827, 0
    %v5854 = vsel %vm826, %v5828, 0
    %v5857 = vsel %vm826, %v5829, 0
    %v5859 = vsel %vm836, %v5845, 0
    %v5861 = vsel %vm836, %v5846, 0
    %v5863 = vsel %vm836, %v5841, 0
    %5865 = vmatprep.subr.mxu0 0.0
    %5866 = vmatpush1.msra.mxu0 0.0
    %5867 = vmatprep.subr.mxu0 0.0
    %5868 = vmatpush1.msra.mxu0 0.0
    %5869 = vmatprep.subr.mxu0 0.0
    %5870 = vmatpush1.msra.mxu0 0.0
    %5871 = vmatprep.subr.mxu0 0.0
    %5872 = vmatpush1.msra.mxu0 0.0
    %5873 = vmatprep.subr.mxu0 0.0
    %5874 = vmatpush1.msra.mxu0 0.0
    %5875 = vmatprep.subr.mxu0 0.0
    %5876 = vmatpush1.msra.mxu0 0.0
    %5877 = vmatprep.subr.mxu0 0.0
    %5878 = vmatpush1.msra.mxu0 0.0
    %5879 = vmatprep.subr.mxu0 0.0
    %5880 = vmatpush1.msra.mxu0 0.0
    %5881 = vmatprep.subr.mxu0 0.0
    %5882 = vmatpush1.msra.mxu0 0.0
    %5883 = vmatprep.subr.mxu0 0.0
    %5884 = vmatpush1.msra.mxu0 0.0
    %5885 = vmatprep.subr.mxu0 0.0
    %5886 = vmatpush1.msra.mxu0 0.0
    %5887 = vmatprep.subr.mxu0 0.0
    %5888 = vmatpush1.msra.mxu0 0.0
    %5889 = vmatprep.subr.mxu0 0.0
    %5890 = vmatpush1.msra.mxu0 0.0
    %5891 = vmatprep.subr.mxu0 0.0
    %5892 = vmatpush1.msra.mxu0 0.0
    %5893 = vmatprep.subr.mxu0 %v5861
    %5894 = vmatpush1.msra.mxu0 %v5859
    %5895 = vmatprep.subr.mxu0 %v5844
    %5896 = vmatpush1.msra.mxu0 %v5843
    %5897 = vmatprep.subr.mxu0 0.0
    %5898 = vmatpush2.msra.mxu0 0.0
    %5899 = vmatprep.subr.mxu0 0.0
    %5900 = vmatpush2.msra.mxu0 0.0
    %5901 = vmatprep.subr.mxu0 0.0
    %5902 = vmatpush2.msra.mxu0 0.0
    %5903 = vmatprep.subr.mxu0 0.0
    %5904 = vmatpush2.msra.mxu0 0.0
    %5905 = vmatprep.subr.mxu0 0.0
    %5906 = vmatpush2.msra.mxu0 0.0
    %5907 = vmatprep.subr.mxu0 0.0
    %5908 = vmatpush2.msra.mxu0 0.0
    %5909 = vmatprep.subr.mxu0 0.0
    %5910 = vmatpush2.msra.mxu0 0.0
    %5911 = vmatprep.subr.mxu0 0.0
    %5912 = vmatpush2.msra.mxu0 0.0
    %5913 = vmatprep.subr.mxu0 0.0
    %5914 = vmatpush2.msra.mxu0 0.0
    %5915 = vmatprep.subr.mxu0 0.0
    %5916 = vmatpush2.msra.mxu0 0.0
    %5917 = vmatprep.subr.mxu0 0.0
    %5918 = vmatpush2.msra.mxu0 0.0
    %5919 = vmatprep.subr.mxu0 0.0
    %5920 = vmatpush2.msra.mxu0 0.0
    %5921 = vmatprep.subr.mxu0 0.0
    %5922 = vmatpush2.msra.mxu0 0.0
    %5923 = vmatprep.subr.mxu0 0.0
    %5924 = vmatpush2.msra.mxu0 0.0
    %5925 = vmatprep.subr.mxu0 0.0
    %5926 = vmatpush2.msra.mxu0 0.0
    %5927 = vmatprep.subr.mxu0 0.0
    %5928 = vmatpush2.msra.mxu0 0.0
    %5929 = vmatprep.mubr.f32.mxu0 0.0
    %5930 = vmatmul.mubr.f32.gmra.mxu0 %v5851
    %v5931 = vpop.f32.mrf.mxu0
    %v5932 = vadd.f32 0.0, %v5931
    %v5933 = vpop.f32.mrf.mxu0
    %v5934 = vadd.f32 0.0, %v5933
    %5935 = vmatprep.mubr.f32.mxu0 0.0
    %5936 = vmatmul.mubr.f32.gmra.mxu0 %v5854
    %v5937 = vpop.f32.mrf.mxu0
    %v5938 = vadd.f32 0.0, %v5937
    %v5939 = vpop.f32.mrf.mxu0
    %v5940 = vadd.f32 0.0, %v5939
    %5941 = vmatprep.mubr.f32.mxu0 0.0
    %5942 = vmatmul.mubr.f32.gmra.mxu0 %v5857
    %v5943 = vpop.f32.mrf.mxu0
    %v5944 = vadd.f32 0.0, %v5943
    %v5945 = vpop.f32.mrf.mxu0
    %v5946 = vadd.f32 0.0, %v5945
    %5947 = vdwg.mxu0
    %5948 = vmatprep.subr.mxu0 0.0
    %5949 = vmatpush1.msra.mxu0 0.0
    %5950 = vmatprep.subr.mxu0 0.0
    %5951 = vmatpush1.msra.mxu0 0.0
    %5952 = vmatprep.subr.mxu0 0.0
    %5953 = vmatpush1.msra.mxu0 0.0
    %5954 = vmatprep.subr.mxu0 0.0
    %5955 = vmatpush1.msra.mxu0 0.0
    %5956 = vmatprep.subr.mxu0 0.0
    %5957 = vmatpush1.msra.mxu0 0.0
    %5958 = vmatprep.subr.mxu0 0.0
    %5959 = vmatpush1.msra.mxu0 0.0
    %5960 = vmatprep.subr.mxu0 0.0
    %5961 = vmatpush1.msra.mxu0 0.0
    %5962 = vmatprep.subr.mxu0 0.0
    %5963 = vmatpush1.msra.mxu0 0.0
    %5964 = vmatprep.subr.mxu0 0.0
    %5965 = vmatpush1.msra.mxu0 0.0
    %5966 = vmatprep.subr.mxu0 0.0
    %5967 = vmatpush1.msra.mxu0 0.0
    %5968 = vmatprep.subr.mxu0 0.0
    %5969 = vmatpush1.msra.mxu0 0.0
    %5970 = vmatprep.subr.mxu0 0.0
    %5971 = vmatpush1.msra.mxu0 0.0
    %5972 = vmatprep.subr.mxu0 0.0
    %5973 = vmatpush1.msra.mxu0 0.0
    %5974 = vmatprep.subr.mxu0 0.0
    %5975 = vmatpush1.msra.mxu0 0.0
    %5976 = vmatprep.subr.mxu0 0.0
    %5977 = vmatpush1.msra.mxu0 %v5863
    %5978 = vmatprep.subr.mxu0 0.0
    %5979 = vmatpush1.msra.mxu0 %v5835
    %5980 = vmatprep.subr.mxu0 0.0
    %5981 = vmatpush2.msra.mxu0 0.0
    %5982 = vmatprep.subr.mxu0 0.0
    %5983 = vmatpush2.msra.mxu0 0.0
    %5984 = vmatprep.subr.mxu0 0.0
    %5985 = vmatpush2.msra.mxu0 0.0
    %5986 = vmatprep.subr.mxu0 0.0
    %5987 = vmatpush2.msra.mxu0 0.0
    %5988 = vmatprep.subr.mxu0 0.0
    %5989 = vmatpush2.msra.mxu0 0.0
    %5990 = vmatprep.subr.mxu0 0.0
    %5991 = vmatpush2.msra.mxu0 0.0
    %5992 = vmatprep.subr.mxu0 0.0
    %5993 = vmatpush2.msra.mxu0 0.0
    %5994 = vmatprep.subr.mxu0 0.0
    %5995 = vmatpush2.msra.mxu0 0.0
    %5996 = vmatprep.subr.mxu0 0.0
    %5997 = vmatpush2.msra.mxu0 0.0
    %5998 = vmatprep.subr.mxu0 0.0
    %5999 = vmatpush2.msra.mxu0 0.0
    %6000 = vmatprep.subr.mxu0 0.0
    %6001 = vmatpush2.msra.mxu0 0.0
    %6002 = vmatprep.subr.mxu0 0.0
    %6003 = vmatpush2.msra.mxu0 0.0
    %6004 = vmatprep.subr.mxu0 0.0
    %6005 = vmatpush2.msra.mxu0 0.0
    %6006 = vmatprep.subr.mxu0 0.0
    %6007 = vmatpush2.msra.mxu0 0.0
    %6008 = vmatprep.subr.mxu0 0.0
    %6009 = vmatpush2.msra.mxu0 0.0
    %6010 = vmatprep.subr.mxu0 0.0
    %6011 = vmatpush2.msra.mxu0 0.0
    %6012 = vmatprep.mubr.f32.mxu0 0.0
    %6013 = vmatmul.mubr.f32.gmra.mxu0 %v5851
    %v6014 = vpop.f32.mrf.mxu0
    %v6015 = vadd.f32 0.0, %v6014
    %v6016 = vpop.f32.mrf.mxu0
    %6017 = vmatprep.mubr.f32.mxu0 0.0
    %6018 = vmatmul.mubr.f32.gmra.mxu0 %v5854
    %v6019 = vpop.f32.mrf.mxu0
    %v6020 = vadd.f32 0.0, %v6019
    %v6021 = vpop.f32.mrf.mxu0
    %6022 = vmatprep.mubr.f32.mxu0 0.0
    %6023 = vmatmul.mubr.f32.gmra.mxu0 %v5857
    %v6024 = vpop.f32.mrf.mxu0
    %v6025 = vadd.f32 0.0, %v6024
    %v6026 = vpop.f32.mrf.mxu0
    %6027 = vdwg.mxu0
    %v6028 = vadd.f32 %v5817, %v5932
    %v6029 = vadd.f32 %v5818, %v5934
    %v6030 = vadd.f32 %v5819, %v6015
    %v6031 = vadd.f32 %v5820, %v5938
    %v6032 = vadd.f32 %v5821, %v5940
    %v6033 = vadd.f32 %v5822, %v6020
    %v6034 = vadd.f32 %v5823, %v5944
    %v6035 = vadd.f32 %v5824, %v5946
    %v6036 = vadd.f32 %v5825, %v6025
    %v6037 = vld [vmem:[%s4] sm:$0xff]
    %v6038 = vld [vmem:[%s4 + $0x8] sm:$0xff]
    %v6039 = vld [vmem:[%s4 + $0x10] sm:$0xf]
    %6041 = vset.pattern.permute.xlu0 0
    %6042 = vperm.xlu0 %6041, %v6037
    %v6043 = vpop.permute.xlu0 %6042
    %6046 = vset.pattern.permute.xlu0 0
    %6047 = vperm.xlu0 %6046, %v6038
    %v6048 = vpop.permute.xlu0 %6047
    %6051 = vset.pattern.permute.xlu0 0
    %6052 = vperm.xlu0 %6051, %v6039
    %v6053 = vpop.permute.xlu0 %6052
    %v6055 = vadd.f32 %v6028, %v6043
    %v6056 = vadd.f32 %v6029, %v6043
    %v6057 = vadd.f32 %v6030, %v6043
    %v6058 = vadd.f32 %v6031, %v6048
    %v6059 = vadd.f32 %v6032, %v6048
    %v6060 = vadd.f32 %v6033, %v6048
    %v6061 = vadd.f32 %v6034, %v6053
    %v6062 = vadd.f32 %v6035, %v6053
    %v6063 = vadd.f32 %v6036, %v6053
    %v6064 = vmax.f32 %v6055, 0.0
    %v6065 = vmax.f32 %v6056, 0.0
    %v6066 = vmax.f32 %v6057, 0.0
    %v6067 = vmax.f32 %v6058, 0.0
    %v6068 = vmax.f32 %v6059, 0.0
    %v6069 = vmax.f32 %v6060, 0.0
    %v6070 = vmax.f32 %v6061, 0.0
    %v6071 = vmax.f32 %v6062, 0.0
    %v6072 = vmax.f32 %v6063, 0.0
    %6073 = vst [vmem:[#allocation3] sm:$0xff] 0.0
    %6074 = vst [vmem:[#allocation3 + $0x8] sm:$0xff] 0.0
    %6075 = vst [vmem:[#allocation3 + $0x10] sm:$0xff] 0.0
    %6076 = vst [vmem:[#allocation3 + $0x18] sm:$0xff] 0.0
    %6077 = vst [vmem:[#allocation3 + $0x20] sm:$0xff] 0.0
    %6078 = vst [vmem:[#allocation3 + $0x28] sm:$0xff] 0.0
    %6079 = vst [vmem:[#allocation3 + $0x30] sm:$0xf] 0.0
    %6080 = vst [vmem:[#allocation3 + $0x38] sm:$0xf] 0.0
    %6081 = vst [vmem:[#allocation3 + $0x40] sm:$0xf] 0.0
    %6082 = vst [vmem:[#allocation3] sm:$0xff] %v6064
    %6083 = vst [vmem:[#allocation3 + $0x8] sm:$0xff] %v6065
    %6084 = vst.msk [vmem:[#allocation3 + $0x10] sm:$0xff] %vm781, %v6066
    %6085 = vst [vmem:[#allocation3 + $0x18] sm:$0xff] %v6067
    %6086 = vst [vmem:[#allocation3 + $0x20] sm:$0xff] %v6068
    %6087 = vst.msk [vmem:[#allocation3 + $0x28] sm:$0xff] %vm781, %v6069
    %6088 = vst [vmem:[#allocation3 + $0x30] sm:$0xf] %v6070
    %6089 = vst [vmem:[#allocation3 + $0x38] sm:$0xf] %v6071
    %vm6090 = vcmask 257024
    %6091 = vst.msk [vmem:[#allocation3 + $0x40] sm:$0xf] %vm6090, %v6072
    %v6092 = vld [vmem:[#allocation3] sm:$0xff]
    %v6093 = vld [vmem:[#allocation3 + $0x8] sm:$0xff]
    %v6094 = vld [vmem:[#allocation3 + $0x10] sm:$0xff]
    %v6095 = vld [vmem:[#allocation3 + $0x18] sm:$0xff]
    %v6096 = vld [vmem:[#allocation3 + $0x20] sm:$0xff]
    %v6097 = vld [vmem:[#allocation3 + $0x28] sm:$0xff]
    %v6098 = vld [vmem:[#allocation3 + $0x30] sm:$0xf]
    %v6099 = vld [vmem:[#allocation3 + $0x38] sm:$0xf]
    %v6100 = vld [vmem:[#allocation3 + $0x40] sm:$0xf]
    %6110 = vrot.lane.b32.xlu0 %v6092, 127
    %v6111 = vpop.permute.xlu0 %6110
    %6112 = vrot.lane.b32.xlu0 %v6093, 127
    %v6113 = vpop.permute.xlu0 %6112
    %6114 = vrot.lane.b32.xlu0 %v6094, 127
    %v6115 = vpop.permute.xlu0 %6114
    %6116 = vrot.lane.b32.xlu0 %v6095, 127
    %v6117 = vpop.permute.xlu0 %6116
    %6118 = vrot.lane.b32.xlu0 %v6096, 127
    %v6119 = vpop.permute.xlu0 %6118
    %6120 = vrot.lane.b32.xlu0 %v6097, 127
    %v6121 = vpop.permute.xlu0 %6120
    %6122 = vrot.lane.b32.xlu0 %v6098, 127
    %v6123 = vpop.permute.xlu0 %6122
    %6124 = vrot.lane.b32.xlu0 %v6099, 127
    %v6125 = vpop.permute.xlu0 %6124
    %6126 = vrot.lane.b32.xlu0 %v6100, 127
    %v6127 = vpop.permute.xlu0 %6126
    %v6128 = vsel %vm818, %v6111, %v6113
    %v6129 = vsel %vm818, %v6113, %v6115
    %v6130 = vsel %vm818, %v6117, %v6119
    %v6131 = vsel %vm818, %v6119, %v6121
    %v6132 = vsel %vm818, %v6123, %v6125
    %v6133 = vsel %vm818, %v6125, %v6127
    %v6143 = vmax.f32 %v6092, %v6128
    %v6144 = vmax.f32 %v6093, %v6129
    %v6145 = vmax.f32 %v6094, %v6115
    %v6146 = vmax.f32 %v6095, %v6130
    %v6147 = vmax.f32 %v6096, %v6131
    %v6148 = vmax.f32 %v6097, %v6121
    %v6149 = vmax.f32 %v6098, %v6132
    %v6150 = vmax.f32 %v6099, %v6133
    %v6151 = vmax.f32 %v6100, %v6127
    %6152 = vrot.lane.b32.xlu0 %v6092, 116
    %v6153 = vpop.permute.xlu0 %6152
    %6154 = vrot.lane.b32.xlu0 %v6093, 116
    %v6155 = vpop.permute.xlu0 %6154
    %6156 = vrot.lane.b32.xlu0 %v6094, 116
    %v6157 = vpop.permute.xlu0 %6156
    %6158 = vrot.lane.b32.xlu0 %v6095, 116
    %v6159 = vpop.permute.xlu0 %6158
    %6160 = vrot.lane.b32.xlu0 %v6096, 116
    %v6161 = vpop.permute.xlu0 %6160
    %6162 = vrot.lane.b32.xlu0 %v6097, 116
    %v6163 = vpop.permute.xlu0 %6162
    %6164 = vrot.lane.b32.xlu0 %v6098, 116
    %v6165 = vpop.permute.xlu0 %6164
    %6166 = vrot.lane.b32.xlu0 %v6099, 116
    %v6167 = vpop.permute.xlu0 %6166
    %6168 = vrot.lane.b32.xlu0 %v6100, 116
    %v6169 = vpop.permute.xlu0 %6168
    %v6170 = vsel %vm1833, %v6153, %v6155
    %v6171 = vsel %vm1833, %v6155, %v6157
    %v6172 = vsel %vm1833, %v6159, %v6161
    %v6173 = vsel %vm1833, %v6161, %v6163
    %v6174 = vsel %vm1833, %v6165, %v6167
    %v6175 = vsel %vm1833, %v6167, %v6169
    %v6185 = vmax.f32 %v6143, %v6170
    %v6186 = vmax.f32 %v6144, %v6171
    %v6187 = vmax.f32 %v6145, %v6157
    %v6188 = vmax.f32 %v6146, %v6172
    %v6189 = vmax.f32 %v6147, %v6173
    %v6190 = vmax.f32 %v6148, %v6163
    %v6191 = vmax.f32 %v6149, %v6174
    %v6192 = vmax.f32 %v6150, %v6175
    %v6193 = vmax.f32 %v6151, %v6169
    %6194 = vrot.lane.b32.xlu0 %v6092, 115
    %v6195 = vpop.permute.xlu0 %6194
    %6196 = vrot.lane.b32.xlu0 %v6093, 115
    %v6197 = vpop.permute.xlu0 %6196
    %6198 = vrot.lane.b32.xlu0 %v6094, 115
    %v6199 = vpop.permute.xlu0 %6198
    %6200 = vrot.lane.b32.xlu0 %v6095, 115
    %v6201 = vpop.permute.xlu0 %6200
    %6202 = vrot.lane.b32.xlu0 %v6096, 115
    %v6203 = vpop.permute.xlu0 %6202
    %6204 = vrot.lane.b32.xlu0 %v6097, 115
    %v6205 = vpop.permute.xlu0 %6204
    %6206 = vrot.lane.b32.xlu0 %v6098, 115
    %v6207 = vpop.permute.xlu0 %6206
    %6208 = vrot.lane.b32.xlu0 %v6099, 115
    %v6209 = vpop.permute.xlu0 %6208
    %6210 = vrot.lane.b32.xlu0 %v6100, 115
    %v6211 = vpop.permute.xlu0 %6210
    %v6212 = vsel %vm2044, %v6195, %v6197
    %v6213 = vsel %vm2044, %v6197, %v6199
    %v6214 = vsel %vm2044, %v6201, %v6203
    %v6215 = vsel %vm2044, %v6203, %v6205
    %v6216 = vsel %vm2044, %v6207, %v6209
    %v6217 = vsel %vm2044, %v6209, %v6211
    %v6227 = vmax.f32 %v6185, %v6212
    %v6228 = vmax.f32 %v6186, %v6213
    %v6229 = vmax.f32 %v6187, %v6199
    %v6230 = vmax.f32 %v6188, %v6214
    %v6231 = vmax.f32 %v6189, %v6215
    %v6232 = vmax.f32 %v6190, %v6205
    %v6233 = vmax.f32 %v6191, %v6216
    %v6234 = vmax.f32 %v6192, %v6217
    %v6235 = vmax.f32 %v6193, %v6211
    %6236 = vst [vmem:[#allocation4] sm:$0xff] %v6227
    %6237 = vst [vmem:[#allocation4 + $0x8] sm:$0xff] %v6228
    %6238 = vst.msk [vmem:[#allocation4 + $0x10] sm:$0xff] %vm2677, %v6229
    %6239 = vst [vmem:[#allocation4 + $0x18] sm:$0xff] %v6230
    %6240 = vst [vmem:[#allocation4 + $0x20] sm:$0xff] %v6231
    %6241 = vst.msk [vmem:[#allocation4 + $0x28] sm:$0xff] %vm2677, %v6232
    %6242 = vst [vmem:[#allocation4 + $0x30] sm:$0xf] %v6233
    %6243 = vst [vmem:[#allocation4 + $0x38] sm:$0xf] %v6234
    %vm6244 = vcmask 912384
    %6245 = vst.msk [vmem:[#allocation4 + $0x40] sm:$0xf] %vm6244, %v6235
    %v6246 = vld [vmem:[%s5] sm:$0xff]
    %v6247 = vld [vmem:[%s5 + $0x8] sm:$0x3]
    %v6248 = vld [vmem:[#allocation4] sm:$0xff]
    %v6249 = vld [vmem:[#allocation4 + $0x8] sm:$0xff]
    %v6250 = vld [vmem:[#allocation4 + $0x10] sm:$0xff]
    %v6251 = vld [vmem:[#allocation4 + $0x18] sm:$0xff]
    %v6252 = vld [vmem:[#allocation4 + $0x20] sm:$0xff]
    %v6253 = vld [vmem:[#allocation4 + $0x28] sm:$0xff]
    %v6254 = vld [vmem:[#allocation4 + $0x30] sm:$0xf]
    %v6255 = vld [vmem:[#allocation4 + $0x38] sm:$0xf]
    %v6256 = vld [vmem:[#allocation4 + $0x40] sm:$0xf]
    %s6257 = scalar_lea.vmem %s5, 16
    %v6258 = vld [vmem:[%s6257] sm:$0xff]
    %v6259 = vld [vmem:[%s6257 + $0x8] sm:$0x3]
    %6269 = vrot.lane.b32.xlu0 %v6248, 126
    %v6270 = vpop.permute.xlu0 %6269
    %6271 = vrot.lane.b32.xlu0 %v6249, 126
    %v6272 = vpop.permute.xlu0 %6271
    %6273 = vrot.lane.b32.xlu0 %v6250, 126
    %v6274 = vpop.permute.xlu0 %6273
    %6275 = vrot.lane.b32.xlu0 %v6251, 126
    %v6276 = vpop.permute.xlu0 %6275
    %6277 = vrot.lane.b32.xlu0 %v6252, 126
    %v6278 = vpop.permute.xlu0 %6277
    %6279 = vrot.lane.b32.xlu0 %v6253, 126
    %v6280 = vpop.permute.xlu0 %6279
    %6281 = vrot.lane.b32.xlu0 %v6254, 126
    %v6282 = vpop.permute.xlu0 %6281
    %6283 = vrot.lane.b32.xlu0 %v6255, 126
    %v6284 = vpop.permute.xlu0 %6283
    %6285 = vrot.lane.b32.xlu0 %v6256, 126
    %v6286 = vpop.permute.xlu0 %6285
    %v6287 = vsel %vm1200, %v6270, %v6272
    %v6288 = vsel %vm1200, %v6272, %v6274
    %v6289 = vsel %vm1200, %v6276, %v6278
    %v6290 = vsel %vm1200, %v6278, %v6280
    %v6291 = vsel %vm1200, %v6282, %v6284
    %v6292 = vsel %vm1200, %v6284, %v6286
    %vm6299 = vcmask 162816
    %v6301 = vsel %vm6299, %v6258, 0
    %v6304 = vsel %vm6299, %v6259, 0
    %vm6306 = vcmask 1043456
    %v6307 = vsel %vm6306, %v6291, 0
    %v6309 = vsel %vm6306, %v6292, 0
    %v6311 = vsel %vm6306, %v6286, 0
    %6313 = vmatprep.subr.mxu0 0.0
    %6314 = vmatpush1.msra.mxu0 0.0
    %6315 = vmatprep.subr.mxu0 0.0
    %6316 = vmatpush1.msra.mxu0 0.0
    %6317 = vmatprep.subr.mxu0 0.0
    %6318 = vmatpush1.msra.mxu0 0.0
    %6319 = vmatprep.subr.mxu0 0.0
    %6320 = vmatpush1.msra.mxu0 0.0
    %6321 = vmatprep.subr.mxu0 0.0
    %6322 = vmatpush1.msra.mxu0 0.0
    %6323 = vmatprep.subr.mxu0 0.0
    %6324 = vmatpush1.msra.mxu0 0.0
    %6325 = vmatprep.subr.mxu0 0.0
    %6326 = vmatpush1.msra.mxu0 0.0
    %6327 = vmatprep.subr.mxu0 0.0
    %6328 = vmatpush1.msra.mxu0 0.0
    %6329 = vmatprep.subr.mxu0 0.0
    %6330 = vmatpush1.msra.mxu0 0.0
    %6331 = vmatprep.subr.mxu0 0.0
    %6332 = vmatpush1.msra.mxu0 0.0
    %6333 = vmatprep.subr.mxu0 0.0
    %6334 = vmatpush1.msra.mxu0 0.0
    %6335 = vmatprep.subr.mxu0 0.0
    %6336 = vmatpush1.msra.mxu0 0.0
    %6337 = vmatprep.subr.mxu0 0.0
    %6338 = vmatpush1.msra.mxu0 0.0
    %6339 = vmatprep.subr.mxu0 %v6309
    %6340 = vmatpush1.msra.mxu0 %v6307
    %6341 = vmatprep.subr.mxu0 %v6290
    %6342 = vmatpush1.msra.mxu0 %v6289
    %6343 = vmatprep.subr.mxu0 %v6288
    %6344 = vmatpush1.msra.mxu0 %v6287
    %6345 = vmatprep.subr.mxu0 0.0
    %6346 = vmatpush2.msra.mxu0 0.0
    %6347 = vmatprep.subr.mxu0 0.0
    %6348 = vmatpush2.msra.mxu0 0.0
    %6349 = vmatprep.subr.mxu0 0.0
    %6350 = vmatpush2.msra.mxu0 0.0
    %6351 = vmatprep.subr.mxu0 0.0
    %6352 = vmatpush2.msra.mxu0 0.0
    %6353 = vmatprep.subr.mxu0 0.0
    %6354 = vmatpush2.msra.mxu0 0.0
    %6355 = vmatprep.subr.mxu0 0.0
    %6356 = vmatpush2.msra.mxu0 0.0
    %6357 = vmatprep.subr.mxu0 0.0
    %6358 = vmatpush2.msra.mxu0 0.0
    %6359 = vmatprep.subr.mxu0 0.0
    %6360 = vmatpush2.msra.mxu0 0.0
    %6361 = vmatprep.subr.mxu0 0.0
    %6362 = vmatpush2.msra.mxu0 0.0
    %6363 = vmatprep.subr.mxu0 0.0
    %6364 = vmatpush2.msra.mxu0 0.0
    %6365 = vmatprep.subr.mxu0 0.0
    %6366 = vmatpush2.msra.mxu0 0.0
    %6367 = vmatprep.subr.mxu0 0.0
    %6368 = vmatpush2.msra.mxu0 0.0
    %6369 = vmatprep.subr.mxu0 0.0
    %6370 = vmatpush2.msra.mxu0 0.0
    %6371 = vmatprep.subr.mxu0 0.0
    %6372 = vmatpush2.msra.mxu0 0.0
    %6373 = vmatprep.subr.mxu0 0.0
    %6374 = vmatpush2.msra.mxu0 0.0
    %6375 = vmatprep.subr.mxu0 0.0
    %6376 = vmatpush2.msra.mxu0 0.0
    %6377 = vmatprep.mubr.f32.mxu0 0.0
    %6378 = vmatmul.mubr.f32.gmra.mxu0 %v6301
    %v6379 = vpop.f32.mrf.mxu0
    %v6380 = vadd.f32 0.0, %v6379
    %v6381 = vpop.f32.mrf.mxu0
    %v6382 = vadd.f32 0.0, %v6381
    %6383 = vmatprep.mubr.f32.mxu0 0.0
    %6384 = vmatmul.mubr.f32.gmra.mxu0 %v6304
    %v6385 = vpop.f32.mrf.mxu0
    %v6386 = vadd.f32 0.0, %v6385
    %v6387 = vpop.f32.mrf.mxu0
    %v6388 = vadd.f32 0.0, %v6387
    %6389 = vdwg.mxu0
    %6390 = vmatprep.subr.mxu0 0.0
    %6391 = vmatpush1.msra.mxu0 0.0
    %6392 = vmatprep.subr.mxu0 0.0
    %6393 = vmatpush1.msra.mxu0 0.0
    %6394 = vmatprep.subr.mxu0 0.0
    %6395 = vmatpush1.msra.mxu0 0.0
    %6396 = vmatprep.subr.mxu0 0.0
    %6397 = vmatpush1.msra.mxu0 0.0
    %6398 = vmatprep.subr.mxu0 0.0
    %6399 = vmatpush1.msra.mxu0 0.0
    %6400 = vmatprep.subr.mxu0 0.0
    %6401 = vmatpush1.msra.mxu0 0.0
    %6402 = vmatprep.subr.mxu0 0.0
    %6403 = vmatpush1.msra.mxu0 0.0
    %6404 = vmatprep.subr.mxu0 0.0
    %6405 = vmatpush1.msra.mxu0 0.0
    %6406 = vmatprep.subr.mxu0 0.0
    %6407 = vmatpush1.msra.mxu0 0.0
    %6408 = vmatprep.subr.mxu0 0.0
    %6409 = vmatpush1.msra.mxu0 0.0
    %6410 = vmatprep.subr.mxu0 0.0
    %6411 = vmatpush1.msra.mxu0 0.0
    %6412 = vmatprep.subr.mxu0 0.0
    %6413 = vmatpush1.msra.mxu0 0.0
    %6414 = vmatprep.subr.mxu0 0.0
    %6415 = vmatpush1.msra.mxu0 0.0
    %6416 = vmatprep.subr.mxu0 0.0
    %6417 = vmatpush1.msra.mxu0 %v6311
    %6418 = vmatprep.subr.mxu0 0.0
    %6419 = vmatpush1.msra.mxu0 %v6280
    %6420 = vmatprep.subr.mxu0 0.0
    %6421 = vmatpush1.msra.mxu0 %v6274
    %6422 = vmatprep.subr.mxu0 0.0
    %6423 = vmatpush2.msra.mxu0 0.0
    %6424 = vmatprep.subr.mxu0 0.0
    %6425 = vmatpush2.msra.mxu0 0.0
    %6426 = vmatprep.subr.mxu0 0.0
    %6427 = vmatpush2.msra.mxu0 0.0
    %6428 = vmatprep.subr.mxu0 0.0
    %6429 = vmatpush2.msra.mxu0 0.0
    %6430 = vmatprep.subr.mxu0 0.0
    %6431 = vmatpush2.msra.mxu0 0.0
    %6432 = vmatprep.subr.mxu0 0.0
    %6433 = vmatpush2.msra.mxu0 0.0
    %6434 = vmatprep.subr.mxu0 0.0
    %6435 = vmatpush2.msra.mxu0 0.0
    %6436 = vmatprep.subr.mxu0 0.0
    %6437 = vmatpush2.msra.mxu0 0.0
    %6438 = vmatprep.subr.mxu0 0.0
    %6439 = vmatpush2.msra.mxu0 0.0
    %6440 = vmatprep.subr.mxu0 0.0
    %6441 = vmatpush2.msra.mxu0 0.0
    %6442 = vmatprep.subr.mxu0 0.0
    %6443 = vmatpush2.msra.mxu0 0.0
    %6444 = vmatprep.subr.mxu0 0.0
    %6445 = vmatpush2.msra.mxu0 0.0
    %6446 = vmatprep.subr.mxu0 0.0
    %6447 = vmatpush2.msra.mxu0 0.0
    %6448 = vmatprep.subr.mxu0 0.0
    %6449 = vmatpush2.msra.mxu0 0.0
    %6450 = vmatprep.subr.mxu0 0.0
    %6451 = vmatpush2.msra.mxu0 0.0
    %6452 = vmatprep.subr.mxu0 0.0
    %6453 = vmatpush2.msra.mxu0 0.0
    %6454 = vmatprep.mubr.f32.mxu0 0.0
    %6455 = vmatmul.mubr.f32.gmra.mxu0 %v6301
    %v6456 = vpop.f32.mrf.mxu0
    %v6457 = vadd.f32 0.0, %v6456
    %v6458 = vpop.f32.mrf.mxu0
    %6459 = vmatprep.mubr.f32.mxu0 0.0
    %6460 = vmatmul.mubr.f32.gmra.mxu0 %v6304
    %v6461 = vpop.f32.mrf.mxu0
    %v6462 = vadd.f32 0.0, %v6461
    %v6463 = vpop.f32.mrf.mxu0
    %6464 = vdwg.mxu0
    %v6466 = vsel %vm6299, %v6246, 0
    %v6469 = vsel %vm6299, %v6247, 0
    %v6471 = vsel %vm6306, %v6254, 0
    %v6473 = vsel %vm6306, %v6255, 0
    %v6475 = vsel %vm6306, %v6256, 0
    %6477 = vmatprep.subr.mxu0 0.0
    %6478 = vmatpush1.msra.mxu0 0.0
    %6479 = vmatprep.subr.mxu0 0.0
    %6480 = vmatpush1.msra.mxu0 0.0
    %6481 = vmatprep.subr.mxu0 0.0
    %6482 = vmatpush1.msra.mxu0 0.0
    %6483 = vmatprep.subr.mxu0 0.0
    %6484 = vmatpush1.msra.mxu0 0.0
    %6485 = vmatprep.subr.mxu0 0.0
    %6486 = vmatpush1.msra.mxu0 0.0
    %6487 = vmatprep.subr.mxu0 0.0
    %6488 = vmatpush1.msra.mxu0 0.0
    %6489 = vmatprep.subr.mxu0 0.0
    %6490 = vmatpush1.msra.mxu0 0.0
    %6491 = vmatprep.subr.mxu0 0.0
    %6492 = vmatpush1.msra.mxu0 0.0
    %6493 = vmatprep.subr.mxu0 0.0
    %6494 = vmatpush1.msra.mxu0 0.0
    %6495 = vmatprep.subr.mxu0 0.0
    %6496 = vmatpush1.msra.mxu0 0.0
    %6497 = vmatprep.subr.mxu0 0.0
    %6498 = vmatpush1.msra.mxu0 0.0
    %6499 = vmatprep.subr.mxu0 0.0
    %6500 = vmatpush1.msra.mxu0 0.0
    %6501 = vmatprep.subr.mxu0 0.0
    %6502 = vmatpush1.msra.mxu0 0.0
    %6503 = vmatprep.subr.mxu0 %v6473
    %6504 = vmatpush1.msra.mxu0 %v6471
    %6505 = vmatprep.subr.mxu0 %v6252
    %6506 = vmatpush1.msra.mxu0 %v6251
    %6507 = vmatprep.subr.mxu0 %v6249
    %6508 = vmatpush1.msra.mxu0 %v6248
    %6509 = vmatprep.subr.mxu0 0.0
    %6510 = vmatpush2.msra.mxu0 0.0
    %6511 = vmatprep.subr.mxu0 0.0
    %6512 = vmatpush2.msra.mxu0 0.0
    %6513 = vmatprep.subr.mxu0 0.0
    %6514 = vmatpush2.msra.mxu0 0.0
    %6515 = vmatprep.subr.mxu0 0.0
    %6516 = vmatpush2.msra.mxu0 0.0
    %6517 = vmatprep.subr.mxu0 0.0
    %6518 = vmatpush2.msra.mxu0 0.0
    %6519 = vmatprep.subr.mxu0 0.0
    %6520 = vmatpush2.msra.mxu0 0.0
    %6521 = vmatprep.subr.mxu0 0.0
    %6522 = vmatpush2.msra.mxu0 0.0
    %6523 = vmatprep.subr.mxu0 0.0
    %6524 = vmatpush2.msra.mxu0 0.0
    %6525 = vmatprep.subr.mxu0 0.0
    %6526 = vmatpush2.msra.mxu0 0.0
    %6527 = vmatprep.subr.mxu0 0.0
    %6528 = vmatpush2.msra.mxu0 0.0
    %6529 = vmatprep.subr.mxu0 0.0
    %6530 = vmatpush2.msra.mxu0 0.0
    %6531 = vmatprep.subr.mxu0 0.0
    %6532 = vmatpush2.msra.mxu0 0.0
    %6533 = vmatprep.subr.mxu0 0.0
    %6534 = vmatpush2.msra.mxu0 0.0
    %6535 = vmatprep.subr.mxu0 0.0
    %6536 = vmatpush2.msra.mxu0 0.0
    %6537 = vmatprep.subr.mxu0 0.0
    %6538 = vmatpush2.msra.mxu0 0.0
    %6539 = vmatprep.subr.mxu0 0.0
    %6540 = vmatpush2.msra.mxu0 0.0
    %6541 = vmatprep.mubr.f32.mxu0 0.0
    %6542 = vmatmul.mubr.f32.gmra.mxu0 %v6466
    %v6543 = vpop.f32.mrf.mxu0
    %v6544 = vadd.f32 %v6380, %v6543
    %v6545 = vpop.f32.mrf.mxu0
    %v6546 = vadd.f32 %v6382, %v6545
    %6547 = vmatprep.mubr.f32.mxu0 0.0
    %6548 = vmatmul.mubr.f32.gmra.mxu0 %v6469
    %v6549 = vpop.f32.mrf.mxu0
    %v6550 = vadd.f32 %v6386, %v6549
    %v6551 = vpop.f32.mrf.mxu0
    %v6552 = vadd.f32 %v6388, %v6551
    %6553 = vdwg.mxu0
    %6554 = vmatprep.subr.mxu0 0.0
    %6555 = vmatpush1.msra.mxu0 0.0
    %6556 = vmatprep.subr.mxu0 0.0
    %6557 = vmatpush1.msra.mxu0 0.0
    %6558 = vmatprep.subr.mxu0 0.0
    %6559 = vmatpush1.msra.mxu0 0.0
    %6560 = vmatprep.subr.mxu0 0.0
    %6561 = vmatpush1.msra.mxu0 0.0
    %6562 = vmatprep.subr.mxu0 0.0
    %6563 = vmatpush1.msra.mxu0 0.0
    %6564 = vmatprep.subr.mxu0 0.0
    %6565 = vmatpush1.msra.mxu0 0.0
    %6566 = vmatprep.subr.mxu0 0.0
    %6567 = vmatpush1.msra.mxu0 0.0
    %6568 = vmatprep.subr.mxu0 0.0
    %6569 = vmatpush1.msra.mxu0 0.0
    %6570 = vmatprep.subr.mxu0 0.0
    %6571 = vmatpush1.msra.mxu0 0.0
    %6572 = vmatprep.subr.mxu0 0.0
    %6573 = vmatpush1.msra.mxu0 0.0
    %6574 = vmatprep.subr.mxu0 0.0
    %6575 = vmatpush1.msra.mxu0 0.0
    %6576 = vmatprep.subr.mxu0 0.0
    %6577 = vmatpush1.msra.mxu0 0.0
    %6578 = vmatprep.subr.mxu0 0.0
    %6579 = vmatpush1.msra.mxu0 0.0
    %6580 = vmatprep.subr.mxu0 0.0
    %6581 = vmatpush1.msra.mxu0 %v6475
    %6582 = vmatprep.subr.mxu0 0.0
    %6583 = vmatpush1.msra.mxu0 %v6253
    %6584 = vmatprep.subr.mxu0 0.0
    %6585 = vmatpush1.msra.mxu0 %v6250
    %6586 = vmatprep.subr.mxu0 0.0
    %6587 = vmatpush2.msra.mxu0 0.0
    %6588 = vmatprep.subr.mxu0 0.0
    %6589 = vmatpush2.msra.mxu0 0.0
    %6590 = vmatprep.subr.mxu0 0.0
    %6591 = vmatpush2.msra.mxu0 0.0
    %6592 = vmatprep.subr.mxu0 0.0
    %6593 = vmatpush2.msra.mxu0 0.0
    %6594 = vmatprep.subr.mxu0 0.0
    %6595 = vmatpush2.msra.mxu0 0.0
    %6596 = vmatprep.subr.mxu0 0.0
    %6597 = vmatpush2.msra.mxu0 0.0
    %6598 = vmatprep.subr.mxu0 0.0
    %6599 = vmatpush2.msra.mxu0 0.0
    %6600 = vmatprep.subr.mxu0 0.0
    %6601 = vmatpush2.msra.mxu0 0.0
    %6602 = vmatprep.subr.mxu0 0.0
    %6603 = vmatpush2.msra.mxu0 0.0
    %6604 = vmatprep.subr.mxu0 0.0
    %6605 = vmatpush2.msra.mxu0 0.0
    %6606 = vmatprep.subr.mxu0 0.0
    %6607 = vmatpush2.msra.mxu0 0.0
    %6608 = vmatprep.subr.mxu0 0.0
    %6609 = vmatpush2.msra.mxu0 0.0
    %6610 = vmatprep.subr.mxu0 0.0
    %6611 = vmatpush2.msra.mxu0 0.0
    %6612 = vmatprep.subr.mxu0 0.0
    %6613 = vmatpush2.msra.mxu0 0.0
    %6614 = vmatprep.subr.mxu0 0.0
    %6615 = vmatpush2.msra.mxu0 0.0
    %6616 = vmatprep.subr.mxu0 0.0
    %6617 = vmatpush2.msra.mxu0 0.0
    %6618 = vmatprep.mubr.f32.mxu0 0.0
    %6619 = vmatmul.mubr.f32.gmra.mxu0 %v6466
    %v6620 = vpop.f32.mrf.mxu0
    %v6621 = vadd.f32 %v6457, %v6620
    %v6622 = vpop.f32.mrf.mxu0
    %6623 = vmatprep.mubr.f32.mxu0 0.0
    %6624 = vmatmul.mubr.f32.gmra.mxu0 %v6469
    %v6625 = vpop.f32.mrf.mxu0
    %v6626 = vadd.f32 %v6462, %v6625
    %v6627 = vpop.f32.mrf.mxu0
    %6628 = vdwg.mxu0
    %s6629 = scalar_lea.vmem %s5, 32
    %v6630 = vld [vmem:[%s6629] sm:$0xff]
    %v6631 = vld [vmem:[%s6629 + $0x8] sm:$0x3]
    %6632 = vrot.lane.b32.xlu0 %v6248, 124
    %v6633 = vpop.permute.xlu0 %6632
    %6634 = vrot.lane.b32.xlu0 %v6249, 124
    %v6635 = vpop.permute.xlu0 %6634
    %6636 = vrot.lane.b32.xlu0 %v6250, 124
    %v6637 = vpop.permute.xlu0 %6636
    %6638 = vrot.lane.b32.xlu0 %v6251, 124
    %v6639 = vpop.permute.xlu0 %6638
    %6640 = vrot.lane.b32.xlu0 %v6252, 124
    %v6641 = vpop.permute.xlu0 %6640
    %6642 = vrot.lane.b32.xlu0 %v6253, 124
    %v6643 = vpop.permute.xlu0 %6642
    %6644 = vrot.lane.b32.xlu0 %v6254, 124
    %v6645 = vpop.permute.xlu0 %6644
    %6646 = vrot.lane.b32.xlu0 %v6255, 124
    %v6647 = vpop.permute.xlu0 %6646
    %6648 = vrot.lane.b32.xlu0 %v6256, 124
    %v6649 = vpop.permute.xlu0 %6648
    %v6650 = vsel %vm1622, %v6633, %v6635
    %v6651 = vsel %vm1622, %v6635, %v6637
    %v6652 = vsel %vm1622, %v6639, %v6641
    %v6653 = vsel %vm1622, %v6641, %v6643
    %v6654 = vsel %vm1622, %v6645, %v6647
    %v6655 = vsel %vm1622, %v6647, %v6649
    %v6663 = vsel %vm6299, %v6630, 0
    %v6666 = vsel %vm6299, %v6631, 0
    %v6668 = vsel %vm6306, %v6654, 0
    %v6670 = vsel %vm6306, %v6655, 0
    %v6672 = vsel %vm6306, %v6649, 0
    %6674 = vmatprep.subr.mxu0 0.0
    %6675 = vmatpush1.msra.mxu0 0.0
    %6676 = vmatprep.subr.mxu0 0.0
    %6677 = vmatpush1.msra.mxu0 0.0
    %6678 = vmatprep.subr.mxu0 0.0
    %6679 = vmatpush1.msra.mxu0 0.0
    %6680 = vmatprep.subr.mxu0 0.0
    %6681 = vmatpush1.msra.mxu0 0.0
    %6682 = vmatprep.subr.mxu0 0.0
    %6683 = vmatpush1.msra.mxu0 0.0
    %6684 = vmatprep.subr.mxu0 0.0
    %6685 = vmatpush1.msra.mxu0 0.0
    %6686 = vmatprep.subr.mxu0 0.0
    %6687 = vmatpush1.msra.mxu0 0.0
    %6688 = vmatprep.subr.mxu0 0.0
    %6689 = vmatpush1.msra.mxu0 0.0
    %6690 = vmatprep.subr.mxu0 0.0
    %6691 = vmatpush1.msra.mxu0 0.0
    %6692 = vmatprep.subr.mxu0 0.0
    %6693 = vmatpush1.msra.mxu0 0.0
    %6694 = vmatprep.subr.mxu0 0.0
    %6695 = vmatpush1.msra.mxu0 0.0
    %6696 = vmatprep.subr.mxu0 0.0
    %6697 = vmatpush1.msra.mxu0 0.0
    %6698 = vmatprep.subr.mxu0 0.0
    %6699 = vmatpush1.msra.mxu0 0.0
    %6700 = vmatprep.subr.mxu0 %v6670
    %6701 = vmatpush1.msra.mxu0 %v6668
    %6702 = vmatprep.subr.mxu0 %v6653
    %6703 = vmatpush1.msra.mxu0 %v6652
    %6704 = vmatprep.subr.mxu0 %v6651
    %6705 = vmatpush1.msra.mxu0 %v6650
    %6706 = vmatprep.subr.mxu0 0.0
    %6707 = vmatpush2.msra.mxu0 0.0
    %6708 = vmatprep.subr.mxu0 0.0
    %6709 = vmatpush2.msra.mxu0 0.0
    %6710 = vmatprep.subr.mxu0 0.0
    %6711 = vmatpush2.msra.mxu0 0.0
    %6712 = vmatprep.subr.mxu0 0.0
    %6713 = vmatpush2.msra.mxu0 0.0
    %6714 = vmatprep.subr.mxu0 0.0
    %6715 = vmatpush2.msra.mxu0 0.0
    %6716 = vmatprep.subr.mxu0 0.0
    %6717 = vmatpush2.msra.mxu0 0.0
    %6718 = vmatprep.subr.mxu0 0.0
    %6719 = vmatpush2.msra.mxu0 0.0
    %6720 = vmatprep.subr.mxu0 0.0
    %6721 = vmatpush2.msra.mxu0 0.0
    %6722 = vmatprep.subr.mxu0 0.0
    %6723 = vmatpush2.msra.mxu0 0.0
    %6724 = vmatprep.subr.mxu0 0.0
    %6725 = vmatpush2.msra.mxu0 0.0
    %6726 = vmatprep.subr.mxu0 0.0
    %6727 = vmatpush2.msra.mxu0 0.0
    %6728 = vmatprep.subr.mxu0 0.0
    %6729 = vmatpush2.msra.mxu0 0.0
    %6730 = vmatprep.subr.mxu0 0.0
    %6731 = vmatpush2.msra.mxu0 0.0
    %6732 = vmatprep.subr.mxu0 0.0
    %6733 = vmatpush2.msra.mxu0 0.0
    %6734 = vmatprep.subr.mxu0 0.0
    %6735 = vmatpush2.msra.mxu0 0.0
    %6736 = vmatprep.subr.mxu0 0.0
    %6737 = vmatpush2.msra.mxu0 0.0
    %6738 = vmatprep.mubr.f32.mxu0 0.0
    %6739 = vmatmul.mubr.f32.gmra.mxu0 %v6663
    %v6740 = vpop.f32.mrf.mxu0
    %v6741 = vadd.f32 0.0, %v6740
    %v6742 = vpop.f32.mrf.mxu0
    %v6743 = vadd.f32 0.0, %v6742
    %6744 = vmatprep.mubr.f32.mxu0 0.0
    %6745 = vmatmul.mubr.f32.gmra.mxu0 %v6666
    %v6746 = vpop.f32.mrf.mxu0
    %v6747 = vadd.f32 0.0, %v6746
    %v6748 = vpop.f32.mrf.mxu0
    %v6749 = vadd.f32 0.0, %v6748
    %6750 = vdwg.mxu0
    %6751 = vmatprep.subr.mxu0 0.0
    %6752 = vmatpush1.msra.mxu0 0.0
    %6753 = vmatprep.subr.mxu0 0.0
    %6754 = vmatpush1.msra.mxu0 0.0
    %6755 = vmatprep.subr.mxu0 0.0
    %6756 = vmatpush1.msra.mxu0 0.0
    %6757 = vmatprep.subr.mxu0 0.0
    %6758 = vmatpush1.msra.mxu0 0.0
    %6759 = vmatprep.subr.mxu0 0.0
    %6760 = vmatpush1.msra.mxu0 0.0
    %6761 = vmatprep.subr.mxu0 0.0
    %6762 = vmatpush1.msra.mxu0 0.0
    %6763 = vmatprep.subr.mxu0 0.0
    %6764 = vmatpush1.msra.mxu0 0.0
    %6765 = vmatprep.subr.mxu0 0.0
    %6766 = vmatpush1.msra.mxu0 0.0
    %6767 = vmatprep.subr.mxu0 0.0
    %6768 = vmatpush1.msra.mxu0 0.0
    %6769 = vmatprep.subr.mxu0 0.0
    %6770 = vmatpush1.msra.mxu0 0.0
    %6771 = vmatprep.subr.mxu0 0.0
    %6772 = vmatpush1.msra.mxu0 0.0
    %6773 = vmatprep.subr.mxu0 0.0
    %6774 = vmatpush1.msra.mxu0 0.0
    %6775 = vmatprep.subr.mxu0 0.0
    %6776 = vmatpush1.msra.mxu0 0.0
    %6777 = vmatprep.subr.mxu0 0.0
    %6778 = vmatpush1.msra.mxu0 %v6672
    %6779 = vmatprep.subr.mxu0 0.0
    %6780 = vmatpush1.msra.mxu0 %v6643
    %6781 = vmatprep.subr.mxu0 0.0
    %6782 = vmatpush1.msra.mxu0 %v6637
    %6783 = vmatprep.subr.mxu0 0.0
    %6784 = vmatpush2.msra.mxu0 0.0
    %6785 = vmatprep.subr.mxu0 0.0
    %6786 = vmatpush2.msra.mxu0 0.0
    %6787 = vmatprep.subr.mxu0 0.0
    %6788 = vmatpush2.msra.mxu0 0.0
    %6789 = vmatprep.subr.mxu0 0.0
    %6790 = vmatpush2.msra.mxu0 0.0
    %6791 = vmatprep.subr.mxu0 0.0
    %6792 = vmatpush2.msra.mxu0 0.0
    %6793 = vmatprep.subr.mxu0 0.0
    %6794 = vmatpush2.msra.mxu0 0.0
    %6795 = vmatprep.subr.mxu0 0.0
    %6796 = vmatpush2.msra.mxu0 0.0
    %6797 = vmatprep.subr.mxu0 0.0
    %6798 = vmatpush2.msra.mxu0 0.0
    %6799 = vmatprep.subr.mxu0 0.0
    %6800 = vmatpush2.msra.mxu0 0.0
    %6801 = vmatprep.subr.mxu0 0.0
    %6802 = vmatpush2.msra.mxu0 0.0
    %6803 = vmatprep.subr.mxu0 0.0
    %6804 = vmatpush2.msra.mxu0 0.0
    %6805 = vmatprep.subr.mxu0 0.0
    %6806 = vmatpush2.msra.mxu0 0.0
    %6807 = vmatprep.subr.mxu0 0.0
    %6808 = vmatpush2.msra.mxu0 0.0
    %6809 = vmatprep.subr.mxu0 0.0
    %6810 = vmatpush2.msra.mxu0 0.0
    %6811 = vmatprep.subr.mxu0 0.0
    %6812 = vmatpush2.msra.mxu0 0.0
    %6813 = vmatprep.subr.mxu0 0.0
    %6814 = vmatpush2.msra.mxu0 0.0
    %6815 = vmatprep.mubr.f32.mxu0 0.0
    %6816 = vmatmul.mubr.f32.gmra.mxu0 %v6663
    %v6817 = vpop.f32.mrf.mxu0
    %v6818 = vadd.f32 0.0, %v6817
    %v6819 = vpop.f32.mrf.mxu0
    %6820 = vmatprep.mubr.f32.mxu0 0.0
    %6821 = vmatmul.mubr.f32.gmra.mxu0 %v6666
    %v6822 = vpop.f32.mrf.mxu0
    %v6823 = vadd.f32 0.0, %v6822
    %v6824 = vpop.f32.mrf.mxu0
    %6825 = vdwg.mxu0
    %v6826 = vadd.f32 %v6544, %v6741
    %v6827 = vadd.f32 %v6546, %v6743
    %v6828 = vadd.f32 %v6621, %v6818
    %v6829 = vadd.f32 %v6550, %v6747
    %v6830 = vadd.f32 %v6552, %v6749
    %v6831 = vadd.f32 %v6626, %v6823
    %s6832 = scalar_lea.vmem %s5, 48
    %v6833 = vld [vmem:[%s6832] sm:$0xff]
    %v6834 = vld [vmem:[%s6832 + $0x8] sm:$0x3]
    %6835 = vrot.lane.b32.xlu0 %v6248, 122
    %v6836 = vpop.permute.xlu0 %6835
    %6837 = vrot.lane.b32.xlu0 %v6249, 122
    %v6838 = vpop.permute.xlu0 %6837
    %6839 = vrot.lane.b32.xlu0 %v6250, 122
    %v6840 = vpop.permute.xlu0 %6839
    %6841 = vrot.lane.b32.xlu0 %v6251, 122
    %v6842 = vpop.permute.xlu0 %6841
    %6843 = vrot.lane.b32.xlu0 %v6252, 122
    %v6844 = vpop.permute.xlu0 %6843
    %6845 = vrot.lane.b32.xlu0 %v6253, 122
    %v6846 = vpop.permute.xlu0 %6845
    %6847 = vrot.lane.b32.xlu0 %v6254, 122
    %v6848 = vpop.permute.xlu0 %6847
    %6849 = vrot.lane.b32.xlu0 %v6255, 122
    %v6850 = vpop.permute.xlu0 %6849
    %6851 = vrot.lane.b32.xlu0 %v6256, 122
    %v6852 = vpop.permute.xlu0 %6851
    %vm6853 = vcmask 998400
    %v6854 = vsel %vm6853, %v6836, %v6838
    %v6855 = vsel %vm6853, %v6838, %v6840
    %v6856 = vsel %vm6853, %v6842, %v6844
    %v6857 = vsel %vm6853, %v6844, %v6846
    %v6858 = vsel %vm6853, %v6848, %v6850
    %v6859 = vsel %vm6853, %v6850, %v6852
    %v6867 = vsel %vm6299, %v6833, 0
    %v6870 = vsel %vm6299, %v6834, 0
    %v6872 = vsel %vm6306, %v6858, 0
    %v6874 = vsel %vm6306, %v6859, 0
    %v6876 = vsel %vm6306, %v6852, 0
    %6878 = vmatprep.subr.mxu0 0.0
    %6879 = vmatpush1.msra.mxu0 0.0
    %6880 = vmatprep.subr.mxu0 0.0
    %6881 = vmatpush1.msra.mxu0 0.0
    %6882 = vmatprep.subr.mxu0 0.0
    %6883 = vmatpush1.msra.mxu0 0.0
    %6884 = vmatprep.subr.mxu0 0.0
    %6885 = vmatpush1.msra.mxu0 0.0
    %6886 = vmatprep.subr.mxu0 0.0
    %6887 = vmatpush1.msra.mxu0 0.0
    %6888 = vmatprep.subr.mxu0 0.0
    %6889 = vmatpush1.msra.mxu0 0.0
    %6890 = vmatprep.subr.mxu0 0.0
    %6891 = vmatpush1.msra.mxu0 0.0
    %6892 = vmatprep.subr.mxu0 0.0
    %6893 = vmatpush1.msra.mxu0 0.0
    %6894 = vmatprep.subr.mxu0 0.0
    %6895 = vmatpush1.msra.mxu0 0.0
    %6896 = vmatprep.subr.mxu0 0.0
    %6897 = vmatpush1.msra.mxu0 0.0
    %6898 = vmatprep.subr.mxu0 0.0
    %6899 = vmatpush1.msra.mxu0 0.0
    %6900 = vmatprep.subr.mxu0 0.0
    %6901 = vmatpush1.msra.mxu0 0.0
    %6902 = vmatprep.subr.mxu0 0.0
    %6903 = vmatpush1.msra.mxu0 0.0
    %6904 = vmatprep.subr.mxu0 %v6874
    %6905 = vmatpush1.msra.mxu0 %v6872
    %6906 = vmatprep.subr.mxu0 %v6857
    %6907 = vmatpush1.msra.mxu0 %v6856
    %6908 = vmatprep.subr.mxu0 %v6855
    %6909 = vmatpush1.msra.mxu0 %v6854
    %6910 = vmatprep.subr.mxu0 0.0
    %6911 = vmatpush2.msra.mxu0 0.0
    %6912 = vmatprep.subr.mxu0 0.0
    %6913 = vmatpush2.msra.mxu0 0.0
    %6914 = vmatprep.subr.mxu0 0.0
    %6915 = vmatpush2.msra.mxu0 0.0
    %6916 = vmatprep.subr.mxu0 0.0
    %6917 = vmatpush2.msra.mxu0 0.0
    %6918 = vmatprep.subr.mxu0 0.0
    %6919 = vmatpush2.msra.mxu0 0.0
    %6920 = vmatprep.subr.mxu0 0.0
    %6921 = vmatpush2.msra.mxu0 0.0
    %6922 = vmatprep.subr.mxu0 0.0
    %6923 = vmatpush2.msra.mxu0 0.0
    %6924 = vmatprep.subr.mxu0 0.0
    %6925 = vmatpush2.msra.mxu0 0.0
    %6926 = vmatprep.subr.mxu0 0.0
    %6927 = vmatpush2.msra.mxu0 0.0
    %6928 = vmatprep.subr.mxu0 0.0
    %6929 = vmatpush2.msra.mxu0 0.0
    %6930 = vmatprep.subr.mxu0 0.0
    %6931 = vmatpush2.msra.mxu0 0.0
    %6932 = vmatprep.subr.mxu0 0.0
    %6933 = vmatpush2.msra.mxu0 0.0
    %6934 = vmatprep.subr.mxu0 0.0
    %6935 = vmatpush2.msra.mxu0 0.0
    %6936 = vmatprep.subr.mxu0 0.0
    %6937 = vmatpush2.msra.mxu0 0.0
    %6938 = vmatprep.subr.mxu0 0.0
    %6939 = vmatpush2.msra.mxu0 0.0
    %6940 = vmatprep.subr.mxu0 0.0
    %6941 = vmatpush2.msra.mxu0 0.0
    %6942 = vmatprep.mubr.f32.mxu0 0.0
    %6943 = vmatmul.mubr.f32.gmra.mxu0 %v6867
    %v6944 = vpop.f32.mrf.mxu0
    %v6945 = vadd.f32 0.0, %v6944
    %v6946 = vpop.f32.mrf.mxu0
    %v6947 = vadd.f32 0.0, %v6946
    %6948 = vmatprep.mubr.f32.mxu0 0.0
    %6949 = vmatmul.mubr.f32.gmra.mxu0 %v6870
    %v6950 = vpop.f32.mrf.mxu0
    %v6951 = vadd.f32 0.0, %v6950
    %v6952 = vpop.f32.mrf.mxu0
    %v6953 = vadd.f32 0.0, %v6952
    %6954 = vdwg.mxu0
    %6955 = vmatprep.subr.mxu0 0.0
    %6956 = vmatpush1.msra.mxu0 0.0
    %6957 = vmatprep.subr.mxu0 0.0
    %6958 = vmatpush1.msra.mxu0 0.0
    %6959 = vmatprep.subr.mxu0 0.0
    %6960 = vmatpush1.msra.mxu0 0.0
    %6961 = vmatprep.subr.mxu0 0.0
    %6962 = vmatpush1.msra.mxu0 0.0
    %6963 = vmatprep.subr.mxu0 0.0
    %6964 = vmatpush1.msra.mxu0 0.0
    %6965 = vmatprep.subr.mxu0 0.0
    %6966 = vmatpush1.msra.mxu0 0.0
    %6967 = vmatprep.subr.mxu0 0.0
    %6968 = vmatpush1.msra.mxu0 0.0
    %6969 = vmatprep.subr.mxu0 0.0
    %6970 = vmatpush1.msra.mxu0 0.0
    %6971 = vmatprep.subr.mxu0 0.0
    %6972 = vmatpush1.msra.mxu0 0.0
    %6973 = vmatprep.subr.mxu0 0.0
    %6974 = vmatpush1.msra.mxu0 0.0
    %6975 = vmatprep.subr.mxu0 0.0
    %6976 = vmatpush1.msra.mxu0 0.0
    %6977 = vmatprep.subr.mxu0 0.0
    %6978 = vmatpush1.msra.mxu0 0.0
    %6979 = vmatprep.subr.mxu0 0.0
    %6980 = vmatpush1.msra.mxu0 0.0
    %6981 = vmatprep.subr.mxu0 0.0
    %6982 = vmatpush1.msra.mxu0 %v6876
    %6983 = vmatprep.subr.mxu0 0.0
    %6984 = vmatpush1.msra.mxu0 %v6846
    %6985 = vmatprep.subr.mxu0 0.0
    %6986 = vmatpush1.msra.mxu0 %v6840
    %6987 = vmatprep.subr.mxu0 0.0
    %6988 = vmatpush2.msra.mxu0 0.0
    %6989 = vmatprep.subr.mxu0 0.0
    %6990 = vmatpush2.msra.mxu0 0.0
    %6991 = vmatprep.subr.mxu0 0.0
    %6992 = vmatpush2.msra.mxu0 0.0
    %6993 = vmatprep.subr.mxu0 0.0
    %6994 = vmatpush2.msra.mxu0 0.0
    %6995 = vmatprep.subr.mxu0 0.0
    %6996 = vmatpush2.msra.mxu0 0.0
    %6997 = vmatprep.subr.mxu0 0.0
    %6998 = vmatpush2.msra.mxu0 0.0
    %6999 = vmatprep.subr.mxu0 0.0
    %7000 = vmatpush2.msra.mxu0 0.0
    %7001 = vmatprep.subr.mxu0 0.0
    %7002 = vmatpush2.msra.mxu0 0.0
    %7003 = vmatprep.subr.mxu0 0.0
    %7004 = vmatpush2.msra.mxu0 0.0
    %7005 = vmatprep.subr.mxu0 0.0
    %7006 = vmatpush2.msra.mxu0 0.0
    %7007 = vmatprep.subr.mxu0 0.0
    %7008 = vmatpush2.msra.mxu0 0.0
    %7009 = vmatprep.subr.mxu0 0.0
    %7010 = vmatpush2.msra.mxu0 0.0
    %7011 = vmatprep.subr.mxu0 0.0
    %7012 = vmatpush2.msra.mxu0 0.0
    %7013 = vmatprep.subr.mxu0 0.0
    %7014 = vmatpush2.msra.mxu0 0.0
    %7015 = vmatprep.subr.mxu0 0.0
    %7016 = vmatpush2.msra.mxu0 0.0
    %7017 = vmatprep.subr.mxu0 0.0
    %7018 = vmatpush2.msra.mxu0 0.0
    %7019 = vmatprep.mubr.f32.mxu0 0.0
    %7020 = vmatmul.mubr.f32.gmra.mxu0 %v6867
    %v7021 = vpop.f32.mrf.mxu0
    %v7022 = vadd.f32 0.0, %v7021
    %v7023 = vpop.f32.mrf.mxu0
    %7024 = vmatprep.mubr.f32.mxu0 0.0
    %7025 = vmatmul.mubr.f32.gmra.mxu0 %v6870
    %v7026 = vpop.f32.mrf.mxu0
    %v7027 = vadd.f32 0.0, %v7026
    %v7028 = vpop.f32.mrf.mxu0
    %7029 = vdwg.mxu0
    %v7030 = vadd.f32 %v6826, %v6945
    %v7031 = vadd.f32 %v6827, %v6947
    %v7032 = vadd.f32 %v6828, %v7022
    %v7033 = vadd.f32 %v6829, %v6951
    %v7034 = vadd.f32 %v6830, %v6953
    %v7035 = vadd.f32 %v6831, %v7027
    %s7036 = scalar_lea.vmem %s5, 64
    %v7037 = vld [vmem:[%s7036] sm:$0xff]
    %v7038 = vld [vmem:[%s7036 + $0x8] sm:$0x3]
    %7039 = vrot.lane.b32.xlu0 %v6248, 104
    %v7040 = vpop.permute.xlu0 %7039
    %7041 = vrot.lane.b32.xlu0 %v6249, 104
    %v7042 = vpop.permute.xlu0 %7041
    %7043 = vrot.lane.b32.xlu0 %v6250, 104
    %v7044 = vpop.permute.xlu0 %7043
    %7045 = vrot.lane.b32.xlu0 %v6251, 104
    %v7046 = vpop.permute.xlu0 %7045
    %7047 = vrot.lane.b32.xlu0 %v6252, 104
    %v7048 = vpop.permute.xlu0 %7047
    %7049 = vrot.lane.b32.xlu0 %v6253, 104
    %v7050 = vpop.permute.xlu0 %7049
    %7051 = vrot.lane.b32.xlu0 %v6254, 104
    %v7052 = vpop.permute.xlu0 %7051
    %7053 = vrot.lane.b32.xlu0 %v6255, 104
    %v7054 = vpop.permute.xlu0 %7053
    %7055 = vrot.lane.b32.xlu0 %v6256, 104
    %v7056 = vpop.permute.xlu0 %7055
    %v7057 = vsel %vm2888, %v7040, %v7042
    %v7058 = vsel %vm2888, %v7042, %v7044
    %v7059 = vsel %vm2888, %v7046, %v7048
    %v7060 = vsel %vm2888, %v7048, %v7050
    %v7061 = vsel %vm2888, %v7052, %v7054
    %v7062 = vsel %vm2888, %v7054, %v7056
    %v7070 = vsel %vm6299, %v7037, 0
    %v7073 = vsel %vm6299, %v7038, 0
    %v7075 = vsel %vm6306, %v7061, 0
    %v7077 = vsel %vm6306, %v7062, 0
    %v7079 = vsel %vm6306, %v7056, 0
    %7081 = vmatprep.subr.mxu0 0.0
    %7082 = vmatpush1.msra.mxu0 0.0
    %7083 = vmatprep.subr.mxu0 0.0
    %7084 = vmatpush1.msra.mxu0 0.0
    %7085 = vmatprep.subr.mxu0 0.0
    %7086 = vmatpush1.msra.mxu0 0.0
    %7087 = vmatprep.subr.mxu0 0.0
    %7088 = vmatpush1.msra.mxu0 0.0
    %7089 = vmatprep.subr.mxu0 0.0
    %7090 = vmatpush1.msra.mxu0 0.0
    %7091 = vmatprep.subr.mxu0 0.0
    %7092 = vmatpush1.msra.mxu0 0.0
    %7093 = vmatprep.subr.mxu0 0.0
    %7094 = vmatpush1.msra.mxu0 0.0
    %7095 = vmatprep.subr.mxu0 0.0
    %7096 = vmatpush1.msra.mxu0 0.0
    %7097 = vmatprep.subr.mxu0 0.0
    %7098 = vmatpush1.msra.mxu0 0.0
    %7099 = vmatprep.subr.mxu0 0.0
    %7100 = vmatpush1.msra.mxu0 0.0
    %7101 = vmatprep.subr.mxu0 0.0
    %7102 = vmatpush1.msra.mxu0 0.0
    %7103 = vmatprep.subr.mxu0 0.0
    %7104 = vmatpush1.msra.mxu0 0.0
    %7105 = vmatprep.subr.mxu0 0.0
    %7106 = vmatpush1.msra.mxu0 0.0
    %7107 = vmatprep.subr.mxu0 %v7077
    %7108 = vmatpush1.msra.mxu0 %v7075
    %7109 = vmatprep.subr.mxu0 %v7060
    %7110 = vmatpush1.msra.mxu0 %v7059
    %7111 = vmatprep.subr.mxu0 %v7058
    %7112 = vmatpush1.msra.mxu0 %v7057
    %7113 = vmatprep.subr.mxu0 0.0
    %7114 = vmatpush2.msra.mxu0 0.0
    %7115 = vmatprep.subr.mxu0 0.0
    %7116 = vmatpush2.msra.mxu0 0.0
    %7117 = vmatprep.subr.mxu0 0.0
    %7118 = vmatpush2.msra.mxu0 0.0
    %7119 = vmatprep.subr.mxu0 0.0
    %7120 = vmatpush2.msra.mxu0 0.0
    %7121 = vmatprep.subr.mxu0 0.0
    %7122 = vmatpush2.msra.mxu0 0.0
    %7123 = vmatprep.subr.mxu0 0.0
    %7124 = vmatpush2.msra.mxu0 0.0
    %7125 = vmatprep.subr.mxu0 0.0
    %7126 = vmatpush2.msra.mxu0 0.0
    %7127 = vmatprep.subr.mxu0 0.0
    %7128 = vmatpush2.msra.mxu0 0.0
    %7129 = vmatprep.subr.mxu0 0.0
    %7130 = vmatpush2.msra.mxu0 0.0
    %7131 = vmatprep.subr.mxu0 0.0
    %7132 = vmatpush2.msra.mxu0 0.0
    %7133 = vmatprep.subr.mxu0 0.0
    %7134 = vmatpush2.msra.mxu0 0.0
    %7135 = vmatprep.subr.mxu0 0.0
    %7136 = vmatpush2.msra.mxu0 0.0
    %7137 = vmatprep.subr.mxu0 0.0
    %7138 = vmatpush2.msra.mxu0 0.0
    %7139 = vmatprep.subr.mxu0 0.0
    %7140 = vmatpush2.msra.mxu0 0.0
    %7141 = vmatprep.subr.mxu0 0.0
    %7142 = vmatpush2.msra.mxu0 0.0
    %7143 = vmatprep.subr.mxu0 0.0
    %7144 = vmatpush2.msra.mxu0 0.0
    %7145 = vmatprep.mubr.f32.mxu0 0.0
    %7146 = vmatmul.mubr.f32.gmra.mxu0 %v7070
    %v7147 = vpop.f32.mrf.mxu0
    %v7148 = vadd.f32 0.0, %v7147
    %v7149 = vpop.f32.mrf.mxu0
    %v7150 = vadd.f32 0.0, %v7149
    %7151 = vmatprep.mubr.f32.mxu0 0.0
    %7152 = vmatmul.mubr.f32.gmra.mxu0 %v7073
    %v7153 = vpop.f32.mrf.mxu0
    %v7154 = vadd.f32 0.0, %v7153
    %v7155 = vpop.f32.mrf.mxu0
    %v7156 = vadd.f32 0.0, %v7155
    %7157 = vdwg.mxu0
    %7158 = vmatprep.subr.mxu0 0.0
    %7159 = vmatpush1.msra.mxu0 0.0
    %7160 = vmatprep.subr.mxu0 0.0
    %7161 = vmatpush1.msra.mxu0 0.0
    %7162 = vmatprep.subr.mxu0 0.0
    %7163 = vmatpush1.msra.mxu0 0.0
    %7164 = vmatprep.subr.mxu0 0.0
    %7165 = vmatpush1.msra.mxu0 0.0
    %7166 = vmatprep.subr.mxu0 0.0
    %7167 = vmatpush1.msra.mxu0 0.0
    %7168 = vmatprep.subr.mxu0 0.0
    %7169 = vmatpush1.msra.mxu0 0.0
    %7170 = vmatprep.subr.mxu0 0.0
    %7171 = vmatpush1.msra.mxu0 0.0
    %7172 = vmatprep.subr.mxu0 0.0
    %7173 = vmatpush1.msra.mxu0 0.0
    %7174 = vmatprep.subr.mxu0 0.0
    %7175 = vmatpush1.msra.mxu0 0.0
    %7176 = vmatprep.subr.mxu0 0.0
    %7177 = vmatpush1.msra.mxu0 0.0
    %7178 = vmatprep.subr.mxu0 0.0
    %7179 = vmatpush1.msra.mxu0 0.0
    %7180 = vmatprep.subr.mxu0 0.0
    %7181 = vmatpush1.msra.mxu0 0.0
    %7182 = vmatprep.subr.mxu0 0.0
    %7183 = vmatpush1.msra.mxu0 0.0
    %7184 = vmatprep.subr.mxu0 0.0
    %7185 = vmatpush1.msra.mxu0 %v7079
    %7186 = vmatprep.subr.mxu0 0.0
    %7187 = vmatpush1.msra.mxu0 %v7050
    %7188 = vmatprep.subr.mxu0 0.0
    %7189 = vmatpush1.msra.mxu0 %v7044
    %7190 = vmatprep.subr.mxu0 0.0
    %7191 = vmatpush2.msra.mxu0 0.0
    %7192 = vmatprep.subr.mxu0 0.0
    %7193 = vmatpush2.msra.mxu0 0.0
    %7194 = vmatprep.subr.mxu0 0.0
    %7195 = vmatpush2.msra.mxu0 0.0
    %7196 = vmatprep.subr.mxu0 0.0
    %7197 = vmatpush2.msra.mxu0 0.0
    %7198 = vmatprep.subr.mxu0 0.0
    %7199 = vmatpush2.msra.mxu0 0.0
    %7200 = vmatprep.subr.mxu0 0.0
    %7201 = vmatpush2.msra.mxu0 0.0
    %7202 = vmatprep.subr.mxu0 0.0
    %7203 = vmatpush2.msra.mxu0 0.0
    %7204 = vmatprep.subr.mxu0 0.0
    %7205 = vmatpush2.msra.mxu0 0.0
    %7206 = vmatprep.subr.mxu0 0.0
    %7207 = vmatpush2.msra.mxu0 0.0
    %7208 = vmatprep.subr.mxu0 0.0
    %7209 = vmatpush2.msra.mxu0 0.0
    %7210 = vmatprep.subr.mxu0 0.0
    %7211 = vmatpush2.msra.mxu0 0.0
    %7212 = vmatprep.subr.mxu0 0.0
    %7213 = vmatpush2.msra.mxu0 0.0
    %7214 = vmatprep.subr.mxu0 0.0
    %7215 = vmatpush2.msra.mxu0 0.0
    %7216 = vmatprep.subr.mxu0 0.0
    %7217 = vmatpush2.msra.mxu0 0.0
    %7218 = vmatprep.subr.mxu0 0.0
    %7219 = vmatpush2.msra.mxu0 0.0
    %7220 = vmatprep.subr.mxu0 0.0
    %7221 = vmatpush2.msra.mxu0 0.0
    %7222 = vmatprep.mubr.f32.mxu0 0.0
    %7223 = vmatmul.mubr.f32.gmra.mxu0 %v7070
    %v7224 = vpop.f32.mrf.mxu0
    %v7225 = vadd.f32 0.0, %v7224
    %v7226 = vpop.f32.mrf.mxu0
    %7227 = vmatprep.mubr.f32.mxu0 0.0
    %7228 = vmatmul.mubr.f32.gmra.mxu0 %v7073
    %v7229 = vpop.f32.mrf.mxu0
    %v7230 = vadd.f32 0.0, %v7229
    %v7231 = vpop.f32.mrf.mxu0
    %7232 = vdwg.mxu0
    %v7233 = vadd.f32 %v7030, %v7148
    %v7234 = vadd.f32 %v7031, %v7150
    %v7235 = vadd.f32 %v7032, %v7225
    %v7236 = vadd.f32 %v7033, %v7154
    %v7237 = vadd.f32 %v7034, %v7156
    %v7238 = vadd.f32 %v7035, %v7230
    %s7239 = scalar_lea.vmem %s5, 80
    %v7240 = vld [vmem:[%s7239] sm:$0xff]
    %v7241 = vld [vmem:[%s7239 + $0x8] sm:$0x3]
    %7242 = vrot.lane.b32.xlu0 %v6248, 102
    %v7243 = vpop.permute.xlu0 %7242
    %7244 = vrot.lane.b32.xlu0 %v6249, 102
    %v7245 = vpop.permute.xlu0 %7244
    %7246 = vrot.lane.b32.xlu0 %v6250, 102
    %v7247 = vpop.permute.xlu0 %7246
    %7248 = vrot.lane.b32.xlu0 %v6251, 102
    %v7249 = vpop.permute.xlu0 %7248
    %7250 = vrot.lane.b32.xlu0 %v6252, 102
    %v7251 = vpop.permute.xlu0 %7250
    %7252 = vrot.lane.b32.xlu0 %v6253, 102
    %v7253 = vpop.permute.xlu0 %7252
    %7254 = vrot.lane.b32.xlu0 %v6254, 102
    %v7255 = vpop.permute.xlu0 %7254
    %7256 = vrot.lane.b32.xlu0 %v6255, 102
    %v7257 = vpop.permute.xlu0 %7256
    %7258 = vrot.lane.b32.xlu0 %v6256, 102
    %v7259 = vpop.permute.xlu0 %7258
    %v7260 = vsel %vm3310, %v7243, %v7245
    %v7261 = vsel %vm3310, %v7245, %v7247
    %v7262 = vsel %vm3310, %v7249, %v7251
    %v7263 = vsel %vm3310, %v7251, %v7253
    %v7264 = vsel %vm3310, %v7255, %v7257
    %v7265 = vsel %vm3310, %v7257, %v7259
    %v7273 = vsel %vm6299, %v7240, 0
    %v7276 = vsel %vm6299, %v7241, 0
    %v7278 = vsel %vm6306, %v7264, 0
    %v7280 = vsel %vm6306, %v7265, 0
    %v7282 = vsel %vm6306, %v7259, 0
    %7284 = vmatprep.subr.mxu0 0.0
    %7285 = vmatpush1.msra.mxu0 0.0
    %7286 = vmatprep.subr.mxu0 0.0
    %7287 = vmatpush1.msra.mxu0 0.0
    %7288 = vmatprep.subr.mxu0 0.0
    %7289 = vmatpush1.msra.mxu0 0.0
    %7290 = vmatprep.subr.mxu0 0.0
    %7291 = vmatpush1.msra.mxu0 0.0
    %7292 = vmatprep.subr.mxu0 0.0
    %7293 = vmatpush1.msra.mxu0 0.0
    %7294 = vmatprep.subr.mxu0 0.0
    %7295 = vmatpush1.msra.mxu0 0.0
    %7296 = vmatprep.subr.mxu0 0.0
    %7297 = vmatpush1.msra.mxu0 0.0
    %7298 = vmatprep.subr.mxu0 0.0
    %7299 = vmatpush1.msra.mxu0 0.0
    %7300 = vmatprep.subr.mxu0 0.0
    %7301 = vmatpush1.msra.mxu0 0.0
    %7302 = vmatprep.subr.mxu0 0.0
    %7303 = vmatpush1.msra.mxu0 0.0
    %7304 = vmatprep.subr.mxu0 0.0
    %7305 = vmatpush1.msra.mxu0 0.0
    %7306 = vmatprep.subr.mxu0 0.0
    %7307 = vmatpush1.msra.mxu0 0.0
    %7308 = vmatprep.subr.mxu0 0.0
    %7309 = vmatpush1.msra.mxu0 0.0
    %7310 = vmatprep.subr.mxu0 %v7280
    %7311 = vmatpush1.msra.mxu0 %v7278
    %7312 = vmatprep.subr.mxu0 %v7263
    %7313 = vmatpush1.msra.mxu0 %v7262
    %7314 = vmatprep.subr.mxu0 %v7261
    %7315 = vmatpush1.msra.mxu0 %v7260
    %7316 = vmatprep.subr.mxu0 0.0
    %7317 = vmatpush2.msra.mxu0 0.0
    %7318 = vmatprep.subr.mxu0 0.0
    %7319 = vmatpush2.msra.mxu0 0.0
    %7320 = vmatprep.subr.mxu0 0.0
    %7321 = vmatpush2.msra.mxu0 0.0
    %7322 = vmatprep.subr.mxu0 0.0
    %7323 = vmatpush2.msra.mxu0 0.0
    %7324 = vmatprep.subr.mxu0 0.0
    %7325 = vmatpush2.msra.mxu0 0.0
    %7326 = vmatprep.subr.mxu0 0.0
    %7327 = vmatpush2.msra.mxu0 0.0
    %7328 = vmatprep.subr.mxu0 0.0
    %7329 = vmatpush2.msra.mxu0 0.0
    %7330 = vmatprep.subr.mxu0 0.0
    %7331 = vmatpush2.msra.mxu0 0.0
    %7332 = vmatprep.subr.mxu0 0.0
    %7333 = vmatpush2.msra.mxu0 0.0
    %7334 = vmatprep.subr.mxu0 0.0
    %7335 = vmatpush2.msra.mxu0 0.0
    %7336 = vmatprep.subr.mxu0 0.0
    %7337 = vmatpush2.msra.mxu0 0.0
    %7338 = vmatprep.subr.mxu0 0.0
    %7339 = vmatpush2.msra.mxu0 0.0
    %7340 = vmatprep.subr.mxu0 0.0
    %7341 = vmatpush2.msra.mxu0 0.0
    %7342 = vmatprep.subr.mxu0 0.0
    %7343 = vmatpush2.msra.mxu0 0.0
    %7344 = vmatprep.subr.mxu0 0.0
    %7345 = vmatpush2.msra.mxu0 0.0
    %7346 = vmatprep.subr.mxu0 0.0
    %7347 = vmatpush2.msra.mxu0 0.0
    %7348 = vmatprep.mubr.f32.mxu0 0.0
    %7349 = vmatmul.mubr.f32.gmra.mxu0 %v7273
    %v7350 = vpop.f32.mrf.mxu0
    %v7351 = vadd.f32 0.0, %v7350
    %v7352 = vpop.f32.mrf.mxu0
    %v7353 = vadd.f32 0.0, %v7352
    %7354 = vmatprep.mubr.f32.mxu0 0.0
    %7355 = vmatmul.mubr.f32.gmra.mxu0 %v7276
    %v7356 = vpop.f32.mrf.mxu0
    %v7357 = vadd.f32 0.0, %v7356
    %v7358 = vpop.f32.mrf.mxu0
    %v7359 = vadd.f32 0.0, %v7358
    %7360 = vdwg.mxu0
    %7361 = vmatprep.subr.mxu0 0.0
    %7362 = vmatpush1.msra.mxu0 0.0
    %7363 = vmatprep.subr.mxu0 0.0
    %7364 = vmatpush1.msra.mxu0 0.0
    %7365 = vmatprep.subr.mxu0 0.0
    %7366 = vmatpush1.msra.mxu0 0.0
    %7367 = vmatprep.subr.mxu0 0.0
    %7368 = vmatpush1.msra.mxu0 0.0
    %7369 = vmatprep.subr.mxu0 0.0
    %7370 = vmatpush1.msra.mxu0 0.0
    %7371 = vmatprep.subr.mxu0 0.0
    %7372 = vmatpush1.msra.mxu0 0.0
    %7373 = vmatprep.subr.mxu0 0.0
    %7374 = vmatpush1.msra.mxu0 0.0
    %7375 = vmatprep.subr.mxu0 0.0
    %7376 = vmatpush1.msra.mxu0 0.0
    %7377 = vmatprep.subr.mxu0 0.0
    %7378 = vmatpush1.msra.mxu0 0.0
    %7379 = vmatprep.subr.mxu0 0.0
    %7380 = vmatpush1.msra.mxu0 0.0
    %7381 = vmatprep.subr.mxu0 0.0
    %7382 = vmatpush1.msra.mxu0 0.0
    %7383 = vmatprep.subr.mxu0 0.0
    %7384 = vmatpush1.msra.mxu0 0.0
    %7385 = vmatprep.subr.mxu0 0.0
    %7386 = vmatpush1.msra.mxu0 0.0
    %7387 = vmatprep.subr.mxu0 0.0
    %7388 = vmatpush1.msra.mxu0 %v7282
    %7389 = vmatprep.subr.mxu0 0.0
    %7390 = vmatpush1.msra.mxu0 %v7253
    %7391 = vmatprep.subr.mxu0 0.0
    %7392 = vmatpush1.msra.mxu0 %v7247
    %7393 = vmatprep.subr.mxu0 0.0
    %7394 = vmatpush2.msra.mxu0 0.0
    %7395 = vmatprep.subr.mxu0 0.0
    %7396 = vmatpush2.msra.mxu0 0.0
    %7397 = vmatprep.subr.mxu0 0.0
    %7398 = vmatpush2.msra.mxu0 0.0
    %7399 = vmatprep.subr.mxu0 0.0
    %7400 = vmatpush2.msra.mxu0 0.0
    %7401 = vmatprep.subr.mxu0 0.0
    %7402 = vmatpush2.msra.mxu0 0.0
    %7403 = vmatprep.subr.mxu0 0.0
    %7404 = vmatpush2.msra.mxu0 0.0
    %7405 = vmatprep.subr.mxu0 0.0
    %7406 = vmatpush2.msra.mxu0 0.0
    %7407 = vmatprep.subr.mxu0 0.0
    %7408 = vmatpush2.msra.mxu0 0.0
    %7409 = vmatprep.subr.mxu0 0.0
    %7410 = vmatpush2.msra.mxu0 0.0
    %7411 = vmatprep.subr.mxu0 0.0
    %7412 = vmatpush2.msra.mxu0 0.0
    %7413 = vmatprep.subr.mxu0 0.0
    %7414 = vmatpush2.msra.mxu0 0.0
    %7415 = vmatprep.subr.mxu0 0.0
    %7416 = vmatpush2.msra.mxu0 0.0
    %7417 = vmatprep.subr.mxu0 0.0
    %7418 = vmatpush2.msra.mxu0 0.0
    %7419 = vmatprep.subr.mxu0 0.0
    %7420 = vmatpush2.msra.mxu0 0.0
    %7421 = vmatprep.subr.mxu0 0.0
    %7422 = vmatpush2.msra.mxu0 0.0
    %7423 = vmatprep.subr.mxu0 0.0
    %7424 = vmatpush2.msra.mxu0 0.0
    %7425 = vmatprep.mubr.f32.mxu0 0.0
    %7426 = vmatmul.mubr.f32.gmra.mxu0 %v7273
    %v7427 = vpop.f32.mrf.mxu0
    %v7428 = vadd.f32 0.0, %v7427
    %v7429 = vpop.f32.mrf.mxu0
    %7430 = vmatprep.mubr.f32.mxu0 0.0
    %7431 = vmatmul.mubr.f32.gmra.mxu0 %v7276
    %v7432 = vpop.f32.mrf.mxu0
    %v7433 = vadd.f32 0.0, %v7432
    %v7434 = vpop.f32.mrf.mxu0
    %7435 = vdwg.mxu0
    %v7436 = vadd.f32 %v7233, %v7351
    %v7437 = vadd.f32 %v7234, %v7353
    %v7438 = vadd.f32 %v7235, %v7428
    %v7439 = vadd.f32 %v7236, %v7357
    %v7440 = vadd.f32 %v7237, %v7359
    %v7441 = vadd.f32 %v7238, %v7433
    %s7442 = scalar_lea.vmem %s5, 96
    %v7443 = vld [vmem:[%s7442] sm:$0xff]
    %v7444 = vld [vmem:[%s7442 + $0x8] sm:$0x3]
    %7445 = vrot.lane.b32.xlu0 %v6248, 100
    %v7446 = vpop.permute.xlu0 %7445
    %7447 = vrot.lane.b32.xlu0 %v6249, 100
    %v7448 = vpop.permute.xlu0 %7447
    %7449 = vrot.lane.b32.xlu0 %v6250, 100
    %v7450 = vpop.permute.xlu0 %7449
    %7451 = vrot.lane.b32.xlu0 %v6251, 100
    %v7452 = vpop.permute.xlu0 %7451
    %7453 = vrot.lane.b32.xlu0 %v6252, 100
    %v7454 = vpop.permute.xlu0 %7453
    %7455 = vrot.lane.b32.xlu0 %v6253, 100
    %v7456 = vpop.permute.xlu0 %7455
    %7457 = vrot.lane.b32.xlu0 %v6254, 100
    %v7458 = vpop.permute.xlu0 %7457
    %7459 = vrot.lane.b32.xlu0 %v6255, 100
    %v7460 = vpop.permute.xlu0 %7459
    %7461 = vrot.lane.b32.xlu0 %v6256, 100
    %v7462 = vpop.permute.xlu0 %7461
    %v7463 = vsel %vm3732, %v7446, %v7448
    %v7464 = vsel %vm3732, %v7448, %v7450
    %v7465 = vsel %vm3732, %v7452, %v7454
    %v7466 = vsel %vm3732, %v7454, %v7456
    %v7467 = vsel %vm3732, %v7458, %v7460
    %v7468 = vsel %vm3732, %v7460, %v7462
    %v7476 = vsel %vm6299, %v7443, 0
    %v7479 = vsel %vm6299, %v7444, 0
    %v7481 = vsel %vm6306, %v7467, 0
    %v7483 = vsel %vm6306, %v7468, 0
    %v7485 = vsel %vm6306, %v7462, 0
    %7487 = vmatprep.subr.mxu0 0.0
    %7488 = vmatpush1.msra.mxu0 0.0
    %7489 = vmatprep.subr.mxu0 0.0
    %7490 = vmatpush1.msra.mxu0 0.0
    %7491 = vmatprep.subr.mxu0 0.0
    %7492 = vmatpush1.msra.mxu0 0.0
    %7493 = vmatprep.subr.mxu0 0.0
    %7494 = vmatpush1.msra.mxu0 0.0
    %7495 = vmatprep.subr.mxu0 0.0
    %7496 = vmatpush1.msra.mxu0 0.0
    %7497 = vmatprep.subr.mxu0 0.0
    %7498 = vmatpush1.msra.mxu0 0.0
    %7499 = vmatprep.subr.mxu0 0.0
    %7500 = vmatpush1.msra.mxu0 0.0
    %7501 = vmatprep.subr.mxu0 0.0
    %7502 = vmatpush1.msra.mxu0 0.0
    %7503 = vmatprep.subr.mxu0 0.0
    %7504 = vmatpush1.msra.mxu0 0.0
    %7505 = vmatprep.subr.mxu0 0.0
    %7506 = vmatpush1.msra.mxu0 0.0
    %7507 = vmatprep.subr.mxu0 0.0
    %7508 = vmatpush1.msra.mxu0 0.0
    %7509 = vmatprep.subr.mxu0 0.0
    %7510 = vmatpush1.msra.mxu0 0.0
    %7511 = vmatprep.subr.mxu0 0.0
    %7512 = vmatpush1.msra.mxu0 0.0
    %7513 = vmatprep.subr.mxu0 %v7483
    %7514 = vmatpush1.msra.mxu0 %v7481
    %7515 = vmatprep.subr.mxu0 %v7466
    %7516 = vmatpush1.msra.mxu0 %v7465
    %7517 = vmatprep.subr.mxu0 %v7464
    %7518 = vmatpush1.msra.mxu0 %v7463
    %7519 = vmatprep.subr.mxu0 0.0
    %7520 = vmatpush2.msra.mxu0 0.0
    %7521 = vmatprep.subr.mxu0 0.0
    %7522 = vmatpush2.msra.mxu0 0.0
    %7523 = vmatprep.subr.mxu0 0.0
    %7524 = vmatpush2.msra.mxu0 0.0
    %7525 = vmatprep.subr.mxu0 0.0
    %7526 = vmatpush2.msra.mxu0 0.0
    %7527 = vmatprep.subr.mxu0 0.0
    %7528 = vmatpush2.msra.mxu0 0.0
    %7529 = vmatprep.subr.mxu0 0.0
    %7530 = vmatpush2.msra.mxu0 0.0
    %7531 = vmatprep.subr.mxu0 0.0
    %7532 = vmatpush2.msra.mxu0 0.0
    %7533 = vmatprep.subr.mxu0 0.0
    %7534 = vmatpush2.msra.mxu0 0.0
    %7535 = vmatprep.subr.mxu0 0.0
    %7536 = vmatpush2.msra.mxu0 0.0
    %7537 = vmatprep.subr.mxu0 0.0
    %7538 = vmatpush2.msra.mxu0 0.0
    %7539 = vmatprep.subr.mxu0 0.0
    %7540 = vmatpush2.msra.mxu0 0.0
    %7541 = vmatprep.subr.mxu0 0.0
    %7542 = vmatpush2.msra.mxu0 0.0
    %7543 = vmatprep.subr.mxu0 0.0
    %7544 = vmatpush2.msra.mxu0 0.0
    %7545 = vmatprep.subr.mxu0 0.0
    %7546 = vmatpush2.msra.mxu0 0.0
    %7547 = vmatprep.subr.mxu0 0.0
    %7548 = vmatpush2.msra.mxu0 0.0
    %7549 = vmatprep.subr.mxu0 0.0
    %7550 = vmatpush2.msra.mxu0 0.0
    %7551 = vmatprep.mubr.f32.mxu0 0.0
    %7552 = vmatmul.mubr.f32.gmra.mxu0 %v7476
    %v7553 = vpop.f32.mrf.mxu0
    %v7554 = vadd.f32 0.0, %v7553
    %v7555 = vpop.f32.mrf.mxu0
    %v7556 = vadd.f32 0.0, %v7555
    %7557 = vmatprep.mubr.f32.mxu0 0.0
    %7558 = vmatmul.mubr.f32.gmra.mxu0 %v7479
    %v7559 = vpop.f32.mrf.mxu0
    %v7560 = vadd.f32 0.0, %v7559
    %v7561 = vpop.f32.mrf.mxu0
    %v7562 = vadd.f32 0.0, %v7561
    %7563 = vdwg.mxu0
    %7564 = vmatprep.subr.mxu0 0.0
    %7565 = vmatpush1.msra.mxu0 0.0
    %7566 = vmatprep.subr.mxu0 0.0
    %7567 = vmatpush1.msra.mxu0 0.0
    %7568 = vmatprep.subr.mxu0 0.0
    %7569 = vmatpush1.msra.mxu0 0.0
    %7570 = vmatprep.subr.mxu0 0.0
    %7571 = vmatpush1.msra.mxu0 0.0
    %7572 = vmatprep.subr.mxu0 0.0
    %7573 = vmatpush1.msra.mxu0 0.0
    %7574 = vmatprep.subr.mxu0 0.0
    %7575 = vmatpush1.msra.mxu0 0.0
    %7576 = vmatprep.subr.mxu0 0.0
    %7577 = vmatpush1.msra.mxu0 0.0
    %7578 = vmatprep.subr.mxu0 0.0
    %7579 = vmatpush1.msra.mxu0 0.0
    %7580 = vmatprep.subr.mxu0 0.0
    %7581 = vmatpush1.msra.mxu0 0.0
    %7582 = vmatprep.subr.mxu0 0.0
    %7583 = vmatpush1.msra.mxu0 0.0
    %7584 = vmatprep.subr.mxu0 0.0
    %7585 = vmatpush1.msra.mxu0 0.0
    %7586 = vmatprep.subr.mxu0 0.0
    %7587 = vmatpush1.msra.mxu0 0.0
    %7588 = vmatprep.subr.mxu0 0.0
    %7589 = vmatpush1.msra.mxu0 0.0
    %7590 = vmatprep.subr.mxu0 0.0
    %7591 = vmatpush1.msra.mxu0 %v7485
    %7592 = vmatprep.subr.mxu0 0.0
    %7593 = vmatpush1.msra.mxu0 %v7456
    %7594 = vmatprep.subr.mxu0 0.0
    %7595 = vmatpush1.msra.mxu0 %v7450
    %7596 = vmatprep.subr.mxu0 0.0
    %7597 = vmatpush2.msra.mxu0 0.0
    %7598 = vmatprep.subr.mxu0 0.0
    %7599 = vmatpush2.msra.mxu0 0.0
    %7600 = vmatprep.subr.mxu0 0.0
    %7601 = vmatpush2.msra.mxu0 0.0
    %7602 = vmatprep.subr.mxu0 0.0
    %7603 = vmatpush2.msra.mxu0 0.0
    %7604 = vmatprep.subr.mxu0 0.0
    %7605 = vmatpush2.msra.mxu0 0.0
    %7606 = vmatprep.subr.mxu0 0.0
    %7607 = vmatpush2.msra.mxu0 0.0
    %7608 = vmatprep.subr.mxu0 0.0
    %7609 = vmatpush2.msra.mxu0 0.0
    %7610 = vmatprep.subr.mxu0 0.0
    %7611 = vmatpush2.msra.mxu0 0.0
    %7612 = vmatprep.subr.mxu0 0.0
    %7613 = vmatpush2.msra.mxu0 0.0
    %7614 = vmatprep.subr.mxu0 0.0
    %7615 = vmatpush2.msra.mxu0 0.0
    %7616 = vmatprep.subr.mxu0 0.0
    %7617 = vmatpush2.msra.mxu0 0.0
    %7618 = vmatprep.subr.mxu0 0.0
    %7619 = vmatpush2.msra.mxu0 0.0
    %7620 = vmatprep.subr.mxu0 0.0
    %7621 = vmatpush2.msra.mxu0 0.0
    %7622 = vmatprep.subr.mxu0 0.0
    %7623 = vmatpush2.msra.mxu0 0.0
    %7624 = vmatprep.subr.mxu0 0.0
    %7625 = vmatpush2.msra.mxu0 0.0
    %7626 = vmatprep.subr.mxu0 0.0
    %7627 = vmatpush2.msra.mxu0 0.0
    %7628 = vmatprep.mubr.f32.mxu0 0.0
    %7629 = vmatmul.mubr.f32.gmra.mxu0 %v7476
    %v7630 = vpop.f32.mrf.mxu0
    %v7631 = vadd.f32 0.0, %v7630
    %v7632 = vpop.f32.mrf.mxu0
    %7633 = vmatprep.mubr.f32.mxu0 0.0
    %7634 = vmatmul.mubr.f32.gmra.mxu0 %v7479
    %v7635 = vpop.f32.mrf.mxu0
    %v7636 = vadd.f32 0.0, %v7635
    %v7637 = vpop.f32.mrf.mxu0
    %7638 = vdwg.mxu0
    %v7639 = vadd.f32 %v7436, %v7554
    %v7640 = vadd.f32 %v7437, %v7556
    %v7641 = vadd.f32 %v7438, %v7631
    %v7642 = vadd.f32 %v7439, %v7560
    %v7643 = vadd.f32 %v7440, %v7562
    %v7644 = vadd.f32 %v7441, %v7636
    %s7645 = scalar_lea.vmem %s5, 112
    %v7646 = vld [vmem:[%s7645] sm:$0xff]
    %v7647 = vld [vmem:[%s7645 + $0x8] sm:$0x3]
    %7648 = vrot.lane.b32.xlu0 %v6248, 98
    %v7649 = vpop.permute.xlu0 %7648
    %7650 = vrot.lane.b32.xlu0 %v6249, 98
    %v7651 = vpop.permute.xlu0 %7650
    %7652 = vrot.lane.b32.xlu0 %v6250, 98
    %v7653 = vpop.permute.xlu0 %7652
    %7654 = vrot.lane.b32.xlu0 %v6251, 98
    %v7655 = vpop.permute.xlu0 %7654
    %7656 = vrot.lane.b32.xlu0 %v6252, 98
    %v7657 = vpop.permute.xlu0 %7656
    %7658 = vrot.lane.b32.xlu0 %v6253, 98
    %v7659 = vpop.permute.xlu0 %7658
    %7660 = vrot.lane.b32.xlu0 %v6254, 98
    %v7661 = vpop.permute.xlu0 %7660
    %7662 = vrot.lane.b32.xlu0 %v6255, 98
    %v7663 = vpop.permute.xlu0 %7662
    %7664 = vrot.lane.b32.xlu0 %v6256, 98
    %v7665 = vpop.permute.xlu0 %7664
    %vm7666 = vcmask 801792
    %v7667 = vsel %vm7666, %v7649, %v7651
    %v7668 = vsel %vm7666, %v7651, %v7653
    %v7669 = vsel %vm7666, %v7655, %v7657
    %v7670 = vsel %vm7666, %v7657, %v7659
    %v7671 = vsel %vm7666, %v7661, %v7663
    %v7672 = vsel %vm7666, %v7663, %v7665
    %v7680 = vsel %vm6299, %v7646, 0
    %v7683 = vsel %vm6299, %v7647, 0
    %v7685 = vsel %vm6306, %v7671, 0
    %v7687 = vsel %vm6306, %v7672, 0
    %v7689 = vsel %vm6306, %v7665, 0
    %7691 = vmatprep.subr.mxu0 0.0
    %7692 = vmatpush1.msra.mxu0 0.0
    %7693 = vmatprep.subr.mxu0 0.0
    %7694 = vmatpush1.msra.mxu0 0.0
    %7695 = vmatprep.subr.mxu0 0.0
    %7696 = vmatpush1.msra.mxu0 0.0
    %7697 = vmatprep.subr.mxu0 0.0
    %7698 = vmatpush1.msra.mxu0 0.0
    %7699 = vmatprep.subr.mxu0 0.0
    %7700 = vmatpush1.msra.mxu0 0.0
    %7701 = vmatprep.subr.mxu0 0.0
    %7702 = vmatpush1.msra.mxu0 0.0
    %7703 = vmatprep.subr.mxu0 0.0
    %7704 = vmatpush1.msra.mxu0 0.0
    %7705 = vmatprep.subr.mxu0 0.0
    %7706 = vmatpush1.msra.mxu0 0.0
    %7707 = vmatprep.subr.mxu0 0.0
    %7708 = vmatpush1.msra.mxu0 0.0
    %7709 = vmatprep.subr.mxu0 0.0
    %7710 = vmatpush1.msra.mxu0 0.0
    %7711 = vmatprep.subr.mxu0 0.0
    %7712 = vmatpush1.msra.mxu0 0.0
    %7713 = vmatprep.subr.mxu0 0.0
    %7714 = vmatpush1.msra.mxu0 0.0
    %7715 = vmatprep.subr.mxu0 0.0
    %7716 = vmatpush1.msra.mxu0 0.0
    %7717 = vmatprep.subr.mxu0 %v7687
    %7718 = vmatpush1.msra.mxu0 %v7685
    %7719 = vmatprep.subr.mxu0 %v7670
    %7720 = vmatpush1.msra.mxu0 %v7669
    %7721 = vmatprep.subr.mxu0 %v7668
    %7722 = vmatpush1.msra.mxu0 %v7667
    %7723 = vmatprep.subr.mxu0 0.0
    %7724 = vmatpush2.msra.mxu0 0.0
    %7725 = vmatprep.subr.mxu0 0.0
    %7726 = vmatpush2.msra.mxu0 0.0
    %7727 = vmatprep.subr.mxu0 0.0
    %7728 = vmatpush2.msra.mxu0 0.0
    %7729 = vmatprep.subr.mxu0 0.0
    %7730 = vmatpush2.msra.mxu0 0.0
    %7731 = vmatprep.subr.mxu0 0.0
    %7732 = vmatpush2.msra.mxu0 0.0
    %7733 = vmatprep.subr.mxu0 0.0
    %7734 = vmatpush2.msra.mxu0 0.0
    %7735 = vmatprep.subr.mxu0 0.0
    %7736 = vmatpush2.msra.mxu0 0.0
    %7737 = vmatprep.subr.mxu0 0.0
    %7738 = vmatpush2.msra.mxu0 0.0
    %7739 = vmatprep.subr.mxu0 0.0
    %7740 = vmatpush2.msra.mxu0 0.0
    %7741 = vmatprep.subr.mxu0 0.0
    %7742 = vmatpush2.msra.mxu0 0.0
    %7743 = vmatprep.subr.mxu0 0.0
    %7744 = vmatpush2.msra.mxu0 0.0
    %7745 = vmatprep.subr.mxu0 0.0
    %7746 = vmatpush2.msra.mxu0 0.0
    %7747 = vmatprep.subr.mxu0 0.0
    %7748 = vmatpush2.msra.mxu0 0.0
    %7749 = vmatprep.subr.mxu0 0.0
    %7750 = vmatpush2.msra.mxu0 0.0
    %7751 = vmatprep.subr.mxu0 0.0
    %7752 = vmatpush2.msra.mxu0 0.0
    %7753 = vmatprep.subr.mxu0 0.0
    %7754 = vmatpush2.msra.mxu0 0.0
    %7755 = vmatprep.mubr.f32.mxu0 0.0
    %7756 = vmatmul.mubr.f32.gmra.mxu0 %v7680
    %v7757 = vpop.f32.mrf.mxu0
    %v7758 = vadd.f32 0.0, %v7757
    %v7759 = vpop.f32.mrf.mxu0
    %v7760 = vadd.f32 0.0, %v7759
    %7761 = vmatprep.mubr.f32.mxu0 0.0
    %7762 = vmatmul.mubr.f32.gmra.mxu0 %v7683
    %v7763 = vpop.f32.mrf.mxu0
    %v7764 = vadd.f32 0.0, %v7763
    %v7765 = vpop.f32.mrf.mxu0
    %v7766 = vadd.f32 0.0, %v7765
    %7767 = vdwg.mxu0
    %7768 = vmatprep.subr.mxu0 0.0
    %7769 = vmatpush1.msra.mxu0 0.0
    %7770 = vmatprep.subr.mxu0 0.0
    %7771 = vmatpush1.msra.mxu0 0.0
    %7772 = vmatprep.subr.mxu0 0.0
    %7773 = vmatpush1.msra.mxu0 0.0
    %7774 = vmatprep.subr.mxu0 0.0
    %7775 = vmatpush1.msra.mxu0 0.0
    %7776 = vmatprep.subr.mxu0 0.0
    %7777 = vmatpush1.msra.mxu0 0.0
    %7778 = vmatprep.subr.mxu0 0.0
    %7779 = vmatpush1.msra.mxu0 0.0
    %7780 = vmatprep.subr.mxu0 0.0
    %7781 = vmatpush1.msra.mxu0 0.0
    %7782 = vmatprep.subr.mxu0 0.0
    %7783 = vmatpush1.msra.mxu0 0.0
    %7784 = vmatprep.subr.mxu0 0.0
    %7785 = vmatpush1.msra.mxu0 0.0
    %7786 = vmatprep.subr.mxu0 0.0
    %7787 = vmatpush1.msra.mxu0 0.0
    %7788 = vmatprep.subr.mxu0 0.0
    %7789 = vmatpush1.msra.mxu0 0.0
    %7790 = vmatprep.subr.mxu0 0.0
    %7791 = vmatpush1.msra.mxu0 0.0
    %7792 = vmatprep.subr.mxu0 0.0
    %7793 = vmatpush1.msra.mxu0 0.0
    %7794 = vmatprep.subr.mxu0 0.0
    %7795 = vmatpush1.msra.mxu0 %v7689
    %7796 = vmatprep.subr.mxu0 0.0
    %7797 = vmatpush1.msra.mxu0 %v7659
    %7798 = vmatprep.subr.mxu0 0.0
    %7799 = vmatpush1.msra.mxu0 %v7653
    %7800 = vmatprep.subr.mxu0 0.0
    %7801 = vmatpush2.msra.mxu0 0.0
    %7802 = vmatprep.subr.mxu0 0.0
    %7803 = vmatpush2.msra.mxu0 0.0
    %7804 = vmatprep.subr.mxu0 0.0
    %7805 = vmatpush2.msra.mxu0 0.0
    %7806 = vmatprep.subr.mxu0 0.0
    %7807 = vmatpush2.msra.mxu0 0.0
    %7808 = vmatprep.subr.mxu0 0.0
    %7809 = vmatpush2.msra.mxu0 0.0
    %7810 = vmatprep.subr.mxu0 0.0
    %7811 = vmatpush2.msra.mxu0 0.0
    %7812 = vmatprep.subr.mxu0 0.0
    %7813 = vmatpush2.msra.mxu0 0.0
    %7814 = vmatprep.subr.mxu0 0.0
    %7815 = vmatpush2.msra.mxu0 0.0
    %7816 = vmatprep.subr.mxu0 0.0
    %7817 = vmatpush2.msra.mxu0 0.0
    %7818 = vmatprep.subr.mxu0 0.0
    %7819 = vmatpush2.msra.mxu0 0.0
    %7820 = vmatprep.subr.mxu0 0.0
    %7821 = vmatpush2.msra.mxu0 0.0
    %7822 = vmatprep.subr.mxu0 0.0
    %7823 = vmatpush2.msra.mxu0 0.0
    %7824 = vmatprep.subr.mxu0 0.0
    %7825 = vmatpush2.msra.mxu0 0.0
    %7826 = vmatprep.subr.mxu0 0.0
    %7827 = vmatpush2.msra.mxu0 0.0
    %7828 = vmatprep.subr.mxu0 0.0
    %7829 = vmatpush2.msra.mxu0 0.0
    %7830 = vmatprep.subr.mxu0 0.0
    %7831 = vmatpush2.msra.mxu0 0.0
    %7832 = vmatprep.mubr.f32.mxu0 0.0
    %7833 = vmatmul.mubr.f32.gmra.mxu0 %v7680
    %v7834 = vpop.f32.mrf.mxu0
    %v7835 = vadd.f32 0.0, %v7834
    %v7836 = vpop.f32.mrf.mxu0
    %7837 = vmatprep.mubr.f32.mxu0 0.0
    %7838 = vmatmul.mubr.f32.gmra.mxu0 %v7683
    %v7839 = vpop.f32.mrf.mxu0
    %v7840 = vadd.f32 0.0, %v7839
    %v7841 = vpop.f32.mrf.mxu0
    %7842 = vdwg.mxu0
    %v7843 = vadd.f32 %v7639, %v7758
    %v7844 = vadd.f32 %v7640, %v7760
    %v7845 = vadd.f32 %v7641, %v7835
    %v7846 = vadd.f32 %v7642, %v7764
    %v7847 = vadd.f32 %v7643, %v7766
    %v7848 = vadd.f32 %v7644, %v7840
    %s7849 = scalar_lea.vmem %s5, 128
    %v7850 = vld [vmem:[%s7849] sm:$0xff]
    %v7851 = vld [vmem:[%s7849 + $0x8] sm:$0x3]
    %7852 = vrot.lane.b32.xlu0 %v6248, 80
    %v7853 = vpop.permute.xlu0 %7852
    %7854 = vrot.lane.b32.xlu0 %v6249, 80
    %v7855 = vpop.permute.xlu0 %7854
    %7856 = vrot.lane.b32.xlu0 %v6250, 80
    %v7857 = vpop.permute.xlu0 %7856
    %7858 = vrot.lane.b32.xlu0 %v6251, 80
    %v7859 = vpop.permute.xlu0 %7858
    %7860 = vrot.lane.b32.xlu0 %v6252, 80
    %v7861 = vpop.permute.xlu0 %7860
    %7862 = vrot.lane.b32.xlu0 %v6253, 80
    %v7863 = vpop.permute.xlu0 %7862
    %7864 = vrot.lane.b32.xlu0 %v6254, 80
    %v7865 = vpop.permute.xlu0 %7864
    %7866 = vrot.lane.b32.xlu0 %v6255, 80
    %v7867 = vpop.permute.xlu0 %7866
    %7868 = vrot.lane.b32.xlu0 %v6256, 80
    %v7869 = vpop.permute.xlu0 %7868
    %v7870 = vsel %vm4998, %v7853, %v7855
    %v7871 = vsel %vm4998, %v7855, %v7857
    %v7872 = vsel %vm4998, %v7859, %v7861
    %v7873 = vsel %vm4998, %v7861, %v7863
    %v7874 = vsel %vm4998, %v7865, %v7867
    %v7875 = vsel %vm4998, %v7867, %v7869
    %v7883 = vsel %vm6299, %v7850, 0
    %v7886 = vsel %vm6299, %v7851, 0
    %v7888 = vsel %vm6306, %v7874, 0
    %v7890 = vsel %vm6306, %v7875, 0
    %v7892 = vsel %vm6306, %v7869, 0
    %7894 = vmatprep.subr.mxu0 0.0
    %7895 = vmatpush1.msra.mxu0 0.0
    %7896 = vmatprep.subr.mxu0 0.0
    %7897 = vmatpush1.msra.mxu0 0.0
    %7898 = vmatprep.subr.mxu0 0.0
    %7899 = vmatpush1.msra.mxu0 0.0
    %7900 = vmatprep.subr.mxu0 0.0
    %7901 = vmatpush1.msra.mxu0 0.0
    %7902 = vmatprep.subr.mxu0 0.0
    %7903 = vmatpush1.msra.mxu0 0.0
    %7904 = vmatprep.subr.mxu0 0.0
    %7905 = vmatpush1.msra.mxu0 0.0
    %7906 = vmatprep.subr.mxu0 0.0
    %7907 = vmatpush1.msra.mxu0 0.0
    %7908 = vmatprep.subr.mxu0 0.0
    %7909 = vmatpush1.msra.mxu0 0.0
    %7910 = vmatprep.subr.mxu0 0.0
    %7911 = vmatpush1.msra.mxu0 0.0
    %7912 = vmatprep.subr.mxu0 0.0
    %7913 = vmatpush1.msra.mxu0 0.0
    %7914 = vmatprep.subr.mxu0 0.0
    %7915 = vmatpush1.msra.mxu0 0.0
    %7916 = vmatprep.subr.mxu0 0.0
    %7917 = vmatpush1.msra.mxu0 0.0
    %7918 = vmatprep.subr.mxu0 0.0
    %7919 = vmatpush1.msra.mxu0 0.0
    %7920 = vmatprep.subr.mxu0 %v7890
    %7921 = vmatpush1.msra.mxu0 %v7888
    %7922 = vmatprep.subr.mxu0 %v7873
    %7923 = vmatpush1.msra.mxu0 %v7872
    %7924 = vmatprep.subr.mxu0 %v7871
    %7925 = vmatpush1.msra.mxu0 %v7870
    %7926 = vmatprep.subr.mxu0 0.0
    %7927 = vmatpush2.msra.mxu0 0.0
    %7928 = vmatprep.subr.mxu0 0.0
    %7929 = vmatpush2.msra.mxu0 0.0
    %7930 = vmatprep.subr.mxu0 0.0
    %7931 = vmatpush2.msra.mxu0 0.0
    %7932 = vmatprep.subr.mxu0 0.0
    %7933 = vmatpush2.msra.mxu0 0.0
    %7934 = vmatprep.subr.mxu0 0.0
    %7935 = vmatpush2.msra.mxu0 0.0
    %7936 = vmatprep.subr.mxu0 0.0
    %7937 = vmatpush2.msra.mxu0 0.0
    %7938 = vmatprep.subr.mxu0 0.0
    %7939 = vmatpush2.msra.mxu0 0.0
    %7940 = vmatprep.subr.mxu0 0.0
    %7941 = vmatpush2.msra.mxu0 0.0
    %7942 = vmatprep.subr.mxu0 0.0
    %7943 = vmatpush2.msra.mxu0 0.0
    %7944 = vmatprep.subr.mxu0 0.0
    %7945 = vmatpush2.msra.mxu0 0.0
    %7946 = vmatprep.subr.mxu0 0.0
    %7947 = vmatpush2.msra.mxu0 0.0
    %7948 = vmatprep.subr.mxu0 0.0
    %7949 = vmatpush2.msra.mxu0 0.0
    %7950 = vmatprep.subr.mxu0 0.0
    %7951 = vmatpush2.msra.mxu0 0.0
    %7952 = vmatprep.subr.mxu0 0.0
    %7953 = vmatpush2.msra.mxu0 0.0
    %7954 = vmatprep.subr.mxu0 0.0
    %7955 = vmatpush2.msra.mxu0 0.0
    %7956 = vmatprep.subr.mxu0 0.0
    %7957 = vmatpush2.msra.mxu0 0.0
    %7958 = vmatprep.mubr.f32.mxu0 0.0
    %7959 = vmatmul.mubr.f32.gmra.mxu0 %v7883
    %v7960 = vpop.f32.mrf.mxu0
    %v7961 = vadd.f32 0.0, %v7960
    %v7962 = vpop.f32.mrf.mxu0
    %v7963 = vadd.f32 0.0, %v7962
    %7964 = vmatprep.mubr.f32.mxu0 0.0
    %7965 = vmatmul.mubr.f32.gmra.mxu0 %v7886
    %v7966 = vpop.f32.mrf.mxu0
    %v7967 = vadd.f32 0.0, %v7966
    %v7968 = vpop.f32.mrf.mxu0
    %v7969 = vadd.f32 0.0, %v7968
    %7970 = vdwg.mxu0
    %7971 = vmatprep.subr.mxu0 0.0
    %7972 = vmatpush1.msra.mxu0 0.0
    %7973 = vmatprep.subr.mxu0 0.0
    %7974 = vmatpush1.msra.mxu0 0.0
    %7975 = vmatprep.subr.mxu0 0.0
    %7976 = vmatpush1.msra.mxu0 0.0
    %7977 = vmatprep.subr.mxu0 0.0
    %7978 = vmatpush1.msra.mxu0 0.0
    %7979 = vmatprep.subr.mxu0 0.0
    %7980 = vmatpush1.msra.mxu0 0.0
    %7981 = vmatprep.subr.mxu0 0.0
    %7982 = vmatpush1.msra.mxu0 0.0
    %7983 = vmatprep.subr.mxu0 0.0
    %7984 = vmatpush1.msra.mxu0 0.0
    %7985 = vmatprep.subr.mxu0 0.0
    %7986 = vmatpush1.msra.mxu0 0.0
    %7987 = vmatprep.subr.mxu0 0.0
    %7988 = vmatpush1.msra.mxu0 0.0
    %7989 = vmatprep.subr.mxu0 0.0
    %7990 = vmatpush1.msra.mxu0 0.0
    %7991 = vmatprep.subr.mxu0 0.0
    %7992 = vmatpush1.msra.mxu0 0.0
    %7993 = vmatprep.subr.mxu0 0.0
    %7994 = vmatpush1.msra.mxu0 0.0
    %7995 = vmatprep.subr.mxu0 0.0
    %7996 = vmatpush1.msra.mxu0 0.0
    %7997 = vmatprep.subr.mxu0 0.0
    %7998 = vmatpush1.msra.mxu0 %v7892
    %7999 = vmatprep.subr.mxu0 0.0
    %8000 = vmatpush1.msra.mxu0 %v7863
    %8001 = vmatprep.subr.mxu0 0.0
    %8002 = vmatpush1.msra.mxu0 %v7857
    %8003 = vmatprep.subr.mxu0 0.0
    %8004 = vmatpush2.msra.mxu0 0.0
    %8005 = vmatprep.subr.mxu0 0.0
    %8006 = vmatpush2.msra.mxu0 0.0
    %8007 = vmatprep.subr.mxu0 0.0
    %8008 = vmatpush2.msra.mxu0 0.0
    %8009 = vmatprep.subr.mxu0 0.0
    %8010 = vmatpush2.msra.mxu0 0.0
    %8011 = vmatprep.subr.mxu0 0.0
    %8012 = vmatpush2.msra.mxu0 0.0
    %8013 = vmatprep.subr.mxu0 0.0
    %8014 = vmatpush2.msra.mxu0 0.0
    %8015 = vmatprep.subr.mxu0 0.0
    %8016 = vmatpush2.msra.mxu0 0.0
    %8017 = vmatprep.subr.mxu0 0.0
    %8018 = vmatpush2.msra.mxu0 0.0
    %8019 = vmatprep.subr.mxu0 0.0
    %8020 = vmatpush2.msra.mxu0 0.0
    %8021 = vmatprep.subr.mxu0 0.0
    %8022 = vmatpush2.msra.mxu0 0.0
    %8023 = vmatprep.subr.mxu0 0.0
    %8024 = vmatpush2.msra.mxu0 0.0
    %8025 = vmatprep.subr.mxu0 0.0
    %8026 = vmatpush2.msra.mxu0 0.0
    %8027 = vmatprep.subr.mxu0 0.0
    %8028 = vmatpush2.msra.mxu0 0.0
    %8029 = vmatprep.subr.mxu0 0.0
    %8030 = vmatpush2.msra.mxu0 0.0
    %8031 = vmatprep.subr.mxu0 0.0
    %8032 = vmatpush2.msra.mxu0 0.0
    %8033 = vmatprep.subr.mxu0 0.0
    %8034 = vmatpush2.msra.mxu0 0.0
    %8035 = vmatprep.mubr.f32.mxu0 0.0
    %8036 = vmatmul.mubr.f32.gmra.mxu0 %v7883
    %v8037 = vpop.f32.mrf.mxu0
    %v8038 = vadd.f32 0.0, %v8037
    %v8039 = vpop.f32.mrf.mxu0
    %8040 = vmatprep.mubr.f32.mxu0 0.0
    %8041 = vmatmul.mubr.f32.gmra.mxu0 %v7886
    %v8042 = vpop.f32.mrf.mxu0
    %v8043 = vadd.f32 0.0, %v8042
    %v8044 = vpop.f32.mrf.mxu0
    %8045 = vdwg.mxu0
    %v8046 = vadd.f32 %v7843, %v7961
    %v8047 = vadd.f32 %v7844, %v7963
    %v8048 = vadd.f32 %v7845, %v8038
    %v8049 = vadd.f32 %v7846, %v7967
    %v8050 = vadd.f32 %v7847, %v7969
    %v8051 = vadd.f32 %v7848, %v8043
    %s8052 = scalar_lea.vmem %s5, 144
    %v8053 = vld [vmem:[%s8052] sm:$0xff]
    %v8054 = vld [vmem:[%s8052 + $0x8] sm:$0x3]
    %8055 = vrot.lane.b32.xlu0 %v6248, 78
    %v8056 = vpop.permute.xlu0 %8055
    %8057 = vrot.lane.b32.xlu0 %v6249, 78
    %v8058 = vpop.permute.xlu0 %8057
    %8059 = vrot.lane.b32.xlu0 %v6250, 78
    %v8060 = vpop.permute.xlu0 %8059
    %8061 = vrot.lane.b32.xlu0 %v6251, 78
    %v8062 = vpop.permute.xlu0 %8061
    %8063 = vrot.lane.b32.xlu0 %v6252, 78
    %v8064 = vpop.permute.xlu0 %8063
    %8065 = vrot.lane.b32.xlu0 %v6253, 78
    %v8066 = vpop.permute.xlu0 %8065
    %8067 = vrot.lane.b32.xlu0 %v6254, 78
    %v8068 = vpop.permute.xlu0 %8067
    %8069 = vrot.lane.b32.xlu0 %v6255, 78
    %v8070 = vpop.permute.xlu0 %8069
    %8071 = vrot.lane.b32.xlu0 %v6256, 78
    %v8072 = vpop.permute.xlu0 %8071
    %v8073 = vsel %vm5420, %v8056, %v8058
    %v8074 = vsel %vm5420, %v8058, %v8060
    %v8075 = vsel %vm5420, %v8062, %v8064
    %v8076 = vsel %vm5420, %v8064, %v8066
    %v8077 = vsel %vm5420, %v8068, %v8070
    %v8078 = vsel %vm5420, %v8070, %v8072
    %v8086 = vsel %vm6299, %v8053, 0
    %v8089 = vsel %vm6299, %v8054, 0
    %v8091 = vsel %vm6306, %v8077, 0
    %v8093 = vsel %vm6306, %v8078, 0
    %v8095 = vsel %vm6306, %v8072, 0
    %8097 = vmatprep.subr.mxu0 0.0
    %8098 = vmatpush1.msra.mxu0 0.0
    %8099 = vmatprep.subr.mxu0 0.0
    %8100 = vmatpush1.msra.mxu0 0.0
    %8101 = vmatprep.subr.mxu0 0.0
    %8102 = vmatpush1.msra.mxu0 0.0
    %8103 = vmatprep.subr.mxu0 0.0
    %8104 = vmatpush1.msra.mxu0 0.0
    %8105 = vmatprep.subr.mxu0 0.0
    %8106 = vmatpush1.msra.mxu0 0.0
    %8107 = vmatprep.subr.mxu0 0.0
    %8108 = vmatpush1.msra.mxu0 0.0
    %8109 = vmatprep.subr.mxu0 0.0
    %8110 = vmatpush1.msra.mxu0 0.0
    %8111 = vmatprep.subr.mxu0 0.0
    %8112 = vmatpush1.msra.mxu0 0.0
    %8113 = vmatprep.subr.mxu0 0.0
    %8114 = vmatpush1.msra.mxu0 0.0
    %8115 = vmatprep.subr.mxu0 0.0
    %8116 = vmatpush1.msra.mxu0 0.0
    %8117 = vmatprep.subr.mxu0 0.0
    %8118 = vmatpush1.msra.mxu0 0.0
    %8119 = vmatprep.subr.mxu0 0.0
    %8120 = vmatpush1.msra.mxu0 0.0
    %8121 = vmatprep.subr.mxu0 0.0
    %8122 = vmatpush1.msra.mxu0 0.0
    %8123 = vmatprep.subr.mxu0 %v8093
    %8124 = vmatpush1.msra.mxu0 %v8091
    %8125 = vmatprep.subr.mxu0 %v8076
    %8126 = vmatpush1.msra.mxu0 %v8075
    %8127 = vmatprep.subr.mxu0 %v8074
    %8128 = vmatpush1.msra.mxu0 %v8073
    %8129 = vmatprep.subr.mxu0 0.0
    %8130 = vmatpush2.msra.mxu0 0.0
    %8131 = vmatprep.subr.mxu0 0.0
    %8132 = vmatpush2.msra.mxu0 0.0
    %8133 = vmatprep.subr.mxu0 0.0
    %8134 = vmatpush2.msra.mxu0 0.0
    %8135 = vmatprep.subr.mxu0 0.0
    %8136 = vmatpush2.msra.mxu0 0.0
    %8137 = vmatprep.subr.mxu0 0.0
    %8138 = vmatpush2.msra.mxu0 0.0
    %8139 = vmatprep.subr.mxu0 0.0
    %8140 = vmatpush2.msra.mxu0 0.0
    %8141 = vmatprep.subr.mxu0 0.0
    %8142 = vmatpush2.msra.mxu0 0.0
    %8143 = vmatprep.subr.mxu0 0.0
    %8144 = vmatpush2.msra.mxu0 0.0
    %8145 = vmatprep.subr.mxu0 0.0
    %8146 = vmatpush2.msra.mxu0 0.0
    %8147 = vmatprep.subr.mxu0 0.0
    %8148 = vmatpush2.msra.mxu0 0.0
    %8149 = vmatprep.subr.mxu0 0.0
    %8150 = vmatpush2.msra.mxu0 0.0
    %8151 = vmatprep.subr.mxu0 0.0
    %8152 = vmatpush2.msra.mxu0 0.0
    %8153 = vmatprep.subr.mxu0 0.0
    %8154 = vmatpush2.msra.mxu0 0.0
    %8155 = vmatprep.subr.mxu0 0.0
    %8156 = vmatpush2.msra.mxu0 0.0
    %8157 = vmatprep.subr.mxu0 0.0
    %8158 = vmatpush2.msra.mxu0 0.0
    %8159 = vmatprep.subr.mxu0 0.0
    %8160 = vmatpush2.msra.mxu0 0.0
    %8161 = vmatprep.mubr.f32.mxu0 0.0
    %8162 = vmatmul.mubr.f32.gmra.mxu0 %v8086
    %v8163 = vpop.f32.mrf.mxu0
    %v8164 = vadd.f32 0.0, %v8163
    %v8165 = vpop.f32.mrf.mxu0
    %v8166 = vadd.f32 0.0, %v8165
    %8167 = vmatprep.mubr.f32.mxu0 0.0
    %8168 = vmatmul.mubr.f32.gmra.mxu0 %v8089
    %v8169 = vpop.f32.mrf.mxu0
    %v8170 = vadd.f32 0.0, %v8169
    %v8171 = vpop.f32.mrf.mxu0
    %v8172 = vadd.f32 0.0, %v8171
    %8173 = vdwg.mxu0
    %8174 = vmatprep.subr.mxu0 0.0
    %8175 = vmatpush1.msra.mxu0 0.0
    %8176 = vmatprep.subr.mxu0 0.0
    %8177 = vmatpush1.msra.mxu0 0.0
    %8178 = vmatprep.subr.mxu0 0.0
    %8179 = vmatpush1.msra.mxu0 0.0
    %8180 = vmatprep.subr.mxu0 0.0
    %8181 = vmatpush1.msra.mxu0 0.0
    %8182 = vmatprep.subr.mxu0 0.0
    %8183 = vmatpush1.msra.mxu0 0.0
    %8184 = vmatprep.subr.mxu0 0.0
    %8185 = vmatpush1.msra.mxu0 0.0
    %8186 = vmatprep.subr.mxu0 0.0
    %8187 = vmatpush1.msra.mxu0 0.0
    %8188 = vmatprep.subr.mxu0 0.0
    %8189 = vmatpush1.msra.mxu0 0.0
    %8190 = vmatprep.subr.mxu0 0.0
    %8191 = vmatpush1.msra.mxu0 0.0
    %8192 = vmatprep.subr.mxu0 0.0
    %8193 = vmatpush1.msra.mxu0 0.0
    %8194 = vmatprep.subr.mxu0 0.0
    %8195 = vmatpush1.msra.mxu0 0.0
    %8196 = vmatprep.subr.mxu0 0.0
    %8197 = vmatpush1.msra.mxu0 0.0
    %8198 = vmatprep.subr.mxu0 0.0
    %8199 = vmatpush1.msra.mxu0 0.0
    %8200 = vmatprep.subr.mxu0 0.0
    %8201 = vmatpush1.msra.mxu0 %v8095
    %8202 = vmatprep.subr.mxu0 0.0
    %8203 = vmatpush1.msra.mxu0 %v8066
    %8204 = vmatprep.subr.mxu0 0.0
    %8205 = vmatpush1.msra.mxu0 %v8060
    %8206 = vmatprep.subr.mxu0 0.0
    %8207 = vmatpush2.msra.mxu0 0.0
    %8208 = vmatprep.subr.mxu0 0.0
    %8209 = vmatpush2.msra.mxu0 0.0
    %8210 = vmatprep.subr.mxu0 0.0
    %8211 = vmatpush2.msra.mxu0 0.0
    %8212 = vmatprep.subr.mxu0 0.0
    %8213 = vmatpush2.msra.mxu0 0.0
    %8214 = vmatprep.subr.mxu0 0.0
    %8215 = vmatpush2.msra.mxu0 0.0
    %8216 = vmatprep.subr.mxu0 0.0
    %8217 = vmatpush2.msra.mxu0 0.0
    %8218 = vmatprep.subr.mxu0 0.0
    %8219 = vmatpush2.msra.mxu0 0.0
    %8220 = vmatprep.subr.mxu0 0.0
    %8221 = vmatpush2.msra.mxu0 0.0
    %8222 = vmatprep.subr.mxu0 0.0
    %8223 = vmatpush2.msra.mxu0 0.0
    %8224 = vmatprep.subr.mxu0 0.0
    %8225 = vmatpush2.msra.mxu0 0.0
    %8226 = vmatprep.subr.mxu0 0.0
    %8227 = vmatpush2.msra.mxu0 0.0
    %8228 = vmatprep.subr.mxu0 0.0
    %8229 = vmatpush2.msra.mxu0 0.0
    %8230 = vmatprep.subr.mxu0 0.0
    %8231 = vmatpush2.msra.mxu0 0.0
    %8232 = vmatprep.subr.mxu0 0.0
    %8233 = vmatpush2.msra.mxu0 0.0
    %8234 = vmatprep.subr.mxu0 0.0
    %8235 = vmatpush2.msra.mxu0 0.0
    %8236 = vmatprep.subr.mxu0 0.0
    %8237 = vmatpush2.msra.mxu0 0.0
    %8238 = vmatprep.mubr.f32.mxu0 0.0
    %8239 = vmatmul.mubr.f32.gmra.mxu0 %v8086
    %v8240 = vpop.f32.mrf.mxu0
    %v8241 = vadd.f32 0.0, %v8240
    %v8242 = vpop.f32.mrf.mxu0
    %8243 = vmatprep.mubr.f32.mxu0 0.0
    %8244 = vmatmul.mubr.f32.gmra.mxu0 %v8089
    %v8245 = vpop.f32.mrf.mxu0
    %v8246 = vadd.f32 0.0, %v8245
    %v8247 = vpop.f32.mrf.mxu0
    %8248 = vdwg.mxu0
    %v8249 = vadd.f32 %v8046, %v8164
    %v8250 = vadd.f32 %v8047, %v8166
    %v8251 = vadd.f32 %v8048, %v8241
    %v8252 = vadd.f32 %v8049, %v8170
    %v8253 = vadd.f32 %v8050, %v8172
    %v8254 = vadd.f32 %v8051, %v8246
    %s8255 = scalar_lea.vmem %s5, 160
    %v8256 = vld [vmem:[%s8255] sm:$0xff]
    %v8257 = vld [vmem:[%s8255 + $0x8] sm:$0x3]
    %8258 = vrot.lane.b32.xlu0 %v6248, 76
    %v8259 = vpop.permute.xlu0 %8258
    %8260 = vrot.lane.b32.xlu0 %v6249, 76
    %v8261 = vpop.permute.xlu0 %8260
    %8262 = vrot.lane.b32.xlu0 %v6250, 76
    %v8263 = vpop.permute.xlu0 %8262
    %8264 = vrot.lane.b32.xlu0 %v6251, 76
    %v8265 = vpop.permute.xlu0 %8264
    %8266 = vrot.lane.b32.xlu0 %v6252, 76
    %v8267 = vpop.permute.xlu0 %8266
    %8268 = vrot.lane.b32.xlu0 %v6253, 76
    %v8269 = vpop.permute.xlu0 %8268
    %8270 = vrot.lane.b32.xlu0 %v6254, 76
    %v8271 = vpop.permute.xlu0 %8270
    %8272 = vrot.lane.b32.xlu0 %v6255, 76
    %v8273 = vpop.permute.xlu0 %8272
    %8274 = vrot.lane.b32.xlu0 %v6256, 76
    %v8275 = vpop.permute.xlu0 %8274
    %v8276 = vsel %vm5842, %v8259, %v8261
    %v8277 = vsel %vm5842, %v8261, %v8263
    %v8278 = vsel %vm5842, %v8265, %v8267
    %v8279 = vsel %vm5842, %v8267, %v8269
    %v8280 = vsel %vm5842, %v8271, %v8273
    %v8281 = vsel %vm5842, %v8273, %v8275
    %v8289 = vsel %vm6299, %v8256, 0
    %v8292 = vsel %vm6299, %v8257, 0
    %v8294 = vsel %vm6306, %v8280, 0
    %v8296 = vsel %vm6306, %v8281, 0
    %v8298 = vsel %vm6306, %v8275, 0
    %8300 = vmatprep.subr.mxu0 0.0
    %8301 = vmatpush1.msra.mxu0 0.0
    %8302 = vmatprep.subr.mxu0 0.0
    %8303 = vmatpush1.msra.mxu0 0.0
    %8304 = vmatprep.subr.mxu0 0.0
    %8305 = vmatpush1.msra.mxu0 0.0
    %8306 = vmatprep.subr.mxu0 0.0
    %8307 = vmatpush1.msra.mxu0 0.0
    %8308 = vmatprep.subr.mxu0 0.0
    %8309 = vmatpush1.msra.mxu0 0.0
    %8310 = vmatprep.subr.mxu0 0.0
    %8311 = vmatpush1.msra.mxu0 0.0
    %8312 = vmatprep.subr.mxu0 0.0
    %8313 = vmatpush1.msra.mxu0 0.0
    %8314 = vmatprep.subr.mxu0 0.0
    %8315 = vmatpush1.msra.mxu0 0.0
    %8316 = vmatprep.subr.mxu0 0.0
    %8317 = vmatpush1.msra.mxu0 0.0
    %8318 = vmatprep.subr.mxu0 0.0
    %8319 = vmatpush1.msra.mxu0 0.0
    %8320 = vmatprep.subr.mxu0 0.0
    %8321 = vmatpush1.msra.mxu0 0.0
    %8322 = vmatprep.subr.mxu0 0.0
    %8323 = vmatpush1.msra.mxu0 0.0
    %8324 = vmatprep.subr.mxu0 0.0
    %8325 = vmatpush1.msra.mxu0 0.0
    %8326 = vmatprep.subr.mxu0 %v8296
    %8327 = vmatpush1.msra.mxu0 %v8294
    %8328 = vmatprep.subr.mxu0 %v8279
    %8329 = vmatpush1.msra.mxu0 %v8278
    %8330 = vmatprep.subr.mxu0 %v8277
    %8331 = vmatpush1.msra.mxu0 %v8276
    %8332 = vmatprep.subr.mxu0 0.0
    %8333 = vmatpush2.msra.mxu0 0.0
    %8334 = vmatprep.subr.mxu0 0.0
    %8335 = vmatpush2.msra.mxu0 0.0
    %8336 = vmatprep.subr.mxu0 0.0
    %8337 = vmatpush2.msra.mxu0 0.0
    %8338 = vmatprep.subr.mxu0 0.0
    %8339 = vmatpush2.msra.mxu0 0.0
    %8340 = vmatprep.subr.mxu0 0.0
    %8341 = vmatpush2.msra.mxu0 0.0
    %8342 = vmatprep.subr.mxu0 0.0
    %8343 = vmatpush2.msra.mxu0 0.0
    %8344 = vmatprep.subr.mxu0 0.0
    %8345 = vmatpush2.msra.mxu0 0.0
    %8346 = vmatprep.subr.mxu0 0.0
    %8347 = vmatpush2.msra.mxu0 0.0
    %8348 = vmatprep.subr.mxu0 0.0
    %8349 = vmatpush2.msra.mxu0 0.0
    %8350 = vmatprep.subr.mxu0 0.0
    %8351 = vmatpush2.msra.mxu0 0.0
    %8352 = vmatprep.subr.mxu0 0.0
    %8353 = vmatpush2.msra.mxu0 0.0
    %8354 = vmatprep.subr.mxu0 0.0
    %8355 = vmatpush2.msra.mxu0 0.0
    %8356 = vmatprep.subr.mxu0 0.0
    %8357 = vmatpush2.msra.mxu0 0.0
    %8358 = vmatprep.subr.mxu0 0.0
    %8359 = vmatpush2.msra.mxu0 0.0
    %8360 = vmatprep.subr.mxu0 0.0
    %8361 = vmatpush2.msra.mxu0 0.0
    %8362 = vmatprep.subr.mxu0 0.0
    %8363 = vmatpush2.msra.mxu0 0.0
    %8364 = vmatprep.mubr.f32.mxu0 0.0
    %8365 = vmatmul.mubr.f32.gmra.mxu0 %v8289
    %v8366 = vpop.f32.mrf.mxu0
    %v8367 = vadd.f32 0.0, %v8366
    %v8368 = vpop.f32.mrf.mxu0
    %v8369 = vadd.f32 0.0, %v8368
    %8370 = vmatprep.mubr.f32.mxu0 0.0
    %8371 = vmatmul.mubr.f32.gmra.mxu0 %v8292
    %v8372 = vpop.f32.mrf.mxu0
    %v8373 = vadd.f32 0.0, %v8372
    %v8374 = vpop.f32.mrf.mxu0
    %v8375 = vadd.f32 0.0, %v8374
    %8376 = vdwg.mxu0
    %8377 = vmatprep.subr.mxu0 0.0
    %8378 = vmatpush1.msra.mxu0 0.0
    %8379 = vmatprep.subr.mxu0 0.0
    %8380 = vmatpush1.msra.mxu0 0.0
    %8381 = vmatprep.subr.mxu0 0.0
    %8382 = vmatpush1.msra.mxu0 0.0
    %8383 = vmatprep.subr.mxu0 0.0
    %8384 = vmatpush1.msra.mxu0 0.0
    %8385 = vmatprep.subr.mxu0 0.0
    %8386 = vmatpush1.msra.mxu0 0.0
    %8387 = vmatprep.subr.mxu0 0.0
    %8388 = vmatpush1.msra.mxu0 0.0
    %8389 = vmatprep.subr.mxu0 0.0
    %8390 = vmatpush1.msra.mxu0 0.0
    %8391 = vmatprep.subr.mxu0 0.0
    %8392 = vmatpush1.msra.mxu0 0.0
    %8393 = vmatprep.subr.mxu0 0.0
    %8394 = vmatpush1.msra.mxu0 0.0
    %8395 = vmatprep.subr.mxu0 0.0
    %8396 = vmatpush1.msra.mxu0 0.0
    %8397 = vmatprep.subr.mxu0 0.0
    %8398 = vmatpush1.msra.mxu0 0.0
    %8399 = vmatprep.subr.mxu0 0.0
    %8400 = vmatpush1.msra.mxu0 0.0
    %8401 = vmatprep.subr.mxu0 0.0
    %8402 = vmatpush1.msra.mxu0 0.0
    %8403 = vmatprep.subr.mxu0 0.0
    %8404 = vmatpush1.msra.mxu0 %v8298
    %8405 = vmatprep.subr.mxu0 0.0
    %8406 = vmatpush1.msra.mxu0 %v8269
    %8407 = vmatprep.subr.mxu0 0.0
    %8408 = vmatpush1.msra.mxu0 %v8263
    %8409 = vmatprep.subr.mxu0 0.0
    %8410 = vmatpush2.msra.mxu0 0.0
    %8411 = vmatprep.subr.mxu0 0.0
    %8412 = vmatpush2.msra.mxu0 0.0
    %8413 = vmatprep.subr.mxu0 0.0
    %8414 = vmatpush2.msra.mxu0 0.0
    %8415 = vmatprep.subr.mxu0 0.0
    %8416 = vmatpush2.msra.mxu0 0.0
    %8417 = vmatprep.subr.mxu0 0.0
    %8418 = vmatpush2.msra.mxu0 0.0
    %8419 = vmatprep.subr.mxu0 0.0
    %8420 = vmatpush2.msra.mxu0 0.0
    %8421 = vmatprep.subr.mxu0 0.0
    %8422 = vmatpush2.msra.mxu0 0.0
    %8423 = vmatprep.subr.mxu0 0.0
    %8424 = vmatpush2.msra.mxu0 0.0
    %8425 = vmatprep.subr.mxu0 0.0
    %8426 = vmatpush2.msra.mxu0 0.0
    %8427 = vmatprep.subr.mxu0 0.0
    %8428 = vmatpush2.msra.mxu0 0.0
    %8429 = vmatprep.subr.mxu0 0.0
    %8430 = vmatpush2.msra.mxu0 0.0
    %8431 = vmatprep.subr.mxu0 0.0
    %8432 = vmatpush2.msra.mxu0 0.0
    %8433 = vmatprep.subr.mxu0 0.0
    %8434 = vmatpush2.msra.mxu0 0.0
    %8435 = vmatprep.subr.mxu0 0.0
    %8436 = vmatpush2.msra.mxu0 0.0
    %8437 = vmatprep.subr.mxu0 0.0
    %8438 = vmatpush2.msra.mxu0 0.0
    %8439 = vmatprep.subr.mxu0 0.0
    %8440 = vmatpush2.msra.mxu0 0.0
    %8441 = vmatprep.mubr.f32.mxu0 0.0
    %8442 = vmatmul.mubr.f32.gmra.mxu0 %v8289
    %v8443 = vpop.f32.mrf.mxu0
    %v8444 = vadd.f32 0.0, %v8443
    %v8445 = vpop.f32.mrf.mxu0
    %8446 = vmatprep.mubr.f32.mxu0 0.0
    %8447 = vmatmul.mubr.f32.gmra.mxu0 %v8292
    %v8448 = vpop.f32.mrf.mxu0
    %v8449 = vadd.f32 0.0, %v8448
    %v8450 = vpop.f32.mrf.mxu0
    %8451 = vdwg.mxu0
    %v8452 = vadd.f32 %v8249, %v8367
    %v8453 = vadd.f32 %v8250, %v8369
    %v8454 = vadd.f32 %v8251, %v8444
    %v8455 = vadd.f32 %v8252, %v8373
    %v8456 = vadd.f32 %v8253, %v8375
    %v8457 = vadd.f32 %v8254, %v8449
    %s8458 = scalar_lea.vmem %s5, 176
    %v8459 = vld [vmem:[%s8458] sm:$0xff]
    %v8460 = vld [vmem:[%s8458 + $0x8] sm:$0x3]
    %8461 = vrot.lane.b32.xlu0 %v6248, 74
    %v8462 = vpop.permute.xlu0 %8461
    %8463 = vrot.lane.b32.xlu0 %v6249, 74
    %v8464 = vpop.permute.xlu0 %8463
    %8465 = vrot.lane.b32.xlu0 %v6250, 74
    %v8466 = vpop.permute.xlu0 %8465
    %8467 = vrot.lane.b32.xlu0 %v6251, 74
    %v8468 = vpop.permute.xlu0 %8467
    %8469 = vrot.lane.b32.xlu0 %v6252, 74
    %v8470 = vpop.permute.xlu0 %8469
    %8471 = vrot.lane.b32.xlu0 %v6253, 74
    %v8472 = vpop.permute.xlu0 %8471
    %8473 = vrot.lane.b32.xlu0 %v6254, 74
    %v8474 = vpop.permute.xlu0 %8473
    %8475 = vrot.lane.b32.xlu0 %v6255, 74
    %v8476 = vpop.permute.xlu0 %8475
    %8477 = vrot.lane.b32.xlu0 %v6256, 74
    %v8478 = vpop.permute.xlu0 %8477
    %vm8479 = vcmask 605184
    %v8480 = vsel %vm8479, %v8462, %v8464
    %v8481 = vsel %vm8479, %v8464, %v8466
    %v8482 = vsel %vm8479, %v8468, %v8470
    %v8483 = vsel %vm8479, %v8470, %v8472
    %v8484 = vsel %vm8479, %v8474, %v8476
    %v8485 = vsel %vm8479, %v8476, %v8478
    %v8493 = vsel %vm6299, %v8459, 0
    %v8496 = vsel %vm6299, %v8460, 0
    %v8498 = vsel %vm6306, %v8484, 0
    %v8500 = vsel %vm6306, %v8485, 0
    %v8502 = vsel %vm6306, %v8478, 0
    %8504 = vmatprep.subr.mxu0 0.0
    %8505 = vmatpush1.msra.mxu0 0.0
    %8506 = vmatprep.subr.mxu0 0.0
    %8507 = vmatpush1.msra.mxu0 0.0
    %8508 = vmatprep.subr.mxu0 0.0
    %8509 = vmatpush1.msra.mxu0 0.0
    %8510 = vmatprep.subr.mxu0 0.0
    %8511 = vmatpush1.msra.mxu0 0.0
    %8512 = vmatprep.subr.mxu0 0.0
    %8513 = vmatpush1.msra.mxu0 0.0
    %8514 = vmatprep.subr.mxu0 0.0
    %8515 = vmatpush1.msra.mxu0 0.0
    %8516 = vmatprep.subr.mxu0 0.0
    %8517 = vmatpush1.msra.mxu0 0.0
    %8518 = vmatprep.subr.mxu0 0.0
    %8519 = vmatpush1.msra.mxu0 0.0
    %8520 = vmatprep.subr.mxu0 0.0
    %8521 = vmatpush1.msra.mxu0 0.0
    %8522 = vmatprep.subr.mxu0 0.0
    %8523 = vmatpush1.msra.mxu0 0.0
    %8524 = vmatprep.subr.mxu0 0.0
    %8525 = vmatpush1.msra.mxu0 0.0
    %8526 = vmatprep.subr.mxu0 0.0
    %8527 = vmatpush1.msra.mxu0 0.0
    %8528 = vmatprep.subr.mxu0 0.0
    %8529 = vmatpush1.msra.mxu0 0.0
    %8530 = vmatprep.subr.mxu0 %v8500
    %8531 = vmatpush1.msra.mxu0 %v8498
    %8532 = vmatprep.subr.mxu0 %v8483
    %8533 = vmatpush1.msra.mxu0 %v8482
    %8534 = vmatprep.subr.mxu0 %v8481
    %8535 = vmatpush1.msra.mxu0 %v8480
    %8536 = vmatprep.subr.mxu0 0.0
    %8537 = vmatpush2.msra.mxu0 0.0
    %8538 = vmatprep.subr.mxu0 0.0
    %8539 = vmatpush2.msra.mxu0 0.0
    %8540 = vmatprep.subr.mxu0 0.0
    %8541 = vmatpush2.msra.mxu0 0.0
    %8542 = vmatprep.subr.mxu0 0.0
    %8543 = vmatpush2.msra.mxu0 0.0
    %8544 = vmatprep.subr.mxu0 0.0
    %8545 = vmatpush2.msra.mxu0 0.0
    %8546 = vmatprep.subr.mxu0 0.0
    %8547 = vmatpush2.msra.mxu0 0.0
    %8548 = vmatprep.subr.mxu0 0.0
    %8549 = vmatpush2.msra.mxu0 0.0
    %8550 = vmatprep.subr.mxu0 0.0
    %8551 = vmatpush2.msra.mxu0 0.0
    %8552 = vmatprep.subr.mxu0 0.0
    %8553 = vmatpush2.msra.mxu0 0.0
    %8554 = vmatprep.subr.mxu0 0.0
    %8555 = vmatpush2.msra.mxu0 0.0
    %8556 = vmatprep.subr.mxu0 0.0
    %8557 = vmatpush2.msra.mxu0 0.0
    %8558 = vmatprep.subr.mxu0 0.0
    %8559 = vmatpush2.msra.mxu0 0.0
    %8560 = vmatprep.subr.mxu0 0.0
    %8561 = vmatpush2.msra.mxu0 0.0
    %8562 = vmatprep.subr.mxu0 0.0
    %8563 = vmatpush2.msra.mxu0 0.0
    %8564 = vmatprep.subr.mxu0 0.0
    %8565 = vmatpush2.msra.mxu0 0.0
    %8566 = vmatprep.subr.mxu0 0.0
    %8567 = vmatpush2.msra.mxu0 0.0
    %8568 = vmatprep.mubr.f32.mxu0 0.0
    %8569 = vmatmul.mubr.f32.gmra.mxu0 %v8493
    %v8570 = vpop.f32.mrf.mxu0
    %v8571 = vadd.f32 0.0, %v8570
    %v8572 = vpop.f32.mrf.mxu0
    %v8573 = vadd.f32 0.0, %v8572
    %8574 = vmatprep.mubr.f32.mxu0 0.0
    %8575 = vmatmul.mubr.f32.gmra.mxu0 %v8496
    %v8576 = vpop.f32.mrf.mxu0
    %v8577 = vadd.f32 0.0, %v8576
    %v8578 = vpop.f32.mrf.mxu0
    %v8579 = vadd.f32 0.0, %v8578
    %8580 = vdwg.mxu0
    %8581 = vmatprep.subr.mxu0 0.0
    %8582 = vmatpush1.msra.mxu0 0.0
    %8583 = vmatprep.subr.mxu0 0.0
    %8584 = vmatpush1.msra.mxu0 0.0
    %8585 = vmatprep.subr.mxu0 0.0
    %8586 = vmatpush1.msra.mxu0 0.0
    %8587 = vmatprep.subr.mxu0 0.0
    %8588 = vmatpush1.msra.mxu0 0.0
    %8589 = vmatprep.subr.mxu0 0.0
    %8590 = vmatpush1.msra.mxu0 0.0
    %8591 = vmatprep.subr.mxu0 0.0
    %8592 = vmatpush1.msra.mxu0 0.0
    %8593 = vmatprep.subr.mxu0 0.0
    %8594 = vmatpush1.msra.mxu0 0.0
    %8595 = vmatprep.subr.mxu0 0.0
    %8596 = vmatpush1.msra.mxu0 0.0
    %8597 = vmatprep.subr.mxu0 0.0
    %8598 = vmatpush1.msra.mxu0 0.0
    %8599 = vmatprep.subr.mxu0 0.0
    %8600 = vmatpush1.msra.mxu0 0.0
    %8601 = vmatprep.subr.mxu0 0.0
    %8602 = vmatpush1.msra.mxu0 0.0
    %8603 = vmatprep.subr.mxu0 0.0
    %8604 = vmatpush1.msra.mxu0 0.0
    %8605 = vmatprep.subr.mxu0 0.0
    %8606 = vmatpush1.msra.mxu0 0.0
    %8607 = vmatprep.subr.mxu0 0.0
    %8608 = vmatpush1.msra.mxu0 %v8502
    %8609 = vmatprep.subr.mxu0 0.0
    %8610 = vmatpush1.msra.mxu0 %v8472
    %8611 = vmatprep.subr.mxu0 0.0
    %8612 = vmatpush1.msra.mxu0 %v8466
    %8613 = vmatprep.subr.mxu0 0.0
    %8614 = vmatpush2.msra.mxu0 0.0
    %8615 = vmatprep.subr.mxu0 0.0
    %8616 = vmatpush2.msra.mxu0 0.0
    %8617 = vmatprep.subr.mxu0 0.0
    %8618 = vmatpush2.msra.mxu0 0.0
    %8619 = vmatprep.subr.mxu0 0.0
    %8620 = vmatpush2.msra.mxu0 0.0
    %8621 = vmatprep.subr.mxu0 0.0
    %8622 = vmatpush2.msra.mxu0 0.0
    %8623 = vmatprep.subr.mxu0 0.0
    %8624 = vmatpush2.msra.mxu0 0.0
    %8625 = vmatprep.subr.mxu0 0.0
    %8626 = vmatpush2.msra.mxu0 0.0
    %8627 = vmatprep.subr.mxu0 0.0
    %8628 = vmatpush2.msra.mxu0 0.0
    %8629 = vmatprep.subr.mxu0 0.0
    %8630 = vmatpush2.msra.mxu0 0.0
    %8631 = vmatprep.subr.mxu0 0.0
    %8632 = vmatpush2.msra.mxu0 0.0
    %8633 = vmatprep.subr.mxu0 0.0
    %8634 = vmatpush2.msra.mxu0 0.0
    %8635 = vmatprep.subr.mxu0 0.0
    %8636 = vmatpush2.msra.mxu0 0.0
    %8637 = vmatprep.subr.mxu0 0.0
    %8638 = vmatpush2.msra.mxu0 0.0
    %8639 = vmatprep.subr.mxu0 0.0
    %8640 = vmatpush2.msra.mxu0 0.0
    %8641 = vmatprep.subr.mxu0 0.0
    %8642 = vmatpush2.msra.mxu0 0.0
    %8643 = vmatprep.subr.mxu0 0.0
    %8644 = vmatpush2.msra.mxu0 0.0
    %8645 = vmatprep.mubr.f32.mxu0 0.0
    %8646 = vmatmul.mubr.f32.gmra.mxu0 %v8493
    %v8647 = vpop.f32.mrf.mxu0
    %v8648 = vadd.f32 0.0, %v8647
    %v8649 = vpop.f32.mrf.mxu0
    %8650 = vmatprep.mubr.f32.mxu0 0.0
    %8651 = vmatmul.mubr.f32.gmra.mxu0 %v8496
    %v8652 = vpop.f32.mrf.mxu0
    %v8653 = vadd.f32 0.0, %v8652
    %v8654 = vpop.f32.mrf.mxu0
    %8655 = vdwg.mxu0
    %v8656 = vadd.f32 %v8452, %v8571
    %v8657 = vadd.f32 %v8453, %v8573
    %v8658 = vadd.f32 %v8454, %v8648
    %v8659 = vadd.f32 %v8455, %v8577
    %v8660 = vadd.f32 %v8456, %v8579
    %v8661 = vadd.f32 %v8457, %v8653
    %s8662 = scalar_lea.vmem %s5, 192
    %v8663 = vld [vmem:[%s8662] sm:$0xff]
    %v8664 = vld [vmem:[%s8662 + $0x8] sm:$0x3]
    %8665 = vrot.lane.b32.xlu0 %v6248, 56
    %v8666 = vpop.permute.xlu0 %8665
    %8667 = vrot.lane.b32.xlu0 %v6249, 56
    %v8668 = vpop.permute.xlu0 %8667
    %8669 = vrot.lane.b32.xlu0 %v6250, 56
    %v8670 = vpop.permute.xlu0 %8669
    %8671 = vrot.lane.b32.xlu0 %v6251, 56
    %v8672 = vpop.permute.xlu0 %8671
    %8673 = vrot.lane.b32.xlu0 %v6252, 56
    %v8674 = vpop.permute.xlu0 %8673
    %8675 = vrot.lane.b32.xlu0 %v6253, 56
    %v8676 = vpop.permute.xlu0 %8675
    %8677 = vrot.lane.b32.xlu0 %v6254, 56
    %v8678 = vpop.permute.xlu0 %8677
    %8679 = vrot.lane.b32.xlu0 %v6255, 56
    %v8680 = vpop.permute.xlu0 %8679
    %8681 = vrot.lane.b32.xlu0 %v6256, 56
    %v8682 = vpop.permute.xlu0 %8681
    %vm8683 = vcmask 457728
    %v8684 = vsel %vm8683, %v8666, %v8668
    %v8685 = vsel %vm8683, %v8668, %v8670
    %v8686 = vsel %vm8683, %v8672, %v8674
    %v8687 = vsel %vm8683, %v8674, %v8676
    %v8688 = vsel %vm8683, %v8678, %v8680
    %v8689 = vsel %vm8683, %v8680, %v8682
    %v8697 = vsel %vm6299, %v8663, 0
    %v8700 = vsel %vm6299, %v8664, 0
    %v8702 = vsel %vm6306, %v8688, 0
    %v8704 = vsel %vm6306, %v8689, 0
    %v8706 = vsel %vm6306, %v8682, 0
    %8708 = vmatprep.subr.mxu0 0.0
    %8709 = vmatpush1.msra.mxu0 0.0
    %8710 = vmatprep.subr.mxu0 0.0
    %8711 = vmatpush1.msra.mxu0 0.0
    %8712 = vmatprep.subr.mxu0 0.0
    %8713 = vmatpush1.msra.mxu0 0.0
    %8714 = vmatprep.subr.mxu0 0.0
    %8715 = vmatpush1.msra.mxu0 0.0
    %8716 = vmatprep.subr.mxu0 0.0
    %8717 = vmatpush1.msra.mxu0 0.0
    %8718 = vmatprep.subr.mxu0 0.0
    %8719 = vmatpush1.msra.mxu0 0.0
    %8720 = vmatprep.subr.mxu0 0.0
    %8721 = vmatpush1.msra.mxu0 0.0
    %8722 = vmatprep.subr.mxu0 0.0
    %8723 = vmatpush1.msra.mxu0 0.0
    %8724 = vmatprep.subr.mxu0 0.0
    %8725 = vmatpush1.msra.mxu0 0.0
    %8726 = vmatprep.subr.mxu0 0.0
    %8727 = vmatpush1.msra.mxu0 0.0
    %8728 = vmatprep.subr.mxu0 0.0
    %8729 = vmatpush1.msra.mxu0 0.0
    %8730 = vmatprep.subr.mxu0 0.0
    %8731 = vmatpush1.msra.mxu0 0.0
    %8732 = vmatprep.subr.mxu0 0.0
    %8733 = vmatpush1.msra.mxu0 0.0
    %8734 = vmatprep.subr.mxu0 %v8704
    %8735 = vmatpush1.msra.mxu0 %v8702
    %8736 = vmatprep.subr.mxu0 %v8687
    %8737 = vmatpush1.msra.mxu0 %v8686
    %8738 = vmatprep.subr.mxu0 %v8685
    %8739 = vmatpush1.msra.mxu0 %v8684
    %8740 = vmatprep.subr.mxu0 0.0
    %8741 = vmatpush2.msra.mxu0 0.0
    %8742 = vmatprep.subr.mxu0 0.0
    %8743 = vmatpush2.msra.mxu0 0.0
    %8744 = vmatprep.subr.mxu0 0.0
    %8745 = vmatpush2.msra.mxu0 0.0
    %8746 = vmatprep.subr.mxu0 0.0
    %8747 = vmatpush2.msra.mxu0 0.0
    %8748 = vmatprep.subr.mxu0 0.0
    %8749 = vmatpush2.msra.mxu0 0.0
    %8750 = vmatprep.subr.mxu0 0.0
    %8751 = vmatpush2.msra.mxu0 0.0
    %8752 = vmatprep.subr.mxu0 0.0
    %8753 = vmatpush2.msra.mxu0 0.0
    %8754 = vmatprep.subr.mxu0 0.0
    %8755 = vmatpush2.msra.mxu0 0.0
    %8756 = vmatprep.subr.mxu0 0.0
    %8757 = vmatpush2.msra.mxu0 0.0
    %8758 = vmatprep.subr.mxu0 0.0
    %8759 = vmatpush2.msra.mxu0 0.0
    %8760 = vmatprep.subr.mxu0 0.0
    %8761 = vmatpush2.msra.mxu0 0.0
    %8762 = vmatprep.subr.mxu0 0.0
    %8763 = vmatpush2.msra.mxu0 0.0
    %8764 = vmatprep.subr.mxu0 0.0
    %8765 = vmatpush2.msra.mxu0 0.0
    %8766 = vmatprep.subr.mxu0 0.0
    %8767 = vmatpush2.msra.mxu0 0.0
    %8768 = vmatprep.subr.mxu0 0.0
    %8769 = vmatpush2.msra.mxu0 0.0
    %8770 = vmatprep.subr.mxu0 0.0
    %8771 = vmatpush2.msra.mxu0 0.0
    %8772 = vmatprep.mubr.f32.mxu0 0.0
    %8773 = vmatmul.mubr.f32.gmra.mxu0 %v8697
    %v8774 = vpop.f32.mrf.mxu0
    %v8775 = vadd.f32 0.0, %v8774
    %v8776 = vpop.f32.mrf.mxu0
    %v8777 = vadd.f32 0.0, %v8776
    %8778 = vmatprep.mubr.f32.mxu0 0.0
    %8779 = vmatmul.mubr.f32.gmra.mxu0 %v8700
    %v8780 = vpop.f32.mrf.mxu0
    %v8781 = vadd.f32 0.0, %v8780
    %v8782 = vpop.f32.mrf.mxu0
    %v8783 = vadd.f32 0.0, %v8782
    %8784 = vdwg.mxu0
    %8785 = vmatprep.subr.mxu0 0.0
    %8786 = vmatpush1.msra.mxu0 0.0
    %8787 = vmatprep.subr.mxu0 0.0
    %8788 = vmatpush1.msra.mxu0 0.0
    %8789 = vmatprep.subr.mxu0 0.0
    %8790 = vmatpush1.msra.mxu0 0.0
    %8791 = vmatprep.subr.mxu0 0.0
    %8792 = vmatpush1.msra.mxu0 0.0
    %8793 = vmatprep.subr.mxu0 0.0
    %8794 = vmatpush1.msra.mxu0 0.0
    %8795 = vmatprep.subr.mxu0 0.0
    %8796 = vmatpush1.msra.mxu0 0.0
    %8797 = vmatprep.subr.mxu0 0.0
    %8798 = vmatpush1.msra.mxu0 0.0
    %8799 = vmatprep.subr.mxu0 0.0
    %8800 = vmatpush1.msra.mxu0 0.0
    %8801 = vmatprep.subr.mxu0 0.0
    %8802 = vmatpush1.msra.mxu0 0.0
    %8803 = vmatprep.subr.mxu0 0.0
    %8804 = vmatpush1.msra.mxu0 0.0
    %8805 = vmatprep.subr.mxu0 0.0
    %8806 = vmatpush1.msra.mxu0 0.0
    %8807 = vmatprep.subr.mxu0 0.0
    %8808 = vmatpush1.msra.mxu0 0.0
    %8809 = vmatprep.subr.mxu0 0.0
    %8810 = vmatpush1.msra.mxu0 0.0
    %8811 = vmatprep.subr.mxu0 0.0
    %8812 = vmatpush1.msra.mxu0 %v8706
    %8813 = vmatprep.subr.mxu0 0.0
    %8814 = vmatpush1.msra.mxu0 %v8676
    %8815 = vmatprep.subr.mxu0 0.0
    %8816 = vmatpush1.msra.mxu0 %v8670
    %8817 = vmatprep.subr.mxu0 0.0
    %8818 = vmatpush2.msra.mxu0 0.0
    %8819 = vmatprep.subr.mxu0 0.0
    %8820 = vmatpush2.msra.mxu0 0.0
    %8821 = vmatprep.subr.mxu0 0.0
    %8822 = vmatpush2.msra.mxu0 0.0
    %8823 = vmatprep.subr.mxu0 0.0
    %8824 = vmatpush2.msra.mxu0 0.0
    %8825 = vmatprep.subr.mxu0 0.0
    %8826 = vmatpush2.msra.mxu0 0.0
    %8827 = vmatprep.subr.mxu0 0.0
    %8828 = vmatpush2.msra.mxu0 0.0
    %8829 = vmatprep.subr.mxu0 0.0
    %8830 = vmatpush2.msra.mxu0 0.0
    %8831 = vmatprep.subr.mxu0 0.0
    %8832 = vmatpush2.msra.mxu0 0.0
    %8833 = vmatprep.subr.mxu0 0.0
    %8834 = vmatpush2.msra.mxu0 0.0
    %8835 = vmatprep.subr.mxu0 0.0
    %8836 = vmatpush2.msra.mxu0 0.0
    %8837 = vmatprep.subr.mxu0 0.0
    %8838 = vmatpush2.msra.mxu0 0.0
    %8839 = vmatprep.subr.mxu0 0.0
    %8840 = vmatpush2.msra.mxu0 0.0
    %8841 = vmatprep.subr.mxu0 0.0
    %8842 = vmatpush2.msra.mxu0 0.0
    %8843 = vmatprep.subr.mxu0 0.0
    %8844 = vmatpush2.msra.mxu0 0.0
    %8845 = vmatprep.subr.mxu0 0.0
    %8846 = vmatpush2.msra.mxu0 0.0
    %8847 = vmatprep.subr.mxu0 0.0
    %8848 = vmatpush2.msra.mxu0 0.0
    %8849 = vmatprep.mubr.f32.mxu0 0.0
    %8850 = vmatmul.mubr.f32.gmra.mxu0 %v8697
    %v8851 = vpop.f32.mrf.mxu0
    %v8852 = vadd.f32 0.0, %v8851
    %v8853 = vpop.f32.mrf.mxu0
    %8854 = vmatprep.mubr.f32.mxu0 0.0
    %8855 = vmatmul.mubr.f32.gmra.mxu0 %v8700
    %v8856 = vpop.f32.mrf.mxu0
    %v8857 = vadd.f32 0.0, %v8856
    %v8858 = vpop.f32.mrf.mxu0
    %8859 = vdwg.mxu0
    %v8860 = vadd.f32 %v8656, %v8775
    %v8861 = vadd.f32 %v8657, %v8777
    %v8862 = vadd.f32 %v8658, %v8852
    %v8863 = vadd.f32 %v8659, %v8781
    %v8864 = vadd.f32 %v8660, %v8783
    %v8865 = vadd.f32 %v8661, %v8857
    %s8866 = scalar_lea.vmem %s5, 208
    %v8867 = vld [vmem:[%s8866] sm:$0xff]
    %v8868 = vld [vmem:[%s8866 + $0x8] sm:$0x3]
    %8869 = vrot.lane.b32.xlu0 %v6248, 54
    %v8870 = vpop.permute.xlu0 %8869
    %8871 = vrot.lane.b32.xlu0 %v6249, 54
    %v8872 = vpop.permute.xlu0 %8871
    %8873 = vrot.lane.b32.xlu0 %v6250, 54
    %v8874 = vpop.permute.xlu0 %8873
    %8875 = vrot.lane.b32.xlu0 %v6251, 54
    %v8876 = vpop.permute.xlu0 %8875
    %8877 = vrot.lane.b32.xlu0 %v6252, 54
    %v8878 = vpop.permute.xlu0 %8877
    %8879 = vrot.lane.b32.xlu0 %v6253, 54
    %v8880 = vpop.permute.xlu0 %8879
    %8881 = vrot.lane.b32.xlu0 %v6254, 54
    %v8882 = vpop.permute.xlu0 %8881
    %8883 = vrot.lane.b32.xlu0 %v6255, 54
    %v8884 = vpop.permute.xlu0 %8883
    %8885 = vrot.lane.b32.xlu0 %v6256, 54
    %v8886 = vpop.permute.xlu0 %8885
    %vm8887 = vcmask 441344
    %v8888 = vsel %vm8887, %v8870, %v8872
    %v8889 = vsel %vm8887, %v8872, %v8874
    %v8890 = vsel %vm8887, %v8876, %v8878
    %v8891 = vsel %vm8887, %v8878, %v8880
    %v8892 = vsel %vm8887, %v8882, %v8884
    %v8893 = vsel %vm8887, %v8884, %v8886
    %v8901 = vsel %vm6299, %v8867, 0
    %v8904 = vsel %vm6299, %v8868, 0
    %v8906 = vsel %vm6306, %v8892, 0
    %v8908 = vsel %vm6306, %v8893, 0
    %v8910 = vsel %vm6306, %v8886, 0
    %8912 = vmatprep.subr.mxu0 0.0
    %8913 = vmatpush1.msra.mxu0 0.0
    %8914 = vmatprep.subr.mxu0 0.0
    %8915 = vmatpush1.msra.mxu0 0.0
    %8916 = vmatprep.subr.mxu0 0.0
    %8917 = vmatpush1.msra.mxu0 0.0
    %8918 = vmatprep.subr.mxu0 0.0
    %8919 = vmatpush1.msra.mxu0 0.0
    %8920 = vmatprep.subr.mxu0 0.0
    %8921 = vmatpush1.msra.mxu0 0.0
    %8922 = vmatprep.subr.mxu0 0.0
    %8923 = vmatpush1.msra.mxu0 0.0
    %8924 = vmatprep.subr.mxu0 0.0
    %8925 = vmatpush1.msra.mxu0 0.0
    %8926 = vmatprep.subr.mxu0 0.0
    %8927 = vmatpush1.msra.mxu0 0.0
    %8928 = vmatprep.subr.mxu0 0.0
    %8929 = vmatpush1.msra.mxu0 0.0
    %8930 = vmatprep.subr.mxu0 0.0
    %8931 = vmatpush1.msra.mxu0 0.0
    %8932 = vmatprep.subr.mxu0 0.0
    %8933 = vmatpush1.msra.mxu0 0.0
    %8934 = vmatprep.subr.mxu0 0.0
    %8935 = vmatpush1.msra.mxu0 0.0
    %8936 = vmatprep.subr.mxu0 0.0
    %8937 = vmatpush1.msra.mxu0 0.0
    %8938 = vmatprep.subr.mxu0 %v8908
    %8939 = vmatpush1.msra.mxu0 %v8906
    %8940 = vmatprep.subr.mxu0 %v8891
    %8941 = vmatpush1.msra.mxu0 %v8890
    %8942 = vmatprep.subr.mxu0 %v8889
    %8943 = vmatpush1.msra.mxu0 %v8888
    %8944 = vmatprep.subr.mxu0 0.0
    %8945 = vmatpush2.msra.mxu0 0.0
    %8946 = vmatprep.subr.mxu0 0.0
    %8947 = vmatpush2.msra.mxu0 0.0
    %8948 = vmatprep.subr.mxu0 0.0
    %8949 = vmatpush2.msra.mxu0 0.0
    %8950 = vmatprep.subr.mxu0 0.0
    %8951 = vmatpush2.msra.mxu0 0.0
    %8952 = vmatprep.subr.mxu0 0.0
    %8953 = vmatpush2.msra.mxu0 0.0
    %8954 = vmatprep.subr.mxu0 0.0
    %8955 = vmatpush2.msra.mxu0 0.0
    %8956 = vmatprep.subr.mxu0 0.0
    %8957 = vmatpush2.msra.mxu0 0.0
    %8958 = vmatprep.subr.mxu0 0.0
    %8959 = vmatpush2.msra.mxu0 0.0
    %8960 = vmatprep.subr.mxu0 0.0
    %8961 = vmatpush2.msra.mxu0 0.0
    %8962 = vmatprep.subr.mxu0 0.0
    %8963 = vmatpush2.msra.mxu0 0.0
    %8964 = vmatprep.subr.mxu0 0.0
    %8965 = vmatpush2.msra.mxu0 0.0
    %8966 = vmatprep.subr.mxu0 0.0
    %8967 = vmatpush2.msra.mxu0 0.0
    %8968 = vmatprep.subr.mxu0 0.0
    %8969 = vmatpush2.msra.mxu0 0.0
    %8970 = vmatprep.subr.mxu0 0.0
    %8971 = vmatpush2.msra.mxu0 0.0
    %8972 = vmatprep.subr.mxu0 0.0
    %8973 = vmatpush2.msra.mxu0 0.0
    %8974 = vmatprep.subr.mxu0 0.0
    %8975 = vmatpush2.msra.mxu0 0.0
    %8976 = vmatprep.mubr.f32.mxu0 0.0
    %8977 = vmatmul.mubr.f32.gmra.mxu0 %v8901
    %v8978 = vpop.f32.mrf.mxu0
    %v8979 = vadd.f32 0.0, %v8978
    %v8980 = vpop.f32.mrf.mxu0
    %v8981 = vadd.f32 0.0, %v8980
    %8982 = vmatprep.mubr.f32.mxu0 0.0
    %8983 = vmatmul.mubr.f32.gmra.mxu0 %v8904
    %v8984 = vpop.f32.mrf.mxu0
    %v8985 = vadd.f32 0.0, %v8984
    %v8986 = vpop.f32.mrf.mxu0
    %v8987 = vadd.f32 0.0, %v8986
    %8988 = vdwg.mxu0
    %8989 = vmatprep.subr.mxu0 0.0
    %8990 = vmatpush1.msra.mxu0 0.0
    %8991 = vmatprep.subr.mxu0 0.0
    %8992 = vmatpush1.msra.mxu0 0.0
    %8993 = vmatprep.subr.mxu0 0.0
    %8994 = vmatpush1.msra.mxu0 0.0
    %8995 = vmatprep.subr.mxu0 0.0
    %8996 = vmatpush1.msra.mxu0 0.0
    %8997 = vmatprep.subr.mxu0 0.0
    %8998 = vmatpush1.msra.mxu0 0.0
    %8999 = vmatprep.subr.mxu0 0.0
    %9000 = vmatpush1.msra.mxu0 0.0
    %9001 = vmatprep.subr.mxu0 0.0
    %9002 = vmatpush1.msra.mxu0 0.0
    %9003 = vmatprep.subr.mxu0 0.0
    %9004 = vmatpush1.msra.mxu0 0.0
    %9005 = vmatprep.subr.mxu0 0.0
    %9006 = vmatpush1.msra.mxu0 0.0
    %9007 = vmatprep.subr.mxu0 0.0
    %9008 = vmatpush1.msra.mxu0 0.0
    %9009 = vmatprep.subr.mxu0 0.0
    %9010 = vmatpush1.msra.mxu0 0.0
    %9011 = vmatprep.subr.mxu0 0.0
    %9012 = vmatpush1.msra.mxu0 0.0
    %9013 = vmatprep.subr.mxu0 0.0
    %9014 = vmatpush1.msra.mxu0 0.0
    %9015 = vmatprep.subr.mxu0 0.0
    %9016 = vmatpush1.msra.mxu0 %v8910
    %9017 = vmatprep.subr.mxu0 0.0
    %9018 = vmatpush1.msra.mxu0 %v8880
    %9019 = vmatprep.subr.mxu0 0.0
    %9020 = vmatpush1.msra.mxu0 %v8874
    %9021 = vmatprep.subr.mxu0 0.0
    %9022 = vmatpush2.msra.mxu0 0.0
    %9023 = vmatprep.subr.mxu0 0.0
    %9024 = vmatpush2.msra.mxu0 0.0
    %9025 = vmatprep.subr.mxu0 0.0
    %9026 = vmatpush2.msra.mxu0 0.0
    %9027 = vmatprep.subr.mxu0 0.0
    %9028 = vmatpush2.msra.mxu0 0.0
    %9029 = vmatprep.subr.mxu0 0.0
    %9030 = vmatpush2.msra.mxu0 0.0
    %9031 = vmatprep.subr.mxu0 0.0
    %9032 = vmatpush2.msra.mxu0 0.0
    %9033 = vmatprep.subr.mxu0 0.0
    %9034 = vmatpush2.msra.mxu0 0.0
    %9035 = vmatprep.subr.mxu0 0.0
    %9036 = vmatpush2.msra.mxu0 0.0
    %9037 = vmatprep.subr.mxu0 0.0
    %9038 = vmatpush2.msra.mxu0 0.0
    %9039 = vmatprep.subr.mxu0 0.0
    %9040 = vmatpush2.msra.mxu0 0.0
    %9041 = vmatprep.subr.mxu0 0.0
    %9042 = vmatpush2.msra.mxu0 0.0
    %9043 = vmatprep.subr.mxu0 0.0
    %9044 = vmatpush2.msra.mxu0 0.0
    %9045 = vmatprep.subr.mxu0 0.0
    %9046 = vmatpush2.msra.mxu0 0.0
    %9047 = vmatprep.subr.mxu0 0.0
    %9048 = vmatpush2.msra.mxu0 0.0
    %9049 = vmatprep.subr.mxu0 0.0
    %9050 = vmatpush2.msra.mxu0 0.0
    %9051 = vmatprep.subr.mxu0 0.0
    %9052 = vmatpush2.msra.mxu0 0.0
    %9053 = vmatprep.mubr.f32.mxu0 0.0
    %9054 = vmatmul.mubr.f32.gmra.mxu0 %v8901
    %v9055 = vpop.f32.mrf.mxu0
    %v9056 = vadd.f32 0.0, %v9055
    %v9057 = vpop.f32.mrf.mxu0
    %9058 = vmatprep.mubr.f32.mxu0 0.0
    %9059 = vmatmul.mubr.f32.gmra.mxu0 %v8904
    %v9060 = vpop.f32.mrf.mxu0
    %v9061 = vadd.f32 0.0, %v9060
    %v9062 = vpop.f32.mrf.mxu0
    %9063 = vdwg.mxu0
    %v9064 = vadd.f32 %v8860, %v8979
    %v9065 = vadd.f32 %v8861, %v8981
    %v9066 = vadd.f32 %v8862, %v9056
    %v9067 = vadd.f32 %v8863, %v8985
    %v9068 = vadd.f32 %v8864, %v8987
    %v9069 = vadd.f32 %v8865, %v9061
    %s9070 = scalar_lea.vmem %s5, 224
    %v9071 = vld [vmem:[%s9070] sm:$0xff]
    %v9072 = vld [vmem:[%s9070 + $0x8] sm:$0x3]
    %9073 = vrot.lane.b32.xlu0 %v6248, 52
    %v9074 = vpop.permute.xlu0 %9073
    %9075 = vrot.lane.b32.xlu0 %v6249, 52
    %v9076 = vpop.permute.xlu0 %9075
    %9077 = vrot.lane.b32.xlu0 %v6250, 52
    %v9078 = vpop.permute.xlu0 %9077
    %9079 = vrot.lane.b32.xlu0 %v6251, 52
    %v9080 = vpop.permute.xlu0 %9079
    %9081 = vrot.lane.b32.xlu0 %v6252, 52
    %v9082 = vpop.permute.xlu0 %9081
    %9083 = vrot.lane.b32.xlu0 %v6253, 52
    %v9084 = vpop.permute.xlu0 %9083
    %9085 = vrot.lane.b32.xlu0 %v6254, 52
    %v9086 = vpop.permute.xlu0 %9085
    %9087 = vrot.lane.b32.xlu0 %v6255, 52
    %v9088 = vpop.permute.xlu0 %9087
    %9089 = vrot.lane.b32.xlu0 %v6256, 52
    %v9090 = vpop.permute.xlu0 %9089
    %vm9091 = vcmask 424960
    %v9092 = vsel %vm9091, %v9074, %v9076
    %v9093 = vsel %vm9091, %v9076, %v9078
    %v9094 = vsel %vm9091, %v9080, %v9082
    %v9095 = vsel %vm9091, %v9082, %v9084
    %v9096 = vsel %vm9091, %v9086, %v9088
    %v9097 = vsel %vm9091, %v9088, %v9090
    %v9105 = vsel %vm6299, %v9071, 0
    %v9108 = vsel %vm6299, %v9072, 0
    %v9110 = vsel %vm6306, %v9096, 0
    %v9112 = vsel %vm6306, %v9097, 0
    %v9114 = vsel %vm6306, %v9090, 0
    %9116 = vmatprep.subr.mxu0 0.0
    %9117 = vmatpush1.msra.mxu0 0.0
    %9118 = vmatprep.subr.mxu0 0.0
    %9119 = vmatpush1.msra.mxu0 0.0
    %9120 = vmatprep.subr.mxu0 0.0
    %9121 = vmatpush1.msra.mxu0 0.0
    %9122 = vmatprep.subr.mxu0 0.0
    %9123 = vmatpush1.msra.mxu0 0.0
    %9124 = vmatprep.subr.mxu0 0.0
    %9125 = vmatpush1.msra.mxu0 0.0
    %9126 = vmatprep.subr.mxu0 0.0
    %9127 = vmatpush1.msra.mxu0 0.0
    %9128 = vmatprep.subr.mxu0 0.0
    %9129 = vmatpush1.msra.mxu0 0.0
    %9130 = vmatprep.subr.mxu0 0.0
    %9131 = vmatpush1.msra.mxu0 0.0
    %9132 = vmatprep.subr.mxu0 0.0
    %9133 = vmatpush1.msra.mxu0 0.0
    %9134 = vmatprep.subr.mxu0 0.0
    %9135 = vmatpush1.msra.mxu0 0.0
    %9136 = vmatprep.subr.mxu0 0.0
    %9137 = vmatpush1.msra.mxu0 0.0
    %9138 = vmatprep.subr.mxu0 0.0
    %9139 = vmatpush1.msra.mxu0 0.0
    %9140 = vmatprep.subr.mxu0 0.0
    %9141 = vmatpush1.msra.mxu0 0.0
    %9142 = vmatprep.subr.mxu0 %v9112
    %9143 = vmatpush1.msra.mxu0 %v9110
    %9144 = vmatprep.subr.mxu0 %v9095
    %9145 = vmatpush1.msra.mxu0 %v9094
    %9146 = vmatprep.subr.mxu0 %v9093
    %9147 = vmatpush1.msra.mxu0 %v9092
    %9148 = vmatprep.subr.mxu0 0.0
    %9149 = vmatpush2.msra.mxu0 0.0
    %9150 = vmatprep.subr.mxu0 0.0
    %9151 = vmatpush2.msra.mxu0 0.0
    %9152 = vmatprep.subr.mxu0 0.0
    %9153 = vmatpush2.msra.mxu0 0.0
    %9154 = vmatprep.subr.mxu0 0.0
    %9155 = vmatpush2.msra.mxu0 0.0
    %9156 = vmatprep.subr.mxu0 0.0
    %9157 = vmatpush2.msra.mxu0 0.0
    %9158 = vmatprep.subr.mxu0 0.0
    %9159 = vmatpush2.msra.mxu0 0.0
    %9160 = vmatprep.subr.mxu0 0.0
    %9161 = vmatpush2.msra.mxu0 0.0
    %9162 = vmatprep.subr.mxu0 0.0
    %9163 = vmatpush2.msra.mxu0 0.0
    %9164 = vmatprep.subr.mxu0 0.0
    %9165 = vmatpush2.msra.mxu0 0.0
    %9166 = vmatprep.subr.mxu0 0.0
    %9167 = vmatpush2.msra.mxu0 0.0
    %9168 = vmatprep.subr.mxu0 0.0
    %9169 = vmatpush2.msra.mxu0 0.0
    %9170 = vmatprep.subr.mxu0 0.0
    %9171 = vmatpush2.msra.mxu0 0.0
    %9172 = vmatprep.subr.mxu0 0.0
    %9173 = vmatpush2.msra.mxu0 0.0
    %9174 = vmatprep.subr.mxu0 0.0
    %9175 = vmatpush2.msra.mxu0 0.0
    %9176 = vmatprep.subr.mxu0 0.0
    %9177 = vmatpush2.msra.mxu0 0.0
    %9178 = vmatprep.subr.mxu0 0.0
    %9179 = vmatpush2.msra.mxu0 0.0
    %9180 = vmatprep.mubr.f32.mxu0 0.0
    %9181 = vmatmul.mubr.f32.gmra.mxu0 %v9105
    %v9182 = vpop.f32.mrf.mxu0
    %v9183 = vadd.f32 0.0, %v9182
    %v9184 = vpop.f32.mrf.mxu0
    %v9185 = vadd.f32 0.0, %v9184
    %9186 = vmatprep.mubr.f32.mxu0 0.0
    %9187 = vmatmul.mubr.f32.gmra.mxu0 %v9108
    %v9188 = vpop.f32.mrf.mxu0
    %v9189 = vadd.f32 0.0, %v9188
    %v9190 = vpop.f32.mrf.mxu0
    %v9191 = vadd.f32 0.0, %v9190
    %9192 = vdwg.mxu0
    %9193 = vmatprep.subr.mxu0 0.0
    %9194 = vmatpush1.msra.mxu0 0.0
    %9195 = vmatprep.subr.mxu0 0.0
    %9196 = vmatpush1.msra.mxu0 0.0
    %9197 = vmatprep.subr.mxu0 0.0
    %9198 = vmatpush1.msra.mxu0 0.0
    %9199 = vmatprep.subr.mxu0 0.0
    %9200 = vmatpush1.msra.mxu0 0.0
    %9201 = vmatprep.subr.mxu0 0.0
    %9202 = vmatpush1.msra.mxu0 0.0
    %9203 = vmatprep.subr.mxu0 0.0
    %9204 = vmatpush1.msra.mxu0 0.0
    %9205 = vmatprep.subr.mxu0 0.0
    %9206 = vmatpush1.msra.mxu0 0.0
    %9207 = vmatprep.subr.mxu0 0.0
    %9208 = vmatpush1.msra.mxu0 0.0
    %9209 = vmatprep.subr.mxu0 0.0
    %9210 = vmatpush1.msra.mxu0 0.0
    %9211 = vmatprep.subr.mxu0 0.0
    %9212 = vmatpush1.msra.mxu0 0.0
    %9213 = vmatprep.subr.mxu0 0.0
    %9214 = vmatpush1.msra.mxu0 0.0
    %9215 = vmatprep.subr.mxu0 0.0
    %9216 = vmatpush1.msra.mxu0 0.0
    %9217 = vmatprep.subr.mxu0 0.0
    %9218 = vmatpush1.msra.mxu0 0.0
    %9219 = vmatprep.subr.mxu0 0.0
    %9220 = vmatpush1.msra.mxu0 %v9114
    %9221 = vmatprep.subr.mxu0 0.0
    %9222 = vmatpush1.msra.mxu0 %v9084
    %9223 = vmatprep.subr.mxu0 0.0
    %9224 = vmatpush1.msra.mxu0 %v9078
    %9225 = vmatprep.subr.mxu0 0.0
    %9226 = vmatpush2.msra.mxu0 0.0
    %9227 = vmatprep.subr.mxu0 0.0
    %9228 = vmatpush2.msra.mxu0 0.0
    %9229 = vmatprep.subr.mxu0 0.0
    %9230 = vmatpush2.msra.mxu0 0.0
    %9231 = vmatprep.subr.mxu0 0.0
    %9232 = vmatpush2.msra.mxu0 0.0
    %9233 = vmatprep.subr.mxu0 0.0
    %9234 = vmatpush2.msra.mxu0 0.0
    %9235 = vmatprep.subr.mxu0 0.0
    %9236 = vmatpush2.msra.mxu0 0.0
    %9237 = vmatprep.subr.mxu0 0.0
    %9238 = vmatpush2.msra.mxu0 0.0
    %9239 = vmatprep.subr.mxu0 0.0
    %9240 = vmatpush2.msra.mxu0 0.0
    %9241 = vmatprep.subr.mxu0 0.0
    %9242 = vmatpush2.msra.mxu0 0.0
    %9243 = vmatprep.subr.mxu0 0.0
    %9244 = vmatpush2.msra.mxu0 0.0
    %9245 = vmatprep.subr.mxu0 0.0
    %9246 = vmatpush2.msra.mxu0 0.0
    %9247 = vmatprep.subr.mxu0 0.0
    %9248 = vmatpush2.msra.mxu0 0.0
    %9249 = vmatprep.subr.mxu0 0.0
    %9250 = vmatpush2.msra.mxu0 0.0
    %9251 = vmatprep.subr.mxu0 0.0
    %9252 = vmatpush2.msra.mxu0 0.0
    %9253 = vmatprep.subr.mxu0 0.0
    %9254 = vmatpush2.msra.mxu0 0.0
    %9255 = vmatprep.subr.mxu0 0.0
    %9256 = vmatpush2.msra.mxu0 0.0
    %9257 = vmatprep.mubr.f32.mxu0 0.0
    %9258 = vmatmul.mubr.f32.gmra.mxu0 %v9105
    %v9259 = vpop.f32.mrf.mxu0
    %v9260 = vadd.f32 0.0, %v9259
    %v9261 = vpop.f32.mrf.mxu0
    %9262 = vmatprep.mubr.f32.mxu0 0.0
    %9263 = vmatmul.mubr.f32.gmra.mxu0 %v9108
    %v9264 = vpop.f32.mrf.mxu0
    %v9265 = vadd.f32 0.0, %v9264
    %v9266 = vpop.f32.mrf.mxu0
    %9267 = vdwg.mxu0
    %v9268 = vadd.f32 %v9064, %v9183
    %v9269 = vadd.f32 %v9065, %v9185
    %v9270 = vadd.f32 %v9066, %v9260
    %v9271 = vadd.f32 %v9067, %v9189
    %v9272 = vadd.f32 %v9068, %v9191
    %v9273 = vadd.f32 %v9069, %v9265
    %s9274 = scalar_lea.vmem %s5, 240
    %v9275 = vld [vmem:[%s9274] sm:$0xff]
    %v9276 = vld [vmem:[%s9274 + $0x8] sm:$0x3]
    %9277 = vrot.lane.b32.xlu0 %v6248, 50
    %v9278 = vpop.permute.xlu0 %9277
    %9279 = vrot.lane.b32.xlu0 %v6249, 50
    %v9280 = vpop.permute.xlu0 %9279
    %9281 = vrot.lane.b32.xlu0 %v6250, 50
    %v9282 = vpop.permute.xlu0 %9281
    %9283 = vrot.lane.b32.xlu0 %v6251, 50
    %v9284 = vpop.permute.xlu0 %9283
    %9285 = vrot.lane.b32.xlu0 %v6252, 50
    %v9286 = vpop.permute.xlu0 %9285
    %9287 = vrot.lane.b32.xlu0 %v6253, 50
    %v9288 = vpop.permute.xlu0 %9287
    %9289 = vrot.lane.b32.xlu0 %v6254, 50
    %v9290 = vpop.permute.xlu0 %9289
    %9291 = vrot.lane.b32.xlu0 %v6255, 50
    %v9292 = vpop.permute.xlu0 %9291
    %9293 = vrot.lane.b32.xlu0 %v6256, 50
    %v9294 = vpop.permute.xlu0 %9293
    %vm9295 = vcmask 408576
    %v9296 = vsel %vm9295, %v9278, %v9280
    %v9297 = vsel %vm9295, %v9280, %v9282
    %v9298 = vsel %vm9295, %v9284, %v9286
    %v9299 = vsel %vm9295, %v9286, %v9288
    %v9300 = vsel %vm9295, %v9290, %v9292
    %v9301 = vsel %vm9295, %v9292, %v9294
    %v9309 = vsel %vm6299, %v9275, 0
    %v9312 = vsel %vm6299, %v9276, 0
    %v9314 = vsel %vm6306, %v9300, 0
    %v9316 = vsel %vm6306, %v9301, 0
    %v9318 = vsel %vm6306, %v9294, 0
    %9320 = vmatprep.subr.mxu0 0.0
    %9321 = vmatpush1.msra.mxu0 0.0
    %9322 = vmatprep.subr.mxu0 0.0
    %9323 = vmatpush1.msra.mxu0 0.0
    %9324 = vmatprep.subr.mxu0 0.0
    %9325 = vmatpush1.msra.mxu0 0.0
    %9326 = vmatprep.subr.mxu0 0.0
    %9327 = vmatpush1.msra.mxu0 0.0
    %9328 = vmatprep.subr.mxu0 0.0
    %9329 = vmatpush1.msra.mxu0 0.0
    %9330 = vmatprep.subr.mxu0 0.0
    %9331 = vmatpush1.msra.mxu0 0.0
    %9332 = vmatprep.subr.mxu0 0.0
    %9333 = vmatpush1.msra.mxu0 0.0
    %9334 = vmatprep.subr.mxu0 0.0
    %9335 = vmatpush1.msra.mxu0 0.0
    %9336 = vmatprep.subr.mxu0 0.0
    %9337 = vmatpush1.msra.mxu0 0.0
    %9338 = vmatprep.subr.mxu0 0.0
    %9339 = vmatpush1.msra.mxu0 0.0
    %9340 = vmatprep.subr.mxu0 0.0
    %9341 = vmatpush1.msra.mxu0 0.0
    %9342 = vmatprep.subr.mxu0 0.0
    %9343 = vmatpush1.msra.mxu0 0.0
    %9344 = vmatprep.subr.mxu0 0.0
    %9345 = vmatpush1.msra.mxu0 0.0
    %9346 = vmatprep.subr.mxu0 %v9316
    %9347 = vmatpush1.msra.mxu0 %v9314
    %9348 = vmatprep.subr.mxu0 %v9299
    %9349 = vmatpush1.msra.mxu0 %v9298
    %9350 = vmatprep.subr.mxu0 %v9297
    %9351 = vmatpush1.msra.mxu0 %v9296
    %9352 = vmatprep.subr.mxu0 0.0
    %9353 = vmatpush2.msra.mxu0 0.0
    %9354 = vmatprep.subr.mxu0 0.0
    %9355 = vmatpush2.msra.mxu0 0.0
    %9356 = vmatprep.subr.mxu0 0.0
    %9357 = vmatpush2.msra.mxu0 0.0
    %9358 = vmatprep.subr.mxu0 0.0
    %9359 = vmatpush2.msra.mxu0 0.0
    %9360 = vmatprep.subr.mxu0 0.0
    %9361 = vmatpush2.msra.mxu0 0.0
    %9362 = vmatprep.subr.mxu0 0.0
    %9363 = vmatpush2.msra.mxu0 0.0
    %9364 = vmatprep.subr.mxu0 0.0
    %9365 = vmatpush2.msra.mxu0 0.0
    %9366 = vmatprep.subr.mxu0 0.0
    %9367 = vmatpush2.msra.mxu0 0.0
    %9368 = vmatprep.subr.mxu0 0.0
    %9369 = vmatpush2.msra.mxu0 0.0
    %9370 = vmatprep.subr.mxu0 0.0
    %9371 = vmatpush2.msra.mxu0 0.0
    %9372 = vmatprep.subr.mxu0 0.0
    %9373 = vmatpush2.msra.mxu0 0.0
    %9374 = vmatprep.subr.mxu0 0.0
    %9375 = vmatpush2.msra.mxu0 0.0
    %9376 = vmatprep.subr.mxu0 0.0
    %9377 = vmatpush2.msra.mxu0 0.0
    %9378 = vmatprep.subr.mxu0 0.0
    %9379 = vmatpush2.msra.mxu0 0.0
    %9380 = vmatprep.subr.mxu0 0.0
    %9381 = vmatpush2.msra.mxu0 0.0
    %9382 = vmatprep.subr.mxu0 0.0
    %9383 = vmatpush2.msra.mxu0 0.0
    %9384 = vmatprep.mubr.f32.mxu0 0.0
    %9385 = vmatmul.mubr.f32.gmra.mxu0 %v9309
    %v9386 = vpop.f32.mrf.mxu0
    %v9387 = vadd.f32 0.0, %v9386
    %v9388 = vpop.f32.mrf.mxu0
    %v9389 = vadd.f32 0.0, %v9388
    %9390 = vmatprep.mubr.f32.mxu0 0.0
    %9391 = vmatmul.mubr.f32.gmra.mxu0 %v9312
    %v9392 = vpop.f32.mrf.mxu0
    %v9393 = vadd.f32 0.0, %v9392
    %v9394 = vpop.f32.mrf.mxu0
    %v9395 = vadd.f32 0.0, %v9394
    %9396 = vdwg.mxu0
    %9397 = vmatprep.subr.mxu0 0.0
    %9398 = vmatpush1.msra.mxu0 0.0
    %9399 = vmatprep.subr.mxu0 0.0
    %9400 = vmatpush1.msra.mxu0 0.0
    %9401 = vmatprep.subr.mxu0 0.0
    %9402 = vmatpush1.msra.mxu0 0.0
    %9403 = vmatprep.subr.mxu0 0.0
    %9404 = vmatpush1.msra.mxu0 0.0
    %9405 = vmatprep.subr.mxu0 0.0
    %9406 = vmatpush1.msra.mxu0 0.0
    %9407 = vmatprep.subr.mxu0 0.0
    %9408 = vmatpush1.msra.mxu0 0.0
    %9409 = vmatprep.subr.mxu0 0.0
    %9410 = vmatpush1.msra.mxu0 0.0
    %9411 = vmatprep.subr.mxu0 0.0
    %9412 = vmatpush1.msra.mxu0 0.0
    %9413 = vmatprep.subr.mxu0 0.0
    %9414 = vmatpush1.msra.mxu0 0.0
    %9415 = vmatprep.subr.mxu0 0.0
    %9416 = vmatpush1.msra.mxu0 0.0
    %9417 = vmatprep.subr.mxu0 0.0
    %9418 = vmatpush1.msra.mxu0 0.0
    %9419 = vmatprep.subr.mxu0 0.0
    %9420 = vmatpush1.msra.mxu0 0.0
    %9421 = vmatprep.subr.mxu0 0.0
    %9422 = vmatpush1.msra.mxu0 0.0
    %9423 = vmatprep.subr.mxu0 0.0
    %9424 = vmatpush1.msra.mxu0 %v9318
    %9425 = vmatprep.subr.mxu0 0.0
    %9426 = vmatpush1.msra.mxu0 %v9288
    %9427 = vmatprep.subr.mxu0 0.0
    %9428 = vmatpush1.msra.mxu0 %v9282
    %9429 = vmatprep.subr.mxu0 0.0
    %9430 = vmatpush2.msra.mxu0 0.0
    %9431 = vmatprep.subr.mxu0 0.0
    %9432 = vmatpush2.msra.mxu0 0.0
    %9433 = vmatprep.subr.mxu0 0.0
    %9434 = vmatpush2.msra.mxu0 0.0
    %9435 = vmatprep.subr.mxu0 0.0
    %9436 = vmatpush2.msra.mxu0 0.0
    %9437 = vmatprep.subr.mxu0 0.0
    %9438 = vmatpush2.msra.mxu0 0.0
    %9439 = vmatprep.subr.mxu0 0.0
    %9440 = vmatpush2.msra.mxu0 0.0
    %9441 = vmatprep.subr.mxu0 0.0
    %9442 = vmatpush2.msra.mxu0 0.0
    %9443 = vmatprep.subr.mxu0 0.0
    %9444 = vmatpush2.msra.mxu0 0.0
    %9445 = vmatprep.subr.mxu0 0.0
    %9446 = vmatpush2.msra.mxu0 0.0
    %9447 = vmatprep.subr.mxu0 0.0
    %9448 = vmatpush2.msra.mxu0 0.0
    %9449 = vmatprep.subr.mxu0 0.0
    %9450 = vmatpush2.msra.mxu0 0.0
    %9451 = vmatprep.subr.mxu0 0.0
    %9452 = vmatpush2.msra.mxu0 0.0
    %9453 = vmatprep.subr.mxu0 0.0
    %9454 = vmatpush2.msra.mxu0 0.0
    %9455 = vmatprep.subr.mxu0 0.0
    %9456 = vmatpush2.msra.mxu0 0.0
    %9457 = vmatprep.subr.mxu0 0.0
    %9458 = vmatpush2.msra.mxu0 0.0
    %9459 = vmatprep.subr.mxu0 0.0
    %9460 = vmatpush2.msra.mxu0 0.0
    %9461 = vmatprep.mubr.f32.mxu0 0.0
    %9462 = vmatmul.mubr.f32.gmra.mxu0 %v9309
    %v9463 = vpop.f32.mrf.mxu0
    %v9464 = vadd.f32 0.0, %v9463
    %v9465 = vpop.f32.mrf.mxu0
    %9466 = vmatprep.mubr.f32.mxu0 0.0
    %9467 = vmatmul.mubr.f32.gmra.mxu0 %v9312
    %v9468 = vpop.f32.mrf.mxu0
    %v9469 = vadd.f32 0.0, %v9468
    %v9470 = vpop.f32.mrf.mxu0
    %9471 = vdwg.mxu0
    %v9472 = vadd.f32 %v9268, %v9387
    %v9473 = vadd.f32 %v9269, %v9389
    %v9474 = vadd.f32 %v9270, %v9464
    %v9475 = vadd.f32 %v9271, %v9393
    %v9476 = vadd.f32 %v9272, %v9395
    %v9477 = vadd.f32 %v9273, %v9469
    %v9478 = vlaneseq
    %v9479 = vand.u32 %v9478, 127
    %v9480 = vadd.s32 %v9479, 128
    %v9481 = vadd.s32 %v9479, 256
    %v9482 = vlaneseq
    %v9483 = vshrl.u32 %v9482, 7
    %v9484 = vmul.u32 %v9483, 144
    %vm9485 = vcmp.eq.s32.totalorder %v9479, %v9484
    %vm9486 = vcmp.eq.s32.totalorder %v9480, %v9484
    %vm9487 = vcmp.eq.s32.totalorder %v9481, %v9484
    %v9488 = vsel %vm9485, 1, 0
    %v9489 = vsel %vm9486, 1, 0
    %v9490 = vsel %vm9487, 1, 0
    %v9491 = vcvt.s32.f32 %v9488
    %v9492 = vcvt.s32.f32 %v9489
    %v9493 = vcvt.s32.f32 %v9490
    %v9495 = vsel %vm781, %v9493, 0
    %v9498 = vsel %vm781, %v9474, 0
    %v9501 = vsel %vm781, %v9477, 0
    %9503 = vmatprep.subr.mxu0 0.0
    %9504 = vmatpush1.xpose.msra.mxu0 0.0
    %9505 = vmatprep.subr.mxu0 0.0
    %9506 = vmatpush1.xpose.msra.mxu0 0.0
    %9507 = vmatprep.subr.mxu0 0.0
    %9508 = vmatpush1.xpose.msra.mxu0 0.0
    %9509 = vmatprep.subr.mxu0 0.0
    %9510 = vmatpush1.xpose.msra.mxu0 0.0
    %9511 = vmatprep.subr.mxu0 0.0
    %9512 = vmatpush1.xpose.msra.mxu0 0.0
    %9513 = vmatprep.subr.mxu0 0.0
    %9514 = vmatpush1.xpose.msra.mxu0 0.0
    %9515 = vmatprep.subr.mxu0 0.0
    %9516 = vmatpush1.xpose.msra.mxu0 0.0
    %9517 = vmatprep.subr.mxu0 0.0
    %9518 = vmatpush1.xpose.msra.mxu0 0.0
    %9519 = vmatprep.subr.mxu0 0.0
    %9520 = vmatpush1.xpose.msra.mxu0 0.0
    %9521 = vmatprep.subr.mxu0 0.0
    %9522 = vmatpush1.xpose.msra.mxu0 0.0
    %9523 = vmatprep.subr.mxu0 0.0
    %9524 = vmatpush1.xpose.msra.mxu0 0.0
    %9525 = vmatprep.subr.mxu0 0.0
    %9526 = vmatpush1.xpose.msra.mxu0 0.0
    %9527 = vmatprep.subr.mxu0 0.0
    %9528 = vmatpush1.xpose.msra.mxu0 0.0
    %9529 = vmatprep.subr.mxu0 0.0
    %9530 = vmatpush1.xpose.msra.mxu0 0.0
    %9531 = vmatprep.subr.mxu0 %v9476
    %9532 = vmatpush1.xpose.msra.mxu0 %v9475
    %9533 = vmatprep.subr.mxu0 %v9473
    %9534 = vmatpush1.xpose.msra.mxu0 %v9472
    %9535 = vmatprep.subr.mxu0 0.0
    %9536 = vmatpush2.xpose.msra.mxu0 0.0
    %9537 = vmatprep.subr.mxu0 0.0
    %9538 = vmatpush2.xpose.msra.mxu0 0.0
    %9539 = vmatprep.subr.mxu0 0.0
    %9540 = vmatpush2.xpose.msra.mxu0 0.0
    %9541 = vmatprep.subr.mxu0 0.0
    %9542 = vmatpush2.xpose.msra.mxu0 0.0
    %9543 = vmatprep.subr.mxu0 0.0
    %9544 = vmatpush2.xpose.msra.mxu0 0.0
    %9545 = vmatprep.subr.mxu0 0.0
    %9546 = vmatpush2.xpose.msra.mxu0 0.0
    %9547 = vmatprep.subr.mxu0 0.0
    %9548 = vmatpush2.xpose.msra.mxu0 0.0
    %9549 = vmatprep.subr.mxu0 0.0
    %9550 = vmatpush2.xpose.msra.mxu0 0.0
    %9551 = vmatprep.subr.mxu0 0.0
    %9552 = vmatpush2.xpose.msra.mxu0 0.0
    %9553 = vmatprep.subr.mxu0 0.0
    %9554 = vmatpush2.xpose.msra.mxu0 0.0
    %9555 = vmatprep.subr.mxu0 0.0
    %9556 = vmatpush2.xpose.msra.mxu0 0.0
    %9557 = vmatprep.subr.mxu0 0.0
    %9558 = vmatpush2.xpose.msra.mxu0 0.0
    %9559 = vmatprep.subr.mxu0 0.0
    %9560 = vmatpush2.xpose.msra.mxu0 0.0
    %9561 = vmatprep.subr.mxu0 0.0
    %9562 = vmatpush2.xpose.msra.mxu0 0.0
    %9563 = vmatprep.subr.mxu0 0.0
    %9564 = vmatpush2.xpose.msra.mxu0 0.0
    %9565 = vmatprep.subr.mxu0 0.0
    %9566 = vmatpush2.xpose.msra.mxu0 0.0
    %9567 = vmatprep.mubr.f32.mxu0 %v9492
    %9568 = vmatmul.mubr.f32.gmra.mxu0 %v9491
    %v9569 = vpop.f32.mrf.mxu0
    %v9570 = vadd.f32 0.0, %v9569
    %v9571 = vpop.f32.mrf.mxu0
    %9572 = vdwg.mxu0
    %9573 = vmatprep.subr.mxu0 0.0
    %9574 = vmatpush1.xpose.msra.mxu0 0.0
    %9575 = vmatprep.subr.mxu0 0.0
    %9576 = vmatpush1.xpose.msra.mxu0 0.0
    %9577 = vmatprep.subr.mxu0 0.0
    %9578 = vmatpush1.xpose.msra.mxu0 0.0
    %9579 = vmatprep.subr.mxu0 0.0
    %9580 = vmatpush1.xpose.msra.mxu0 0.0
    %9581 = vmatprep.subr.mxu0 0.0
    %9582 = vmatpush1.xpose.msra.mxu0 0.0
    %9583 = vmatprep.subr.mxu0 0.0
    %9584 = vmatpush1.xpose.msra.mxu0 0.0
    %9585 = vmatprep.subr.mxu0 0.0
    %9586 = vmatpush1.xpose.msra.mxu0 0.0
    %9587 = vmatprep.subr.mxu0 0.0
    %9588 = vmatpush1.xpose.msra.mxu0 0.0
    %9589 = vmatprep.subr.mxu0 0.0
    %9590 = vmatpush1.xpose.msra.mxu0 0.0
    %9591 = vmatprep.subr.mxu0 0.0
    %9592 = vmatpush1.xpose.msra.mxu0 0.0
    %9593 = vmatprep.subr.mxu0 0.0
    %9594 = vmatpush1.xpose.msra.mxu0 0.0
    %9595 = vmatprep.subr.mxu0 0.0
    %9596 = vmatpush1.xpose.msra.mxu0 0.0
    %9597 = vmatprep.subr.mxu0 0.0
    %9598 = vmatpush1.xpose.msra.mxu0 0.0
    %9599 = vmatprep.subr.mxu0 0.0
    %9600 = vmatpush1.xpose.msra.mxu0 0.0
    %9601 = vmatprep.subr.mxu0 0.0
    %9602 = vmatpush1.xpose.msra.mxu0 %v9501
    %9603 = vmatprep.subr.mxu0 0.0
    %9604 = vmatpush1.xpose.msra.mxu0 %v9498
    %9605 = vmatprep.subr.mxu0 0.0
    %9606 = vmatpush2.xpose.msra.mxu0 0.0
    %9607 = vmatprep.subr.mxu0 0.0
    %9608 = vmatpush2.xpose.msra.mxu0 0.0
    %9609 = vmatprep.subr.mxu0 0.0
    %9610 = vmatpush2.xpose.msra.mxu0 0.0
    %9611 = vmatprep.subr.mxu0 0.0
    %9612 = vmatpush2.xpose.msra.mxu0 0.0
    %9613 = vmatprep.subr.mxu0 0.0
    %9614 = vmatpush2.xpose.msra.mxu0 0.0
    %9615 = vmatprep.subr.mxu0 0.0
    %9616 = vmatpush2.xpose.msra.mxu0 0.0
    %9617 = vmatprep.subr.mxu0 0.0
    %9618 = vmatpush2.xpose.msra.mxu0 0.0
    %9619 = vmatprep.subr.mxu0 0.0
    %9620 = vmatpush2.xpose.msra.mxu0 0.0
    %9621 = vmatprep.subr.mxu0 0.0
    %9622 = vmatpush2.xpose.msra.mxu0 0.0
    %9623 = vmatprep.subr.mxu0 0.0
    %9624 = vmatpush2.xpose.msra.mxu0 0.0
    %9625 = vmatprep.subr.mxu0 0.0
    %9626 = vmatpush2.xpose.msra.mxu0 0.0
    %9627 = vmatprep.subr.mxu0 0.0
    %9628 = vmatpush2.xpose.msra.mxu0 0.0
    %9629 = vmatprep.subr.mxu0 0.0
    %9630 = vmatpush2.xpose.msra.mxu0 0.0
    %9631 = vmatprep.subr.mxu0 0.0
    %9632 = vmatpush2.xpose.msra.mxu0 0.0
    %9633 = vmatprep.subr.mxu0 0.0
    %9634 = vmatpush2.xpose.msra.mxu0 0.0
    %9635 = vmatprep.subr.mxu0 0.0
    %9636 = vmatpush2.xpose.msra.mxu0 0.0
    %9637 = vmatprep.mubr.f32.mxu0 0.0
    %9638 = vmatmul.mubr.f32.gmra.mxu0 %v9495
    %v9639 = vpop.f32.mrf.mxu0
    %v9640 = vadd.f32 %v9570, %v9639
    %v9641 = vpop.f32.mrf.mxu0
    %9642 = vdwg.mxu0
    %vm9643 = vcmask 74752
    %v9644 = vsel %vm9643, %v9640, -inf
    %9645 = vmax.xlane.f32.xlu0 %v9644
    %v9646 = vpop.xlane.xlu0 %9645
    %v9647 = vsub.f32 %v9640, %v9646
    %v9648 = vmul.f32 %v9647, 1.442695
    %v9649 = vpow.pop %v9648
    %v9650 = vsel %vm9643, %v9649, 0.0
    %9651 = vadd.xlane.f32.xlu0 %v9650
    %v9652 = vpop.xlane.xlu0 %9651
    %v9653 = vrcp.pop %v9652
    %v9654 = vmul.f32 %v9649, %v9653
    %9655 = vst.msk [vmem:[#allocation5] sm:$0x3] %vm9643, %v9654
    // Predicated region
    $region26: #{tpu_custom_call.1} parent=1 // pred_check
      _
    $region27: #{tpu_custom_call.1} parent=1 // pred_check_branch
      %9657 = sbr.rel (0) target = $region29
    $region28: #{tpu_custom_call.1} parent=1 // pred_region
      %s9659 = ssub.s32 32, 32
      %9660 = vsyncadd [#allocation6], %s9659
      %s9662 = sshll.u32 [#allocation5], 4
      %s9663 = int_to_ptr.vmem [resolvable:$true] %s9662
      %9665 = dma.vmem_to_hbm [thread:$0]  %s9663, 32, %s6, [#allocation6]
    $region29: #{tpu_custom_call.1} parent=1 // pred_fallthru
      _
    // Predicated region
    $region30: #{tpu_custom_call.1} parent=1 // pred_check
      _
    $region31: #{tpu_custom_call.1} parent=1 // pred_check_branch
      %9667 = sbr.rel (0) target = $region33
    $region32: #{tpu_custom_call.1} parent=1 // pred_region
      %9668 = dma.done [#allocation6], 32
    $region33: #{tpu_custom_call.1} parent=1 // pred_fallthru
      _
    %9669 = vsyncpa [#allocation6], 1

</llo_original>
